<compile_context>
chip_gen: v6e
topology: v6e:2x2x1
jax: 0.10.0
libtpu: 0.0.40
codegen_flags: <defaults>
</compile_context>

<pallas_src>
import math
import numpy as np
import jax
import jax.numpy as jnp
from jax import lax
from jax.experimental import pallas as pl
from jax.experimental.pallas import tpu as pltpu

# ---- small, module-consistent config ----
B = 2                     # batch
L = 16                    # win_size (sequence length)
D_MODEL = 32
N_HEADS = 4
D_K = D_MODEL // N_HEADS  # 8
D_FF = 64
E_LAYERS = 2
EPS = 1e-5
SCALE = 1.0 / math.sqrt(D_K)
LN3 = math.log(3.0)
INV_SQRT_2PI = 1.0 / math.sqrt(2.0 * math.pi)

# fused projection column layout: [q | k | vo(head0..head3) | sigma | pad]
OFF_Q = 0
OFF_K = D_MODEL
OFF_VO = 2 * D_MODEL
OFF_SG = 2 * D_MODEL + N_HEADS * D_MODEL       # 192
PROJ_COLS = 256                                 # lane-dense, rest zero-padded

# packed lane-dense output slab: [series(128) | prior(128) | x_out(32) | sigma(8) | pad]
EH = E_LAYERS * N_HEADS
SER_OFF = 0
PRI_OFF = EH * L              # 128
XO_OFF = PRI_OFF + EH * L     # 256
SIG_OFF = XO_OFF + D_MODEL    # 288
SLAB_W = 384                  # 3 x 128 lanes

# aux slab (all small constants in one input): rows of 256 lanes
AUX_W = PROJ_COLS
ROW_ND2 = 0                   # rows [0:L): -0.5*dist^2 in lanes [0:L)
ROW_LAYER = L                 # 8 rows per layer follow
R_BPROJ, R_BO, R_G1, R_BE1, R_B1, R_B2, R_G2, R_BE2 = range(8)
ROW_NORM = L + 8 * E_LAYERS   # final-norm gamma / beta rows
AUX_ROWS = ROW_NORM + 2       # 34


def _layernorm(x, g, b):
    mu = jnp.mean(x, axis=-1, keepdims=True)
    var = jnp.mean((x - mu) ** 2, axis=-1, keepdims=True)
    return (x - mu) * lax.rsqrt(var + EPS) * g + b


def _recip(x):
    # EUP approximate reciprocal + one Newton step (keeps f32 accuracy, frees VPU).
    r = pl.reciprocal(x, approx=True)
    return r * (2.0 - x * r)


# ----------------------------------------------------------------------------
# Pallas kernel: the FULL Encoder (all layers + final norm) for a block of
# `bb` batch elements per grid step.
# ----------------------------------------------------------------------------
def make_encoder_kernel(bb):
    def kernel(x_ref, wproj_ref, w1_ref, w2_ref, aux_ref, out_ref):
        def arow(r, w):
            return aux_ref[r:r + 1, :w]          # (1, w) static row slice

        x = x_ref[...]                            # (bb*L, D)
        nd2 = aux_ref[0:L, 0:L]                   # -0.5 * dist**2 (hoisted host-side)

        for l in range(E_LAYERS):
            base = ROW_LAYER + 8 * l
            # fused lane-dense projection: q*scale | k | per-head (V @ Wo) | sigma
            proj = jnp.dot(x, wproj_ref[l],
                           preferred_element_type=jnp.float32) + arow(base + R_BPROJ, PROJ_COLS)

            # sigma transform: sigmoid(sigma*5)+1e-5 ; 3**sigma - 1 (stored in slab)
            sg_raw = proj[:, OFF_SG:OFF_SG + N_HEADS]
            s = _recip(1.0 + jnp.exp(-5.0 * sg_raw)) + 1e-5
            sg = jnp.exp(s * LN3) - 1.0
            out_ref[:, SIG_OFF + l * N_HEADS:SIG_OFF + (l + 1) * N_HEADS] = sg
            inv_sg = _recip(sg)

            attn_parts = []
            for b in range(bb):
                r0 = b * L
                pb = proj[r0:r0 + L]              # (L, 256) sublane slice
                ib = inv_sg[r0:r0 + L]
                acc = None
                for h in range(N_HEADS):
                    c = l * N_HEADS + h
                    qh = pb[:, OFF_Q + h * D_K:OFF_Q + (h + 1) * D_K]
                    kh = pb[:, OFF_K + h * D_K:OFF_K + (h + 1) * D_K]
                    # contract last-vs-last: no materialized K transpose
                    scores = lax.dot_general(
                        qh, kh, (((1,), (1,)), ((), ())),
                        preferred_element_type=jnp.float32)
                    m = jnp.max(scores, axis=-1, keepdims=True)
                    e = jnp.exp(scores - m)
                    series_h = e * _recip(jnp.sum(e, axis=-1, keepdims=True))
                    out_ref[r0:r0 + L, SER_OFF + c * L:SER_OFF + (c + 1) * L] = series_h

                    ic = ib[:, h:h + 1]
                    out_ref[r0:r0 + L, PRI_OFF + c * L:PRI_OFF + (c + 1) * L] = (
                        (INV_SQRT_2PI * ic) * jnp.exp(nd2 * (ic * ic)))

                    # value already projected to model space (Wo folded host-side)
                    voh = pb[:, OFF_VO + h * D_MODEL:OFF_VO + (h + 1) * D_MODEL]
                    d = jnp.dot(series_h, voh, preferred_element_type=jnp.float32)
                    acc = d if acc is None else acc + d
                attn_parts.append(acc)
            attn = attn_parts[0] if bb == 1 else jnp.concatenate(attn_parts, axis=0)
            attn = attn + arow(base + R_BO, D_MODEL)

            # residual + norm1
            x1 = _layernorm(x + attn, arow(base + R_G1, D_MODEL), arow(base + R_BE1, D_MODEL))

            # FFN: Conv1d(k=1) -> relu -> Conv1d(k=1), as feature-axis matmuls
            y = jnp.dot(x1, w1_ref[l], preferred_element_type=jnp.float32) + arow(base + R_B1, D_FF)
            y = jnp.maximum(y, 0.0)
            y = jnp.dot(y, w2_ref[l], preferred_element_type=jnp.float32) + arow(base + R_B2, D_MODEL)

            # residual + norm2 -> input of next layer
            x = _layernorm(x1 + y, arow(base + R_G2, D_MODEL), arow(base + R_BE2, D_MODEL))

        # final Encoder LayerNorm, stored lane-packed next to series/prior
        out_ref[:, XO_OFF:XO_OFF + D_MODEL] = _layernorm(
            x, arow(ROW_NORM, D_MODEL), arow(ROW_NORM + 1, D_MODEL))

    return kernel


# ----------------------------------------------------------------------------
# Host-side weight fusion / consolidation
# ----------------------------------------------------------------------------
def _pad_row(v, w=AUX_W):
    return jnp.pad(v, ((0, 0), (0, w - v.shape[1])))


def _fuse_layer(p):
    """(D, 256) fused projection weight + (1, 256) bias; scale folded into Q, Wo into V."""
    hi = lax.Precision.HIGHEST
    wvT, woT = p['wv'].T, p['wo'].T
    cols = [p['wq'].T * SCALE, p['wk'].T]
    bcols = [p['bq'] * SCALE, p['bk']]
    for h in range(N_HEADS):
        sl = slice(h * D_K, (h + 1) * D_K)
        cols.append(jnp.matmul(wvT[:, sl], woT[sl, :], precision=hi))      # fold Wo into V
        bcols.append(jnp.matmul(p['bv'][:, sl], woT[sl, :], precision=hi))
    cols.append(p['ws'].T)
    bcols.append(p['bs'])
    w = jnp.concatenate(cols, axis=1)                 # (D, 196)
    b = jnp.concatenate(bcols, axis=1)                # (1, 196)
    return jnp.pad(w, ((0, 0), (0, PROJ_COLS - w.shape[1]))), _pad_row(b, PROJ_COLS)


def fuse_encoder_params(layer_params, dist, norm_g, norm_b):
    nd2 = -0.5 * dist * dist
    aux_rows = [jnp.pad(nd2, ((0, 0), (0, AUX_W - nd2.shape[1])))]         # rows 0..L-1
    wprojs = []
    for p in layer_params:
        w, bproj = _fuse_layer(p)
        wprojs.append(w)
        aux_rows += [bproj,                       # R_BPROJ
                     _pad_row(p['bo']),           # R_BO
                     _pad_row(p['g1']),           # R_G1
                     _pad_row(p['be1']),          # R_BE1
                     _pad_row(p['b1']),           # R_B1
                     _pad_row(p['b2']),           # R_B2
                     _pad_row(p['g2']),           # R_G2
                     _pad_row(p['be2'])]          # R_BE2
    aux_rows += [_pad_row(norm_g), _pad_row(norm_b)]
    aux = jnp.concatenate(aux_rows, axis=0)                                # (34, 256)
    wproj = jnp.stack(wprojs)                                              # (E, D, 256)
    w1 = jnp.stack([p['w1'].T for p in layer_params])                      # (E, D, D_FF)
    w2 = jnp.stack([p['w2'].T for p in layer_params])                      # (E, D_FF, D)
    return wproj, w1, w2, aux


# ----------------------------------------------------------------------------
# pallas_call wrapper
# ----------------------------------------------------------------------------
def _tensorcores_per_chip():
    try:
        kind = jax.devices()[0].device_kind.lower()
        if "v7" in kind or "7x" in kind:
            return 2
    except Exception:
        pass
    return 1


def encoder_call(x, wproj, w1, w2, aux):
    Bb, Ll, Dd = x.shape
    # Batch fold: one grid step on single-TC chips (v5e/v6e); per-batch parallel
    # grid steps on dual-TC chips (v7x) so both TensorCores get work.
    bb = 1 if (_tensorcores_per_chip() >= 2 and Bb > 1) else Bb
    bl = bb * Ll
    x2 = x.reshape(Bb * Ll, Dd)

    def full_spec(a):
        nd = a.ndim
        return pl.BlockSpec(a.shape, lambda i, _nd=nd: (0,) * _nd)

    slab = pl.pallas_call(
        make_encoder_kernel(bb),
        out_shape=jax.ShapeDtypeStruct((Bb * Ll, SLAB_W), jnp.float32),
        grid_spec=pltpu.PrefetchScalarGridSpec(
            num_scalar_prefetch=0,
            grid=(Bb // bb,),
            in_specs=[pl.BlockSpec((bl, Dd), lambda i: (i, 0)),
                      full_spec(wproj), full_spec(w1), full_spec(w2), full_spec(aux)],
            out_specs=pl.BlockSpec((bl, SLAB_W), lambda i: (i, 0))),
        compiler_params=pltpu.CompilerParams(dimension_semantics=("parallel",)),
    )(x2, wproj, w1, w2, aux)
    return slab.reshape(Bb, Ll, SLAB_W)


# ----------------------------------------------------------------------------
# Encoder.forward
# ----------------------------------------------------------------------------
def encoder_forward(x, dist, layer_params, norm_g, norm_b, attn_mask=None):
    # TODO(synk): attn_mask / TriangularCausalMask path not implemented (unused in Orion model).
    wproj, w1, w2, aux = fuse_encoder_params(layer_params, dist, norm_g, norm_b)
    slab = encoder_call(x, wproj, w1, w2, aux)

    Bb, Ll = x.shape[0], x.shape[1]
    xo = slab[:, :, XO_OFF:XO_OFF + D_MODEL]
    ser5 = slab[:, :, SER_OFF:SER_OFF + EH * Ll].reshape(Bb, Ll, E_LAYERS, N_HEADS, Ll)
    ser5 = jnp.transpose(ser5, (0, 2, 3, 1, 4))
    pri5 = slab[:, :, PRI_OFF:PRI_OFF + EH * Ll].reshape(Bb, Ll, E_LAYERS, N_HEADS, Ll)
    pri5 = jnp.transpose(pri5, (0, 2, 3, 1, 4))
    sig = slab[:, :, SIG_OFF:SIG_OFF + EH].reshape(Bb, Ll, E_LAYERS, N_HEADS)

    series_list, prior_list, sigma_list = [], [], []
    for l in range(E_LAYERS):
        series_list.append(ser5[:, l])
        prior_list.append(pri5[:, l])
        sigma_list.append(jnp.broadcast_to(
            jnp.transpose(sig[:, :, l, :], (0, 2, 1))[..., None],
            (Bb, N_HEADS, Ll, Ll)))
    return xo, series_list, prior_list, sigma_list


# ----------------------------------------------------------------------------
# Pure-JAX reference (mirrors the PyTorch semantics) for a correctness check
# ----------------------------------------------------------------------------
def encoder_layer_ref(x, dist, p):
    Bb, Ll, Dd = x.shape
    q = (x @ p['wq'].T + p['bq']).reshape(Bb, Ll, N_HEADS, D_K)
    k = (x @ p['wk'].T + p['bk']).reshape(Bb, Ll, N_HEADS, D_K)
    v = (x @ p['wv'].T + p['bv']).reshape(Bb, Ll, N_HEADS, D_K)
    sg = x @ p['ws'].T + p['bs']                              # (B, L, H)

    scores = jnp.einsum('blhe,bshe->bhls', q, k) * SCALE
    series = jax.nn.softmax(scores, axis=-1)

    s = 1.0 / (1.0 + jnp.exp(-5.0 * sg)) + 1e-5
    s = jnp.exp(s * LN3) - 1.0                                # (B, L, H)
    sigma = jnp.broadcast_to(jnp.transpose(s, (0, 2, 1))[..., None],
                             (Bb, N_HEADS, Ll, Ll))
    prior = 1.0 / (math.sqrt(2.0 * math.pi) * sigma) * jnp.exp(
        -(dist ** 2) / (2.0 * sigma ** 2))

    out = jnp.einsum('bhls,bshd->blhd', series, v).reshape(Bb, Ll, N_HEADS * D_K)
    out = out @ p['wo'].T + p['bo']

    x1 = _layernorm(x + out, p['g1'], p['be1'])
    y = jnp.maximum(x1 @ p['w1'].T + p['b1'], 0.0)
    y = y @ p['w2'].T + p['b2']
    return _layernorm(x1 + y, p['g2'], p['be2']), series, prior, sigma


# ----------------------------------------------------------------------------
# Deterministic parameter init (shapes from the module __init__)
# ----------------------------------------------------------------------------
def init_layer_params(key):
    ks = jax.random.split(key, 12)

    def w(k, o, i):
        return jax.random.normal(k, (o, i), jnp.float32) * 0.08

    def bvec(k, n):
        return jax.random.normal(k, (1, n), jnp.float32) * 0.02

    return dict(
        wq=w(ks[0], N_HEADS * D_K, D_MODEL), bq=bvec(ks[1], N_HEADS * D_K),
        wk=w(ks[2], N_HEADS * D_K, D_MODEL), bk=bvec(ks[3], N_HEADS * D_K),
        wv=w(ks[4], N_HEADS * D_K, D_MODEL), bv=bvec(ks[5], N_HEADS * D_K),
        ws=w(ks[6], N_HEADS, D_MODEL),       bs=bvec(ks[7], N_HEADS),
        wo=w(ks[8], D_MODEL, N_HEADS * D_K), bo=bvec(ks[9], D_MODEL),
        g1=jnp.ones((1, D_MODEL), jnp.float32), be1=jnp.zeros((1, D_MODEL), jnp.float32),
        w1=w(ks[10], D_FF, D_MODEL), b1=jnp.zeros((1, D_FF), jnp.float32),
        w2=w(ks[11], D_MODEL, D_FF), b2=jnp.zeros((1, D_MODEL), jnp.float32),
        g2=jnp.ones((1, D_MODEL), jnp.float32), be2=jnp.zeros((1, D_MODEL), jnp.float32),
    )


if __name__ == "__main__":
    key = jax.random.PRNGKey(0)
    keys = jax.random.split(key, E_LAYERS + 1)
    x = jax.random.normal(keys[0], (B, L, D_MODEL), jnp.float32)

    # AnomalyAttention distance matrix |i - j|
    idx = jnp.arange(L, dtype=jnp.float32)
    dist = jnp.abs(idx[:, None] - idx[None, :])

    layer_params = [init_layer_params(k) for k in keys[1:]]
    norm_g = jnp.ones((1, D_MODEL), jnp.float32)
    norm_b = jnp.zeros((1, D_MODEL), jnp.float32)

    out, series_l, prior_l, sigma_l = encoder_forward(
        x, dist, layer_params, norm_g, norm_b)
    jax.block_until_ready(out)
    for t in series_l + prior_l + sigma_l:
        jax.block_until_ready(t)

    # reference check (all layers)
    xr = x
    for li, p in enumerate(layer_params):
        xr, sr, pr, sg = encoder_layer_ref(xr, dist, p)
        np.testing.assert_allclose(np.asarray(series_l[li]), np.asarray(sr),
                                   rtol=1e-4, atol=1e-4)
        np.testing.assert_allclose(np.asarray(prior_l[li]), np.asarray(pr),
                                   rtol=1e-4, atol=1e-4)
        np.testing.assert_allclose(np.asarray(sigma_l[li]), np.asarray(sg),
                                   rtol=1e-4, atol=1e-4)
    xr = _layernorm(xr, norm_g, norm_b)
    np.testing.assert_allclose(np.asarray(out), np.asarray(xr), rtol=1e-4, atol=1e-4)

    print("KERNEL_OK")
</pallas_src>

<mosaic_0001>
module attributes {stable_mosaic.version = 11 : i64} {
  func.func @kernel(%arg0: i32, %arg1: memref<32x32xf32, #tpu.memory_space<vmem>>, %arg2: memref<2x32x256xf32, #tpu.memory_space<vmem>>, %arg3: memref<2x32x64xf32, #tpu.memory_space<vmem>>, %arg4: memref<2x64x32xf32, #tpu.memory_space<vmem>>, %arg5: memref<34x256xf32, #tpu.memory_space<vmem>>, %arg6: memref<32x384xf32, #tpu.memory_space<vmem>>) attributes {dimension_semantics = [#tpu.dimension_semantics<parallel>], iteration_bounds = array<i64: 1>, scalar_prefetch = 0 : i64, scratch_operands = 0 : i64, tpu.core_type = #tpu.core_type<tc>, window_params = [{transform_indices = @transform_0, window_bounds = array<i64: 32, 32>}, {pipeline_mode = #tpu.pipeline_mode<synchronous>, transform_indices = @transform_1, window_bounds = array<i64: 2, 32, 256>}, {pipeline_mode = #tpu.pipeline_mode<synchronous>, transform_indices = @transform_2, window_bounds = array<i64: 2, 32, 64>}, {pipeline_mode = #tpu.pipeline_mode<synchronous>, transform_indices = @transform_3, window_bounds = array<i64: 2, 64, 32>}, {pipeline_mode = #tpu.pipeline_mode<synchronous>, transform_indices = @transform_4, window_bounds = array<i64: 34, 256>}, {transform_indices = @transform_5, window_bounds = array<i64: 32, 384>}]} {
    %c0 = arith.constant 0 : index
    %c0_0 = arith.constant 0 : index
    %0 = vector.load %arg1[%c0, %c0_0] : memref<32x32xf32, #tpu.memory_space<vmem>>, vector<32x32xf32>
    %c0_1 = arith.constant 0 : index
    %c0_2 = arith.constant 0 : index
    %1 = vector.load %arg5[%c0_1, %c0_2] : memref<34x256xf32, #tpu.memory_space<vmem>>, vector<16x16xf32>
    %c0_3 = arith.constant 0 : index
    %c0_4 = arith.constant 0 : index
    %c0_5 = arith.constant 0 : index
    %2 = vector.load %arg2[%c0_3, %c0_4, %c0_5] : memref<2x32x256xf32, #tpu.memory_space<vmem>>, vector<1x32x256xf32>
    %3 = vector.shape_cast %2 : vector<1x32x256xf32> to vector<32x256xf32>
    %cst = arith.constant dense<0.000000e+00> : vector<32x256xf32>
    %4 = tpu.matmul %0, %3, %cst {dimension_numbers = #tpu.dot_dimension_numbers<[1], [0], [0], [1], [0, 0, 1, 1], [], []>} : vector<32x32xf32>, vector<32x256xf32>, vector<32x256xf32> -> vector<32x256xf32>
    %c16 = arith.constant 16 : index
    %c0_6 = arith.constant 0 : index
    %5 = vector.load %arg5[%c16, %c0_6] : memref<34x256xf32, #tpu.memory_space<vmem>>, vector<1x256xf32>
    %6 = vector.broadcast %5 : vector<1x256xf32> to vector<32x256xf32>
    %7 = arith.addf %4, %6 : vector<32x256xf32>
    %8 = vector.extract_strided_slice %7 {offsets = [0, 192], sizes = [32, 4], strides = [1, 1]} : vector<32x256xf32> to vector<32x4xf32>
    %cst_7 = arith.constant -5.000000e+00 : f32
    %9 = vector.broadcast %cst_7 : f32 to vector<32x4xf32>
    %10 = arith.mulf %9, %8 : vector<32x4xf32>
    %11 = math.exp %10 : vector<32x4xf32>
    %cst_8 = arith.constant 1.000000e+00 : f32
    %12 = vector.broadcast %cst_8 : f32 to vector<32x4xf32>
    %13 = arith.addf %12, %11 : vector<32x4xf32>
    %14 = tpu.reciprocal %13 {approx = true} : vector<32x4xf32> -> vector<32x4xf32>
    %15 = arith.mulf %13, %14 : vector<32x4xf32>
    %cst_9 = arith.constant 2.000000e+00 : f32
    %16 = vector.broadcast %cst_9 : f32 to vector<32x4xf32>
    %17 = arith.subf %16, %15 : vector<32x4xf32>
    %18 = arith.mulf %14, %17 : vector<32x4xf32>
    %cst_10 = arith.constant 9.99999974E-6 : f32
    %19 = vector.broadcast %cst_10 : f32 to vector<32x4xf32>
    %20 = arith.addf %18, %19 : vector<32x4xf32>
    %cst_11 = arith.constant 1.09861231 : f32
    %21 = vector.broadcast %cst_11 : f32 to vector<32x4xf32>
    %22 = arith.mulf %20, %21 : vector<32x4xf32>
    %23 = math.exp %22 : vector<32x4xf32>
    %cst_12 = arith.constant 1.000000e+00 : f32
    %24 = vector.broadcast %cst_12 : f32 to vector<32x4xf32>
    %25 = arith.subf %23, %24 : vector<32x4xf32>
    %c0_13 = arith.constant 0 : index
    %c288 = arith.constant 288 : index
    %26 = vector.load %arg6[%c0_13, %c288] : memref<32x384xf32, #tpu.memory_space<vmem>>, vector<32x4xf32>
    tpu.vector_store %arg6[%c0_13, %c288], %25 {strides = array<i32>} : memref<32x384xf32, #tpu.memory_space<vmem>>, vector<32x4xf32>,
    %27 = tpu.reciprocal %25 {approx = true} : vector<32x4xf32> -> vector<32x4xf32>
    %28 = arith.mulf %25, %27 : vector<32x4xf32>
    %cst_14 = arith.constant 2.000000e+00 : f32
    %29 = vector.broadcast %cst_14 : f32 to vector<32x4xf32>
    %30 = arith.subf %29, %28 : vector<32x4xf32>
    %31 = arith.mulf %27, %30 : vector<32x4xf32>
    %32 = vector.extract_strided_slice %7 {offsets = [0, 0], sizes = [16, 256], strides = [1, 1]} : vector<32x256xf32> to vector<16x256xf32>
    %33 = vector.extract_strided_slice %31 {offsets = [0, 0], sizes = [16, 4], strides = [1, 1]} : vector<32x4xf32> to vector<16x4xf32>
    %34 = vector.extract_strided_slice %32 {offsets = [0, 0], sizes = [16, 8], strides = [1, 1]} : vector<16x256xf32> to vector<16x8xf32>
    %35 = vector.extract_strided_slice %32 {offsets = [0, 32], sizes = [16, 8], strides = [1, 1]} : vector<16x256xf32> to vector<16x8xf32>
    %cst_15 = arith.constant dense<0.000000e+00> : vector<16x16xf32>
    %36 = tpu.matmul %34, %35, %cst_15 {dimension_numbers = #tpu.dot_dimension_numbers<[1], [1], [0], [0], [0, 0, 1, 0], [], []>} : vector<16x8xf32>, vector<16x8xf32>, vector<16x16xf32> -> vector<16x16xf32>
    %cst_16 = arith.constant dense<0xFF800000> : vector<16xf32>
    %37 = vector.multi_reduction <maximumf>, %36, %cst_16 [1] : vector<16x16xf32> to vector<16xf32>
    %38 = vector.shape_cast %37 : vector<16xf32> to vector<16x1xf32>
    %39 = vector.broadcast %38 : vector<16x1xf32> to vector<16x16xf32>
    %40 = arith.subf %36, %39 : vector<16x16xf32>
    %41 = math.exp %40 : vector<16x16xf32>
    %cst_17 = arith.constant dense<0.000000e+00> : vector<16xf32>
    %42 = vector.multi_reduction <add>, %41, %cst_17 [1] : vector<16x16xf32> to vector<16xf32>
    %43 = vector.shape_cast %42 : vector<16xf32> to vector<16x1xf32>
    %44 = tpu.reciprocal %43 {approx = true} : vector<16x1xf32> -> vector<16x1xf32>
    %45 = arith.mulf %43, %44 : vector<16x1xf32>
    %cst_18 = arith.constant 2.000000e+00 : f32
    %46 = vector.broadcast %cst_18 : f32 to vector<16x1xf32>
    %47 = arith.subf %46, %45 : vector<16x1xf32>
    %48 = arith.mulf %44, %47 : vector<16x1xf32>
    %49 = vector.broadcast %48 : vector<16x1xf32> to vector<16x16xf32>
    %50 = arith.mulf %41, %49 : vector<16x16xf32>
    %c0_19 = arith.constant 0 : index
    %c0_20 = arith.constant 0 : index
    %51 = vector.load %arg6[%c0_19, %c0_20] : memref<32x384xf32, #tpu.memory_space<vmem>>, vector<16x16xf32>
    tpu.vector_store %arg6[%c0_19, %c0_20], %50 {strides = array<i32>} : memref<32x384xf32, #tpu.memory_space<vmem>>, vector<16x16xf32>,
    %52 = vector.extract_strided_slice %33 {offsets = [0, 0], sizes = [16, 1], strides = [1, 1]} : vector<16x4xf32> to vector<16x1xf32>
    %cst_21 = arith.constant 0.398942292 : f32
    %53 = vector.broadcast %cst_21 : f32 to vector<16x1xf32>
    %54 = arith.mulf %53, %52 : vector<16x1xf32>
    %55 = arith.mulf %52, %52 : vector<16x1xf32>
    %56 = vector.broadcast %55 : vector<16x1xf32> to vector<16x16xf32>
    %57 = arith.mulf %1, %56 : vector<16x16xf32>
    %58 = math.exp %57 : vector<16x16xf32>
    %59 = vector.broadcast %54 : vector<16x1xf32> to vector<16x16xf32>
    %60 = arith.mulf %59, %58 : vector<16x16xf32>
    %c0_22 = arith.constant 0 : index
    %c128 = arith.constant 128 : index
    %61 = vector.load %arg6[%c0_22, %c128] : memref<32x384xf32, #tpu.memory_space<vmem>>, vector<16x16xf32>
    tpu.vector_store %arg6[%c0_22, %c128], %60 {strides = array<i32>} : memref<32x384xf32, #tpu.memory_space<vmem>>, vector<16x16xf32>,
    %62 = vector.extract_strided_slice %32 {offsets = [0, 64], sizes = [16, 32], strides = [1, 1]} : vector<16x256xf32> to vector<16x32xf32>
    %cst_23 = arith.constant dense<0.000000e+00> : vector<16x32xf32>
    %63 = tpu.matmul %50, %62, %cst_23 {dimension_numbers = #tpu.dot_dimension_numbers<[1], [0], [0], [1], [0, 0, 1, 1], [], []>} : vector<16x16xf32>, vector<16x32xf32>, vector<16x32xf32> -> vector<16x32xf32>
    %64 = vector.extract_strided_slice %32 {offsets = [0, 8], sizes = [16, 8], strides = [1, 1]} : vector<16x256xf32> to vector<16x8xf32>
    %65 = vector.extract_strided_slice %32 {offsets = [0, 40], sizes = [16, 8], strides = [1, 1]} : vector<16x256xf32> to vector<16x8xf32>
    %cst_24 = arith.constant dense<0.000000e+00> : vector<16x16xf32>
    %66 = tpu.matmul %64, %65, %cst_24 {dimension_numbers = #tpu.dot_dimension_numbers<[1], [1], [0], [0], [0, 0, 1, 0], [], []>} : vector<16x8xf32>, vector<16x8xf32>, vector<16x16xf32> -> vector<16x16xf32>
    %cst_25 = arith.constant dense<0xFF800000> : vector<16xf32>
    %67 = vector.multi_reduction <maximumf>, %66, %cst_25 [1] : vector<16x16xf32> to vector<16xf32>
    %68 = vector.shape_cast %67 : vector<16xf32> to vector<16x1xf32>
    %69 = vector.broadcast %68 : vector<16x1xf32> to vector<16x16xf32>
    %70 = arith.subf %66, %69 : vector<16x16xf32>
    %71 = math.exp %70 : vector<16x16xf32>
    %cst_26 = arith.constant dense<0.000000e+00> : vector<16xf32>
    %72 = vector.multi_reduction <add>, %71, %cst_26 [1] : vector<16x16xf32> to vector<16xf32>
    %73 = vector.shape_cast %72 : vector<16xf32> to vector<16x1xf32>
    %74 = tpu.reciprocal %73 {approx = true} : vector<16x1xf32> -> vector<16x1xf32>
    %75 = arith.mulf %73, %74 : vector<16x1xf32>
    %cst_27 = arith.constant 2.000000e+00 : f32
    %76 = vector.broadcast %cst_27 : f32 to vector<16x1xf32>
    %77 = arith.subf %76, %75 : vector<16x1xf32>
    %78 = arith.mulf %74, %77 : vector<16x1xf32>
    %79 = vector.broadcast %78 : vector<16x1xf32> to vector<16x16xf32>
    %80 = arith.mulf %71, %79 : vector<16x16xf32>
    %c0_28 = arith.constant 0 : index
    %c16_29 = arith.constant 16 : index
    %81 = vector.load %arg6[%c0_28, %c16_29] : memref<32x384xf32, #tpu.memory_space<vmem>>, vector<16x16xf32>
    tpu.vector_store %arg6[%c0_28, %c16_29], %80 {strides = array<i32>} : memref<32x384xf32, #tpu.memory_space<vmem>>, vector<16x16xf32>,
    %82 = vector.extract_strided_slice %33 {offsets = [0, 1], sizes = [16, 1], strides = [1, 1]} : vector<16x4xf32> to vector<16x1xf32>
    %cst_30 = arith.constant 0.398942292 : f32
    %83 = vector.broadcast %cst_30 : f32 to vector<16x1xf32>
    %84 = arith.mulf %83, %82 : vector<16x1xf32>
    %85 = arith.mulf %82, %82 : vector<16x1xf32>
    %86 = vector.broadcast %85 : vector<16x1xf32> to vector<16x16xf32>
    %87 = arith.mulf %1, %86 : vector<16x16xf32>
    %88 = math.exp %87 : vector<16x16xf32>
    %89 = vector.broadcast %84 : vector<16x1xf32> to vector<16x16xf32>
    %90 = arith.mulf %89, %88 : vector<16x16xf32>
    %c0_31 = arith.constant 0 : index
    %c144 = arith.constant 144 : index
    %91 = vector.load %arg6[%c0_31, %c144] : memref<32x384xf32, #tpu.memory_space<vmem>>, vector<16x16xf32>
    tpu.vector_store %arg6[%c0_31, %c144], %90 {strides = array<i32>} : memref<32x384xf32, #tpu.memory_space<vmem>>, vector<16x16xf32>,
    %92 = vector.extract_strided_slice %32 {offsets = [0, 96], sizes = [16, 32], strides = [1, 1]} : vector<16x256xf32> to vector<16x32xf32>
    %cst_32 = arith.constant dense<0.000000e+00> : vector<16x32xf32>
    %93 = tpu.matmul %80, %92, %cst_32 {dimension_numbers = #tpu.dot_dimension_numbers<[1], [0], [0], [1], [0, 0, 1, 1], [], []>} : vector<16x16xf32>, vector<16x32xf32>, vector<16x32xf32> -> vector<16x32xf32>
    %94 = arith.addf %63, %93 : vector<16x32xf32>
    %95 = vector.extract_strided_slice %32 {offsets = [0, 16], sizes = [16, 8], strides = [1, 1]} : vector<16x256xf32> to vector<16x8xf32>
    %96 = vector.extract_strided_slice %32 {offsets = [0, 48], sizes = [16, 8], strides = [1, 1]} : vector<16x256xf32> to vector<16x8xf32>
    %cst_33 = arith.constant dense<0.000000e+00> : vector<16x16xf32>
    %97 = tpu.matmul %95, %96, %cst_33 {dimension_numbers = #tpu.dot_dimension_numbers<[1], [1], [0], [0], [0, 0, 1, 0], [], []>} : vector<16x8xf32>, vector<16x8xf32>, vector<16x16xf32> -> vector<16x16xf32>
    %cst_34 = arith.constant dense<0xFF800000> : vector<16xf32>
    %98 = vector.multi_reduction <maximumf>, %97, %cst_34 [1] : vector<16x16xf32> to vector<16xf32>
    %99 = vector.shape_cast %98 : vector<16xf32> to vector<16x1xf32>
    %100 = vector.broadcast %99 : vector<16x1xf32> to vector<16x16xf32>
    %101 = arith.subf %97, %100 : vector<16x16xf32>
    %102 = math.exp %101 : vector<16x16xf32>
    %cst_35 = arith.constant dense<0.000000e+00> : vector<16xf32>
    %103 = vector.multi_reduction <add>, %102, %cst_35 [1] : vector<16x16xf32> to vector<16xf32>
    %104 = vector.shape_cast %103 : vector<16xf32> to vector<16x1xf32>
    %105 = tpu.reciprocal %104 {approx = true} : vector<16x1xf32> -> vector<16x1xf32>
    %106 = arith.mulf %104, %105 : vector<16x1xf32>
    %cst_36 = arith.constant 2.000000e+00 : f32
    %107 = vector.broadcast %cst_36 : f32 to vector<16x1xf32>
    %108 = arith.subf %107, %106 : vector<16x1xf32>
    %109 = arith.mulf %105, %108 : vector<16x1xf32>
    %110 = vector.broadcast %109 : vector<16x1xf32> to vector<16x16xf32>
    %111 = arith.mulf %102, %110 : vector<16x16xf32>
    %c0_37 = arith.constant 0 : index
    %c32 = arith.constant 32 : index
    %112 = vector.load %arg6[%c0_37, %c32] : memref<32x384xf32, #tpu.memory_space<vmem>>, vector<16x16xf32>
    tpu.vector_store %arg6[%c0_37, %c32], %111 {strides = array<i32>} : memref<32x384xf32, #tpu.memory_space<vmem>>, vector<16x16xf32>,
    %113 = vector.extract_strided_slice %33 {offsets = [0, 2], sizes = [16, 1], strides = [1, 1]} : vector<16x4xf32> to vector<16x1xf32>
    %cst_38 = arith.constant 0.398942292 : f32
    %114 = vector.broadcast %cst_38 : f32 to vector<16x1xf32>
    %115 = arith.mulf %114, %113 : vector<16x1xf32>
    %116 = arith.mulf %113, %113 : vector<16x1xf32>
    %117 = vector.broadcast %116 : vector<16x1xf32> to vector<16x16xf32>
    %118 = arith.mulf %1, %117 : vector<16x16xf32>
    %119 = math.exp %118 : vector<16x16xf32>
    %120 = vector.broadcast %115 : vector<16x1xf32> to vector<16x16xf32>
    %121 = arith.mulf %120, %119 : vector<16x16xf32>
    %c0_39 = arith.constant 0 : index
    %c160 = arith.constant 160 : index
    %122 = vector.load %arg6[%c0_39, %c160] : memref<32x384xf32, #tpu.memory_space<vmem>>, vector<16x16xf32>
    tpu.vector_store %arg6[%c0_39, %c160], %121 {strides = array<i32>} : memref<32x384xf32, #tpu.memory_space<vmem>>, vector<16x16xf32>,
    %123 = vector.extract_strided_slice %32 {offsets = [0, 128], sizes = [16, 32], strides = [1, 1]} : vector<16x256xf32> to vector<16x32xf32>
    %cst_40 = arith.constant dense<0.000000e+00> : vector<16x32xf32>
    %124 = tpu.matmul %111, %123, %cst_40 {dimension_numbers = #tpu.dot_dimension_numbers<[1], [0], [0], [1], [0, 0, 1, 1], [], []>} : vector<16x16xf32>, vector<16x32xf32>, vector<16x32xf32> -> vector<16x32xf32>
    %125 = arith.addf %94, %124 : vector<16x32xf32>
    %126 = vector.extract_strided_slice %32 {offsets = [0, 24], sizes = [16, 8], strides = [1, 1]} : vector<16x256xf32> to vector<16x8xf32>
    %127 = vector.extract_strided_slice %32 {offsets = [0, 56], sizes = [16, 8], strides = [1, 1]} : vector<16x256xf32> to vector<16x8xf32>
    %cst_41 = arith.constant dense<0.000000e+00> : vector<16x16xf32>
    %128 = tpu.matmul %126, %127, %cst_41 {dimension_numbers = #tpu.dot_dimension_numbers<[1], [1], [0], [0], [0, 0, 1, 0], [], []>} : vector<16x8xf32>, vector<16x8xf32>, vector<16x16xf32> -> vector<16x16xf32>
    %cst_42 = arith.constant dense<0xFF800000> : vector<16xf32>
    %129 = vector.multi_reduction <maximumf>, %128, %cst_42 [1] : vector<16x16xf32> to vector<16xf32>
    %130 = vector.shape_cast %129 : vector<16xf32> to vector<16x1xf32>
    %131 = vector.broadcast %130 : vector<16x1xf32> to vector<16x16xf32>
    %132 = arith.subf %128, %131 : vector<16x16xf32>
    %133 = math.exp %132 : vector<16x16xf32>
    %cst_43 = arith.constant dense<0.000000e+00> : vector<16xf32>
    %134 = vector.multi_reduction <add>, %133, %cst_43 [1] : vector<16x16xf32> to vector<16xf32>
    %135 = vector.shape_cast %134 : vector<16xf32> to vector<16x1xf32>
    %136 = tpu.reciprocal %135 {approx = true} : vector<16x1xf32> -> vector<16x1xf32>
    %137 = arith.mulf %135, %136 : vector<16x1xf32>
    %cst_44 = arith.constant 2.000000e+00 : f32
    %138 = vector.broadcast %cst_44 : f32 to vector<16x1xf32>
    %139 = arith.subf %138, %137 : vector<16x1xf32>
    %140 = arith.mulf %136, %139 : vector<16x1xf32>
    %141 = vector.broadcast %140 : vector<16x1xf32> to vector<16x16xf32>
    %142 = arith.mulf %133, %141 : vector<16x16xf32>
    %c0_45 = arith.constant 0 : index
    %c48 = arith.constant 48 : index
    %143 = vector.load %arg6[%c0_45, %c48] : memref<32x384xf32, #tpu.memory_space<vmem>>, vector<16x16xf32>
    tpu.vector_store %arg6[%c0_45, %c48], %142 {strides = array<i32>} : memref<32x384xf32, #tpu.memory_space<vmem>>, vector<16x16xf32>,
    %144 = vector.extract_strided_slice %33 {offsets = [0, 3], sizes = [16, 1], strides = [1, 1]} : vector<16x4xf32> to vector<16x1xf32>
    %cst_46 = arith.constant 0.398942292 : f32
    %145 = vector.broadcast %cst_46 : f32 to vector<16x1xf32>
    %146 = arith.mulf %145, %144 : vector<16x1xf32>
    %147 = arith.mulf %144, %144 : vector<16x1xf32>
    %148 = vector.broadcast %147 : vector<16x1xf32> to vector<16x16xf32>
    %149 = arith.mulf %1, %148 : vector<16x16xf32>
    %150 = math.exp %149 : vector<16x16xf32>
    %151 = vector.broadcast %146 : vector<16x1xf32> to vector<16x16xf32>
    %152 = arith.mulf %151, %150 : vector<16x16xf32>
    %c0_47 = arith.constant 0 : index
    %c176 = arith.constant 176 : index
    %153 = vector.load %arg6[%c0_47, %c176] : memref<32x384xf32, #tpu.memory_space<vmem>>, vector<16x16xf32>
    tpu.vector_store %arg6[%c0_47, %c176], %152 {strides = array<i32>} : memref<32x384xf32, #tpu.memory_space<vmem>>, vector<16x16xf32>,
    %154 = vector.extract_strided_slice %32 {offsets = [0, 160], sizes = [16, 32], strides = [1, 1]} : vector<16x256xf32> to vector<16x32xf32>
    %cst_48 = arith.constant dense<0.000000e+00> : vector<16x32xf32>
    %155 = tpu.matmul %142, %154, %cst_48 {dimension_numbers = #tpu.dot_dimension_numbers<[1], [0], [0], [1], [0, 0, 1, 1], [], []>} : vector<16x16xf32>, vector<16x32xf32>, vector<16x32xf32> -> vector<16x32xf32>
    %156 = arith.addf %125, %155 : vector<16x32xf32>
    %157 = vector.extract_strided_slice %7 {offsets = [16, 0], sizes = [16, 256], strides = [1, 1]} : vector<32x256xf32> to vector<16x256xf32>
    %158 = vector.extract_strided_slice %31 {offsets = [16, 0], sizes = [16, 4], strides = [1, 1]} : vector<32x4xf32> to vector<16x4xf32>
    %159 = vector.extract_strided_slice %157 {offsets = [0, 0], sizes = [16, 8], strides = [1, 1]} : vector<16x256xf32> to vector<16x8xf32>
    %160 = vector.extract_strided_slice %157 {offsets = [0, 32], sizes = [16, 8], strides = [1, 1]} : vector<16x256xf32> to vector<16x8xf32>
    %cst_49 = arith.constant dense<0.000000e+00> : vector<16x16xf32>
    %161 = tpu.matmul %159, %160, %cst_49 {dimension_numbers = #tpu.dot_dimension_numbers<[1], [1], [0], [0], [0, 0, 1, 0], [], []>} : vector<16x8xf32>, vector<16x8xf32>, vector<16x16xf32> -> vector<16x16xf32>
    %cst_50 = arith.constant dense<0xFF800000> : vector<16xf32>
    %162 = vector.multi_reduction <maximumf>, %161, %cst_50 [1] : vector<16x16xf32> to vector<16xf32>
    %163 = vector.shape_cast %162 : vector<16xf32> to vector<16x1xf32>
    %164 = vector.broadcast %163 : vector<16x1xf32> to vector<16x16xf32>
    %165 = arith.subf %161, %164 : vector<16x16xf32>
    %166 = math.exp %165 : vector<16x16xf32>
    %cst_51 = arith.constant dense<0.000000e+00> : vector<16xf32>
    %167 = vector.multi_reduction <add>, %166, %cst_51 [1] : vector<16x16xf32> to vector<16xf32>
    %168 = vector.shape_cast %167 : vector<16xf32> to vector<16x1xf32>
    %169 = tpu.reciprocal %168 {approx = true} : vector<16x1xf32> -> vector<16x1xf32>
    %170 = arith.mulf %168, %169 : vector<16x1xf32>
    %cst_52 = arith.constant 2.000000e+00 : f32
    %171 = vector.broadcast %cst_52 : f32 to vector<16x1xf32>
    %172 = arith.subf %171, %170 : vector<16x1xf32>
    %173 = arith.mulf %169, %172 : vector<16x1xf32>
    %174 = vector.broadcast %173 : vector<16x1xf32> to vector<16x16xf32>
    %175 = arith.mulf %166, %174 : vector<16x16xf32>
    %c16_53 = arith.constant 16 : index
    %c0_54 = arith.constant 0 : index
    %176 = vector.load %arg6[%c16_53, %c0_54] : memref<32x384xf32, #tpu.memory_space<vmem>>, vector<16x16xf32>
    tpu.vector_store %arg6[%c16_53, %c0_54], %175 {strides = array<i32>} : memref<32x384xf32, #tpu.memory_space<vmem>>, vector<16x16xf32>,
    %177 = vector.extract_strided_slice %158 {offsets = [0, 0], sizes = [16, 1], strides = [1, 1]} : vector<16x4xf32> to vector<16x1xf32>
    %cst_55 = arith.constant 0.398942292 : f32
    %178 = vector.broadcast %cst_55 : f32 to vector<16x1xf32>
    %179 = arith.mulf %178, %177 : vector<16x1xf32>
    %180 = arith.mulf %177, %177 : vector<16x1xf32>
    %181 = vector.broadcast %180 : vector<16x1xf32> to vector<16x16xf32>
    %182 = arith.mulf %1, %181 : vector<16x16xf32>
    %183 = math.exp %182 : vector<16x16xf32>
    %184 = vector.broadcast %179 : vector<16x1xf32> to vector<16x16xf32>
    %185 = arith.mulf %184, %183 : vector<16x16xf32>
    %c16_56 = arith.constant 16 : index
    %c128_57 = arith.constant 128 : index
    %186 = vector.load %arg6[%c16_56, %c128_57] : memref<32x384xf32, #tpu.memory_space<vmem>>, vector<16x16xf32>
    tpu.vector_store %arg6[%c16_56, %c128_57], %185 {strides = array<i32>} : memref<32x384xf32, #tpu.memory_space<vmem>>, vector<16x16xf32>,
    %187 = vector.extract_strided_slice %157 {offsets = [0, 64], sizes = [16, 32], strides = [1, 1]} : vector<16x256xf32> to vector<16x32xf32>
    %cst_58 = arith.constant dense<0.000000e+00> : vector<16x32xf32>
    %188 = tpu.matmul %175, %187, %cst_58 {dimension_numbers = #tpu.dot_dimension_numbers<[1], [0], [0], [1], [0, 0, 1, 1], [], []>} : vector<16x16xf32>, vector<16x32xf32>, vector<16x32xf32> -> vector<16x32xf32>
    %189 = vector.extract_strided_slice %157 {offsets = [0, 8], sizes = [16, 8], strides = [1, 1]} : vector<16x256xf32> to vector<16x8xf32>
    %190 = vector.extract_strided_slice %157 {offsets = [0, 40], sizes = [16, 8], strides = [1, 1]} : vector<16x256xf32> to vector<16x8xf32>
    %cst_59 = arith.constant dense<0.000000e+00> : vector<16x16xf32>
    %191 = tpu.matmul %189, %190, %cst_59 {dimension_numbers = #tpu.dot_dimension_numbers<[1], [1], [0], [0], [0, 0, 1, 0], [], []>} : vector<16x8xf32>, vector<16x8xf32>, vector<16x16xf32> -> vector<16x16xf32>
    %cst_60 = arith.constant dense<0xFF800000> : vector<16xf32>
    %192 = vector.multi_reduction <maximumf>, %191, %cst_60 [1] : vector<16x16xf32> to vector<16xf32>
    %193 = vector.shape_cast %192 : vector<16xf32> to vector<16x1xf32>
    %194 = vector.broadcast %193 : vector<16x1xf32> to vector<16x16xf32>
    %195 = arith.subf %191, %194 : vector<16x16xf32>
    %196 = math.exp %195 : vector<16x16xf32>
    %cst_61 = arith.constant dense<0.000000e+00> : vector<16xf32>
    %197 = vector.multi_reduction <add>, %196, %cst_61 [1] : vector<16x16xf32> to vector<16xf32>
    %198 = vector.shape_cast %197 : vector<16xf32> to vector<16x1xf32>
    %199 = tpu.reciprocal %198 {approx = true} : vector<16x1xf32> -> vector<16x1xf32>
    %200 = arith.mulf %198, %199 : vector<16x1xf32>
    %cst_62 = arith.constant 2.000000e+00 : f32
    %201 = vector.broadcast %cst_62 : f32 to vector<16x1xf32>
    %202 = arith.subf %201, %200 : vector<16x1xf32>
    %203 = arith.mulf %199, %202 : vector<16x1xf32>
    %204 = vector.broadcast %203 : vector<16x1xf32> to vector<16x16xf32>
    %205 = arith.mulf %196, %204 : vector<16x16xf32>
    %c16_63 = arith.constant 16 : index
    %c16_64 = arith.constant 16 : index
    %206 = vector.load %arg6[%c16_63, %c16_64] : memref<32x384xf32, #tpu.memory_space<vmem>>, vector<16x16xf32>
    tpu.vector_store %arg6[%c16_63, %c16_64], %205 {strides = array<i32>} : memref<32x384xf32, #tpu.memory_space<vmem>>, vector<16x16xf32>,
    %207 = vector.extract_strided_slice %158 {offsets = [0, 1], sizes = [16, 1], strides = [1, 1]} : vector<16x4xf32> to vector<16x1xf32>
    %cst_65 = arith.constant 0.398942292 : f32
    %208 = vector.broadcast %cst_65 : f32 to vector<16x1xf32>
    %209 = arith.mulf %208, %207 : vector<16x1xf32>
    %210 = arith.mulf %207, %207 : vector<16x1xf32>
    %211 = vector.broadcast %210 : vector<16x1xf32> to vector<16x16xf32>
    %212 = arith.mulf %1, %211 : vector<16x16xf32>
    %213 = math.exp %212 : vector<16x16xf32>
    %214 = vector.broadcast %209 : vector<16x1xf32> to vector<16x16xf32>
    %215 = arith.mulf %214, %213 : vector<16x16xf32>
    %c16_66 = arith.constant 16 : index
    %c144_67 = arith.constant 144 : index
    %216 = vector.load %arg6[%c16_66, %c144_67] : memref<32x384xf32, #tpu.memory_space<vmem>>, vector<16x16xf32>
    tpu.vector_store %arg6[%c16_66, %c144_67], %215 {strides = array<i32>} : memref<32x384xf32, #tpu.memory_space<vmem>>, vector<16x16xf32>,
    %217 = vector.extract_strided_slice %157 {offsets = [0, 96], sizes = [16, 32], strides = [1, 1]} : vector<16x256xf32> to vector<16x32xf32>
    %cst_68 = arith.constant dense<0.000000e+00> : vector<16x32xf32>
    %218 = tpu.matmul %205, %217, %cst_68 {dimension_numbers = #tpu.dot_dimension_numbers<[1], [0], [0], [1], [0, 0, 1, 1], [], []>} : vector<16x16xf32>, vector<16x32xf32>, vector<16x32xf32> -> vector<16x32xf32>
    %219 = arith.addf %188, %218 : vector<16x32xf32>
    %220 = vector.extract_strided_slice %157 {offsets = [0, 16], sizes = [16, 8], strides = [1, 1]} : vector<16x256xf32> to vector<16x8xf32>
    %221 = vector.extract_strided_slice %157 {offsets = [0, 48], sizes = [16, 8], strides = [1, 1]} : vector<16x256xf32> to vector<16x8xf32>
    %cst_69 = arith.constant dense<0.000000e+00> : vector<16x16xf32>
    %222 = tpu.matmul %220, %221, %cst_69 {dimension_numbers = #tpu.dot_dimension_numbers<[1], [1], [0], [0], [0, 0, 1, 0], [], []>} : vector<16x8xf32>, vector<16x8xf32>, vector<16x16xf32> -> vector<16x16xf32>
    %cst_70 = arith.constant dense<0xFF800000> : vector<16xf32>
    %223 = vector.multi_reduction <maximumf>, %222, %cst_70 [1] : vector<16x16xf32> to vector<16xf32>
    %224 = vector.shape_cast %223 : vector<16xf32> to vector<16x1xf32>
    %225 = vector.broadcast %224 : vector<16x1xf32> to vector<16x16xf32>
    %226 = arith.subf %222, %225 : vector<16x16xf32>
    %227 = math.exp %226 : vector<16x16xf32>
    %cst_71 = arith.constant dense<0.000000e+00> : vector<16xf32>
    %228 = vector.multi_reduction <add>, %227, %cst_71 [1] : vector<16x16xf32> to vector<16xf32>
    %229 = vector.shape_cast %228 : vector<16xf32> to vector<16x1xf32>
    %230 = tpu.reciprocal %229 {approx = true} : vector<16x1xf32> -> vector<16x1xf32>
    %231 = arith.mulf %229, %230 : vector<16x1xf32>
    %cst_72 = arith.constant 2.000000e+00 : f32
    %232 = vector.broadcast %cst_72 : f32 to vector<16x1xf32>
    %233 = arith.subf %232, %231 : vector<16x1xf32>
    %234 = arith.mulf %230, %233 : vector<16x1xf32>
    %235 = vector.broadcast %234 : vector<16x1xf32> to vector<16x16xf32>
    %236 = arith.mulf %227, %235 : vector<16x16xf32>
    %c16_73 = arith.constant 16 : index
    %c32_74 = arith.constant 32 : index
    %237 = vector.load %arg6[%c16_73, %c32_74] : memref<32x384xf32, #tpu.memory_space<vmem>>, vector<16x16xf32>
    tpu.vector_store %arg6[%c16_73, %c32_74], %236 {strides = array<i32>} : memref<32x384xf32, #tpu.memory_space<vmem>>, vector<16x16xf32>,
    %238 = vector.extract_strided_slice %158 {offsets = [0, 2], sizes = [16, 1], strides = [1, 1]} : vector<16x4xf32> to vector<16x1xf32>
    %cst_75 = arith.constant 0.398942292 : f32
    %239 = vector.broadcast %cst_75 : f32 to vector<16x1xf32>
    %240 = arith.mulf %239, %238 : vector<16x1xf32>
    %241 = arith.mulf %238, %238 : vector<16x1xf32>
    %242 = vector.broadcast %241 : vector<16x1xf32> to vector<16x16xf32>
    %243 = arith.mulf %1, %242 : vector<16x16xf32>
    %244 = math.exp %243 : vector<16x16xf32>
    %245 = vector.broadcast %240 : vector<16x1xf32> to vector<16x16xf32>
    %246 = arith.mulf %245, %244 : vector<16x16xf32>
    %c16_76 = arith.constant 16 : index
    %c160_77 = arith.constant 160 : index
    %247 = vector.load %arg6[%c16_76, %c160_77] : memref<32x384xf32, #tpu.memory_space<vmem>>, vector<16x16xf32>
    tpu.vector_store %arg6[%c16_76, %c160_77], %246 {strides = array<i32>} : memref<32x384xf32, #tpu.memory_space<vmem>>, vector<16x16xf32>,
    %248 = vector.extract_strided_slice %157 {offsets = [0, 128], sizes = [16, 32], strides = [1, 1]} : vector<16x256xf32> to vector<16x32xf32>
    %cst_78 = arith.constant dense<0.000000e+00> : vector<16x32xf32>
    %249 = tpu.matmul %236, %248, %cst_78 {dimension_numbers = #tpu.dot_dimension_numbers<[1], [0], [0], [1], [0, 0, 1, 1], [], []>} : vector<16x16xf32>, vector<16x32xf32>, vector<16x32xf32> -> vector<16x32xf32>
    %250 = arith.addf %219, %249 : vector<16x32xf32>
    %251 = vector.extract_strided_slice %157 {offsets = [0, 24], sizes = [16, 8], strides = [1, 1]} : vector<16x256xf32> to vector<16x8xf32>
    %252 = vector.extract_strided_slice %157 {offsets = [0, 56], sizes = [16, 8], strides = [1, 1]} : vector<16x256xf32> to vector<16x8xf32>
    %cst_79 = arith.constant dense<0.000000e+00> : vector<16x16xf32>
    %253 = tpu.matmul %251, %252, %cst_79 {dimension_numbers = #tpu.dot_dimension_numbers<[1], [1], [0], [0], [0, 0, 1, 0], [], []>} : vector<16x8xf32>, vector<16x8xf32>, vector<16x16xf32> -> vector<16x16xf32>
    %cst_80 = arith.constant dense<0xFF800000> : vector<16xf32>
    %254 = vector.multi_reduction <maximumf>, %253, %cst_80 [1] : vector<16x16xf32> to vector<16xf32>
    %255 = vector.shape_cast %254 : vector<16xf32> to vector<16x1xf32>
    %256 = vector.broadcast %255 : vector<16x1xf32> to vector<16x16xf32>
    %257 = arith.subf %253, %256 : vector<16x16xf32>
    %258 = math.exp %257 : vector<16x16xf32>
    %cst_81 = arith.constant dense<0.000000e+00> : vector<16xf32>
    %259 = vector.multi_reduction <add>, %258, %cst_81 [1] : vector<16x16xf32> to vector<16xf32>
    %260 = vector.shape_cast %259 : vector<16xf32> to vector<16x1xf32>
    %261 = tpu.reciprocal %260 {approx = true} : vector<16x1xf32> -> vector<16x1xf32>
    %262 = arith.mulf %260, %261 : vector<16x1xf32>
    %cst_82 = arith.constant 2.000000e+00 : f32
    %263 = vector.broadcast %cst_82 : f32 to vector<16x1xf32>
    %264 = arith.subf %263, %262 : vector<16x1xf32>
    %265 = arith.mulf %261, %264 : vector<16x1xf32>
    %266 = vector.broadcast %265 : vector<16x1xf32> to vector<16x16xf32>
    %267 = arith.mulf %258, %266 : vector<16x16xf32>
    %c16_83 = arith.constant 16 : index
    %c48_84 = arith.constant 48 : index
    %268 = vector.load %arg6[%c16_83, %c48_84] : memref<32x384xf32, #tpu.memory_space<vmem>>, vector<16x16xf32>
    tpu.vector_store %arg6[%c16_83, %c48_84], %267 {strides = array<i32>} : memref<32x384xf32, #tpu.memory_space<vmem>>, vector<16x16xf32>,
    %269 = vector.extract_strided_slice %158 {offsets = [0, 3], sizes = [16, 1], strides = [1, 1]} : vector<16x4xf32> to vector<16x1xf32>
    %cst_85 = arith.constant 0.398942292 : f32
    %270 = vector.broadcast %cst_85 : f32 to vector<16x1xf32>
    %271 = arith.mulf %270, %269 : vector<16x1xf32>
    %272 = arith.mulf %269, %269 : vector<16x1xf32>
    %273 = vector.broadcast %272 : vector<16x1xf32> to vector<16x16xf32>
    %274 = arith.mulf %1, %273 : vector<16x16xf32>
    %275 = math.exp %274 : vector<16x16xf32>
    %276 = vector.broadcast %271 : vector<16x1xf32> to vector<16x16xf32>
    %277 = arith.mulf %276, %275 : vector<16x16xf32>
    %c16_86 = arith.constant 16 : index
    %c176_87 = arith.constant 176 : index
    %278 = vector.load %arg6[%c16_86, %c176_87] : memref<32x384xf32, #tpu.memory_space<vmem>>, vector<16x16xf32>
    tpu.vector_store %arg6[%c16_86, %c176_87], %277 {strides = array<i32>} : memref<32x384xf32, #tpu.memory_space<vmem>>, vector<16x16xf32>,
    %279 = vector.extract_strided_slice %157 {offsets = [0, 160], sizes = [16, 32], strides = [1, 1]} : vector<16x256xf32> to vector<16x32xf32>
    %cst_88 = arith.constant dense<0.000000e+00> : vector<16x32xf32>
    %280 = tpu.matmul %267, %279, %cst_88 {dimension_numbers = #tpu.dot_dimension_numbers<[1], [0], [0], [1], [0, 0, 1, 1], [], []>} : vector<16x16xf32>, vector<16x32xf32>, vector<16x32xf32> -> vector<16x32xf32>
    %281 = arith.addf %250, %280 : vector<16x32xf32>
    %282 = tpu.concatenate %156, %281 in 0 : vector<16x32xf32>, vector<16x32xf32> -> vector<32x32xf32>
    %c17 = arith.constant 17 : index
    %c0_89 = arith.constant 0 : index
    %283 = vector.load %arg5[%c17, %c0_89] : memref<34x256xf32, #tpu.memory_space<vmem>>, vector<1x32xf32>
    %284 = vector.broadcast %283 : vector<1x32xf32> to vector<32x32xf32>
    %285 = arith.addf %282, %284 : vector<32x32xf32>
    %286 = arith.addf %0, %285 : vector<32x32xf32>
    %c18 = arith.constant 18 : index
    %c0_90 = arith.constant 0 : index
    %287 = vector.load %arg5[%c18, %c0_90] : memref<34x256xf32, #tpu.memory_space<vmem>>, vector<1x32xf32>
    %c19 = arith.constant 19 : index
    %c0_91 = arith.constant 0 : index
    %288 = vector.load %arg5[%c19, %c0_91] : memref<34x256xf32, #tpu.memory_space<vmem>>, vector<1x32xf32>
    %cst_92 = arith.constant dense<0.000000e+00> : vector<32xf32>
    %289 = vector.multi_reduction <add>, %286, %cst_92 [1] : vector<32x32xf32> to vector<32xf32>
    %290 = vector.shape_cast %289 : vector<32xf32> to vector<32x1xf32>
    %cst_93 = arith.constant 3.200000e+01 : f32
    %291 = vector.broadcast %cst_93 : f32 to vector<32x1xf32>
    %292 = arith.divf %290, %291 : vector<32x1xf32>
    %293 = vector.broadcast %292 : vector<32x1xf32> to vector<32x32xf32>
    %294 = arith.subf %286, %293 : vector<32x32xf32>
    %295 = arith.mulf %294, %294 : vector<32x32xf32>
    %cst_94 = arith.constant dense<0.000000e+00> : vector<32xf32>
    %296 = vector.multi_reduction <add>, %295, %cst_94 [1] : vector<32x32xf32> to vector<32xf32>
    %297 = vector.shape_cast %296 : vector<32xf32> to vector<32x1xf32>
    %cst_95 = arith.constant 3.200000e+01 : f32
    %298 = vector.broadcast %cst_95 : f32 to vector<32x1xf32>
    %299 = arith.divf %297, %298 : vector<32x1xf32>
    %300 = vector.broadcast %292 : vector<32x1xf32> to vector<32x32xf32>
    %301 = arith.subf %286, %300 : vector<32x32xf32>
    %cst_96 = arith.constant 9.99999974E-6 : f32
    %302 = vector.broadcast %cst_96 : f32 to vector<32x1xf32>
    %303 = arith.addf %299, %302 : vector<32x1xf32>
    %304 = math.rsqrt %303 : vector<32x1xf32>
    %305 = vector.broadcast %304 : vector<32x1xf32> to vector<32x32xf32>
    %306 = arith.mulf %301, %305 : vector<32x32xf32>
    %307 = vector.broadcast %287 : vector<1x32xf32> to vector<32x32xf32>
    %308 = arith.mulf %306, %307 : vector<32x32xf32>
    %309 = vector.broadcast %288 : vector<1x32xf32> to vector<32x32xf32>
    %310 = arith.addf %308, %309 : vector<32x32xf32>
    %c0_97 = arith.constant 0 : index
    %c0_98 = arith.constant 0 : index
    %c0_99 = arith.constant 0 : index
    %311 = vector.load %arg3[%c0_97, %c0_98, %c0_99] : memref<2x32x64xf32, #tpu.memory_space<vmem>>, vector<1x32x64xf32>
    %312 = vector.shape_cast %311 : vector<1x32x64xf32> to vector<32x64xf32>
    %cst_100 = arith.constant dense<0.000000e+00> : vector<32x64xf32>
    %313 = tpu.matmul %310, %312, %cst_100 {dimension_numbers = #tpu.dot_dimension_numbers<[1], [0], [0], [1], [0, 0, 1, 1], [], []>} : vector<32x32xf32>, vector<32x64xf32>, vector<32x64xf32> -> vector<32x64xf32>
    %c20 = arith.constant 20 : index
    %c0_101 = arith.constant 0 : index
    %314 = vector.load %arg5[%c20, %c0_101] : memref<34x256xf32, #tpu.memory_space<vmem>>, vector<1x64xf32>
    %315 = vector.broadcast %314 : vector<1x64xf32> to vector<32x64xf32>
    %316 = arith.addf %313, %315 : vector<32x64xf32>
    %cst_102 = arith.constant 0.000000e+00 : f32
    %317 = vector.broadcast %cst_102 : f32 to vector<32x64xf32>
    %318 = arith.maximumf %316, %317 : vector<32x64xf32>
    %c0_103 = arith.constant 0 : index
    %c0_104 = arith.constant 0 : index
    %c0_105 = arith.constant 0 : index
    %319 = vector.load %arg4[%c0_103, %c0_104, %c0_105] : memref<2x64x32xf32, #tpu.memory_space<vmem>>, vector<1x64x32xf32>
    %320 = vector.shape_cast %319 : vector<1x64x32xf32> to vector<64x32xf32>
    %cst_106 = arith.constant dense<0.000000e+00> : vector<32x32xf32>
    %321 = tpu.matmul %318, %320, %cst_106 {dimension_numbers = #tpu.dot_dimension_numbers<[1], [0], [0], [1], [0, 0, 1, 1], [], []>} : vector<32x64xf32>, vector<64x32xf32>, vector<32x32xf32> -> vector<32x32xf32>
    %c21 = arith.constant 21 : index
    %c0_107 = arith.constant 0 : index
    %322 = vector.load %arg5[%c21, %c0_107] : memref<34x256xf32, #tpu.memory_space<vmem>>, vector<1x32xf32>
    %323 = vector.broadcast %322 : vector<1x32xf32> to vector<32x32xf32>
    %324 = arith.addf %321, %323 : vector<32x32xf32>
    %325 = arith.addf %310, %324 : vector<32x32xf32>
    %c22 = arith.constant 22 : index
    %c0_108 = arith.constant 0 : index
    %326 = vector.load %arg5[%c22, %c0_108] : memref<34x256xf32, #tpu.memory_space<vmem>>, vector<1x32xf32>
    %c23 = arith.constant 23 : index
    %c0_109 = arith.constant 0 : index
    %327 = vector.load %arg5[%c23, %c0_109] : memref<34x256xf32, #tpu.memory_space<vmem>>, vector<1x32xf32>
    %cst_110 = arith.constant dense<0.000000e+00> : vector<32xf32>
    %328 = vector.multi_reduction <add>, %325, %cst_110 [1] : vector<32x32xf32> to vector<32xf32>
    %329 = vector.shape_cast %328 : vector<32xf32> to vector<32x1xf32>
    %cst_111 = arith.constant 3.200000e+01 : f32
    %330 = vector.broadcast %cst_111 : f32 to vector<32x1xf32>
    %331 = arith.divf %329, %330 : vector<32x1xf32>
    %332 = vector.broadcast %331 : vector<32x1xf32> to vector<32x32xf32>
    %333 = arith.subf %325, %332 : vector<32x32xf32>
    %334 = arith.mulf %333, %333 : vector<32x32xf32>
    %cst_112 = arith.constant dense<0.000000e+00> : vector<32xf32>
    %335 = vector.multi_reduction <add>, %334, %cst_112 [1] : vector<32x32xf32> to vector<32xf32>
    %336 = vector.shape_cast %335 : vector<32xf32> to vector<32x1xf32>
    %cst_113 = arith.constant 3.200000e+01 : f32
    %337 = vector.broadcast %cst_113 : f32 to vector<32x1xf32>
    %338 = arith.divf %336, %337 : vector<32x1xf32>
    %339 = vector.broadcast %331 : vector<32x1xf32> to vector<32x32xf32>
    %340 = arith.subf %325, %339 : vector<32x32xf32>
    %cst_114 = arith.constant 9.99999974E-6 : f32
    %341 = vector.broadcast %cst_114 : f32 to vector<32x1xf32>
    %342 = arith.addf %338, %341 : vector<32x1xf32>
    %343 = math.rsqrt %342 : vector<32x1xf32>
    %344 = vector.broadcast %343 : vector<32x1xf32> to vector<32x32xf32>
    %345 = arith.mulf %340, %344 : vector<32x32xf32>
    %346 = vector.broadcast %326 : vector<1x32xf32> to vector<32x32xf32>
    %347 = arith.mulf %345, %346 : vector<32x32xf32>
    %348 = vector.broadcast %327 : vector<1x32xf32> to vector<32x32xf32>
    %349 = arith.addf %347, %348 : vector<32x32xf32>
    %c1 = arith.constant 1 : index
    %c0_115 = arith.constant 0 : index
    %c0_116 = arith.constant 0 : index
    %350 = vector.load %arg2[%c1, %c0_115, %c0_116] : memref<2x32x256xf32, #tpu.memory_space<vmem>>, vector<1x32x256xf32>
    %351 = vector.shape_cast %350 : vector<1x32x256xf32> to vector<32x256xf32>
    %cst_117 = arith.constant dense<0.000000e+00> : vector<32x256xf32>
    %352 = tpu.matmul %349, %351, %cst_117 {dimension_numbers = #tpu.dot_dimension_numbers<[1], [0], [0], [1], [0, 0, 1, 1], [], []>} : vector<32x32xf32>, vector<32x256xf32>, vector<32x256xf32> -> vector<32x256xf32>
    %c24 = arith.constant 24 : index
    %c0_118 = arith.constant 0 : index
    %353 = vector.load %arg5[%c24, %c0_118] : memref<34x256xf32, #tpu.memory_space<vmem>>, vector<1x256xf32>
    %354 = vector.broadcast %353 : vector<1x256xf32> to vector<32x256xf32>
    %355 = arith.addf %352, %354 : vector<32x256xf32>
    %356 = vector.extract_strided_slice %355 {offsets = [0, 192], sizes = [32, 4], strides = [1, 1]} : vector<32x256xf32> to vector<32x4xf32>
    %cst_119 = arith.constant -5.000000e+00 : f32
    %357 = vector.broadcast %cst_119 : f32 to vector<32x4xf32>
    %358 = arith.mulf %357, %356 : vector<32x4xf32>
    %359 = math.exp %358 : vector<32x4xf32>
    %cst_120 = arith.constant 1.000000e+00 : f32
    %360 = vector.broadcast %cst_120 : f32 to vector<32x4xf32>
    %361 = arith.addf %360, %359 : vector<32x4xf32>
    %362 = tpu.reciprocal %361 {approx = true} : vector<32x4xf32> -> vector<32x4xf32>
    %363 = arith.mulf %361, %362 : vector<32x4xf32>
    %cst_121 = arith.constant 2.000000e+00 : f32
    %364 = vector.broadcast %cst_121 : f32 to vector<32x4xf32>
    %365 = arith.subf %364, %363 : vector<32x4xf32>
    %366 = arith.mulf %362, %365 : vector<32x4xf32>
    %cst_122 = arith.constant 9.99999974E-6 : f32
    %367 = vector.broadcast %cst_122 : f32 to vector<32x4xf32>
    %368 = arith.addf %366, %367 : vector<32x4xf32>
    %cst_123 = arith.constant 1.09861231 : f32
    %369 = vector.broadcast %cst_123 : f32 to vector<32x4xf32>
    %370 = arith.mulf %368, %369 : vector<32x4xf32>
    %371 = math.exp %370 : vector<32x4xf32>
    %cst_124 = arith.constant 1.000000e+00 : f32
    %372 = vector.broadcast %cst_124 : f32 to vector<32x4xf32>
    %373 = arith.subf %371, %372 : vector<32x4xf32>
    %c0_125 = arith.constant 0 : index
    %c292 = arith.constant 292 : index
    %374 = vector.load %arg6[%c0_125, %c292] : memref<32x384xf32, #tpu.memory_space<vmem>>, vector<32x4xf32>
    tpu.vector_store %arg6[%c0_125, %c292], %373 {strides = array<i32>} : memref<32x384xf32, #tpu.memory_space<vmem>>, vector<32x4xf32>,
    %375 = tpu.reciprocal %373 {approx = true} : vector<32x4xf32> -> vector<32x4xf32>
    %376 = arith.mulf %373, %375 : vector<32x4xf32>
    %cst_126 = arith.constant 2.000000e+00 : f32
    %377 = vector.broadcast %cst_126 : f32 to vector<32x4xf32>
    %378 = arith.subf %377, %376 : vector<32x4xf32>
    %379 = arith.mulf %375, %378 : vector<32x4xf32>
    %380 = vector.extract_strided_slice %355 {offsets = [0, 0], sizes = [16, 256], strides = [1, 1]} : vector<32x256xf32> to vector<16x256xf32>
    %381 = vector.extract_strided_slice %379 {offsets = [0, 0], sizes = [16, 4], strides = [1, 1]} : vector<32x4xf32> to vector<16x4xf32>
    %382 = vector.extract_strided_slice %380 {offsets = [0, 0], sizes = [16, 8], strides = [1, 1]} : vector<16x256xf32> to vector<16x8xf32>
    %383 = vector.extract_strided_slice %380 {offsets = [0, 32], sizes = [16, 8], strides = [1, 1]} : vector<16x256xf32> to vector<16x8xf32>
    %cst_127 = arith.constant dense<0.000000e+00> : vector<16x16xf32>
    %384 = tpu.matmul %382, %383, %cst_127 {dimension_numbers = #tpu.dot_dimension_numbers<[1], [1], [0], [0], [0, 0, 1, 0], [], []>} : vector<16x8xf32>, vector<16x8xf32>, vector<16x16xf32> -> vector<16x16xf32>
    %cst_128 = arith.constant dense<0xFF800000> : vector<16xf32>
    %385 = vector.multi_reduction <maximumf>, %384, %cst_128 [1] : vector<16x16xf32> to vector<16xf32>
    %386 = vector.shape_cast %385 : vector<16xf32> to vector<16x1xf32>
    %387 = vector.broadcast %386 : vector<16x1xf32> to vector<16x16xf32>
    %388 = arith.subf %384, %387 : vector<16x16xf32>
    %389 = math.exp %388 : vector<16x16xf32>
    %cst_129 = arith.constant dense<0.000000e+00> : vector<16xf32>
    %390 = vector.multi_reduction <add>, %389, %cst_129 [1] : vector<16x16xf32> to vector<16xf32>
    %391 = vector.shape_cast %390 : vector<16xf32> to vector<16x1xf32>
    %392 = tpu.reciprocal %391 {approx = true} : vector<16x1xf32> -> vector<16x1xf32>
    %393 = arith.mulf %391, %392 : vector<16x1xf32>
    %cst_130 = arith.constant 2.000000e+00 : f32
    %394 = vector.broadcast %cst_130 : f32 to vector<16x1xf32>
    %395 = arith.subf %394, %393 : vector<16x1xf32>
    %396 = arith.mulf %392, %395 : vector<16x1xf32>
    %397 = vector.broadcast %396 : vector<16x1xf32> to vector<16x16xf32>
    %398 = arith.mulf %389, %397 : vector<16x16xf32>
    %c0_131 = arith.constant 0 : index
    %c64 = arith.constant 64 : index
    %399 = vector.load %arg6[%c0_131, %c64] : memref<32x384xf32, #tpu.memory_space<vmem>>, vector<16x16xf32>
    tpu.vector_store %arg6[%c0_131, %c64], %398 {strides = array<i32>} : memref<32x384xf32, #tpu.memory_space<vmem>>, vector<16x16xf32>,
    %400 = vector.extract_strided_slice %381 {offsets = [0, 0], sizes = [16, 1], strides = [1, 1]} : vector<16x4xf32> to vector<16x1xf32>
    %cst_132 = arith.constant 0.398942292 : f32
    %401 = vector.broadcast %cst_132 : f32 to vector<16x1xf32>
    %402 = arith.mulf %401, %400 : vector<16x1xf32>
    %403 = arith.mulf %400, %400 : vector<16x1xf32>
    %404 = vector.broadcast %403 : vector<16x1xf32> to vector<16x16xf32>
    %405 = arith.mulf %1, %404 : vector<16x16xf32>
    %406 = math.exp %405 : vector<16x16xf32>
    %407 = vector.broadcast %402 : vector<16x1xf32> to vector<16x16xf32>
    %408 = arith.mulf %407, %406 : vector<16x16xf32>
    %c0_133 = arith.constant 0 : index
    %c192 = arith.constant 192 : index
    %409 = vector.load %arg6[%c0_133, %c192] : memref<32x384xf32, #tpu.memory_space<vmem>>, vector<16x16xf32>
    tpu.vector_store %arg6[%c0_133, %c192], %408 {strides = array<i32>} : memref<32x384xf32, #tpu.memory_space<vmem>>, vector<16x16xf32>,
    %410 = vector.extract_strided_slice %380 {offsets = [0, 64], sizes = [16, 32], strides = [1, 1]} : vector<16x256xf32> to vector<16x32xf32>
    %cst_134 = arith.constant dense<0.000000e+00> : vector<16x32xf32>
    %411 = tpu.matmul %398, %410, %cst_134 {dimension_numbers = #tpu.dot_dimension_numbers<[1], [0], [0], [1], [0, 0, 1, 1], [], []>} : vector<16x16xf32>, vector<16x32xf32>, vector<16x32xf32> -> vector<16x32xf32>
    %412 = vector.extract_strided_slice %380 {offsets = [0, 8], sizes = [16, 8], strides = [1, 1]} : vector<16x256xf32> to vector<16x8xf32>
    %413 = vector.extract_strided_slice %380 {offsets = [0, 40], sizes = [16, 8], strides = [1, 1]} : vector<16x256xf32> to vector<16x8xf32>
    %cst_135 = arith.constant dense<0.000000e+00> : vector<16x16xf32>
    %414 = tpu.matmul %412, %413, %cst_135 {dimension_numbers = #tpu.dot_dimension_numbers<[1], [1], [0], [0], [0, 0, 1, 0], [], []>} : vector<16x8xf32>, vector<16x8xf32>, vector<16x16xf32> -> vector<16x16xf32>
    %cst_136 = arith.constant dense<0xFF800000> : vector<16xf32>
    %415 = vector.multi_reduction <maximumf>, %414, %cst_136 [1] : vector<16x16xf32> to vector<16xf32>
    %416 = vector.shape_cast %415 : vector<16xf32> to vector<16x1xf32>
    %417 = vector.broadcast %416 : vector<16x1xf32> to vector<16x16xf32>
    %418 = arith.subf %414, %417 : vector<16x16xf32>
    %419 = math.exp %418 : vector<16x16xf32>
    %cst_137 = arith.constant dense<0.000000e+00> : vector<16xf32>
    %420 = vector.multi_reduction <add>, %419, %cst_137 [1] : vector<16x16xf32> to vector<16xf32>
    %421 = vector.shape_cast %420 : vector<16xf32> to vector<16x1xf32>
    %422 = tpu.reciprocal %421 {approx = true} : vector<16x1xf32> -> vector<16x1xf32>
    %423 = arith.mulf %421, %422 : vector<16x1xf32>
    %cst_138 = arith.constant 2.000000e+00 : f32
    %424 = vector.broadcast %cst_138 : f32 to vector<16x1xf32>
    %425 = arith.subf %424, %423 : vector<16x1xf32>
    %426 = arith.mulf %422, %425 : vector<16x1xf32>
    %427 = vector.broadcast %426 : vector<16x1xf32> to vector<16x16xf32>
    %428 = arith.mulf %419, %427 : vector<16x16xf32>
    %c0_139 = arith.constant 0 : index
    %c80 = arith.constant 80 : index
    %429 = vector.load %arg6[%c0_139, %c80] : memref<32x384xf32, #tpu.memory_space<vmem>>, vector<16x16xf32>
    tpu.vector_store %arg6[%c0_139, %c80], %428 {strides = array<i32>} : memref<32x384xf32, #tpu.memory_space<vmem>>, vector<16x16xf32>,
    %430 = vector.extract_strided_slice %381 {offsets = [0, 1], sizes = [16, 1], strides = [1, 1]} : vector<16x4xf32> to vector<16x1xf32>
    %cst_140 = arith.constant 0.398942292 : f32
    %431 = vector.broadcast %cst_140 : f32 to vector<16x1xf32>
    %432 = arith.mulf %431, %430 : vector<16x1xf32>
    %433 = arith.mulf %430, %430 : vector<16x1xf32>
    %434 = vector.broadcast %433 : vector<16x1xf32> to vector<16x16xf32>
    %435 = arith.mulf %1, %434 : vector<16x16xf32>
    %436 = math.exp %435 : vector<16x16xf32>
    %437 = vector.broadcast %432 : vector<16x1xf32> to vector<16x16xf32>
    %438 = arith.mulf %437, %436 : vector<16x16xf32>
    %c0_141 = arith.constant 0 : index
    %c208 = arith.constant 208 : index
    %439 = vector.load %arg6[%c0_141, %c208] : memref<32x384xf32, #tpu.memory_space<vmem>>, vector<16x16xf32>
    tpu.vector_store %arg6[%c0_141, %c208], %438 {strides = array<i32>} : memref<32x384xf32, #tpu.memory_space<vmem>>, vector<16x16xf32>,
    %440 = vector.extract_strided_slice %380 {offsets = [0, 96], sizes = [16, 32], strides = [1, 1]} : vector<16x256xf32> to vector<16x32xf32>
    %cst_142 = arith.constant dense<0.000000e+00> : vector<16x32xf32>
    %441 = tpu.matmul %428, %440, %cst_142 {dimension_numbers = #tpu.dot_dimension_numbers<[1], [0], [0], [1], [0, 0, 1, 1], [], []>} : vector<16x16xf32>, vector<16x32xf32>, vector<16x32xf32> -> vector<16x32xf32>
    %442 = arith.addf %411, %441 : vector<16x32xf32>
    %443 = vector.extract_strided_slice %380 {offsets = [0, 16], sizes = [16, 8], strides = [1, 1]} : vector<16x256xf32> to vector<16x8xf32>
    %444 = vector.extract_strided_slice %380 {offsets = [0, 48], sizes = [16, 8], strides = [1, 1]} : vector<16x256xf32> to vector<16x8xf32>
    %cst_143 = arith.constant dense<0.000000e+00> : vector<16x16xf32>
    %445 = tpu.matmul %443, %444, %cst_143 {dimension_numbers = #tpu.dot_dimension_numbers<[1], [1], [0], [0], [0, 0, 1, 0], [], []>} : vector<16x8xf32>, vector<16x8xf32>, vector<16x16xf32> -> vector<16x16xf32>
    %cst_144 = arith.constant dense<0xFF800000> : vector<16xf32>
    %446 = vector.multi_reduction <maximumf>, %445, %cst_144 [1] : vector<16x16xf32> to vector<16xf32>
    %447 = vector.shape_cast %446 : vector<16xf32> to vector<16x1xf32>
    %448 = vector.broadcast %447 : vector<16x1xf32> to vector<16x16xf32>
    %449 = arith.subf %445, %448 : vector<16x16xf32>
    %450 = math.exp %449 : vector<16x16xf32>
    %cst_145 = arith.constant dense<0.000000e+00> : vector<16xf32>
    %451 = vector.multi_reduction <add>, %450, %cst_145 [1] : vector<16x16xf32> to vector<16xf32>
    %452 = vector.shape_cast %451 : vector<16xf32> to vector<16x1xf32>
    %453 = tpu.reciprocal %452 {approx = true} : vector<16x1xf32> -> vector<16x1xf32>
    %454 = arith.mulf %452, %453 : vector<16x1xf32>
    %cst_146 = arith.constant 2.000000e+00 : f32
    %455 = vector.broadcast %cst_146 : f32 to vector<16x1xf32>
    %456 = arith.subf %455, %454 : vector<16x1xf32>
    %457 = arith.mulf %453, %456 : vector<16x1xf32>
    %458 = vector.broadcast %457 : vector<16x1xf32> to vector<16x16xf32>
    %459 = arith.mulf %450, %458 : vector<16x16xf32>
    %c0_147 = arith.constant 0 : index
    %c96 = arith.constant 96 : index
    %460 = vector.load %arg6[%c0_147, %c96] : memref<32x384xf32, #tpu.memory_space<vmem>>, vector<16x16xf32>
    tpu.vector_store %arg6[%c0_147, %c96], %459 {strides = array<i32>} : memref<32x384xf32, #tpu.memory_space<vmem>>, vector<16x16xf32>,
    %461 = vector.extract_strided_slice %381 {offsets = [0, 2], sizes = [16, 1], strides = [1, 1]} : vector<16x4xf32> to vector<16x1xf32>
    %cst_148 = arith.constant 0.398942292 : f32
    %462 = vector.broadcast %cst_148 : f32 to vector<16x1xf32>
    %463 = arith.mulf %462, %461 : vector<16x1xf32>
    %464 = arith.mulf %461, %461 : vector<16x1xf32>
    %465 = vector.broadcast %464 : vector<16x1xf32> to vector<16x16xf32>
    %466 = arith.mulf %1, %465 : vector<16x16xf32>
    %467 = math.exp %466 : vector<16x16xf32>
    %468 = vector.broadcast %463 : vector<16x1xf32> to vector<16x16xf32>
    %469 = arith.mulf %468, %467 : vector<16x16xf32>
    %c0_149 = arith.constant 0 : index
    %c224 = arith.constant 224 : index
    %470 = vector.load %arg6[%c0_149, %c224] : memref<32x384xf32, #tpu.memory_space<vmem>>, vector<16x16xf32>
    tpu.vector_store %arg6[%c0_149, %c224], %469 {strides = array<i32>} : memref<32x384xf32, #tpu.memory_space<vmem>>, vector<16x16xf32>,
    %471 = vector.extract_strided_slice %380 {offsets = [0, 128], sizes = [16, 32], strides = [1, 1]} : vector<16x256xf32> to vector<16x32xf32>
    %cst_150 = arith.constant dense<0.000000e+00> : vector<16x32xf32>
    %472 = tpu.matmul %459, %471, %cst_150 {dimension_numbers = #tpu.dot_dimension_numbers<[1], [0], [0], [1], [0, 0, 1, 1], [], []>} : vector<16x16xf32>, vector<16x32xf32>, vector<16x32xf32> -> vector<16x32xf32>
    %473 = arith.addf %442, %472 : vector<16x32xf32>
    %474 = vector.extract_strided_slice %380 {offsets = [0, 24], sizes = [16, 8], strides = [1, 1]} : vector<16x256xf32> to vector<16x8xf32>
    %475 = vector.extract_strided_slice %380 {offsets = [0, 56], sizes = [16, 8], strides = [1, 1]} : vector<16x256xf32> to vector<16x8xf32>
    %cst_151 = arith.constant dense<0.000000e+00> : vector<16x16xf32>
    %476 = tpu.matmul %474, %475, %cst_151 {dimension_numbers = #tpu.dot_dimension_numbers<[1], [1], [0], [0], [0, 0, 1, 0], [], []>} : vector<16x8xf32>, vector<16x8xf32>, vector<16x16xf32> -> vector<16x16xf32>
    %cst_152 = arith.constant dense<0xFF800000> : vector<16xf32>
    %477 = vector.multi_reduction <maximumf>, %476, %cst_152 [1] : vector<16x16xf32> to vector<16xf32>
    %478 = vector.shape_cast %477 : vector<16xf32> to vector<16x1xf32>
    %479 = vector.broadcast %478 : vector<16x1xf32> to vector<16x16xf32>
    %480 = arith.subf %476, %479 : vector<16x16xf32>
    %481 = math.exp %480 : vector<16x16xf32>
    %cst_153 = arith.constant dense<0.000000e+00> : vector<16xf32>
    %482 = vector.multi_reduction <add>, %481, %cst_153 [1] : vector<16x16xf32> to vector<16xf32>
    %483 = vector.shape_cast %482 : vector<16xf32> to vector<16x1xf32>
    %484 = tpu.reciprocal %483 {approx = true} : vector<16x1xf32> -> vector<16x1xf32>
    %485 = arith.mulf %483, %484 : vector<16x1xf32>
    %cst_154 = arith.constant 2.000000e+00 : f32
    %486 = vector.broadcast %cst_154 : f32 to vector<16x1xf32>
    %487 = arith.subf %486, %485 : vector<16x1xf32>
    %488 = arith.mulf %484, %487 : vector<16x1xf32>
    %489 = vector.broadcast %488 : vector<16x1xf32> to vector<16x16xf32>
    %490 = arith.mulf %481, %489 : vector<16x16xf32>
    %c0_155 = arith.constant 0 : index
    %c112 = arith.constant 112 : index
    %491 = vector.load %arg6[%c0_155, %c112] : memref<32x384xf32, #tpu.memory_space<vmem>>, vector<16x16xf32>
    tpu.vector_store %arg6[%c0_155, %c112], %490 {strides = array<i32>} : memref<32x384xf32, #tpu.memory_space<vmem>>, vector<16x16xf32>,
    %492 = vector.extract_strided_slice %381 {offsets = [0, 3], sizes = [16, 1], strides = [1, 1]} : vector<16x4xf32> to vector<16x1xf32>
    %cst_156 = arith.constant 0.398942292 : f32
    %493 = vector.broadcast %cst_156 : f32 to vector<16x1xf32>
    %494 = arith.mulf %493, %492 : vector<16x1xf32>
    %495 = arith.mulf %492, %492 : vector<16x1xf32>
    %496 = vector.broadcast %495 : vector<16x1xf32> to vector<16x16xf32>
    %497 = arith.mulf %1, %496 : vector<16x16xf32>
    %498 = math.exp %497 : vector<16x16xf32>
    %499 = vector.broadcast %494 : vector<16x1xf32> to vector<16x16xf32>
    %500 = arith.mulf %499, %498 : vector<16x16xf32>
    %c0_157 = arith.constant 0 : index
    %c240 = arith.constant 240 : index
    %501 = vector.load %arg6[%c0_157, %c240] : memref<32x384xf32, #tpu.memory_space<vmem>>, vector<16x16xf32>
    tpu.vector_store %arg6[%c0_157, %c240], %500 {strides = array<i32>} : memref<32x384xf32, #tpu.memory_space<vmem>>, vector<16x16xf32>,
    %502 = vector.extract_strided_slice %380 {offsets = [0, 160], sizes = [16, 32], strides = [1, 1]} : vector<16x256xf32> to vector<16x32xf32>
    %cst_158 = arith.constant dense<0.000000e+00> : vector<16x32xf32>
    %503 = tpu.matmul %490, %502, %cst_158 {dimension_numbers = #tpu.dot_dimension_numbers<[1], [0], [0], [1], [0, 0, 1, 1], [], []>} : vector<16x16xf32>, vector<16x32xf32>, vector<16x32xf32> -> vector<16x32xf32>
    %504 = arith.addf %473, %503 : vector<16x32xf32>
    %505 = vector.extract_strided_slice %355 {offsets = [16, 0], sizes = [16, 256], strides = [1, 1]} : vector<32x256xf32> to vector<16x256xf32>
    %506 = vector.extract_strided_slice %379 {offsets = [16, 0], sizes = [16, 4], strides = [1, 1]} : vector<32x4xf32> to vector<16x4xf32>
    %507 = vector.extract_strided_slice %505 {offsets = [0, 0], sizes = [16, 8], strides = [1, 1]} : vector<16x256xf32> to vector<16x8xf32>
    %508 = vector.extract_strided_slice %505 {offsets = [0, 32], sizes = [16, 8], strides = [1, 1]} : vector<16x256xf32> to vector<16x8xf32>
    %cst_159 = arith.constant dense<0.000000e+00> : vector<16x16xf32>
    %509 = tpu.matmul %507, %508, %cst_159 {dimension_numbers = #tpu.dot_dimension_numbers<[1], [1], [0], [0], [0, 0, 1, 0], [], []>} : vector<16x8xf32>, vector<16x8xf32>, vector<16x16xf32> -> vector<16x16xf32>
    %cst_160 = arith.constant dense<0xFF800000> : vector<16xf32>
    %510 = vector.multi_reduction <maximumf>, %509, %cst_160 [1] : vector<16x16xf32> to vector<16xf32>
    %511 = vector.shape_cast %510 : vector<16xf32> to vector<16x1xf32>
    %512 = vector.broadcast %511 : vector<16x1xf32> to vector<16x16xf32>
    %513 = arith.subf %509, %512 : vector<16x16xf32>
    %514 = math.exp %513 : vector<16x16xf32>
    %cst_161 = arith.constant dense<0.000000e+00> : vector<16xf32>
    %515 = vector.multi_reduction <add>, %514, %cst_161 [1] : vector<16x16xf32> to vector<16xf32>
    %516 = vector.shape_cast %515 : vector<16xf32> to vector<16x1xf32>
    %517 = tpu.reciprocal %516 {approx = true} : vector<16x1xf32> -> vector<16x1xf32>
    %518 = arith.mulf %516, %517 : vector<16x1xf32>
    %cst_162 = arith.constant 2.000000e+00 : f32
    %519 = vector.broadcast %cst_162 : f32 to vector<16x1xf32>
    %520 = arith.subf %519, %518 : vector<16x1xf32>
    %521 = arith.mulf %517, %520 : vector<16x1xf32>
    %522 = vector.broadcast %521 : vector<16x1xf32> to vector<16x16xf32>
    %523 = arith.mulf %514, %522 : vector<16x16xf32>
    %c16_163 = arith.constant 16 : index
    %c64_164 = arith.constant 64 : index
    %524 = vector.load %arg6[%c16_163, %c64_164] : memref<32x384xf32, #tpu.memory_space<vmem>>, vector<16x16xf32>
    tpu.vector_store %arg6[%c16_163, %c64_164], %523 {strides = array<i32>} : memref<32x384xf32, #tpu.memory_space<vmem>>, vector<16x16xf32>,
    %525 = vector.extract_strided_slice %506 {offsets = [0, 0], sizes = [16, 1], strides = [1, 1]} : vector<16x4xf32> to vector<16x1xf32>
    %cst_165 = arith.constant 0.398942292 : f32
    %526 = vector.broadcast %cst_165 : f32 to vector<16x1xf32>
    %527 = arith.mulf %526, %525 : vector<16x1xf32>
    %528 = arith.mulf %525, %525 : vector<16x1xf32>
    %529 = vector.broadcast %528 : vector<16x1xf32> to vector<16x16xf32>
    %530 = arith.mulf %1, %529 : vector<16x16xf32>
    %531 = math.exp %530 : vector<16x16xf32>
    %532 = vector.broadcast %527 : vector<16x1xf32> to vector<16x16xf32>
    %533 = arith.mulf %532, %531 : vector<16x16xf32>
    %c16_166 = arith.constant 16 : index
    %c192_167 = arith.constant 192 : index
    %534 = vector.load %arg6[%c16_166, %c192_167] : memref<32x384xf32, #tpu.memory_space<vmem>>, vector<16x16xf32>
    tpu.vector_store %arg6[%c16_166, %c192_167], %533 {strides = array<i32>} : memref<32x384xf32, #tpu.memory_space<vmem>>, vector<16x16xf32>,
    %535 = vector.extract_strided_slice %505 {offsets = [0, 64], sizes = [16, 32], strides = [1, 1]} : vector<16x256xf32> to vector<16x32xf32>
    %cst_168 = arith.constant dense<0.000000e+00> : vector<16x32xf32>
    %536 = tpu.matmul %523, %535, %cst_168 {dimension_numbers = #tpu.dot_dimension_numbers<[1], [0], [0], [1], [0, 0, 1, 1], [], []>} : vector<16x16xf32>, vector<16x32xf32>, vector<16x32xf32> -> vector<16x32xf32>
    %537 = vector.extract_strided_slice %505 {offsets = [0, 8], sizes = [16, 8], strides = [1, 1]} : vector<16x256xf32> to vector<16x8xf32>
    %538 = vector.extract_strided_slice %505 {offsets = [0, 40], sizes = [16, 8], strides = [1, 1]} : vector<16x256xf32> to vector<16x8xf32>
    %cst_169 = arith.constant dense<0.000000e+00> : vector<16x16xf32>
    %539 = tpu.matmul %537, %538, %cst_169 {dimension_numbers = #tpu.dot_dimension_numbers<[1], [1], [0], [0], [0, 0, 1, 0], [], []>} : vector<16x8xf32>, vector<16x8xf32>, vector<16x16xf32> -> vector<16x16xf32>
    %cst_170 = arith.constant dense<0xFF800000> : vector<16xf32>
    %540 = vector.multi_reduction <maximumf>, %539, %cst_170 [1] : vector<16x16xf32> to vector<16xf32>
    %541 = vector.shape_cast %540 : vector<16xf32> to vector<16x1xf32>
    %542 = vector.broadcast %541 : vector<16x1xf32> to vector<16x16xf32>
    %543 = arith.subf %539, %542 : vector<16x16xf32>
    %544 = math.exp %543 : vector<16x16xf32>
    %cst_171 = arith.constant dense<0.000000e+00> : vector<16xf32>
    %545 = vector.multi_reduction <add>, %544, %cst_171 [1] : vector<16x16xf32> to vector<16xf32>
    %546 = vector.shape_cast %545 : vector<16xf32> to vector<16x1xf32>
    %547 = tpu.reciprocal %546 {approx = true} : vector<16x1xf32> -> vector<16x1xf32>
    %548 = arith.mulf %546, %547 : vector<16x1xf32>
    %cst_172 = arith.constant 2.000000e+00 : f32
    %549 = vector.broadcast %cst_172 : f32 to vector<16x1xf32>
    %550 = arith.subf %549, %548 : vector<16x1xf32>
    %551 = arith.mulf %547, %550 : vector<16x1xf32>
    %552 = vector.broadcast %551 : vector<16x1xf32> to vector<16x16xf32>
    %553 = arith.mulf %544, %552 : vector<16x16xf32>
    %c16_173 = arith.constant 16 : index
    %c80_174 = arith.constant 80 : index
    %554 = vector.load %arg6[%c16_173, %c80_174] : memref<32x384xf32, #tpu.memory_space<vmem>>, vector<16x16xf32>
    tpu.vector_store %arg6[%c16_173, %c80_174], %553 {strides = array<i32>} : memref<32x384xf32, #tpu.memory_space<vmem>>, vector<16x16xf32>,
    %555 = vector.extract_strided_slice %506 {offsets = [0, 1], sizes = [16, 1], strides = [1, 1]} : vector<16x4xf32> to vector<16x1xf32>
    %cst_175 = arith.constant 0.398942292 : f32
    %556 = vector.broadcast %cst_175 : f32 to vector<16x1xf32>
    %557 = arith.mulf %556, %555 : vector<16x1xf32>
    %558 = arith.mulf %555, %555 : vector<16x1xf32>
    %559 = vector.broadcast %558 : vector<16x1xf32> to vector<16x16xf32>
    %560 = arith.mulf %1, %559 : vector<16x16xf32>
    %561 = math.exp %560 : vector<16x16xf32>
    %562 = vector.broadcast %557 : vector<16x1xf32> to vector<16x16xf32>
    %563 = arith.mulf %562, %561 : vector<16x16xf32>
    %c16_176 = arith.constant 16 : index
    %c208_177 = arith.constant 208 : index
    %564 = vector.load %arg6[%c16_176, %c208_177] : memref<32x384xf32, #tpu.memory_space<vmem>>, vector<16x16xf32>
    tpu.vector_store %arg6[%c16_176, %c208_177], %563 {strides = array<i32>} : memref<32x384xf32, #tpu.memory_space<vmem>>, vector<16x16xf32>,
    %565 = vector.extract_strided_slice %505 {offsets = [0, 96], sizes = [16, 32], strides = [1, 1]} : vector<16x256xf32> to vector<16x32xf32>
    %cst_178 = arith.constant dense<0.000000e+00> : vector<16x32xf32>
    %566 = tpu.matmul %553, %565, %cst_178 {dimension_numbers = #tpu.dot_dimension_numbers<[1], [0], [0], [1], [0, 0, 1, 1], [], []>} : vector<16x16xf32>, vector<16x32xf32>, vector<16x32xf32> -> vector<16x32xf32>
    %567 = arith.addf %536, %566 : vector<16x32xf32>
    %568 = vector.extract_strided_slice %505 {offsets = [0, 16], sizes = [16, 8], strides = [1, 1]} : vector<16x256xf32> to vector<16x8xf32>
    %569 = vector.extract_strided_slice %505 {offsets = [0, 48], sizes = [16, 8], strides = [1, 1]} : vector<16x256xf32> to vector<16x8xf32>
    %cst_179 = arith.constant dense<0.000000e+00> : vector<16x16xf32>
    %570 = tpu.matmul %568, %569, %cst_179 {dimension_numbers = #tpu.dot_dimension_numbers<[1], [1], [0], [0], [0, 0, 1, 0], [], []>} : vector<16x8xf32>, vector<16x8xf32>, vector<16x16xf32> -> vector<16x16xf32>
    %cst_180 = arith.constant dense<0xFF800000> : vector<16xf32>
    %571 = vector.multi_reduction <maximumf>, %570, %cst_180 [1] : vector<16x16xf32> to vector<16xf32>
    %572 = vector.shape_cast %571 : vector<16xf32> to vector<16x1xf32>
    %573 = vector.broadcast %572 : vector<16x1xf32> to vector<16x16xf32>
    %574 = arith.subf %570, %573 : vector<16x16xf32>
    %575 = math.exp %574 : vector<16x16xf32>
    %cst_181 = arith.constant dense<0.000000e+00> : vector<16xf32>
    %576 = vector.multi_reduction <add>, %575, %cst_181 [1] : vector<16x16xf32> to vector<16xf32>
    %577 = vector.shape_cast %576 : vector<16xf32> to vector<16x1xf32>
    %578 = tpu.reciprocal %577 {approx = true} : vector<16x1xf32> -> vector<16x1xf32>
    %579 = arith.mulf %577, %578 : vector<16x1xf32>
    %cst_182 = arith.constant 2.000000e+00 : f32
    %580 = vector.broadcast %cst_182 : f32 to vector<16x1xf32>
    %581 = arith.subf %580, %579 : vector<16x1xf32>
    %582 = arith.mulf %578, %581 : vector<16x1xf32>
    %583 = vector.broadcast %582 : vector<16x1xf32> to vector<16x16xf32>
    %584 = arith.mulf %575, %583 : vector<16x16xf32>
    %c16_183 = arith.constant 16 : index
    %c96_184 = arith.constant 96 : index
    %585 = vector.load %arg6[%c16_183, %c96_184] : memref<32x384xf32, #tpu.memory_space<vmem>>, vector<16x16xf32>
    tpu.vector_store %arg6[%c16_183, %c96_184], %584 {strides = array<i32>} : memref<32x384xf32, #tpu.memory_space<vmem>>, vector<16x16xf32>,
    %586 = vector.extract_strided_slice %506 {offsets = [0, 2], sizes = [16, 1], strides = [1, 1]} : vector<16x4xf32> to vector<16x1xf32>
    %cst_185 = arith.constant 0.398942292 : f32
    %587 = vector.broadcast %cst_185 : f32 to vector<16x1xf32>
    %588 = arith.mulf %587, %586 : vector<16x1xf32>
    %589 = arith.mulf %586, %586 : vector<16x1xf32>
    %590 = vector.broadcast %589 : vector<16x1xf32> to vector<16x16xf32>
    %591 = arith.mulf %1, %590 : vector<16x16xf32>
    %592 = math.exp %591 : vector<16x16xf32>
    %593 = vector.broadcast %588 : vector<16x1xf32> to vector<16x16xf32>
    %594 = arith.mulf %593, %592 : vector<16x16xf32>
    %c16_186 = arith.constant 16 : index
    %c224_187 = arith.constant 224 : index
    %595 = vector.load %arg6[%c16_186, %c224_187] : memref<32x384xf32, #tpu.memory_space<vmem>>, vector<16x16xf32>
    tpu.vector_store %arg6[%c16_186, %c224_187], %594 {strides = array<i32>} : memref<32x384xf32, #tpu.memory_space<vmem>>, vector<16x16xf32>,
    %596 = vector.extract_strided_slice %505 {offsets = [0, 128], sizes = [16, 32], strides = [1, 1]} : vector<16x256xf32> to vector<16x32xf32>
    %cst_188 = arith.constant dense<0.000000e+00> : vector<16x32xf32>
    %597 = tpu.matmul %584, %596, %cst_188 {dimension_numbers = #tpu.dot_dimension_numbers<[1], [0], [0], [1], [0, 0, 1, 1], [], []>} : vector<16x16xf32>, vector<16x32xf32>, vector<16x32xf32> -> vector<16x32xf32>
    %598 = arith.addf %567, %597 : vector<16x32xf32>
    %599 = vector.extract_strided_slice %505 {offsets = [0, 24], sizes = [16, 8], strides = [1, 1]} : vector<16x256xf32> to vector<16x8xf32>
    %600 = vector.extract_strided_slice %505 {offsets = [0, 56], sizes = [16, 8], strides = [1, 1]} : vector<16x256xf32> to vector<16x8xf32>
    %cst_189 = arith.constant dense<0.000000e+00> : vector<16x16xf32>
    %601 = tpu.matmul %599, %600, %cst_189 {dimension_numbers = #tpu.dot_dimension_numbers<[1], [1], [0], [0], [0, 0, 1, 0], [], []>} : vector<16x8xf32>, vector<16x8xf32>, vector<16x16xf32> -> vector<16x16xf32>
    %cst_190 = arith.constant dense<0xFF800000> : vector<16xf32>
    %602 = vector.multi_reduction <maximumf>, %601, %cst_190 [1] : vector<16x16xf32> to vector<16xf32>
    %603 = vector.shape_cast %602 : vector<16xf32> to vector<16x1xf32>
    %604 = vector.broadcast %603 : vector<16x1xf32> to vector<16x16xf32>
    %605 = arith.subf %601, %604 : vector<16x16xf32>
    %606 = math.exp %605 : vector<16x16xf32>
    %cst_191 = arith.constant dense<0.000000e+00> : vector<16xf32>
    %607 = vector.multi_reduction <add>, %606, %cst_191 [1] : vector<16x16xf32> to vector<16xf32>
    %608 = vector.shape_cast %607 : vector<16xf32> to vector<16x1xf32>
    %609 = tpu.reciprocal %608 {approx = true} : vector<16x1xf32> -> vector<16x1xf32>
    %610 = arith.mulf %608, %609 : vector<16x1xf32>
    %cst_192 = arith.constant 2.000000e+00 : f32
    %611 = vector.broadcast %cst_192 : f32 to vector<16x1xf32>
    %612 = arith.subf %611, %610 : vector<16x1xf32>
    %613 = arith.mulf %609, %612 : vector<16x1xf32>
    %614 = vector.broadcast %613 : vector<16x1xf32> to vector<16x16xf32>
    %615 = arith.mulf %606, %614 : vector<16x16xf32>
    %c16_193 = arith.constant 16 : index
    %c112_194 = arith.constant 112 : index
    %616 = vector.load %arg6[%c16_193, %c112_194] : memref<32x384xf32, #tpu.memory_space<vmem>>, vector<16x16xf32>
    tpu.vector_store %arg6[%c16_193, %c112_194], %615 {strides = array<i32>} : memref<32x384xf32, #tpu.memory_space<vmem>>, vector<16x16xf32>,
    %617 = vector.extract_strided_slice %506 {offsets = [0, 3], sizes = [16, 1], strides = [1, 1]} : vector<16x4xf32> to vector<16x1xf32>
    %cst_195 = arith.constant 0.398942292 : f32
    %618 = vector.broadcast %cst_195 : f32 to vector<16x1xf32>
    %619 = arith.mulf %618, %617 : vector<16x1xf32>
    %620 = arith.mulf %617, %617 : vector<16x1xf32>
    %621 = vector.broadcast %620 : vector<16x1xf32> to vector<16x16xf32>
    %622 = arith.mulf %1, %621 : vector<16x16xf32>
    %623 = math.exp %622 : vector<16x16xf32>
    %624 = vector.broadcast %619 : vector<16x1xf32> to vector<16x16xf32>
    %625 = arith.mulf %624, %623 : vector<16x16xf32>
    %c16_196 = arith.constant 16 : index
    %c240_197 = arith.constant 240 : index
    %626 = vector.load %arg6[%c16_196, %c240_197] : memref<32x384xf32, #tpu.memory_space<vmem>>, vector<16x16xf32>
    tpu.vector_store %arg6[%c16_196, %c240_197], %625 {strides = array<i32>} : memref<32x384xf32, #tpu.memory_space<vmem>>, vector<16x16xf32>,
    %627 = vector.extract_strided_slice %505 {offsets = [0, 160], sizes = [16, 32], strides = [1, 1]} : vector<16x256xf32> to vector<16x32xf32>
    %cst_198 = arith.constant dense<0.000000e+00> : vector<16x32xf32>
    %628 = tpu.matmul %615, %627, %cst_198 {dimension_numbers = #tpu.dot_dimension_numbers<[1], [0], [0], [1], [0, 0, 1, 1], [], []>} : vector<16x16xf32>, vector<16x32xf32>, vector<16x32xf32> -> vector<16x32xf32>
    %629 = arith.addf %598, %628 : vector<16x32xf32>
    %630 = tpu.concatenate %504, %629 in 0 : vector<16x32xf32>, vector<16x32xf32> -> vector<32x32xf32>
    %c25 = arith.constant 25 : index
    %c0_199 = arith.constant 0 : index
    %631 = vector.load %arg5[%c25, %c0_199] : memref<34x256xf32, #tpu.memory_space<vmem>>, vector<1x32xf32>
    %632 = vector.broadcast %631 : vector<1x32xf32> to vector<32x32xf32>
    %633 = arith.addf %630, %632 : vector<32x32xf32>
    %634 = arith.addf %349, %633 : vector<32x32xf32>
    %c26 = arith.constant 26 : index
    %c0_200 = arith.constant 0 : index
    %635 = vector.load %arg5[%c26, %c0_200] : memref<34x256xf32, #tpu.memory_space<vmem>>, vector<1x32xf32>
    %c27 = arith.constant 27 : index
    %c0_201 = arith.constant 0 : index
    %636 = vector.load %arg5[%c27, %c0_201] : memref<34x256xf32, #tpu.memory_space<vmem>>, vector<1x32xf32>
    %cst_202 = arith.constant dense<0.000000e+00> : vector<32xf32>
    %637 = vector.multi_reduction <add>, %634, %cst_202 [1] : vector<32x32xf32> to vector<32xf32>
    %638 = vector.shape_cast %637 : vector<32xf32> to vector<32x1xf32>
    %cst_203 = arith.constant 3.200000e+01 : f32
    %639 = vector.broadcast %cst_203 : f32 to vector<32x1xf32>
    %640 = arith.divf %638, %639 : vector<32x1xf32>
    %641 = vector.broadcast %640 : vector<32x1xf32> to vector<32x32xf32>
    %642 = arith.subf %634, %641 : vector<32x32xf32>
    %643 = arith.mulf %642, %642 : vector<32x32xf32>
    %cst_204 = arith.constant dense<0.000000e+00> : vector<32xf32>
    %644 = vector.multi_reduction <add>, %643, %cst_204 [1] : vector<32x32xf32> to vector<32xf32>
    %645 = vector.shape_cast %644 : vector<32xf32> to vector<32x1xf32>
    %cst_205 = arith.constant 3.200000e+01 : f32
    %646 = vector.broadcast %cst_205 : f32 to vector<32x1xf32>
    %647 = arith.divf %645, %646 : vector<32x1xf32>
    %648 = vector.broadcast %640 : vector<32x1xf32> to vector<32x32xf32>
    %649 = arith.subf %634, %648 : vector<32x32xf32>
    %cst_206 = arith.constant 9.99999974E-6 : f32
    %650 = vector.broadcast %cst_206 : f32 to vector<32x1xf32>
    %651 = arith.addf %647, %650 : vector<32x1xf32>
    %652 = math.rsqrt %651 : vector<32x1xf32>
    %653 = vector.broadcast %652 : vector<32x1xf32> to vector<32x32xf32>
    %654 = arith.mulf %649, %653 : vector<32x32xf32>
    %655 = vector.broadcast %635 : vector<1x32xf32> to vector<32x32xf32>
    %656 = arith.mulf %654, %655 : vector<32x32xf32>
    %657 = vector.broadcast %636 : vector<1x32xf32> to vector<32x32xf32>
    %658 = arith.addf %656, %657 : vector<32x32xf32>
    %c1_207 = arith.constant 1 : index
    %c0_208 = arith.constant 0 : index
    %c0_209 = arith.constant 0 : index
    %659 = vector.load %arg3[%c1_207, %c0_208, %c0_209] : memref<2x32x64xf32, #tpu.memory_space<vmem>>, vector<1x32x64xf32>
    %660 = vector.shape_cast %659 : vector<1x32x64xf32> to vector<32x64xf32>
    %cst_210 = arith.constant dense<0.000000e+00> : vector<32x64xf32>
    %661 = tpu.matmul %658, %660, %cst_210 {dimension_numbers = #tpu.dot_dimension_numbers<[1], [0], [0], [1], [0, 0, 1, 1], [], []>} : vector<32x32xf32>, vector<32x64xf32>, vector<32x64xf32> -> vector<32x64xf32>
    %c28 = arith.constant 28 : index
    %c0_211 = arith.constant 0 : index
    %662 = vector.load %arg5[%c28, %c0_211] : memref<34x256xf32, #tpu.memory_space<vmem>>, vector<1x64xf32>
    %663 = vector.broadcast %662 : vector<1x64xf32> to vector<32x64xf32>
    %664 = arith.addf %661, %663 : vector<32x64xf32>
    %cst_212 = arith.constant 0.000000e+00 : f32
    %665 = vector.broadcast %cst_212 : f32 to vector<32x64xf32>
    %666 = arith.maximumf %664, %665 : vector<32x64xf32>
    %c1_213 = arith.constant 1 : index
    %c0_214 = arith.constant 0 : index
    %c0_215 = arith.constant 0 : index
    %667 = vector.load %arg4[%c1_213, %c0_214, %c0_215] : memref<2x64x32xf32, #tpu.memory_space<vmem>>, vector<1x64x32xf32>
    %668 = vector.shape_cast %667 : vector<1x64x32xf32> to vector<64x32xf32>
    %cst_216 = arith.constant dense<0.000000e+00> : vector<32x32xf32>
    %669 = tpu.matmul %666, %668, %cst_216 {dimension_numbers = #tpu.dot_dimension_numbers<[1], [0], [0], [1], [0, 0, 1, 1], [], []>} : vector<32x64xf32>, vector<64x32xf32>, vector<32x32xf32> -> vector<32x32xf32>
    %c29 = arith.constant 29 : index
    %c0_217 = arith.constant 0 : index
    %670 = vector.load %arg5[%c29, %c0_217] : memref<34x256xf32, #tpu.memory_space<vmem>>, vector<1x32xf32>
    %671 = vector.broadcast %670 : vector<1x32xf32> to vector<32x32xf32>
    %672 = arith.addf %669, %671 : vector<32x32xf32>
    %673 = arith.addf %658, %672 : vector<32x32xf32>
    %c30 = arith.constant 30 : index
    %c0_218 = arith.constant 0 : index
    %674 = vector.load %arg5[%c30, %c0_218] : memref<34x256xf32, #tpu.memory_space<vmem>>, vector<1x32xf32>
    %c31 = arith.constant 31 : index
    %c0_219 = arith.constant 0 : index
    %675 = vector.load %arg5[%c31, %c0_219] : memref<34x256xf32, #tpu.memory_space<vmem>>, vector<1x32xf32>
    %cst_220 = arith.constant dense<0.000000e+00> : vector<32xf32>
    %676 = vector.multi_reduction <add>, %673, %cst_220 [1] : vector<32x32xf32> to vector<32xf32>
    %677 = vector.shape_cast %676 : vector<32xf32> to vector<32x1xf32>
    %cst_221 = arith.constant 3.200000e+01 : f32
    %678 = vector.broadcast %cst_221 : f32 to vector<32x1xf32>
    %679 = arith.divf %677, %678 : vector<32x1xf32>
    %680 = vector.broadcast %679 : vector<32x1xf32> to vector<32x32xf32>
    %681 = arith.subf %673, %680 : vector<32x32xf32>
    %682 = arith.mulf %681, %681 : vector<32x32xf32>
    %cst_222 = arith.constant dense<0.000000e+00> : vector<32xf32>
    %683 = vector.multi_reduction <add>, %682, %cst_222 [1] : vector<32x32xf32> to vector<32xf32>
    %684 = vector.shape_cast %683 : vector<32xf32> to vector<32x1xf32>
    %cst_223 = arith.constant 3.200000e+01 : f32
    %685 = vector.broadcast %cst_223 : f32 to vector<32x1xf32>
    %686 = arith.divf %684, %685 : vector<32x1xf32>
    %687 = vector.broadcast %679 : vector<32x1xf32> to vector<32x32xf32>
    %688 = arith.subf %673, %687 : vector<32x32xf32>
    %cst_224 = arith.constant 9.99999974E-6 : f32
    %689 = vector.broadcast %cst_224 : f32 to vector<32x1xf32>
    %690 = arith.addf %686, %689 : vector<32x1xf32>
    %691 = math.rsqrt %690 : vector<32x1xf32>
    %692 = vector.broadcast %691 : vector<32x1xf32> to vector<32x32xf32>
    %693 = arith.mulf %688, %692 : vector<32x32xf32>
    %694 = vector.broadcast %674 : vector<1x32xf32> to vector<32x32xf32>
    %695 = arith.mulf %693, %694 : vector<32x32xf32>
    %696 = vector.broadcast %675 : vector<1x32xf32> to vector<32x32xf32>
    %697 = arith.addf %695, %696 : vector<32x32xf32>
    %c32_225 = arith.constant 32 : index
    %c0_226 = arith.constant 0 : index
    %698 = vector.load %arg5[%c32_225, %c0_226] : memref<34x256xf32, #tpu.memory_space<vmem>>, vector<1x32xf32>
    %c33 = arith.constant 33 : index
    %c0_227 = arith.constant 0 : index
    %699 = vector.load %arg5[%c33, %c0_227] : memref<34x256xf32, #tpu.memory_space<vmem>>, vector<1x32xf32>
    %cst_228 = arith.constant dense<0.000000e+00> : vector<32xf32>
    %700 = vector.multi_reduction <add>, %697, %cst_228 [1] : vector<32x32xf32> to vector<32xf32>
    %701 = vector.shape_cast %700 : vector<32xf32> to vector<32x1xf32>
    %cst_229 = arith.constant 3.200000e+01 : f32
    %702 = vector.broadcast %cst_229 : f32 to vector<32x1xf32>
    %703 = arith.divf %701, %702 : vector<32x1xf32>
    %704 = vector.broadcast %703 : vector<32x1xf32> to vector<32x32xf32>
    %705 = arith.subf %697, %704 : vector<32x32xf32>
    %706 = arith.mulf %705, %705 : vector<32x32xf32>
    %cst_230 = arith.constant dense<0.000000e+00> : vector<32xf32>
    %707 = vector.multi_reduction <add>, %706, %cst_230 [1] : vector<32x32xf32> to vector<32xf32>
    %708 = vector.shape_cast %707 : vector<32xf32> to vector<32x1xf32>
    %cst_231 = arith.constant 3.200000e+01 : f32
    %709 = vector.broadcast %cst_231 : f32 to vector<32x1xf32>
    %710 = arith.divf %708, %709 : vector<32x1xf32>
    %711 = vector.broadcast %703 : vector<32x1xf32> to vector<32x32xf32>
    %712 = arith.subf %697, %711 : vector<32x32xf32>
    %cst_232 = arith.constant 9.99999974E-6 : f32
    %713 = vector.broadcast %cst_232 : f32 to vector<32x1xf32>
    %714 = arith.addf %710, %713 : vector<32x1xf32>
    %715 = math.rsqrt %714 : vector<32x1xf32>
    %716 = vector.broadcast %715 : vector<32x1xf32> to vector<32x32xf32>
    %717 = arith.mulf %712, %716 : vector<32x32xf32>
    %718 = vector.broadcast %698 : vector<1x32xf32> to vector<32x32xf32>
    %719 = arith.mulf %717, %718 : vector<32x32xf32>
    %720 = vector.broadcast %699 : vector<1x32xf32> to vector<32x32xf32>
    %721 = arith.addf %719, %720 : vector<32x32xf32>
    %c0_233 = arith.constant 0 : index
    %c256 = arith.constant 256 : index
    %722 = vector.load %arg6[%c0_233, %c256] : memref<32x384xf32, #tpu.memory_space<vmem>>, vector<32x32xf32>
    tpu.vector_store %arg6[%c0_233, %c256], %721 {strides = array<i32>} : memref<32x384xf32, #tpu.memory_space<vmem>>, vector<32x32xf32>,
    return
  }
  func.func @transform_0(%arg0: i32) -> (i32, i32) {
    %c0_i32 = arith.constant 0 : i32
    %c0_i32_0 = arith.constant 0 : i32
    return %arg0, %c0_i32 : i32, i32
  }
  func.func @transform_1(%arg0: i32) -> (i32, i32, i32) {
    %c0_i32 = arith.constant 0 : i32
    %c0_i32_0 = arith.constant 0 : i32
    %c0_i32_1 = arith.constant 0 : i32
    %c0_i32_2 = arith.constant 0 : i32
    return %c0_i32, %c0_i32_0, %c0_i32_1 : i32, i32, i32
  }
  func.func @transform_2(%arg0: i32) -> (i32, i32, i32) {
    %c0_i32 = arith.constant 0 : i32
    %c0_i32_0 = arith.constant 0 : i32
    %c0_i32_1 = arith.constant 0 : i32
    %c0_i32_2 = arith.constant 0 : i32
    return %c0_i32, %c0_i32_0, %c0_i32_1 : i32, i32, i32
  }
  func.func @transform_3(%arg0: i32) -> (i32, i32, i32) {
    %c0_i32 = arith.constant 0 : i32
    %c0_i32_0 = arith.constant 0 : i32
    %c0_i32_1 = arith.constant 0 : i32
    %c0_i32_2 = arith.constant 0 : i32
    return %c0_i32, %c0_i32_0, %c0_i32_1 : i32, i32, i32
  }
  func.func @transform_4(%arg0: i32) -> (i32, i32) {
    %c0_i32 = arith.constant 0 : i32
    %c0_i32_0 = arith.constant 0 : i32
    %c0_i32_1 = arith.constant 0 : i32
    return %c0_i32, %c0_i32_0 : i32, i32
  }
  func.func @transform_5(%arg0: i32) -> (i32, i32) {
    %c0_i32 = arith.constant 0 : i32
    %c0_i32_0 = arith.constant 0 : i32
    return %arg0, %c0_i32 : i32, i32
  }
}

</mosaic_0001>

<llo_original>
// kernel: tpu_custom_call.1
$region0: #{tpu_custom_call.1}
  #allocation0 [shape = 'u32[]', space=smem, size = 0x4, offset = 0x4, fixed_abs, tag = 'smem constant byte address 0x4 - core index']
  #allocation1 [shape = 'u32[144,128]{1,0:T(1,128)}', space=vmem, size = 0x12000, scoped, tag = 'internal scratch']
  %s0 = inlined_call_operand.hbm [shape: f32[32,32], index: 0, kind: input, shape index: {}]
  %s1 = inlined_call_operand.vmem [shape: f32[2,32,256], index: 1, kind: input, shape index: {}]
  %s2 = inlined_call_operand.vmem [shape: f32[2,32,64], index: 2, kind: input, shape index: {}]
  %s3 = inlined_call_operand.vmem [shape: f32[2,64,32], index: 3, kind: input, shape index: {}]
  %s4 = inlined_call_operand.hbm [shape: f32[34,256], index: 4, kind: input, shape index: {}]
  %s5 = inlined_call_operand.hbm [shape: f32[32,384], index: 5, kind: output, shape index: {}]
  %s6 = sld [smem:[#allocation0]]
  $region38: #{tpu_custom_call.1} parent=0
    _
  %s8 = ssub.s32 1, %s6
  %s9 = scalar_select 0, %s8, %s6
  $region1: #{tpu_custom_call.1} parent=0
    #allocation2 [shape = 'u8[16384]{0}', space=vmem, size = 0x4000, scoped, tag = 'input window, operand 0, single buffered']
    #allocation3 [shape = 's32[1]{0}', space=sflag, size = 0x4, scoped, tag = 'scoped memory for tpu_custom_call.1']
    #allocation4 [shape = 's32[1]{0}', space=sflag, size = 0x4, scoped, tag = 'scoped memory for tpu_custom_call.1']
    #allocation5 [shape = 'u8[40960]{0}', space=vmem, size = 0xa000, scoped, tag = 'input window, operand 4, single buffered']
    #allocation6 [shape = 's32[1]{0}', space=sflag, size = 0x4, scoped, tag = 'scoped memory for tpu_custom_call.1']
    #allocation7 [shape = 'u8[49152]{0}', space=vmem, size = 0xc000, scoped, tag = 'output window, operand 0, single buffered']
    %10 = vsyncpa [#allocation3], 0
    %11 = vsyncpa [#allocation6], 0
    %12 = vsyncpa [#allocation4], 0
    // Predicated region
    $region2: #{tpu_custom_call.1} parent=1 // pred_check
      _
    $region3: #{tpu_custom_call.1} parent=1 // pred_check_branch
      %14 = sbr.rel (0) target = $region5
    $region4: #{tpu_custom_call.1} parent=1 // pred_region
      %s16 = ssub.s32 512, 512
      %17 = vsyncadd [#allocation3], %s16
      %s18 = sshll.u32 [#allocation2], 4
      %s19 = int_to_ptr.vmem [resolvable:$true] %s18
      %24 = dma.hbm_to_vmem [thread:$0]  %s0, 512, %s19, [#allocation3], 128, 128, 8
    $region5: #{tpu_custom_call.1} parent=1 // pred_fallthru
      _
    // Predicated region
    $region6: #{tpu_custom_call.1} parent=1 // pred_check
      _
    $region7: #{tpu_custom_call.1} parent=1 // pred_check_branch
      %26 = sbr.rel (0) target = $region9
    $region8: #{tpu_custom_call.1} parent=1 // pred_region
      _
    $region9: #{tpu_custom_call.1} parent=1 // pred_fallthru
      _
    // Predicated region
    $region10: #{tpu_custom_call.1} parent=1 // pred_check
      _
    $region11: #{tpu_custom_call.1} parent=1 // pred_check_branch
      %28 = sbr.rel (0) target = $region13
    $region12: #{tpu_custom_call.1} parent=1 // pred_region
      _
    $region13: #{tpu_custom_call.1} parent=1 // pred_fallthru
      _
    // Predicated region
    $region14: #{tpu_custom_call.1} parent=1 // pred_check
      _
    $region15: #{tpu_custom_call.1} parent=1 // pred_check_branch
      %30 = sbr.rel (0) target = $region17
    $region16: #{tpu_custom_call.1} parent=1 // pred_region
      _
    $region17: #{tpu_custom_call.1} parent=1 // pred_fallthru
      _
    // Predicated region
    $region18: #{tpu_custom_call.1} parent=1 // pred_check
      _
    $region19: #{tpu_custom_call.1} parent=1 // pred_check_branch
      %32 = sbr.rel (0) target = $region21
    $region20: #{tpu_custom_call.1} parent=1 // pred_region
      %s34 = ssub.s32 1280, 1280
      %35 = vsyncadd [#allocation6], %s34
      %s36 = sshll.u32 [#allocation5], 4
      %s37 = int_to_ptr.vmem [resolvable:$true] %s36
      %42 = dma.hbm_to_vmem [thread:$0]  %s4, 1280, %s37, [#allocation6], 256, 256, 16
    $region21: #{tpu_custom_call.1} parent=1 // pred_fallthru
      _
    // Predicated region
    $region22: #{tpu_custom_call.1} parent=1 // pred_check
      _
    $region23: #{tpu_custom_call.1} parent=1 // pred_check_branch
      %44 = sbr.rel (0) target = $region25
    $region24: #{tpu_custom_call.1} parent=1 // pred_region
      %45 = dma.done [#allocation3], 512
    $region25: #{tpu_custom_call.1} parent=1 // pred_fallthru
      _
    // Predicated region
    $region26: #{tpu_custom_call.1} parent=1 // pred_check
      _
    $region27: #{tpu_custom_call.1} parent=1 // pred_check_branch
      %47 = sbr.rel (0) target = $region29
    $region28: #{tpu_custom_call.1} parent=1 // pred_region
      %48 = dma.done [#allocation6], 1280
    $region29: #{tpu_custom_call.1} parent=1 // pred_fallthru
      _
    %v49 = vld [vmem:[#allocation2] sm:$0xff]
    %v50 = vld [vmem:[#allocation2 + $0x8] sm:$0xff]
    %v51 = vld [vmem:[#allocation2 + $0x10] sm:$0xff]
    %v52 = vld [vmem:[#allocation2 + $0x18] sm:$0xff]
    %v53 = vld [vmem:[#allocation5] sm:$0xff]
    %v54 = vld [vmem:[#allocation5 + $0x10] sm:$0xff]
    %v55 = vld [vmem:[%s1] sm:$0xff]
    %v56 = vld [vmem:[%s1 + $0x8] sm:$0xff]
    %v57 = vld [vmem:[%s1 + $0x10] sm:$0xff]
    %v58 = vld [vmem:[%s1 + $0x18] sm:$0xff]
    %v59 = vld [vmem:[%s1 + $0x20] sm:$0xff]
    %v60 = vld [vmem:[%s1 + $0x28] sm:$0xff]
    %v61 = vld [vmem:[%s1 + $0x30] sm:$0xff]
    %v62 = vld [vmem:[%s1 + $0x38] sm:$0xff]
    %s63 = scalar_lea.vmem [#allocation5], 32
    %v64 = vld [vmem:[%s63] ss:$8 sm:$0x3]
    %v66 = vlaneseq
    %v67 = vshrl.u32 %v66, 7
    %v68 = vsub.s32 0, %v67
    %v69 = vrot.slane %v64, %v68
    %v70 = vlaneseq
    %v71 = vshrl.u32 %v70, 7
    %v72 = vsub.s32 1, %v71
    %v73 = vrot.slane %v64, %v72
    %vm76 = vcmask 261120
    %v78 = vsel %vm76, %v49, 0
    %v81 = vsel %vm76, %v50, 0
    %v84 = vsel %vm76, %v51, 0
    %v87 = vsel %vm76, %v52, 0
    %89 = vmatprep.subr.mxu0 0.0
    %90 = vmatpush1.msra.mxu0 0.0
    %91 = vmatprep.subr.mxu0 0.0
    %92 = vmatpush1.msra.mxu0 0.0
    %93 = vmatprep.subr.mxu0 0.0
    %94 = vmatpush1.msra.mxu0 0.0
    %95 = vmatprep.subr.mxu0 0.0
    %96 = vmatpush1.msra.mxu0 0.0
    %97 = vmatprep.subr.mxu0 0.0
    %98 = vmatpush1.msra.mxu0 0.0
    %99 = vmatprep.subr.mxu0 0.0
    %100 = vmatpush1.msra.mxu0 0.0
    %101 = vmatprep.subr.mxu0 0.0
    %102 = vmatpush1.msra.mxu0 0.0
    %103 = vmatprep.subr.mxu0 0.0
    %104 = vmatpush1.msra.mxu0 0.0
    %105 = vmatprep.subr.mxu0 0.0
    %106 = vmatpush1.msra.mxu0 0.0
    %107 = vmatprep.subr.mxu0 0.0
    %108 = vmatpush1.msra.mxu0 0.0
    %109 = vmatprep.subr.mxu0 0.0
    %110 = vmatpush1.msra.mxu0 0.0
    %111 = vmatprep.subr.mxu0 0.0
    %112 = vmatpush1.msra.mxu0 0.0
    %113 = vmatprep.subr.mxu0 %v62
    %114 = vmatpush1.msra.mxu0 %v61
    %115 = vmatprep.subr.mxu0 %v60
    %116 = vmatpush1.msra.mxu0 %v59
    %117 = vmatprep.subr.mxu0 %v58
    %118 = vmatpush1.msra.mxu0 %v57
    %119 = vmatprep.subr.mxu0 %v56
    %120 = vmatpush1.msra.mxu0 %v55
    %121 = vmatprep.subr.mxu0 0.0
    %122 = vmatpush2.msra.mxu0 0.0
    %123 = vmatprep.subr.mxu0 0.0
    %124 = vmatpush2.msra.mxu0 0.0
    %125 = vmatprep.subr.mxu0 0.0
    %126 = vmatpush2.msra.mxu0 0.0
    %127 = vmatprep.subr.mxu0 0.0
    %128 = vmatpush2.msra.mxu0 0.0
    %129 = vmatprep.subr.mxu0 0.0
    %130 = vmatpush2.msra.mxu0 0.0
    %131 = vmatprep.subr.mxu0 0.0
    %132 = vmatpush2.msra.mxu0 0.0
    %133 = vmatprep.subr.mxu0 0.0
    %134 = vmatpush2.msra.mxu0 0.0
    %135 = vmatprep.subr.mxu0 0.0
    %136 = vmatpush2.msra.mxu0 0.0
    %137 = vmatprep.subr.mxu0 0.0
    %138 = vmatpush2.msra.mxu0 0.0
    %139 = vmatprep.subr.mxu0 0.0
    %140 = vmatpush2.msra.mxu0 0.0
    %141 = vmatprep.subr.mxu0 0.0
    %142 = vmatpush2.msra.mxu0 0.0
    %143 = vmatprep.subr.mxu0 0.0
    %144 = vmatpush2.msra.mxu0 0.0
    %145 = vmatprep.subr.mxu0 0.0
    %146 = vmatpush2.msra.mxu0 0.0
    %147 = vmatprep.subr.mxu0 0.0
    %148 = vmatpush2.msra.mxu0 0.0
    %149 = vmatprep.subr.mxu0 0.0
    %150 = vmatpush2.msra.mxu0 0.0
    %151 = vmatprep.subr.mxu0 0.0
    %152 = vmatpush2.msra.mxu0 0.0
    %153 = vmatprep.mubr.f32.mxu0 0.0
    %154 = vmatmul.mubr.f32.gmra.mxu0 %v78
    %v155 = vpop.f32.mrf.mxu0
    %v156 = vadd.f32 %v69, %v155
    %v157 = vpop.f32.mrf.mxu0
    %v158 = vadd.f32 %v73, %v157
    %159 = vmatprep.mubr.f32.mxu0 0.0
    %160 = vmatmul.mubr.f32.gmra.mxu0 %v81
    %v161 = vpop.f32.mrf.mxu0
    %v162 = vadd.f32 %v69, %v161
    %v163 = vpop.f32.mrf.mxu0
    %v164 = vadd.f32 %v73, %v163
    %165 = vmatprep.mubr.f32.mxu0 0.0
    %166 = vmatmul.mubr.f32.gmra.mxu0 %v84
    %v167 = vpop.f32.mrf.mxu0
    %v168 = vadd.f32 %v69, %v167
    %v169 = vpop.f32.mrf.mxu0
    %v170 = vadd.f32 %v73, %v169
    %171 = vmatprep.mubr.f32.mxu0 0.0
    %172 = vmatmul.mubr.f32.gmra.mxu0 %v87
    %v173 = vpop.f32.mrf.mxu0
    %v174 = vadd.f32 %v69, %v173
    %v175 = vpop.f32.mrf.mxu0
    %v176 = vadd.f32 %v73, %v175
    %177 = vdwg.mxu0
    %v178 = vmul.f32 %v158, -5.0
    %v179 = vmul.f32 %v164, -5.0
    %v180 = vmul.f32 %v170, -5.0
    %v181 = vmul.f32 %v176, -5.0
    %v182 = vmul.f32 %v178, 1.442695
    %v183 = vpow.pop %v182
    %v184 = vmul.f32 %v179, 1.442695
    %v185 = vpow.pop %v184
    %v186 = vmul.f32 %v180, 1.442695
    %v187 = vpow.pop %v186
    %v188 = vmul.f32 %v181, 1.442695
    %v189 = vpow.pop %v188
    %v190 = vadd.f32 %v183, 1.0
    %v191 = vadd.f32 %v185, 1.0
    %v192 = vadd.f32 %v187, 1.0
    %v193 = vadd.f32 %v189, 1.0
    %v194 = vrcp.pop %v190
    %v195 = vrcp.pop %v191
    %v196 = vrcp.pop %v192
    %v197 = vrcp.pop %v193
    %v198 = vmul.f32 %v190, %v194
    %v199 = vmul.f32 %v191, %v195
    %v200 = vmul.f32 %v192, %v196
    %v201 = vmul.f32 %v193, %v197
    %v202 = vsub.f32 2.0, %v198
    %v203 = vsub.f32 2.0, %v199
    %v204 = vsub.f32 2.0, %v200
    %v205 = vsub.f32 2.0, %v201
    %v206 = vmul.f32 %v194, %v202
    %v207 = vmul.f32 %v195, %v203
    %v208 = vmul.f32 %v196, %v204
    %v209 = vmul.f32 %v197, %v205
    %v210 = vadd.f32 %v206, 1e-05
    %v211 = vadd.f32 %v207, 1e-05
    %v212 = vadd.f32 %v208, 1e-05
    %v213 = vadd.f32 %v209, 1e-05
    %v214 = vmul.f32 %v210, 1.0986123
    %v215 = vmul.f32 %v211, 1.0986123
    %v216 = vmul.f32 %v212, 1.0986123
    %v217 = vmul.f32 %v213, 1.0986123
    %v218 = vmul.f32 %v214, 1.442695
    %v219 = vpow.pop %v218
    %v220 = vmul.f32 %v215, 1.442695
    %v221 = vpow.pop %v220
    %v222 = vmul.f32 %v216, 1.442695
    %v223 = vpow.pop %v222
    %v224 = vmul.f32 %v217, 1.442695
    %v225 = vpow.pop %v224
    %v226 = vsub.f32 %v219, 1.0
    %v227 = vsub.f32 %v221, 1.0
    %v228 = vsub.f32 %v223, 1.0
    %v229 = vsub.f32 %v225, 1.0
    %234 = vrot.lane.b32.xlu0 %v226, 96
    %v235 = vpop.permute.xlu0 %234
    %236 = vrot.lane.b32.xlu0 %v227, 96
    %v237 = vpop.permute.xlu0 %236
    %238 = vrot.lane.b32.xlu0 %v228, 96
    %v239 = vpop.permute.xlu0 %238
    %240 = vrot.lane.b32.xlu0 %v229, 96
    %v241 = vpop.permute.xlu0 %240
    %vm246 = vcmask 294144
    %247 = vst.msk [vmem:[#allocation7 + $0x10] sm:$0xff] %vm246, %v235
    %248 = vst.msk [vmem:[#allocation7 + $0x28] sm:$0xff] %vm246, %v237
    %249 = vst.msk [vmem:[#allocation7 + $0x40] sm:$0xff] %vm246, %v239
    %250 = vst.msk [vmem:[#allocation7 + $0x58] sm:$0xff] %vm246, %v241
    %v251 = vrcp.pop %v226
    %v252 = vrcp.pop %v227
    %v253 = vrcp.pop %v228
    %v254 = vrcp.pop %v229
    %v255 = vmul.f32 %v226, %v251
    %v256 = vmul.f32 %v227, %v252
    %v257 = vmul.f32 %v228, %v253
    %v258 = vmul.f32 %v229, %v254
    %v259 = vsub.f32 2.0, %v255
    %v260 = vsub.f32 2.0, %v256
    %v261 = vsub.f32 2.0, %v257
    %v262 = vsub.f32 2.0, %v258
    %v263 = vmul.f32 %v251, %v259
    %v264 = vmul.f32 %v252, %v260
    %v265 = vmul.f32 %v253, %v261
    %v266 = vmul.f32 %v254, %v262
    %269 = vrot.lane.b32.xlu0 %v156, 96
    %v270 = vpop.permute.xlu0 %269
    %271 = vrot.lane.b32.xlu0 %v162, 96
    %v272 = vpop.permute.xlu0 %271
    %vm273 = vcmask 64512
    %v274 = vsel %vm273, %v156, 0
    %v276 = vsel %vm273, %v162, 0
    %v278 = vsel %vm273, %v270, 0
    %v280 = vsel %vm273, %v272, 0
    %282 = vmatprep.subr.mxu0 0.0
    %283 = vmatpush1.xpose.msra.mxu0 0.0
    %284 = vmatprep.subr.mxu0 0.0
    %285 = vmatpush1.xpose.msra.mxu0 0.0
    %286 = vmatprep.subr.mxu0 0.0
    %287 = vmatpush1.xpose.msra.mxu0 0.0
    %288 = vmatprep.subr.mxu0 0.0
    %289 = vmatpush1.xpose.msra.mxu0 0.0
    %290 = vmatprep.subr.mxu0 0.0
    %291 = vmatpush1.xpose.msra.mxu0 0.0
    %292 = vmatprep.subr.mxu0 0.0
    %293 = vmatpush1.xpose.msra.mxu0 0.0
    %294 = vmatprep.subr.mxu0 0.0
    %295 = vmatpush1.xpose.msra.mxu0 0.0
    %296 = vmatprep.subr.mxu0 0.0
    %297 = vmatpush1.xpose.msra.mxu0 0.0
    %298 = vmatprep.subr.mxu0 0.0
    %299 = vmatpush1.xpose.msra.mxu0 0.0
    %300 = vmatprep.subr.mxu0 0.0
    %301 = vmatpush1.xpose.msra.mxu0 0.0
    %302 = vmatprep.subr.mxu0 0.0
    %303 = vmatpush1.xpose.msra.mxu0 0.0
    %304 = vmatprep.subr.mxu0 0.0
    %305 = vmatpush1.xpose.msra.mxu0 0.0
    %306 = vmatprep.subr.mxu0 0.0
    %307 = vmatpush1.xpose.msra.mxu0 0.0
    %308 = vmatprep.subr.mxu0 0.0
    %309 = vmatpush1.xpose.msra.mxu0 0.0
    %310 = vmatprep.subr.mxu0 0.0
    %311 = vmatpush1.xpose.msra.mxu0 %v280
    %312 = vmatprep.subr.mxu0 0.0
    %313 = vmatpush1.xpose.msra.mxu0 %v278
    %314 = vmatprep.subr.mxu0 0.0
    %315 = vmatpush2.xpose.msra.mxu0 0.0
    %316 = vmatprep.subr.mxu0 0.0
    %317 = vmatpush2.xpose.msra.mxu0 0.0
    %318 = vmatprep.subr.mxu0 0.0
    %319 = vmatpush2.xpose.msra.mxu0 0.0
    %320 = vmatprep.subr.mxu0 0.0
    %321 = vmatpush2.xpose.msra.mxu0 0.0
    %322 = vmatprep.subr.mxu0 0.0
    %323 = vmatpush2.xpose.msra.mxu0 0.0
    %324 = vmatprep.subr.mxu0 0.0
    %325 = vmatpush2.xpose.msra.mxu0 0.0
    %326 = vmatprep.subr.mxu0 0.0
    %327 = vmatpush2.xpose.msra.mxu0 0.0
    %328 = vmatprep.subr.mxu0 0.0
    %329 = vmatpush2.xpose.msra.mxu0 0.0
    %330 = vmatprep.subr.mxu0 0.0
    %331 = vmatpush2.xpose.msra.mxu0 0.0
    %332 = vmatprep.subr.mxu0 0.0
    %333 = vmatpush2.xpose.msra.mxu0 0.0
    %334 = vmatprep.subr.mxu0 0.0
    %335 = vmatpush2.xpose.msra.mxu0 0.0
    %336 = vmatprep.subr.mxu0 0.0
    %337 = vmatpush2.xpose.msra.mxu0 0.0
    %338 = vmatprep.subr.mxu0 0.0
    %339 = vmatpush2.xpose.msra.mxu0 0.0
    %340 = vmatprep.subr.mxu0 0.0
    %341 = vmatpush2.xpose.msra.mxu0 0.0
    %342 = vmatprep.subr.mxu0 0.0
    %343 = vmatpush2.xpose.msra.mxu0 0.0
    %344 = vmatprep.subr.mxu0 0.0
    %345 = vmatpush2.xpose.msra.mxu0 0.0
    %346 = vmatprep.mubr.f32.mxu0 0.0
    %347 = vmatmul.mubr.f32.gmra.mxu0 %v274
    %v348 = vpop.f32.mrf.mxu0
    %v349 = vadd.f32 0.0, %v348
    %v350 = vpop.f32.mrf.mxu0
    %351 = vmatprep.mubr.f32.mxu0 0.0
    %352 = vmatmul.mubr.f32.gmra.mxu0 %v276
    %v353 = vpop.f32.mrf.mxu0
    %v354 = vadd.f32 0.0, %v353
    %v355 = vpop.f32.mrf.mxu0
    %356 = vdwg.mxu0
    %vm357 = vcmask 130048
    %v358 = vsel %vm357, %v349, -inf
    %359 = vmax.xlane.f32.xlu0 %v358
    %v360 = vpop.xlane.xlu0 %359
    %v361 = vsel %vm357, %v354, -inf
    %362 = vmax.xlane.f32.xlu0 %v361
    %v363 = vpop.xlane.xlu0 %362
    %v364 = vsub.f32 %v349, %v360
    %v365 = vsub.f32 %v354, %v363
    %v366 = vmul.f32 %v364, 1.442695
    %v367 = vpow.pop %v366
    %v368 = vmul.f32 %v365, 1.442695
    %v369 = vpow.pop %v368
    %v370 = vsel %vm357, %v367, 0.0
    %371 = vadd.xlane.f32.xlu0 %v370
    %v372 = vpop.xlane.xlu0 %371
    %v373 = vsel %vm357, %v369, 0.0
    %374 = vadd.xlane.f32.xlu0 %v373
    %v375 = vpop.xlane.xlu0 %374
    %v376 = vrcp.pop %v372
    %v377 = vrcp.pop %v375
    %v378 = vmul.f32 %v372, %v376
    %v379 = vmul.f32 %v375, %v377
    %v380 = vsub.f32 2.0, %v378
    %v381 = vsub.f32 2.0, %v379
    %v382 = vmul.f32 %v376, %v380
    %v383 = vmul.f32 %v377, %v381
    %v384 = vmul.f32 %v367, %v382
    %v385 = vmul.f32 %v369, %v383
    %386 = vst.msk [vmem:[#allocation7] sm:$0xff] %vm357, %v384
    %387 = vst.msk [vmem:[#allocation7 + $0x18] sm:$0xff] %vm357, %v385
    %v388 = vmul.f32 %v263, 0.3989423
    %v389 = vmul.f32 %v264, 0.3989423
    %v390 = vmul.f32 %v263, %v263
    %v391 = vmul.f32 %v264, %v264
    %393 = vset.pattern.permute.xlu0 64
    %394 = vperm.xlu0 %393, %v390
    %v395 = vpop.permute.xlu0 %394
    %398 = vset.pattern.permute.xlu0 64
    %399 = vperm.xlu0 %398, %v391
    %v400 = vpop.permute.xlu0 %399
    %v402 = vmul.f32 %v53, %v395
    %v403 = vmul.f32 %v54, %v400
    %v404 = vmul.f32 %v402, 1.442695
    %v405 = vpow.pop %v404
    %v406 = vmul.f32 %v403, 1.442695
    %v407 = vpow.pop %v406
    %409 = vset.pattern.permute.xlu0 64
    %410 = vperm.xlu0 %409, %v388
    %v411 = vpop.permute.xlu0 %410
    %414 = vset.pattern.permute.xlu0 64
    %415 = vperm.xlu0 %414, %v389
    %v416 = vpop.permute.xlu0 %415
    %v418 = vmul.f32 %v411, %v405
    %v419 = vmul.f32 %v416, %v407
    %420 = vst.msk [vmem:[#allocation7 + $0x8] sm:$0xff] %vm357, %v418
    %421 = vst.msk [vmem:[#allocation7 + $0x20] sm:$0xff] %vm357, %v419
    %422 = vrot.lane.b32.xlu0 %v156, 120
    %v423 = vpop.permute.xlu0 %422
    %424 = vrot.lane.b32.xlu0 %v162, 120
    %v425 = vpop.permute.xlu0 %424
    %426 = vrot.lane.b32.xlu0 %v156, 88
    %v427 = vpop.permute.xlu0 %426
    %428 = vrot.lane.b32.xlu0 %v162, 88
    %v429 = vpop.permute.xlu0 %428
    %v430 = vsel %vm273, %v423, 0
    %v432 = vsel %vm273, %v425, 0
    %v434 = vsel %vm273, %v427, 0
    %v436 = vsel %vm273, %v429, 0
    %438 = vmatprep.subr.mxu0 0.0
    %439 = vmatpush1.xpose.msra.mxu0 0.0
    %440 = vmatprep.subr.mxu0 0.0
    %441 = vmatpush1.xpose.msra.mxu0 0.0
    %442 = vmatprep.subr.mxu0 0.0
    %443 = vmatpush1.xpose.msra.mxu0 0.0
    %444 = vmatprep.subr.mxu0 0.0
    %445 = vmatpush1.xpose.msra.mxu0 0.0
    %446 = vmatprep.subr.mxu0 0.0
    %447 = vmatpush1.xpose.msra.mxu0 0.0
    %448 = vmatprep.subr.mxu0 0.0
    %449 = vmatpush1.xpose.msra.mxu0 0.0
    %450 = vmatprep.subr.mxu0 0.0
    %451 = vmatpush1.xpose.msra.mxu0 0.0
    %452 = vmatprep.subr.mxu0 0.0
    %453 = vmatpush1.xpose.msra.mxu0 0.0
    %454 = vmatprep.subr.mxu0 0.0
    %455 = vmatpush1.xpose.msra.mxu0 0.0
    %456 = vmatprep.subr.mxu0 0.0
    %457 = vmatpush1.xpose.msra.mxu0 0.0
    %458 = vmatprep.subr.mxu0 0.0
    %459 = vmatpush1.xpose.msra.mxu0 0.0
    %460 = vmatprep.subr.mxu0 0.0
    %461 = vmatpush1.xpose.msra.mxu0 0.0
    %462 = vmatprep.subr.mxu0 0.0
    %463 = vmatpush1.xpose.msra.mxu0 0.0
    %464 = vmatprep.subr.mxu0 0.0
    %465 = vmatpush1.xpose.msra.mxu0 0.0
    %466 = vmatprep.subr.mxu0 0.0
    %467 = vmatpush1.xpose.msra.mxu0 %v436
    %468 = vmatprep.subr.mxu0 0.0
    %469 = vmatpush1.xpose.msra.mxu0 %v434
    %470 = vmatprep.subr.mxu0 0.0
    %471 = vmatpush2.xpose.msra.mxu0 0.0
    %472 = vmatprep.subr.mxu0 0.0
    %473 = vmatpush2.xpose.msra.mxu0 0.0
    %474 = vmatprep.subr.mxu0 0.0
    %475 = vmatpush2.xpose.msra.mxu0 0.0
    %476 = vmatprep.subr.mxu0 0.0
    %477 = vmatpush2.xpose.msra.mxu0 0.0
    %478 = vmatprep.subr.mxu0 0.0
    %479 = vmatpush2.xpose.msra.mxu0 0.0
    %480 = vmatprep.subr.mxu0 0.0
    %481 = vmatpush2.xpose.msra.mxu0 0.0
    %482 = vmatprep.subr.mxu0 0.0
    %483 = vmatpush2.xpose.msra.mxu0 0.0
    %484 = vmatprep.subr.mxu0 0.0
    %485 = vmatpush2.xpose.msra.mxu0 0.0
    %486 = vmatprep.subr.mxu0 0.0
    %487 = vmatpush2.xpose.msra.mxu0 0.0
    %488 = vmatprep.subr.mxu0 0.0
    %489 = vmatpush2.xpose.msra.mxu0 0.0
    %490 = vmatprep.subr.mxu0 0.0
    %491 = vmatpush2.xpose.msra.mxu0 0.0
    %492 = vmatprep.subr.mxu0 0.0
    %493 = vmatpush2.xpose.msra.mxu0 0.0
    %494 = vmatprep.subr.mxu0 0.0
    %495 = vmatpush2.xpose.msra.mxu0 0.0
    %496 = vmatprep.subr.mxu0 0.0
    %497 = vmatpush2.xpose.msra.mxu0 0.0
    %498 = vmatprep.subr.mxu0 0.0
    %499 = vmatpush2.xpose.msra.mxu0 0.0
    %500 = vmatprep.subr.mxu0 0.0
    %501 = vmatpush2.xpose.msra.mxu0 0.0
    %502 = vmatprep.mubr.f32.mxu0 0.0
    %503 = vmatmul.mubr.f32.gmra.mxu0 %v430
    %v504 = vpop.f32.mrf.mxu0
    %v505 = vadd.f32 0.0, %v504
    %v506 = vpop.f32.mrf.mxu0
    %507 = vmatprep.mubr.f32.mxu0 0.0
    %508 = vmatmul.mubr.f32.gmra.mxu0 %v432
    %v509 = vpop.f32.mrf.mxu0
    %v510 = vadd.f32 0.0, %v509
    %v511 = vpop.f32.mrf.mxu0
    %512 = vdwg.mxu0
    %v513 = vsel %vm357, %v505, -inf
    %514 = vmax.xlane.f32.xlu0 %v513
    %v515 = vpop.xlane.xlu0 %514
    %v516 = vsel %vm357, %v510, -inf
    %517 = vmax.xlane.f32.xlu0 %v516
    %v518 = vpop.xlane.xlu0 %517
    %v519 = vsub.f32 %v505, %v515
    %v520 = vsub.f32 %v510, %v518
    %v521 = vmul.f32 %v519, 1.442695
    %v522 = vpow.pop %v521
    %v523 = vmul.f32 %v520, 1.442695
    %v524 = vpow.pop %v523
    %v525 = vsel %vm357, %v522, 0.0
    %526 = vadd.xlane.f32.xlu0 %v525
    %v527 = vpop.xlane.xlu0 %526
    %v528 = vsel %vm357, %v524, 0.0
    %529 = vadd.xlane.f32.xlu0 %v528
    %v530 = vpop.xlane.xlu0 %529
    %v531 = vrcp.pop %v527
    %v532 = vrcp.pop %v530
    %v533 = vmul.f32 %v527, %v531
    %v534 = vmul.f32 %v530, %v532
    %v535 = vsub.f32 2.0, %v533
    %v536 = vsub.f32 2.0, %v534
    %v537 = vmul.f32 %v531, %v535
    %v538 = vmul.f32 %v532, %v536
    %v539 = vmul.f32 %v522, %v537
    %v540 = vmul.f32 %v524, %v538
    %543 = vrot.lane.b32.xlu0 %v539, 16
    %v544 = vpop.permute.xlu0 %543
    %545 = vrot.lane.b32.xlu0 %v540, 16
    %v546 = vpop.permute.xlu0 %545
    %vm549 = vcmask 261248
    %550 = vst.msk [vmem:[#allocation7] sm:$0xff] %vm549, %v544
    %551 = vst.msk [vmem:[#allocation7 + $0x18] sm:$0xff] %vm549, %v546
    %552 = vset.pattern.permute.xlu0 65
    %553 = vperm.xlu0 %552, %v390
    %v554 = vpop.permute.xlu0 %553
    %556 = vset.pattern.permute.xlu0 65
    %557 = vperm.xlu0 %556, %v391
    %v558 = vpop.permute.xlu0 %557
    %v560 = vmul.f32 %v53, %v554
    %v561 = vmul.f32 %v54, %v558
    %v562 = vmul.f32 %v560, 1.442695
    %v563 = vpow.pop %v562
    %v564 = vmul.f32 %v561, 1.442695
    %v565 = vpow.pop %v564
    %566 = vset.pattern.permute.xlu0 65
    %567 = vperm.xlu0 %566, %v388
    %v568 = vpop.permute.xlu0 %567
    %570 = vset.pattern.permute.xlu0 65
    %571 = vperm.xlu0 %570, %v389
    %v572 = vpop.permute.xlu0 %571
    %v574 = vmul.f32 %v568, %v563
    %v575 = vmul.f32 %v572, %v565
    %578 = vrot.lane.b32.xlu0 %v574, 16
    %v579 = vpop.permute.xlu0 %578
    %580 = vrot.lane.b32.xlu0 %v575, 16
    %v581 = vpop.permute.xlu0 %580
    %584 = vst.msk [vmem:[#allocation7 + $0x8] sm:$0xff] %vm549, %v579
    %585 = vst.msk [vmem:[#allocation7 + $0x20] sm:$0xff] %vm549, %v581
    %586 = vrot.lane.b32.xlu0 %v156, 32
    %v587 = vpop.permute.xlu0 %586
    %588 = vrot.lane.b32.xlu0 %v162, 32
    %v589 = vpop.permute.xlu0 %588
    %v592 = vsel %vm357, %v539, 0
    %v594 = vsel %vm357, %v540, 0
    %596 = vmatprep.subr.mxu0 0.0
    %597 = vmatpush1.msra.mxu0 0.0
    %598 = vmatprep.subr.mxu0 0.0
    %599 = vmatpush1.msra.mxu0 0.0
    %600 = vmatprep.subr.mxu0 0.0
    %601 = vmatpush1.msra.mxu0 0.0
    %602 = vmatprep.subr.mxu0 0.0
    %603 = vmatpush1.msra.mxu0 0.0
    %604 = vmatprep.subr.mxu0 0.0
    %605 = vmatpush1.msra.mxu0 0.0
    %606 = vmatprep.subr.mxu0 0.0
    %607 = vmatpush1.msra.mxu0 0.0
    %608 = vmatprep.subr.mxu0 0.0
    %609 = vmatpush1.msra.mxu0 0.0
    %610 = vmatprep.subr.mxu0 0.0
    %611 = vmatpush1.msra.mxu0 0.0
    %612 = vmatprep.subr.mxu0 0.0
    %613 = vmatpush1.msra.mxu0 0.0
    %614 = vmatprep.subr.mxu0 0.0
    %615 = vmatpush1.msra.mxu0 0.0
    %616 = vmatprep.subr.mxu0 0.0
    %617 = vmatpush1.msra.mxu0 0.0
    %618 = vmatprep.subr.mxu0 0.0
    %619 = vmatpush1.msra.mxu0 0.0
    %620 = vmatprep.subr.mxu0 0.0
    %621 = vmatpush1.msra.mxu0 0.0
    %622 = vmatprep.subr.mxu0 0.0
    %623 = vmatpush1.msra.mxu0 0.0
    %624 = vmatprep.subr.mxu0 0.0
    %625 = vmatpush1.msra.mxu0 %v589
    %626 = vmatprep.subr.mxu0 0.0
    %627 = vmatpush1.msra.mxu0 %v587
    %628 = vmatprep.subr.mxu0 0.0
    %629 = vmatpush2.msra.mxu0 0.0
    %630 = vmatprep.subr.mxu0 0.0
    %631 = vmatpush2.msra.mxu0 0.0
    %632 = vmatprep.subr.mxu0 0.0
    %633 = vmatpush2.msra.mxu0 0.0
    %634 = vmatprep.subr.mxu0 0.0
    %635 = vmatpush2.msra.mxu0 0.0
    %636 = vmatprep.subr.mxu0 0.0
    %637 = vmatpush2.msra.mxu0 0.0
    %638 = vmatprep.subr.mxu0 0.0
    %639 = vmatpush2.msra.mxu0 0.0
    %640 = vmatprep.subr.mxu0 0.0
    %641 = vmatpush2.msra.mxu0 0.0
    %642 = vmatprep.subr.mxu0 0.0
    %643 = vmatpush2.msra.mxu0 0.0
    %644 = vmatprep.subr.mxu0 0.0
    %645 = vmatpush2.msra.mxu0 0.0
    %646 = vmatprep.subr.mxu0 0.0
    %647 = vmatpush2.msra.mxu0 0.0
    %648 = vmatprep.subr.mxu0 0.0
    %649 = vmatpush2.msra.mxu0 0.0
    %650 = vmatprep.subr.mxu0 0.0
    %651 = vmatpush2.msra.mxu0 0.0
    %652 = vmatprep.subr.mxu0 0.0
    %653 = vmatpush2.msra.mxu0 0.0
    %654 = vmatprep.subr.mxu0 0.0
    %655 = vmatpush2.msra.mxu0 0.0
    %656 = vmatprep.subr.mxu0 0.0
    %657 = vmatpush2.msra.mxu0 0.0
    %658 = vmatprep.subr.mxu0 0.0
    %659 = vmatpush2.msra.mxu0 0.0
    %660 = vmatprep.mubr.f32.mxu0 0.0
    %661 = vmatmul.mubr.f32.gmra.mxu0 %v592
    %v662 = vpop.f32.mrf.mxu0
    %v663 = vadd.f32 0.0, %v662
    %v664 = vpop.f32.mrf.mxu0
    %665 = vmatprep.mubr.f32.mxu0 0.0
    %666 = vmatmul.mubr.f32.gmra.mxu0 %v594
    %v667 = vpop.f32.mrf.mxu0
    %v668 = vadd.f32 0.0, %v667
    %v669 = vpop.f32.mrf.mxu0
    %670 = vdwg.mxu0
    %671 = vrot.lane.b32.xlu0 %v156, 64
    %v672 = vpop.permute.xlu0 %671
    %673 = vrot.lane.b32.xlu0 %v162, 64
    %v674 = vpop.permute.xlu0 %673
    %v678 = vsel %vm357, %v384, 0
    %v681 = vsel %vm357, %v385, 0
    %683 = vmatprep.subr.mxu0 0.0
    %684 = vmatpush1.msra.mxu0 0.0
    %685 = vmatprep.subr.mxu0 0.0
    %686 = vmatpush1.msra.mxu0 0.0
    %687 = vmatprep.subr.mxu0 0.0
    %688 = vmatpush1.msra.mxu0 0.0
    %689 = vmatprep.subr.mxu0 0.0
    %690 = vmatpush1.msra.mxu0 0.0
    %691 = vmatprep.subr.mxu0 0.0
    %692 = vmatpush1.msra.mxu0 0.0
    %693 = vmatprep.subr.mxu0 0.0
    %694 = vmatpush1.msra.mxu0 0.0
    %695 = vmatprep.subr.mxu0 0.0
    %696 = vmatpush1.msra.mxu0 0.0
    %697 = vmatprep.subr.mxu0 0.0
    %698 = vmatpush1.msra.mxu0 0.0
    %699 = vmatprep.subr.mxu0 0.0
    %700 = vmatpush1.msra.mxu0 0.0
    %701 = vmatprep.subr.mxu0 0.0
    %702 = vmatpush1.msra.mxu0 0.0
    %703 = vmatprep.subr.mxu0 0.0
    %704 = vmatpush1.msra.mxu0 0.0
    %705 = vmatprep.subr.mxu0 0.0
    %706 = vmatpush1.msra.mxu0 0.0
    %707 = vmatprep.subr.mxu0 0.0
    %708 = vmatpush1.msra.mxu0 0.0
    %709 = vmatprep.subr.mxu0 0.0
    %710 = vmatpush1.msra.mxu0 0.0
    %711 = vmatprep.subr.mxu0 0.0
    %712 = vmatpush1.msra.mxu0 %v674
    %713 = vmatprep.subr.mxu0 0.0
    %714 = vmatpush1.msra.mxu0 %v672
    %715 = vmatprep.subr.mxu0 0.0
    %716 = vmatpush2.msra.mxu0 0.0
    %717 = vmatprep.subr.mxu0 0.0
    %718 = vmatpush2.msra.mxu0 0.0
    %719 = vmatprep.subr.mxu0 0.0
    %720 = vmatpush2.msra.mxu0 0.0
    %721 = vmatprep.subr.mxu0 0.0
    %722 = vmatpush2.msra.mxu0 0.0
    %723 = vmatprep.subr.mxu0 0.0
    %724 = vmatpush2.msra.mxu0 0.0
    %725 = vmatprep.subr.mxu0 0.0
    %726 = vmatpush2.msra.mxu0 0.0
    %727 = vmatprep.subr.mxu0 0.0
    %728 = vmatpush2.msra.mxu0 0.0
    %729 = vmatprep.subr.mxu0 0.0
    %730 = vmatpush2.msra.mxu0 0.0
    %731 = vmatprep.subr.mxu0 0.0
    %732 = vmatpush2.msra.mxu0 0.0
    %733 = vmatprep.subr.mxu0 0.0
    %734 = vmatpush2.msra.mxu0 0.0
    %735 = vmatprep.subr.mxu0 0.0
    %736 = vmatpush2.msra.mxu0 0.0
    %737 = vmatprep.subr.mxu0 0.0
    %738 = vmatpush2.msra.mxu0 0.0
    %739 = vmatprep.subr.mxu0 0.0
    %740 = vmatpush2.msra.mxu0 0.0
    %741 = vmatprep.subr.mxu0 0.0
    %742 = vmatpush2.msra.mxu0 0.0
    %743 = vmatprep.subr.mxu0 0.0
    %744 = vmatpush2.msra.mxu0 0.0
    %745 = vmatprep.subr.mxu0 0.0
    %746 = vmatpush2.msra.mxu0 0.0
    %747 = vmatprep.mubr.f32.mxu0 0.0
    %748 = vmatmul.mubr.f32.gmra.mxu0 %v678
    %v749 = vpop.f32.mrf.mxu0
    %v750 = vadd.f32 %v663, %v749
    %v751 = vpop.f32.mrf.mxu0
    %752 = vmatprep.mubr.f32.mxu0 0.0
    %753 = vmatmul.mubr.f32.gmra.mxu0 %v681
    %v754 = vpop.f32.mrf.mxu0
    %v755 = vadd.f32 %v668, %v754
    %v756 = vpop.f32.mrf.mxu0
    %757 = vdwg.mxu0
    %758 = vrot.lane.b32.xlu0 %v156, 112
    %v759 = vpop.permute.xlu0 %758
    %760 = vrot.lane.b32.xlu0 %v162, 112
    %v761 = vpop.permute.xlu0 %760
    %762 = vrot.lane.b32.xlu0 %v156, 80
    %v763 = vpop.permute.xlu0 %762
    %764 = vrot.lane.b32.xlu0 %v162, 80
    %v765 = vpop.permute.xlu0 %764
    %v766 = vsel %vm273, %v759, 0
    %v768 = vsel %vm273, %v761, 0
    %v770 = vsel %vm273, %v763, 0
    %v772 = vsel %vm273, %v765, 0
    %774 = vmatprep.subr.mxu0 0.0
    %775 = vmatpush1.xpose.msra.mxu0 0.0
    %776 = vmatprep.subr.mxu0 0.0
    %777 = vmatpush1.xpose.msra.mxu0 0.0
    %778 = vmatprep.subr.mxu0 0.0
    %779 = vmatpush1.xpose.msra.mxu0 0.0
    %780 = vmatprep.subr.mxu0 0.0
    %781 = vmatpush1.xpose.msra.mxu0 0.0
    %782 = vmatprep.subr.mxu0 0.0
    %783 = vmatpush1.xpose.msra.mxu0 0.0
    %784 = vmatprep.subr.mxu0 0.0
    %785 = vmatpush1.xpose.msra.mxu0 0.0
    %786 = vmatprep.subr.mxu0 0.0
    %787 = vmatpush1.xpose.msra.mxu0 0.0
    %788 = vmatprep.subr.mxu0 0.0
    %789 = vmatpush1.xpose.msra.mxu0 0.0
    %790 = vmatprep.subr.mxu0 0.0
    %791 = vmatpush1.xpose.msra.mxu0 0.0
    %792 = vmatprep.subr.mxu0 0.0
    %793 = vmatpush1.xpose.msra.mxu0 0.0
    %794 = vmatprep.subr.mxu0 0.0
    %795 = vmatpush1.xpose.msra.mxu0 0.0
    %796 = vmatprep.subr.mxu0 0.0
    %797 = vmatpush1.xpose.msra.mxu0 0.0
    %798 = vmatprep.subr.mxu0 0.0
    %799 = vmatpush1.xpose.msra.mxu0 0.0
    %800 = vmatprep.subr.mxu0 0.0
    %801 = vmatpush1.xpose.msra.mxu0 0.0
    %802 = vmatprep.subr.mxu0 0.0
    %803 = vmatpush1.xpose.msra.mxu0 %v772
    %804 = vmatprep.subr.mxu0 0.0
    %805 = vmatpush1.xpose.msra.mxu0 %v770
    %806 = vmatprep.subr.mxu0 0.0
    %807 = vmatpush2.xpose.msra.mxu0 0.0
    %808 = vmatprep.subr.mxu0 0.0
    %809 = vmatpush2.xpose.msra.mxu0 0.0
    %810 = vmatprep.subr.mxu0 0.0
    %811 = vmatpush2.xpose.msra.mxu0 0.0
    %812 = vmatprep.subr.mxu0 0.0
    %813 = vmatpush2.xpose.msra.mxu0 0.0
    %814 = vmatprep.subr.mxu0 0.0
    %815 = vmatpush2.xpose.msra.mxu0 0.0
    %816 = vmatprep.subr.mxu0 0.0
    %817 = vmatpush2.xpose.msra.mxu0 0.0
    %818 = vmatprep.subr.mxu0 0.0
    %819 = vmatpush2.xpose.msra.mxu0 0.0
    %820 = vmatprep.subr.mxu0 0.0
    %821 = vmatpush2.xpose.msra.mxu0 0.0
    %822 = vmatprep.subr.mxu0 0.0
    %823 = vmatpush2.xpose.msra.mxu0 0.0
    %824 = vmatprep.subr.mxu0 0.0
    %825 = vmatpush2.xpose.msra.mxu0 0.0
    %826 = vmatprep.subr.mxu0 0.0
    %827 = vmatpush2.xpose.msra.mxu0 0.0
    %828 = vmatprep.subr.mxu0 0.0
    %829 = vmatpush2.xpose.msra.mxu0 0.0
    %830 = vmatprep.subr.mxu0 0.0
    %831 = vmatpush2.xpose.msra.mxu0 0.0
    %832 = vmatprep.subr.mxu0 0.0
    %833 = vmatpush2.xpose.msra.mxu0 0.0
    %834 = vmatprep.subr.mxu0 0.0
    %835 = vmatpush2.xpose.msra.mxu0 0.0
    %836 = vmatprep.subr.mxu0 0.0
    %837 = vmatpush2.xpose.msra.mxu0 0.0
    %838 = vmatprep.mubr.f32.mxu0 0.0
    %839 = vmatmul.mubr.f32.gmra.mxu0 %v766
    %v840 = vpop.f32.mrf.mxu0
    %v841 = vadd.f32 0.0, %v840
    %v842 = vpop.f32.mrf.mxu0
    %843 = vmatprep.mubr.f32.mxu0 0.0
    %844 = vmatmul.mubr.f32.gmra.mxu0 %v768
    %v845 = vpop.f32.mrf.mxu0
    %v846 = vadd.f32 0.0, %v845
    %v847 = vpop.f32.mrf.mxu0
    %848 = vdwg.mxu0
    %v849 = vsel %vm357, %v841, -inf
    %850 = vmax.xlane.f32.xlu0 %v849
    %v851 = vpop.xlane.xlu0 %850
    %v852 = vsel %vm357, %v846, -inf
    %853 = vmax.xlane.f32.xlu0 %v852
    %v854 = vpop.xlane.xlu0 %853
    %v855 = vsub.f32 %v841, %v851
    %v856 = vsub.f32 %v846, %v854
    %v857 = vmul.f32 %v855, 1.442695
    %v858 = vpow.pop %v857
    %v859 = vmul.f32 %v856, 1.442695
    %v860 = vpow.pop %v859
    %v861 = vsel %vm357, %v858, 0.0
    %862 = vadd.xlane.f32.xlu0 %v861
    %v863 = vpop.xlane.xlu0 %862
    %v864 = vsel %vm357, %v860, 0.0
    %865 = vadd.xlane.f32.xlu0 %v864
    %v866 = vpop.xlane.xlu0 %865
    %v867 = vrcp.pop %v863
    %v868 = vrcp.pop %v866
    %v869 = vmul.f32 %v863, %v867
    %v870 = vmul.f32 %v866, %v868
    %v871 = vsub.f32 2.0, %v869
    %v872 = vsub.f32 2.0, %v870
    %v873 = vmul.f32 %v867, %v871
    %v874 = vmul.f32 %v868, %v872
    %v875 = vmul.f32 %v858, %v873
    %v876 = vmul.f32 %v860, %v874
    %879 = vrot.lane.b32.xlu0 %v875, 32
    %v880 = vpop.permute.xlu0 %879
    %881 = vrot.lane.b32.xlu0 %v876, 32
    %v882 = vpop.permute.xlu0 %881
    %vm885 = vcmask 392448
    %886 = vst.msk [vmem:[#allocation7] sm:$0xff] %vm885, %v880
    %887 = vst.msk [vmem:[#allocation7 + $0x18] sm:$0xff] %vm885, %v882
    %888 = vset.pattern.permute.xlu0 66
    %889 = vperm.xlu0 %888, %v390
    %v890 = vpop.permute.xlu0 %889
    %892 = vset.pattern.permute.xlu0 66
    %893 = vperm.xlu0 %892, %v391
    %v894 = vpop.permute.xlu0 %893
    %v896 = vmul.f32 %v53, %v890
    %v897 = vmul.f32 %v54, %v894
    %v898 = vmul.f32 %v896, 1.442695
    %v899 = vpow.pop %v898
    %v900 = vmul.f32 %v897, 1.442695
    %v901 = vpow.pop %v900
    %902 = vset.pattern.permute.xlu0 66
    %903 = vperm.xlu0 %902, %v388
    %v904 = vpop.permute.xlu0 %903
    %906 = vset.pattern.permute.xlu0 66
    %907 = vperm.xlu0 %906, %v389
    %v908 = vpop.permute.xlu0 %907
    %v910 = vmul.f32 %v904, %v899
    %v911 = vmul.f32 %v908, %v901
    %914 = vrot.lane.b32.xlu0 %v910, 32
    %v915 = vpop.permute.xlu0 %914
    %916 = vrot.lane.b32.xlu0 %v911, 32
    %v917 = vpop.permute.xlu0 %916
    %920 = vst.msk [vmem:[#allocation7 + $0x8] sm:$0xff] %vm885, %v915
    %921 = vst.msk [vmem:[#allocation7 + $0x20] sm:$0xff] %vm885, %v917
    %v922 = vsel %vm357, %v875, 0
    %v924 = vsel %vm357, %v876, 0
    %926 = vmatprep.subr.mxu0 0.0
    %927 = vmatpush1.msra.mxu0 0.0
    %928 = vmatprep.subr.mxu0 0.0
    %929 = vmatpush1.msra.mxu0 0.0
    %930 = vmatprep.subr.mxu0 0.0
    %931 = vmatpush1.msra.mxu0 0.0
    %932 = vmatprep.subr.mxu0 0.0
    %933 = vmatpush1.msra.mxu0 0.0
    %934 = vmatprep.subr.mxu0 0.0
    %935 = vmatpush1.msra.mxu0 0.0
    %936 = vmatprep.subr.mxu0 0.0
    %937 = vmatpush1.msra.mxu0 0.0
    %938 = vmatprep.subr.mxu0 0.0
    %939 = vmatpush1.msra.mxu0 0.0
    %940 = vmatprep.subr.mxu0 0.0
    %941 = vmatpush1.msra.mxu0 0.0
    %942 = vmatprep.subr.mxu0 0.0
    %943 = vmatpush1.msra.mxu0 0.0
    %944 = vmatprep.subr.mxu0 0.0
    %945 = vmatpush1.msra.mxu0 0.0
    %946 = vmatprep.subr.mxu0 0.0
    %947 = vmatpush1.msra.mxu0 0.0
    %948 = vmatprep.subr.mxu0 0.0
    %949 = vmatpush1.msra.mxu0 0.0
    %950 = vmatprep.subr.mxu0 0.0
    %951 = vmatpush1.msra.mxu0 0.0
    %952 = vmatprep.subr.mxu0 0.0
    %953 = vmatpush1.msra.mxu0 0.0
    %954 = vmatprep.subr.mxu0 0.0
    %955 = vmatpush1.msra.mxu0 %v164
    %956 = vmatprep.subr.mxu0 0.0
    %957 = vmatpush1.msra.mxu0 %v158
    %958 = vmatprep.subr.mxu0 0.0
    %959 = vmatpush2.msra.mxu0 0.0
    %960 = vmatprep.subr.mxu0 0.0
    %961 = vmatpush2.msra.mxu0 0.0
    %962 = vmatprep.subr.mxu0 0.0
    %963 = vmatpush2.msra.mxu0 0.0
    %964 = vmatprep.subr.mxu0 0.0
    %965 = vmatpush2.msra.mxu0 0.0
    %966 = vmatprep.subr.mxu0 0.0
    %967 = vmatpush2.msra.mxu0 0.0
    %968 = vmatprep.subr.mxu0 0.0
    %969 = vmatpush2.msra.mxu0 0.0
    %970 = vmatprep.subr.mxu0 0.0
    %971 = vmatpush2.msra.mxu0 0.0
    %972 = vmatprep.subr.mxu0 0.0
    %973 = vmatpush2.msra.mxu0 0.0
    %974 = vmatprep.subr.mxu0 0.0
    %975 = vmatpush2.msra.mxu0 0.0
    %976 = vmatprep.subr.mxu0 0.0
    %977 = vmatpush2.msra.mxu0 0.0
    %978 = vmatprep.subr.mxu0 0.0
    %979 = vmatpush2.msra.mxu0 0.0
    %980 = vmatprep.subr.mxu0 0.0
    %981 = vmatpush2.msra.mxu0 0.0
    %982 = vmatprep.subr.mxu0 0.0
    %983 = vmatpush2.msra.mxu0 0.0
    %984 = vmatprep.subr.mxu0 0.0
    %985 = vmatpush2.msra.mxu0 0.0
    %986 = vmatprep.subr.mxu0 0.0
    %987 = vmatpush2.msra.mxu0 0.0
    %988 = vmatprep.subr.mxu0 0.0
    %989 = vmatpush2.msra.mxu0 0.0
    %990 = vmatprep.mubr.f32.mxu0 0.0
    %991 = vmatmul.mubr.f32.gmra.mxu0 %v922
    %v992 = vpop.f32.mrf.mxu0
    %v993 = vadd.f32 0.0, %v992
    %v994 = vpop.f32.mrf.mxu0
    %995 = vmatprep.mubr.f32.mxu0 0.0
    %996 = vmatmul.mubr.f32.gmra.mxu0 %v924
    %v997 = vpop.f32.mrf.mxu0
    %v998 = vadd.f32 0.0, %v997
    %v999 = vpop.f32.mrf.mxu0
    %1000 = vdwg.mxu0
    %v1001 = vadd.f32 %v750, %v993
    %v1002 = vadd.f32 %v755, %v998
    %1003 = vrot.lane.b32.xlu0 %v156, 104
    %v1004 = vpop.permute.xlu0 %1003
    %1005 = vrot.lane.b32.xlu0 %v162, 104
    %v1006 = vpop.permute.xlu0 %1005
    %1007 = vrot.lane.b32.xlu0 %v156, 72
    %v1008 = vpop.permute.xlu0 %1007
    %1009 = vrot.lane.b32.xlu0 %v162, 72
    %v1010 = vpop.permute.xlu0 %1009
    %v1011 = vsel %vm273, %v1004, 0
    %v1013 = vsel %vm273, %v1006, 0
    %v1015 = vsel %vm273, %v1008, 0
    %v1017 = vsel %vm273, %v1010, 0
    %1019 = vmatprep.subr.mxu0 0.0
    %1020 = vmatpush1.xpose.msra.mxu0 0.0
    %1021 = vmatprep.subr.mxu0 0.0
    %1022 = vmatpush1.xpose.msra.mxu0 0.0
    %1023 = vmatprep.subr.mxu0 0.0
    %1024 = vmatpush1.xpose.msra.mxu0 0.0
    %1025 = vmatprep.subr.mxu0 0.0
    %1026 = vmatpush1.xpose.msra.mxu0 0.0
    %1027 = vmatprep.subr.mxu0 0.0
    %1028 = vmatpush1.xpose.msra.mxu0 0.0
    %1029 = vmatprep.subr.mxu0 0.0
    %1030 = vmatpush1.xpose.msra.mxu0 0.0
    %1031 = vmatprep.subr.mxu0 0.0
    %1032 = vmatpush1.xpose.msra.mxu0 0.0
    %1033 = vmatprep.subr.mxu0 0.0
    %1034 = vmatpush1.xpose.msra.mxu0 0.0
    %1035 = vmatprep.subr.mxu0 0.0
    %1036 = vmatpush1.xpose.msra.mxu0 0.0
    %1037 = vmatprep.subr.mxu0 0.0
    %1038 = vmatpush1.xpose.msra.mxu0 0.0
    %1039 = vmatprep.subr.mxu0 0.0
    %1040 = vmatpush1.xpose.msra.mxu0 0.0
    %1041 = vmatprep.subr.mxu0 0.0
    %1042 = vmatpush1.xpose.msra.mxu0 0.0
    %1043 = vmatprep.subr.mxu0 0.0
    %1044 = vmatpush1.xpose.msra.mxu0 0.0
    %1045 = vmatprep.subr.mxu0 0.0
    %1046 = vmatpush1.xpose.msra.mxu0 0.0
    %1047 = vmatprep.subr.mxu0 0.0
    %1048 = vmatpush1.xpose.msra.mxu0 %v1017
    %1049 = vmatprep.subr.mxu0 0.0
    %1050 = vmatpush1.xpose.msra.mxu0 %v1015
    %1051 = vmatprep.subr.mxu0 0.0
    %1052 = vmatpush2.xpose.msra.mxu0 0.0
    %1053 = vmatprep.subr.mxu0 0.0
    %1054 = vmatpush2.xpose.msra.mxu0 0.0
    %1055 = vmatprep.subr.mxu0 0.0
    %1056 = vmatpush2.xpose.msra.mxu0 0.0
    %1057 = vmatprep.subr.mxu0 0.0
    %1058 = vmatpush2.xpose.msra.mxu0 0.0
    %1059 = vmatprep.subr.mxu0 0.0
    %1060 = vmatpush2.xpose.msra.mxu0 0.0
    %1061 = vmatprep.subr.mxu0 0.0
    %1062 = vmatpush2.xpose.msra.mxu0 0.0
    %1063 = vmatprep.subr.mxu0 0.0
    %1064 = vmatpush2.xpose.msra.mxu0 0.0
    %1065 = vmatprep.subr.mxu0 0.0
    %1066 = vmatpush2.xpose.msra.mxu0 0.0
    %1067 = vmatprep.subr.mxu0 0.0
    %1068 = vmatpush2.xpose.msra.mxu0 0.0
    %1069 = vmatprep.subr.mxu0 0.0
    %1070 = vmatpush2.xpose.msra.mxu0 0.0
    %1071 = vmatprep.subr.mxu0 0.0
    %1072 = vmatpush2.xpose.msra.mxu0 0.0
    %1073 = vmatprep.subr.mxu0 0.0
    %1074 = vmatpush2.xpose.msra.mxu0 0.0
    %1075 = vmatprep.subr.mxu0 0.0
    %1076 = vmatpush2.xpose.msra.mxu0 0.0
    %1077 = vmatprep.subr.mxu0 0.0
    %1078 = vmatpush2.xpose.msra.mxu0 0.0
    %1079 = vmatprep.subr.mxu0 0.0
    %1080 = vmatpush2.xpose.msra.mxu0 0.0
    %1081 = vmatprep.subr.mxu0 0.0
    %1082 = vmatpush2.xpose.msra.mxu0 0.0
    %1083 = vmatprep.mubr.f32.mxu0 0.0
    %1084 = vmatmul.mubr.f32.gmra.mxu0 %v1011
    %v1085 = vpop.f32.mrf.mxu0
    %v1086 = vadd.f32 0.0, %v1085
    %v1087 = vpop.f32.mrf.mxu0
    %1088 = vmatprep.mubr.f32.mxu0 0.0
    %1089 = vmatmul.mubr.f32.gmra.mxu0 %v1013
    %v1090 = vpop.f32.mrf.mxu0
    %v1091 = vadd.f32 0.0, %v1090
    %v1092 = vpop.f32.mrf.mxu0
    %1093 = vdwg.mxu0
    %v1094 = vsel %vm357, %v1086, -inf
    %1095 = vmax.xlane.f32.xlu0 %v1094
    %v1096 = vpop.xlane.xlu0 %1095
    %v1097 = vsel %vm357, %v1091, -inf
    %1098 = vmax.xlane.f32.xlu0 %v1097
    %v1099 = vpop.xlane.xlu0 %1098
    %v1100 = vsub.f32 %v1086, %v1096
    %v1101 = vsub.f32 %v1091, %v1099
    %v1102 = vmul.f32 %v1100, 1.442695
    %v1103 = vpow.pop %v1102
    %v1104 = vmul.f32 %v1101, 1.442695
    %v1105 = vpow.pop %v1104
    %v1106 = vsel %vm357, %v1103, 0.0
    %1107 = vadd.xlane.f32.xlu0 %v1106
    %v1108 = vpop.xlane.xlu0 %1107
    %v1109 = vsel %vm357, %v1105, 0.0
    %1110 = vadd.xlane.f32.xlu0 %v1109
    %v1111 = vpop.xlane.xlu0 %1110
    %v1112 = vrcp.pop %v1108
    %v1113 = vrcp.pop %v1111
    %v1114 = vmul.f32 %v1108, %v1112
    %v1115 = vmul.f32 %v1111, %v1113
    %v1116 = vsub.f32 2.0, %v1114
    %v1117 = vsub.f32 2.0, %v1115
    %v1118 = vmul.f32 %v1112, %v1116
    %v1119 = vmul.f32 %v1113, %v1117
    %v1120 = vmul.f32 %v1103, %v1118
    %v1121 = vmul.f32 %v1105, %v1119
    %1124 = vrot.lane.b32.xlu0 %v1120, 48
    %v1125 = vpop.permute.xlu0 %1124
    %1126 = vrot.lane.b32.xlu0 %v1121, 48
    %v1127 = vpop.permute.xlu0 %1126
    %vm1130 = vcmask 523648
    %1131 = vst.msk [vmem:[#allocation7] sm:$0xff] %vm1130, %v1125
    %1132 = vst.msk [vmem:[#allocation7 + $0x18] sm:$0xff] %vm1130, %v1127
    %1133 = vset.pattern.permute.xlu0 67
    %1134 = vperm.xlu0 %1133, %v390
    %v1135 = vpop.permute.xlu0 %1134
    %1137 = vset.pattern.permute.xlu0 67
    %1138 = vperm.xlu0 %1137, %v391
    %v1139 = vpop.permute.xlu0 %1138
    %v1141 = vmul.f32 %v53, %v1135
    %v1142 = vmul.f32 %v54, %v1139
    %v1143 = vmul.f32 %v1141, 1.442695
    %v1144 = vpow.pop %v1143
    %v1145 = vmul.f32 %v1142, 1.442695
    %v1146 = vpow.pop %v1145
    %1147 = vset.pattern.permute.xlu0 67
    %1148 = vperm.xlu0 %1147, %v388
    %v1149 = vpop.permute.xlu0 %1148
    %1151 = vset.pattern.permute.xlu0 67
    %1152 = vperm.xlu0 %1151, %v389
    %v1153 = vpop.permute.xlu0 %1152
    %v1155 = vmul.f32 %v1149, %v1144
    %v1156 = vmul.f32 %v1153, %v1146
    %1159 = vrot.lane.b32.xlu0 %v1155, 48
    %v1160 = vpop.permute.xlu0 %1159
    %1161 = vrot.lane.b32.xlu0 %v1156, 48
    %v1162 = vpop.permute.xlu0 %1161
    %1165 = vst.msk [vmem:[#allocation7 + $0x8] sm:$0xff] %vm1130, %v1160
    %1166 = vst.msk [vmem:[#allocation7 + $0x20] sm:$0xff] %vm1130, %v1162
    %1169 = vrot.lane.b32.xlu0 %v158, 96
    %v1170 = vpop.permute.xlu0 %1169
    %1171 = vrot.lane.b32.xlu0 %v164, 96
    %v1172 = vpop.permute.xlu0 %1171
    %v1175 = vsel %vm357, %v1120, 0
    %v1177 = vsel %vm357, %v1121, 0
    %1179 = vmatprep.subr.mxu0 0.0
    %1180 = vmatpush1.msra.mxu0 0.0
    %1181 = vmatprep.subr.mxu0 0.0
    %1182 = vmatpush1.msra.mxu0 0.0
    %1183 = vmatprep.subr.mxu0 0.0
    %1184 = vmatpush1.msra.mxu0 0.0
    %1185 = vmatprep.subr.mxu0 0.0
    %1186 = vmatpush1.msra.mxu0 0.0
    %1187 = vmatprep.subr.mxu0 0.0
    %1188 = vmatpush1.msra.mxu0 0.0
    %1189 = vmatprep.subr.mxu0 0.0
    %1190 = vmatpush1.msra.mxu0 0.0
    %1191 = vmatprep.subr.mxu0 0.0
    %1192 = vmatpush1.msra.mxu0 0.0
    %1193 = vmatprep.subr.mxu0 0.0
    %1194 = vmatpush1.msra.mxu0 0.0
    %1195 = vmatprep.subr.mxu0 0.0
    %1196 = vmatpush1.msra.mxu0 0.0
    %1197 = vmatprep.subr.mxu0 0.0
    %1198 = vmatpush1.msra.mxu0 0.0
    %1199 = vmatprep.subr.mxu0 0.0
    %1200 = vmatpush1.msra.mxu0 0.0
    %1201 = vmatprep.subr.mxu0 0.0
    %1202 = vmatpush1.msra.mxu0 0.0
    %1203 = vmatprep.subr.mxu0 0.0
    %1204 = vmatpush1.msra.mxu0 0.0
    %1205 = vmatprep.subr.mxu0 0.0
    %1206 = vmatpush1.msra.mxu0 0.0
    %1207 = vmatprep.subr.mxu0 0.0
    %1208 = vmatpush1.msra.mxu0 %v1172
    %1209 = vmatprep.subr.mxu0 0.0
    %1210 = vmatpush1.msra.mxu0 %v1170
    %1211 = vmatprep.subr.mxu0 0.0
    %1212 = vmatpush2.msra.mxu0 0.0
    %1213 = vmatprep.subr.mxu0 0.0
    %1214 = vmatpush2.msra.mxu0 0.0
    %1215 = vmatprep.subr.mxu0 0.0
    %1216 = vmatpush2.msra.mxu0 0.0
    %1217 = vmatprep.subr.mxu0 0.0
    %1218 = vmatpush2.msra.mxu0 0.0
    %1219 = vmatprep.subr.mxu0 0.0
    %1220 = vmatpush2.msra.mxu0 0.0
    %1221 = vmatprep.subr.mxu0 0.0
    %1222 = vmatpush2.msra.mxu0 0.0
    %1223 = vmatprep.subr.mxu0 0.0
    %1224 = vmatpush2.msra.mxu0 0.0
    %1225 = vmatprep.subr.mxu0 0.0
    %1226 = vmatpush2.msra.mxu0 0.0
    %1227 = vmatprep.subr.mxu0 0.0
    %1228 = vmatpush2.msra.mxu0 0.0
    %1229 = vmatprep.subr.mxu0 0.0
    %1230 = vmatpush2.msra.mxu0 0.0
    %1231 = vmatprep.subr.mxu0 0.0
    %1232 = vmatpush2.msra.mxu0 0.0
    %1233 = vmatprep.subr.mxu0 0.0
    %1234 = vmatpush2.msra.mxu0 0.0
    %1235 = vmatprep.subr.mxu0 0.0
    %1236 = vmatpush2.msra.mxu0 0.0
    %1237 = vmatprep.subr.mxu0 0.0
    %1238 = vmatpush2.msra.mxu0 0.0
    %1239 = vmatprep.subr.mxu0 0.0
    %1240 = vmatpush2.msra.mxu0 0.0
    %1241 = vmatprep.subr.mxu0 0.0
    %1242 = vmatpush2.msra.mxu0 0.0
    %1243 = vmatprep.mubr.f32.mxu0 0.0
    %1244 = vmatmul.mubr.f32.gmra.mxu0 %v1175
    %v1245 = vpop.f32.mrf.mxu0
    %v1246 = vadd.f32 0.0, %v1245
    %v1247 = vpop.f32.mrf.mxu0
    %1248 = vmatprep.mubr.f32.mxu0 0.0
    %1249 = vmatmul.mubr.f32.gmra.mxu0 %v1177
    %v1250 = vpop.f32.mrf.mxu0
    %v1251 = vadd.f32 0.0, %v1250
    %v1252 = vpop.f32.mrf.mxu0
    %1253 = vdwg.mxu0
    %v1254 = vadd.f32 %v1001, %v1246
    %v1255 = vadd.f32 %v1002, %v1251
    %1258 = vrot.lane.b32.xlu0 %v168, 96
    %v1259 = vpop.permute.xlu0 %1258
    %1260 = vrot.lane.b32.xlu0 %v174, 96
    %v1261 = vpop.permute.xlu0 %1260
    %v1262 = vsel %vm273, %v168, 0
    %v1264 = vsel %vm273, %v174, 0
    %v1266 = vsel %vm273, %v1259, 0
    %v1268 = vsel %vm273, %v1261, 0
    %1270 = vmatprep.subr.mxu0 0.0
    %1271 = vmatpush1.xpose.msra.mxu0 0.0
    %1272 = vmatprep.subr.mxu0 0.0
    %1273 = vmatpush1.xpose.msra.mxu0 0.0
    %1274 = vmatprep.subr.mxu0 0.0
    %1275 = vmatpush1.xpose.msra.mxu0 0.0
    %1276 = vmatprep.subr.mxu0 0.0
    %1277 = vmatpush1.xpose.msra.mxu0 0.0
    %1278 = vmatprep.subr.mxu0 0.0
    %1279 = vmatpush1.xpose.msra.mxu0 0.0
    %1280 = vmatprep.subr.mxu0 0.0
    %1281 = vmatpush1.xpose.msra.mxu0 0.0
    %1282 = vmatprep.subr.mxu0 0.0
    %1283 = vmatpush1.xpose.msra.mxu0 0.0
    %1284 = vmatprep.subr.mxu0 0.0
    %1285 = vmatpush1.xpose.msra.mxu0 0.0
    %1286 = vmatprep.subr.mxu0 0.0
    %1287 = vmatpush1.xpose.msra.mxu0 0.0
    %1288 = vmatprep.subr.mxu0 0.0
    %1289 = vmatpush1.xpose.msra.mxu0 0.0
    %1290 = vmatprep.subr.mxu0 0.0
    %1291 = vmatpush1.xpose.msra.mxu0 0.0
    %1292 = vmatprep.subr.mxu0 0.0
    %1293 = vmatpush1.xpose.msra.mxu0 0.0
    %1294 = vmatprep.subr.mxu0 0.0
    %1295 = vmatpush1.xpose.msra.mxu0 0.0
    %1296 = vmatprep.subr.mxu0 0.0
    %1297 = vmatpush1.xpose.msra.mxu0 0.0
    %1298 = vmatprep.subr.mxu0 0.0
    %1299 = vmatpush1.xpose.msra.mxu0 %v1268
    %1300 = vmatprep.subr.mxu0 0.0
    %1301 = vmatpush1.xpose.msra.mxu0 %v1266
    %1302 = vmatprep.subr.mxu0 0.0
    %1303 = vmatpush2.xpose.msra.mxu0 0.0
    %1304 = vmatprep.subr.mxu0 0.0
    %1305 = vmatpush2.xpose.msra.mxu0 0.0
    %1306 = vmatprep.subr.mxu0 0.0
    %1307 = vmatpush2.xpose.msra.mxu0 0.0
    %1308 = vmatprep.subr.mxu0 0.0
    %1309 = vmatpush2.xpose.msra.mxu0 0.0
    %1310 = vmatprep.subr.mxu0 0.0
    %1311 = vmatpush2.xpose.msra.mxu0 0.0
    %1312 = vmatprep.subr.mxu0 0.0
    %1313 = vmatpush2.xpose.msra.mxu0 0.0
    %1314 = vmatprep.subr.mxu0 0.0
    %1315 = vmatpush2.xpose.msra.mxu0 0.0
    %1316 = vmatprep.subr.mxu0 0.0
    %1317 = vmatpush2.xpose.msra.mxu0 0.0
    %1318 = vmatprep.subr.mxu0 0.0
    %1319 = vmatpush2.xpose.msra.mxu0 0.0
    %1320 = vmatprep.subr.mxu0 0.0
    %1321 = vmatpush2.xpose.msra.mxu0 0.0
    %1322 = vmatprep.subr.mxu0 0.0
    %1323 = vmatpush2.xpose.msra.mxu0 0.0
    %1324 = vmatprep.subr.mxu0 0.0
    %1325 = vmatpush2.xpose.msra.mxu0 0.0
    %1326 = vmatprep.subr.mxu0 0.0
    %1327 = vmatpush2.xpose.msra.mxu0 0.0
    %1328 = vmatprep.subr.mxu0 0.0
    %1329 = vmatpush2.xpose.msra.mxu0 0.0
    %1330 = vmatprep.subr.mxu0 0.0
    %1331 = vmatpush2.xpose.msra.mxu0 0.0
    %1332 = vmatprep.subr.mxu0 0.0
    %1333 = vmatpush2.xpose.msra.mxu0 0.0
    %1334 = vmatprep.mubr.f32.mxu0 0.0
    %1335 = vmatmul.mubr.f32.gmra.mxu0 %v1262
    %v1336 = vpop.f32.mrf.mxu0
    %v1337 = vadd.f32 0.0, %v1336
    %v1338 = vpop.f32.mrf.mxu0
    %1339 = vmatprep.mubr.f32.mxu0 0.0
    %1340 = vmatmul.mubr.f32.gmra.mxu0 %v1264
    %v1341 = vpop.f32.mrf.mxu0
    %v1342 = vadd.f32 0.0, %v1341
    %v1343 = vpop.f32.mrf.mxu0
    %1344 = vdwg.mxu0
    %v1345 = vsel %vm357, %v1337, -inf
    %1346 = vmax.xlane.f32.xlu0 %v1345
    %v1347 = vpop.xlane.xlu0 %1346
    %v1348 = vsel %vm357, %v1342, -inf
    %1349 = vmax.xlane.f32.xlu0 %v1348
    %v1350 = vpop.xlane.xlu0 %1349
    %v1351 = vsub.f32 %v1337, %v1347
    %v1352 = vsub.f32 %v1342, %v1350
    %v1353 = vmul.f32 %v1351, 1.442695
    %v1354 = vpow.pop %v1353
    %v1355 = vmul.f32 %v1352, 1.442695
    %v1356 = vpow.pop %v1355
    %v1357 = vsel %vm357, %v1354, 0.0
    %1358 = vadd.xlane.f32.xlu0 %v1357
    %v1359 = vpop.xlane.xlu0 %1358
    %v1360 = vsel %vm357, %v1356, 0.0
    %1361 = vadd.xlane.f32.xlu0 %v1360
    %v1362 = vpop.xlane.xlu0 %1361
    %v1363 = vrcp.pop %v1359
    %v1364 = vrcp.pop %v1362
    %v1365 = vmul.f32 %v1359, %v1363
    %v1366 = vmul.f32 %v1362, %v1364
    %v1367 = vsub.f32 2.0, %v1365
    %v1368 = vsub.f32 2.0, %v1366
    %v1369 = vmul.f32 %v1363, %v1367
    %v1370 = vmul.f32 %v1364, %v1368
    %v1371 = vmul.f32 %v1354, %v1369
    %v1372 = vmul.f32 %v1356, %v1370
    %1373 = vst.msk [vmem:[#allocation7 + $0x30] sm:$0xff] %vm357, %v1371
    %1374 = vst.msk [vmem:[#allocation7 + $0x48] sm:$0xff] %vm357, %v1372
    %v1375 = vmul.f32 %v265, 0.3989423
    %v1376 = vmul.f32 %v266, 0.3989423
    %v1377 = vmul.f32 %v265, %v265
    %v1378 = vmul.f32 %v266, %v266
    %1380 = vset.pattern.permute.xlu0 64
    %1381 = vperm.xlu0 %1380, %v1377
    %v1382 = vpop.permute.xlu0 %1381
    %1385 = vset.pattern.permute.xlu0 64
    %1386 = vperm.xlu0 %1385, %v1378
    %v1387 = vpop.permute.xlu0 %1386
    %v1389 = vmul.f32 %v53, %v1382
    %v1390 = vmul.f32 %v54, %v1387
    %v1391 = vmul.f32 %v1389, 1.442695
    %v1392 = vpow.pop %v1391
    %v1393 = vmul.f32 %v1390, 1.442695
    %v1394 = vpow.pop %v1393
    %1396 = vset.pattern.permute.xlu0 64
    %1397 = vperm.xlu0 %1396, %v1375
    %v1398 = vpop.permute.xlu0 %1397
    %1401 = vset.pattern.permute.xlu0 64
    %1402 = vperm.xlu0 %1401, %v1376
    %v1403 = vpop.permute.xlu0 %1402
    %v1405 = vmul.f32 %v1398, %v1392
    %v1406 = vmul.f32 %v1403, %v1394
    %1407 = vst.msk [vmem:[#allocation7 + $0x38] sm:$0xff] %vm357, %v1405
    %1408 = vst.msk [vmem:[#allocation7 + $0x50] sm:$0xff] %vm357, %v1406
    %1409 = vrot.lane.b32.xlu0 %v168, 120
    %v1410 = vpop.permute.xlu0 %1409
    %1411 = vrot.lane.b32.xlu0 %v174, 120
    %v1412 = vpop.permute.xlu0 %1411
    %1413 = vrot.lane.b32.xlu0 %v168, 88
    %v1414 = vpop.permute.xlu0 %1413
    %1415 = vrot.lane.b32.xlu0 %v174, 88
    %v1416 = vpop.permute.xlu0 %1415
    %v1417 = vsel %vm273, %v1410, 0
    %v1419 = vsel %vm273, %v1412, 0
    %v1421 = vsel %vm273, %v1414, 0
    %v1423 = vsel %vm273, %v1416, 0
    %1425 = vmatprep.subr.mxu0 0.0
    %1426 = vmatpush1.xpose.msra.mxu0 0.0
    %1427 = vmatprep.subr.mxu0 0.0
    %1428 = vmatpush1.xpose.msra.mxu0 0.0
    %1429 = vmatprep.subr.mxu0 0.0
    %1430 = vmatpush1.xpose.msra.mxu0 0.0
    %1431 = vmatprep.subr.mxu0 0.0
    %1432 = vmatpush1.xpose.msra.mxu0 0.0
    %1433 = vmatprep.subr.mxu0 0.0
    %1434 = vmatpush1.xpose.msra.mxu0 0.0
    %1435 = vmatprep.subr.mxu0 0.0
    %1436 = vmatpush1.xpose.msra.mxu0 0.0
    %1437 = vmatprep.subr.mxu0 0.0
    %1438 = vmatpush1.xpose.msra.mxu0 0.0
    %1439 = vmatprep.subr.mxu0 0.0
    %1440 = vmatpush1.xpose.msra.mxu0 0.0
    %1441 = vmatprep.subr.mxu0 0.0
    %1442 = vmatpush1.xpose.msra.mxu0 0.0
    %1443 = vmatprep.subr.mxu0 0.0
    %1444 = vmatpush1.xpose.msra.mxu0 0.0
    %1445 = vmatprep.subr.mxu0 0.0
    %1446 = vmatpush1.xpose.msra.mxu0 0.0
    %1447 = vmatprep.subr.mxu0 0.0
    %1448 = vmatpush1.xpose.msra.mxu0 0.0
    %1449 = vmatprep.subr.mxu0 0.0
    %1450 = vmatpush1.xpose.msra.mxu0 0.0
    %1451 = vmatprep.subr.mxu0 0.0
    %1452 = vmatpush1.xpose.msra.mxu0 0.0
    %1453 = vmatprep.subr.mxu0 0.0
    %1454 = vmatpush1.xpose.msra.mxu0 %v1423
    %1455 = vmatprep.subr.mxu0 0.0
    %1456 = vmatpush1.xpose.msra.mxu0 %v1421
    %1457 = vmatprep.subr.mxu0 0.0
    %1458 = vmatpush2.xpose.msra.mxu0 0.0
    %1459 = vmatprep.subr.mxu0 0.0
    %1460 = vmatpush2.xpose.msra.mxu0 0.0
    %1461 = vmatprep.subr.mxu0 0.0
    %1462 = vmatpush2.xpose.msra.mxu0 0.0
    %1463 = vmatprep.subr.mxu0 0.0
    %1464 = vmatpush2.xpose.msra.mxu0 0.0
    %1465 = vmatprep.subr.mxu0 0.0
    %1466 = vmatpush2.xpose.msra.mxu0 0.0
    %1467 = vmatprep.subr.mxu0 0.0
    %1468 = vmatpush2.xpose.msra.mxu0 0.0
    %1469 = vmatprep.subr.mxu0 0.0
    %1470 = vmatpush2.xpose.msra.mxu0 0.0
    %1471 = vmatprep.subr.mxu0 0.0
    %1472 = vmatpush2.xpose.msra.mxu0 0.0
    %1473 = vmatprep.subr.mxu0 0.0
    %1474 = vmatpush2.xpose.msra.mxu0 0.0
    %1475 = vmatprep.subr.mxu0 0.0
    %1476 = vmatpush2.xpose.msra.mxu0 0.0
    %1477 = vmatprep.subr.mxu0 0.0
    %1478 = vmatpush2.xpose.msra.mxu0 0.0
    %1479 = vmatprep.subr.mxu0 0.0
    %1480 = vmatpush2.xpose.msra.mxu0 0.0
    %1481 = vmatprep.subr.mxu0 0.0
    %1482 = vmatpush2.xpose.msra.mxu0 0.0
    %1483 = vmatprep.subr.mxu0 0.0
    %1484 = vmatpush2.xpose.msra.mxu0 0.0
    %1485 = vmatprep.subr.mxu0 0.0
    %1486 = vmatpush2.xpose.msra.mxu0 0.0
    %1487 = vmatprep.subr.mxu0 0.0
    %1488 = vmatpush2.xpose.msra.mxu0 0.0
    %1489 = vmatprep.mubr.f32.mxu0 0.0
    %1490 = vmatmul.mubr.f32.gmra.mxu0 %v1417
    %v1491 = vpop.f32.mrf.mxu0
    %v1492 = vadd.f32 0.0, %v1491
    %v1493 = vpop.f32.mrf.mxu0
    %1494 = vmatprep.mubr.f32.mxu0 0.0
    %1495 = vmatmul.mubr.f32.gmra.mxu0 %v1419
    %v1496 = vpop.f32.mrf.mxu0
    %v1497 = vadd.f32 0.0, %v1496
    %v1498 = vpop.f32.mrf.mxu0
    %1499 = vdwg.mxu0
    %v1500 = vsel %vm357, %v1492, -inf
    %1501 = vmax.xlane.f32.xlu0 %v1500
    %v1502 = vpop.xlane.xlu0 %1501
    %v1503 = vsel %vm357, %v1497, -inf
    %1504 = vmax.xlane.f32.xlu0 %v1503
    %v1505 = vpop.xlane.xlu0 %1504
    %v1506 = vsub.f32 %v1492, %v1502
    %v1507 = vsub.f32 %v1497, %v1505
    %v1508 = vmul.f32 %v1506, 1.442695
    %v1509 = vpow.pop %v1508
    %v1510 = vmul.f32 %v1507, 1.442695
    %v1511 = vpow.pop %v1510
    %v1512 = vsel %vm357, %v1509, 0.0
    %1513 = vadd.xlane.f32.xlu0 %v1512
    %v1514 = vpop.xlane.xlu0 %1513
    %v1515 = vsel %vm357, %v1511, 0.0
    %1516 = vadd.xlane.f32.xlu0 %v1515
    %v1517 = vpop.xlane.xlu0 %1516
    %v1518 = vrcp.pop %v1514
    %v1519 = vrcp.pop %v1517
    %v1520 = vmul.f32 %v1514, %v1518
    %v1521 = vmul.f32 %v1517, %v1519
    %v1522 = vsub.f32 2.0, %v1520
    %v1523 = vsub.f32 2.0, %v1521
    %v1524 = vmul.f32 %v1518, %v1522
    %v1525 = vmul.f32 %v1519, %v1523
    %v1526 = vmul.f32 %v1509, %v1524
    %v1527 = vmul.f32 %v1511, %v1525
    %1530 = vrot.lane.b32.xlu0 %v1526, 16
    %v1531 = vpop.permute.xlu0 %1530
    %1532 = vrot.lane.b32.xlu0 %v1527, 16
    %v1533 = vpop.permute.xlu0 %1532
    %1536 = vst.msk [vmem:[#allocation7 + $0x30] sm:$0xff] %vm549, %v1531
    %1537 = vst.msk [vmem:[#allocation7 + $0x48] sm:$0xff] %vm549, %v1533
    %1538 = vset.pattern.permute.xlu0 65
    %1539 = vperm.xlu0 %1538, %v1377
    %v1540 = vpop.permute.xlu0 %1539
    %1542 = vset.pattern.permute.xlu0 65
    %1543 = vperm.xlu0 %1542, %v1378
    %v1544 = vpop.permute.xlu0 %1543
    %v1546 = vmul.f32 %v53, %v1540
    %v1547 = vmul.f32 %v54, %v1544
    %v1548 = vmul.f32 %v1546, 1.442695
    %v1549 = vpow.pop %v1548
    %v1550 = vmul.f32 %v1547, 1.442695
    %v1551 = vpow.pop %v1550
    %1552 = vset.pattern.permute.xlu0 65
    %1553 = vperm.xlu0 %1552, %v1375
    %v1554 = vpop.permute.xlu0 %1553
    %1556 = vset.pattern.permute.xlu0 65
    %1557 = vperm.xlu0 %1556, %v1376
    %v1558 = vpop.permute.xlu0 %1557
    %v1560 = vmul.f32 %v1554, %v1549
    %v1561 = vmul.f32 %v1558, %v1551
    %1564 = vrot.lane.b32.xlu0 %v1560, 16
    %v1565 = vpop.permute.xlu0 %1564
    %1566 = vrot.lane.b32.xlu0 %v1561, 16
    %v1567 = vpop.permute.xlu0 %1566
    %1570 = vst.msk [vmem:[#allocation7 + $0x38] sm:$0xff] %vm549, %v1565
    %1571 = vst.msk [vmem:[#allocation7 + $0x50] sm:$0xff] %vm549, %v1567
    %1572 = vrot.lane.b32.xlu0 %v168, 32
    %v1573 = vpop.permute.xlu0 %1572
    %1574 = vrot.lane.b32.xlu0 %v174, 32
    %v1575 = vpop.permute.xlu0 %1574
    %v1578 = vsel %vm357, %v1526, 0
    %v1580 = vsel %vm357, %v1527, 0
    %1582 = vmatprep.subr.mxu0 0.0
    %1583 = vmatpush1.msra.mxu0 0.0
    %1584 = vmatprep.subr.mxu0 0.0
    %1585 = vmatpush1.msra.mxu0 0.0
    %1586 = vmatprep.subr.mxu0 0.0
    %1587 = vmatpush1.msra.mxu0 0.0
    %1588 = vmatprep.subr.mxu0 0.0
    %1589 = vmatpush1.msra.mxu0 0.0
    %1590 = vmatprep.subr.mxu0 0.0
    %1591 = vmatpush1.msra.mxu0 0.0
    %1592 = vmatprep.subr.mxu0 0.0
    %1593 = vmatpush1.msra.mxu0 0.0
    %1594 = vmatprep.subr.mxu0 0.0
    %1595 = vmatpush1.msra.mxu0 0.0
    %1596 = vmatprep.subr.mxu0 0.0
    %1597 = vmatpush1.msra.mxu0 0.0
    %1598 = vmatprep.subr.mxu0 0.0
    %1599 = vmatpush1.msra.mxu0 0.0
    %1600 = vmatprep.subr.mxu0 0.0
    %1601 = vmatpush1.msra.mxu0 0.0
    %1602 = vmatprep.subr.mxu0 0.0
    %1603 = vmatpush1.msra.mxu0 0.0
    %1604 = vmatprep.subr.mxu0 0.0
    %1605 = vmatpush1.msra.mxu0 0.0
    %1606 = vmatprep.subr.mxu0 0.0
    %1607 = vmatpush1.msra.mxu0 0.0
    %1608 = vmatprep.subr.mxu0 0.0
    %1609 = vmatpush1.msra.mxu0 0.0
    %1610 = vmatprep.subr.mxu0 0.0
    %1611 = vmatpush1.msra.mxu0 %v1575
    %1612 = vmatprep.subr.mxu0 0.0
    %1613 = vmatpush1.msra.mxu0 %v1573
    %1614 = vmatprep.subr.mxu0 0.0
    %1615 = vmatpush2.msra.mxu0 0.0
    %1616 = vmatprep.subr.mxu0 0.0
    %1617 = vmatpush2.msra.mxu0 0.0
    %1618 = vmatprep.subr.mxu0 0.0
    %1619 = vmatpush2.msra.mxu0 0.0
    %1620 = vmatprep.subr.mxu0 0.0
    %1621 = vmatpush2.msra.mxu0 0.0
    %1622 = vmatprep.subr.mxu0 0.0
    %1623 = vmatpush2.msra.mxu0 0.0
    %1624 = vmatprep.subr.mxu0 0.0
    %1625 = vmatpush2.msra.mxu0 0.0
    %1626 = vmatprep.subr.mxu0 0.0
    %1627 = vmatpush2.msra.mxu0 0.0
    %1628 = vmatprep.subr.mxu0 0.0
    %1629 = vmatpush2.msra.mxu0 0.0
    %1630 = vmatprep.subr.mxu0 0.0
    %1631 = vmatpush2.msra.mxu0 0.0
    %1632 = vmatprep.subr.mxu0 0.0
    %1633 = vmatpush2.msra.mxu0 0.0
    %1634 = vmatprep.subr.mxu0 0.0
    %1635 = vmatpush2.msra.mxu0 0.0
    %1636 = vmatprep.subr.mxu0 0.0
    %1637 = vmatpush2.msra.mxu0 0.0
    %1638 = vmatprep.subr.mxu0 0.0
    %1639 = vmatpush2.msra.mxu0 0.0
    %1640 = vmatprep.subr.mxu0 0.0
    %1641 = vmatpush2.msra.mxu0 0.0
    %1642 = vmatprep.subr.mxu0 0.0
    %1643 = vmatpush2.msra.mxu0 0.0
    %1644 = vmatprep.subr.mxu0 0.0
    %1645 = vmatpush2.msra.mxu0 0.0
    %1646 = vmatprep.mubr.f32.mxu0 0.0
    %1647 = vmatmul.mubr.f32.gmra.mxu0 %v1578
    %v1648 = vpop.f32.mrf.mxu0
    %v1649 = vadd.f32 0.0, %v1648
    %v1650 = vpop.f32.mrf.mxu0
    %1651 = vmatprep.mubr.f32.mxu0 0.0
    %1652 = vmatmul.mubr.f32.gmra.mxu0 %v1580
    %v1653 = vpop.f32.mrf.mxu0
    %v1654 = vadd.f32 0.0, %v1653
    %v1655 = vpop.f32.mrf.mxu0
    %1656 = vdwg.mxu0
    %1657 = vrot.lane.b32.xlu0 %v168, 64
    %v1658 = vpop.permute.xlu0 %1657
    %1659 = vrot.lane.b32.xlu0 %v174, 64
    %v1660 = vpop.permute.xlu0 %1659
    %v1664 = vsel %vm357, %v1371, 0
    %v1667 = vsel %vm357, %v1372, 0
    %1669 = vmatprep.subr.mxu0 0.0
    %1670 = vmatpush1.msra.mxu0 0.0
    %1671 = vmatprep.subr.mxu0 0.0
    %1672 = vmatpush1.msra.mxu0 0.0
    %1673 = vmatprep.subr.mxu0 0.0
    %1674 = vmatpush1.msra.mxu0 0.0
    %1675 = vmatprep.subr.mxu0 0.0
    %1676 = vmatpush1.msra.mxu0 0.0
    %1677 = vmatprep.subr.mxu0 0.0
    %1678 = vmatpush1.msra.mxu0 0.0
    %1679 = vmatprep.subr.mxu0 0.0
    %1680 = vmatpush1.msra.mxu0 0.0
    %1681 = vmatprep.subr.mxu0 0.0
    %1682 = vmatpush1.msra.mxu0 0.0
    %1683 = vmatprep.subr.mxu0 0.0
    %1684 = vmatpush1.msra.mxu0 0.0
    %1685 = vmatprep.subr.mxu0 0.0
    %1686 = vmatpush1.msra.mxu0 0.0
    %1687 = vmatprep.subr.mxu0 0.0
    %1688 = vmatpush1.msra.mxu0 0.0
    %1689 = vmatprep.subr.mxu0 0.0
    %1690 = vmatpush1.msra.mxu0 0.0
    %1691 = vmatprep.subr.mxu0 0.0
    %1692 = vmatpush1.msra.mxu0 0.0
    %1693 = vmatprep.subr.mxu0 0.0
    %1694 = vmatpush1.msra.mxu0 0.0
    %1695 = vmatprep.subr.mxu0 0.0
    %1696 = vmatpush1.msra.mxu0 0.0
    %1697 = vmatprep.subr.mxu0 0.0
    %1698 = vmatpush1.msra.mxu0 %v1660
    %1699 = vmatprep.subr.mxu0 0.0
    %1700 = vmatpush1.msra.mxu0 %v1658
    %1701 = vmatprep.subr.mxu0 0.0
    %1702 = vmatpush2.msra.mxu0 0.0
    %1703 = vmatprep.subr.mxu0 0.0
    %1704 = vmatpush2.msra.mxu0 0.0
    %1705 = vmatprep.subr.mxu0 0.0
    %1706 = vmatpush2.msra.mxu0 0.0
    %1707 = vmatprep.subr.mxu0 0.0
    %1708 = vmatpush2.msra.mxu0 0.0
    %1709 = vmatprep.subr.mxu0 0.0
    %1710 = vmatpush2.msra.mxu0 0.0
    %1711 = vmatprep.subr.mxu0 0.0
    %1712 = vmatpush2.msra.mxu0 0.0
    %1713 = vmatprep.subr.mxu0 0.0
    %1714 = vmatpush2.msra.mxu0 0.0
    %1715 = vmatprep.subr.mxu0 0.0
    %1716 = vmatpush2.msra.mxu0 0.0
    %1717 = vmatprep.subr.mxu0 0.0
    %1718 = vmatpush2.msra.mxu0 0.0
    %1719 = vmatprep.subr.mxu0 0.0
    %1720 = vmatpush2.msra.mxu0 0.0
    %1721 = vmatprep.subr.mxu0 0.0
    %1722 = vmatpush2.msra.mxu0 0.0
    %1723 = vmatprep.subr.mxu0 0.0
    %1724 = vmatpush2.msra.mxu0 0.0
    %1725 = vmatprep.subr.mxu0 0.0
    %1726 = vmatpush2.msra.mxu0 0.0
    %1727 = vmatprep.subr.mxu0 0.0
    %1728 = vmatpush2.msra.mxu0 0.0
    %1729 = vmatprep.subr.mxu0 0.0
    %1730 = vmatpush2.msra.mxu0 0.0
    %1731 = vmatprep.subr.mxu0 0.0
    %1732 = vmatpush2.msra.mxu0 0.0
    %1733 = vmatprep.mubr.f32.mxu0 0.0
    %1734 = vmatmul.mubr.f32.gmra.mxu0 %v1664
    %v1735 = vpop.f32.mrf.mxu0
    %v1736 = vadd.f32 %v1649, %v1735
    %v1737 = vpop.f32.mrf.mxu0
    %1738 = vmatprep.mubr.f32.mxu0 0.0
    %1739 = vmatmul.mubr.f32.gmra.mxu0 %v1667
    %v1740 = vpop.f32.mrf.mxu0
    %v1741 = vadd.f32 %v1654, %v1740
    %v1742 = vpop.f32.mrf.mxu0
    %1743 = vdwg.mxu0
    %1744 = vrot.lane.b32.xlu0 %v168, 112
    %v1745 = vpop.permute.xlu0 %1744
    %1746 = vrot.lane.b32.xlu0 %v174, 112
    %v1747 = vpop.permute.xlu0 %1746
    %1748 = vrot.lane.b32.xlu0 %v168, 80
    %v1749 = vpop.permute.xlu0 %1748
    %1750 = vrot.lane.b32.xlu0 %v174, 80
    %v1751 = vpop.permute.xlu0 %1750
    %v1752 = vsel %vm273, %v1745, 0
    %v1754 = vsel %vm273, %v1747, 0
    %v1756 = vsel %vm273, %v1749, 0
    %v1758 = vsel %vm273, %v1751, 0
    %1760 = vmatprep.subr.mxu0 0.0
    %1761 = vmatpush1.xpose.msra.mxu0 0.0
    %1762 = vmatprep.subr.mxu0 0.0
    %1763 = vmatpush1.xpose.msra.mxu0 0.0
    %1764 = vmatprep.subr.mxu0 0.0
    %1765 = vmatpush1.xpose.msra.mxu0 0.0
    %1766 = vmatprep.subr.mxu0 0.0
    %1767 = vmatpush1.xpose.msra.mxu0 0.0
    %1768 = vmatprep.subr.mxu0 0.0
    %1769 = vmatpush1.xpose.msra.mxu0 0.0
    %1770 = vmatprep.subr.mxu0 0.0
    %1771 = vmatpush1.xpose.msra.mxu0 0.0
    %1772 = vmatprep.subr.mxu0 0.0
    %1773 = vmatpush1.xpose.msra.mxu0 0.0
    %1774 = vmatprep.subr.mxu0 0.0
    %1775 = vmatpush1.xpose.msra.mxu0 0.0
    %1776 = vmatprep.subr.mxu0 0.0
    %1777 = vmatpush1.xpose.msra.mxu0 0.0
    %1778 = vmatprep.subr.mxu0 0.0
    %1779 = vmatpush1.xpose.msra.mxu0 0.0
    %1780 = vmatprep.subr.mxu0 0.0
    %1781 = vmatpush1.xpose.msra.mxu0 0.0
    %1782 = vmatprep.subr.mxu0 0.0
    %1783 = vmatpush1.xpose.msra.mxu0 0.0
    %1784 = vmatprep.subr.mxu0 0.0
    %1785 = vmatpush1.xpose.msra.mxu0 0.0
    %1786 = vmatprep.subr.mxu0 0.0
    %1787 = vmatpush1.xpose.msra.mxu0 0.0
    %1788 = vmatprep.subr.mxu0 0.0
    %1789 = vmatpush1.xpose.msra.mxu0 %v1758
    %1790 = vmatprep.subr.mxu0 0.0
    %1791 = vmatpush1.xpose.msra.mxu0 %v1756
    %1792 = vmatprep.subr.mxu0 0.0
    %1793 = vmatpush2.xpose.msra.mxu0 0.0
    %1794 = vmatprep.subr.mxu0 0.0
    %1795 = vmatpush2.xpose.msra.mxu0 0.0
    %1796 = vmatprep.subr.mxu0 0.0
    %1797 = vmatpush2.xpose.msra.mxu0 0.0
    %1798 = vmatprep.subr.mxu0 0.0
    %1799 = vmatpush2.xpose.msra.mxu0 0.0
    %1800 = vmatprep.subr.mxu0 0.0
    %1801 = vmatpush2.xpose.msra.mxu0 0.0
    %1802 = vmatprep.subr.mxu0 0.0
    %1803 = vmatpush2.xpose.msra.mxu0 0.0
    %1804 = vmatprep.subr.mxu0 0.0
    %1805 = vmatpush2.xpose.msra.mxu0 0.0
    %1806 = vmatprep.subr.mxu0 0.0
    %1807 = vmatpush2.xpose.msra.mxu0 0.0
    %1808 = vmatprep.subr.mxu0 0.0
    %1809 = vmatpush2.xpose.msra.mxu0 0.0
    %1810 = vmatprep.subr.mxu0 0.0
    %1811 = vmatpush2.xpose.msra.mxu0 0.0
    %1812 = vmatprep.subr.mxu0 0.0
    %1813 = vmatpush2.xpose.msra.mxu0 0.0
    %1814 = vmatprep.subr.mxu0 0.0
    %1815 = vmatpush2.xpose.msra.mxu0 0.0
    %1816 = vmatprep.subr.mxu0 0.0
    %1817 = vmatpush2.xpose.msra.mxu0 0.0
    %1818 = vmatprep.subr.mxu0 0.0
    %1819 = vmatpush2.xpose.msra.mxu0 0.0
    %1820 = vmatprep.subr.mxu0 0.0
    %1821 = vmatpush2.xpose.msra.mxu0 0.0
    %1822 = vmatprep.subr.mxu0 0.0
    %1823 = vmatpush2.xpose.msra.mxu0 0.0
    %1824 = vmatprep.mubr.f32.mxu0 0.0
    %1825 = vmatmul.mubr.f32.gmra.mxu0 %v1752
    %v1826 = vpop.f32.mrf.mxu0
    %v1827 = vadd.f32 0.0, %v1826
    %v1828 = vpop.f32.mrf.mxu0
    %1829 = vmatprep.mubr.f32.mxu0 0.0
    %1830 = vmatmul.mubr.f32.gmra.mxu0 %v1754
    %v1831 = vpop.f32.mrf.mxu0
    %v1832 = vadd.f32 0.0, %v1831
    %v1833 = vpop.f32.mrf.mxu0
    %1834 = vdwg.mxu0
    %v1835 = vsel %vm357, %v1827, -inf
    %1836 = vmax.xlane.f32.xlu0 %v1835
    %v1837 = vpop.xlane.xlu0 %1836
    %v1838 = vsel %vm357, %v1832, -inf
    %1839 = vmax.xlane.f32.xlu0 %v1838
    %v1840 = vpop.xlane.xlu0 %1839
    %v1841 = vsub.f32 %v1827, %v1837
    %v1842 = vsub.f32 %v1832, %v1840
    %v1843 = vmul.f32 %v1841, 1.442695
    %v1844 = vpow.pop %v1843
    %v1845 = vmul.f32 %v1842, 1.442695
    %v1846 = vpow.pop %v1845
    %v1847 = vsel %vm357, %v1844, 0.0
    %1848 = vadd.xlane.f32.xlu0 %v1847
    %v1849 = vpop.xlane.xlu0 %1848
    %v1850 = vsel %vm357, %v1846, 0.0
    %1851 = vadd.xlane.f32.xlu0 %v1850
    %v1852 = vpop.xlane.xlu0 %1851
    %v1853 = vrcp.pop %v1849
    %v1854 = vrcp.pop %v1852
    %v1855 = vmul.f32 %v1849, %v1853
    %v1856 = vmul.f32 %v1852, %v1854
    %v1857 = vsub.f32 2.0, %v1855
    %v1858 = vsub.f32 2.0, %v1856
    %v1859 = vmul.f32 %v1853, %v1857
    %v1860 = vmul.f32 %v1854, %v1858
    %v1861 = vmul.f32 %v1844, %v1859
    %v1862 = vmul.f32 %v1846, %v1860
    %1865 = vrot.lane.b32.xlu0 %v1861, 32
    %v1866 = vpop.permute.xlu0 %1865
    %1867 = vrot.lane.b32.xlu0 %v1862, 32
    %v1868 = vpop.permute.xlu0 %1867
    %1871 = vst.msk [vmem:[#allocation7 + $0x30] sm:$0xff] %vm885, %v1866
    %1872 = vst.msk [vmem:[#allocation7 + $0x48] sm:$0xff] %vm885, %v1868
    %1873 = vset.pattern.permute.xlu0 66
    %1874 = vperm.xlu0 %1873, %v1377
    %v1875 = vpop.permute.xlu0 %1874
    %1877 = vset.pattern.permute.xlu0 66
    %1878 = vperm.xlu0 %1877, %v1378
    %v1879 = vpop.permute.xlu0 %1878
    %v1881 = vmul.f32 %v53, %v1875
    %v1882 = vmul.f32 %v54, %v1879
    %v1883 = vmul.f32 %v1881, 1.442695
    %v1884 = vpow.pop %v1883
    %v1885 = vmul.f32 %v1882, 1.442695
    %v1886 = vpow.pop %v1885
    %1887 = vset.pattern.permute.xlu0 66
    %1888 = vperm.xlu0 %1887, %v1375
    %v1889 = vpop.permute.xlu0 %1888
    %1891 = vset.pattern.permute.xlu0 66
    %1892 = vperm.xlu0 %1891, %v1376
    %v1893 = vpop.permute.xlu0 %1892
    %v1895 = vmul.f32 %v1889, %v1884
    %v1896 = vmul.f32 %v1893, %v1886
    %1899 = vrot.lane.b32.xlu0 %v1895, 32
    %v1900 = vpop.permute.xlu0 %1899
    %1901 = vrot.lane.b32.xlu0 %v1896, 32
    %v1902 = vpop.permute.xlu0 %1901
    %1905 = vst.msk [vmem:[#allocation7 + $0x38] sm:$0xff] %vm885, %v1900
    %1906 = vst.msk [vmem:[#allocation7 + $0x50] sm:$0xff] %vm885, %v1902
    %v1907 = vsel %vm357, %v1861, 0
    %v1909 = vsel %vm357, %v1862, 0
    %1911 = vmatprep.subr.mxu0 0.0
    %1912 = vmatpush1.msra.mxu0 0.0
    %1913 = vmatprep.subr.mxu0 0.0
    %1914 = vmatpush1.msra.mxu0 0.0
    %1915 = vmatprep.subr.mxu0 0.0
    %1916 = vmatpush1.msra.mxu0 0.0
    %1917 = vmatprep.subr.mxu0 0.0
    %1918 = vmatpush1.msra.mxu0 0.0
    %1919 = vmatprep.subr.mxu0 0.0
    %1920 = vmatpush1.msra.mxu0 0.0
    %1921 = vmatprep.subr.mxu0 0.0
    %1922 = vmatpush1.msra.mxu0 0.0
    %1923 = vmatprep.subr.mxu0 0.0
    %1924 = vmatpush1.msra.mxu0 0.0
    %1925 = vmatprep.subr.mxu0 0.0
    %1926 = vmatpush1.msra.mxu0 0.0
    %1927 = vmatprep.subr.mxu0 0.0
    %1928 = vmatpush1.msra.mxu0 0.0
    %1929 = vmatprep.subr.mxu0 0.0
    %1930 = vmatpush1.msra.mxu0 0.0
    %1931 = vmatprep.subr.mxu0 0.0
    %1932 = vmatpush1.msra.mxu0 0.0
    %1933 = vmatprep.subr.mxu0 0.0
    %1934 = vmatpush1.msra.mxu0 0.0
    %1935 = vmatprep.subr.mxu0 0.0
    %1936 = vmatpush1.msra.mxu0 0.0
    %1937 = vmatprep.subr.mxu0 0.0
    %1938 = vmatpush1.msra.mxu0 0.0
    %1939 = vmatprep.subr.mxu0 0.0
    %1940 = vmatpush1.msra.mxu0 %v176
    %1941 = vmatprep.subr.mxu0 0.0
    %1942 = vmatpush1.msra.mxu0 %v170
    %1943 = vmatprep.subr.mxu0 0.0
    %1944 = vmatpush2.msra.mxu0 0.0
    %1945 = vmatprep.subr.mxu0 0.0
    %1946 = vmatpush2.msra.mxu0 0.0
    %1947 = vmatprep.subr.mxu0 0.0
    %1948 = vmatpush2.msra.mxu0 0.0
    %1949 = vmatprep.subr.mxu0 0.0
    %1950 = vmatpush2.msra.mxu0 0.0
    %1951 = vmatprep.subr.mxu0 0.0
    %1952 = vmatpush2.msra.mxu0 0.0
    %1953 = vmatprep.subr.mxu0 0.0
    %1954 = vmatpush2.msra.mxu0 0.0
    %1955 = vmatprep.subr.mxu0 0.0
    %1956 = vmatpush2.msra.mxu0 0.0
    %1957 = vmatprep.subr.mxu0 0.0
    %1958 = vmatpush2.msra.mxu0 0.0
    %1959 = vmatprep.subr.mxu0 0.0
    %1960 = vmatpush2.msra.mxu0 0.0
    %1961 = vmatprep.subr.mxu0 0.0
    %1962 = vmatpush2.msra.mxu0 0.0
    %1963 = vmatprep.subr.mxu0 0.0
    %1964 = vmatpush2.msra.mxu0 0.0
    %1965 = vmatprep.subr.mxu0 0.0
    %1966 = vmatpush2.msra.mxu0 0.0
    %1967 = vmatprep.subr.mxu0 0.0
    %1968 = vmatpush2.msra.mxu0 0.0
    %1969 = vmatprep.subr.mxu0 0.0
    %1970 = vmatpush2.msra.mxu0 0.0
    %1971 = vmatprep.subr.mxu0 0.0
    %1972 = vmatpush2.msra.mxu0 0.0
    %1973 = vmatprep.subr.mxu0 0.0
    %1974 = vmatpush2.msra.mxu0 0.0
    %1975 = vmatprep.mubr.f32.mxu0 0.0
    %1976 = vmatmul.mubr.f32.gmra.mxu0 %v1907
    %v1977 = vpop.f32.mrf.mxu0
    %v1978 = vadd.f32 0.0, %v1977
    %v1979 = vpop.f32.mrf.mxu0
    %1980 = vmatprep.mubr.f32.mxu0 0.0
    %1981 = vmatmul.mubr.f32.gmra.mxu0 %v1909
    %v1982 = vpop.f32.mrf.mxu0
    %v1983 = vadd.f32 0.0, %v1982
    %v1984 = vpop.f32.mrf.mxu0
    %1985 = vdwg.mxu0
    %v1986 = vadd.f32 %v1736, %v1978
    %v1987 = vadd.f32 %v1741, %v1983
    %1988 = vrot.lane.b32.xlu0 %v168, 104
    %v1989 = vpop.permute.xlu0 %1988
    %1990 = vrot.lane.b32.xlu0 %v174, 104
    %v1991 = vpop.permute.xlu0 %1990
    %1992 = vrot.lane.b32.xlu0 %v168, 72
    %v1993 = vpop.permute.xlu0 %1992
    %1994 = vrot.lane.b32.xlu0 %v174, 72
    %v1995 = vpop.permute.xlu0 %1994
    %v1996 = vsel %vm273, %v1989, 0
    %v1998 = vsel %vm273, %v1991, 0
    %v2000 = vsel %vm273, %v1993, 0
    %v2002 = vsel %vm273, %v1995, 0
    %2004 = vmatprep.subr.mxu0 0.0
    %2005 = vmatpush1.xpose.msra.mxu0 0.0
    %2006 = vmatprep.subr.mxu0 0.0
    %2007 = vmatpush1.xpose.msra.mxu0 0.0
    %2008 = vmatprep.subr.mxu0 0.0
    %2009 = vmatpush1.xpose.msra.mxu0 0.0
    %2010 = vmatprep.subr.mxu0 0.0
    %2011 = vmatpush1.xpose.msra.mxu0 0.0
    %2012 = vmatprep.subr.mxu0 0.0
    %2013 = vmatpush1.xpose.msra.mxu0 0.0
    %2014 = vmatprep.subr.mxu0 0.0
    %2015 = vmatpush1.xpose.msra.mxu0 0.0
    %2016 = vmatprep.subr.mxu0 0.0
    %2017 = vmatpush1.xpose.msra.mxu0 0.0
    %2018 = vmatprep.subr.mxu0 0.0
    %2019 = vmatpush1.xpose.msra.mxu0 0.0
    %2020 = vmatprep.subr.mxu0 0.0
    %2021 = vmatpush1.xpose.msra.mxu0 0.0
    %2022 = vmatprep.subr.mxu0 0.0
    %2023 = vmatpush1.xpose.msra.mxu0 0.0
    %2024 = vmatprep.subr.mxu0 0.0
    %2025 = vmatpush1.xpose.msra.mxu0 0.0
    %2026 = vmatprep.subr.mxu0 0.0
    %2027 = vmatpush1.xpose.msra.mxu0 0.0
    %2028 = vmatprep.subr.mxu0 0.0
    %2029 = vmatpush1.xpose.msra.mxu0 0.0
    %2030 = vmatprep.subr.mxu0 0.0
    %2031 = vmatpush1.xpose.msra.mxu0 0.0
    %2032 = vmatprep.subr.mxu0 0.0
    %2033 = vmatpush1.xpose.msra.mxu0 %v2002
    %2034 = vmatprep.subr.mxu0 0.0
    %2035 = vmatpush1.xpose.msra.mxu0 %v2000
    %2036 = vmatprep.subr.mxu0 0.0
    %2037 = vmatpush2.xpose.msra.mxu0 0.0
    %2038 = vmatprep.subr.mxu0 0.0
    %2039 = vmatpush2.xpose.msra.mxu0 0.0
    %2040 = vmatprep.subr.mxu0 0.0
    %2041 = vmatpush2.xpose.msra.mxu0 0.0
    %2042 = vmatprep.subr.mxu0 0.0
    %2043 = vmatpush2.xpose.msra.mxu0 0.0
    %2044 = vmatprep.subr.mxu0 0.0
    %2045 = vmatpush2.xpose.msra.mxu0 0.0
    %2046 = vmatprep.subr.mxu0 0.0
    %2047 = vmatpush2.xpose.msra.mxu0 0.0
    %2048 = vmatprep.subr.mxu0 0.0
    %2049 = vmatpush2.xpose.msra.mxu0 0.0
    %2050 = vmatprep.subr.mxu0 0.0
    %2051 = vmatpush2.xpose.msra.mxu0 0.0
    %2052 = vmatprep.subr.mxu0 0.0
    %2053 = vmatpush2.xpose.msra.mxu0 0.0
    %2054 = vmatprep.subr.mxu0 0.0
    %2055 = vmatpush2.xpose.msra.mxu0 0.0
    %2056 = vmatprep.subr.mxu0 0.0
    %2057 = vmatpush2.xpose.msra.mxu0 0.0
    %2058 = vmatprep.subr.mxu0 0.0
    %2059 = vmatpush2.xpose.msra.mxu0 0.0
    %2060 = vmatprep.subr.mxu0 0.0
    %2061 = vmatpush2.xpose.msra.mxu0 0.0
    %2062 = vmatprep.subr.mxu0 0.0
    %2063 = vmatpush2.xpose.msra.mxu0 0.0
    %2064 = vmatprep.subr.mxu0 0.0
    %2065 = vmatpush2.xpose.msra.mxu0 0.0
    %2066 = vmatprep.subr.mxu0 0.0
    %2067 = vmatpush2.xpose.msra.mxu0 0.0
    %2068 = vmatprep.mubr.f32.mxu0 0.0
    %2069 = vmatmul.mubr.f32.gmra.mxu0 %v1996
    %v2070 = vpop.f32.mrf.mxu0
    %v2071 = vadd.f32 0.0, %v2070
    %v2072 = vpop.f32.mrf.mxu0
    %2073 = vmatprep.mubr.f32.mxu0 0.0
    %2074 = vmatmul.mubr.f32.gmra.mxu0 %v1998
    %v2075 = vpop.f32.mrf.mxu0
    %v2076 = vadd.f32 0.0, %v2075
    %v2077 = vpop.f32.mrf.mxu0
    %2078 = vdwg.mxu0
    %v2079 = vsel %vm357, %v2071, -inf
    %2080 = vmax.xlane.f32.xlu0 %v2079
    %v2081 = vpop.xlane.xlu0 %2080
    %v2082 = vsel %vm357, %v2076, -inf
    %2083 = vmax.xlane.f32.xlu0 %v2082
    %v2084 = vpop.xlane.xlu0 %2083
    %v2085 = vsub.f32 %v2071, %v2081
    %v2086 = vsub.f32 %v2076, %v2084
    %v2087 = vmul.f32 %v2085, 1.442695
    %v2088 = vpow.pop %v2087
    %v2089 = vmul.f32 %v2086, 1.442695
    %v2090 = vpow.pop %v2089
    %v2091 = vsel %vm357, %v2088, 0.0
    %2092 = vadd.xlane.f32.xlu0 %v2091
    %v2093 = vpop.xlane.xlu0 %2092
    %v2094 = vsel %vm357, %v2090, 0.0
    %2095 = vadd.xlane.f32.xlu0 %v2094
    %v2096 = vpop.xlane.xlu0 %2095
    %v2097 = vrcp.pop %v2093
    %v2098 = vrcp.pop %v2096
    %v2099 = vmul.f32 %v2093, %v2097
    %v2100 = vmul.f32 %v2096, %v2098
    %v2101 = vsub.f32 2.0, %v2099
    %v2102 = vsub.f32 2.0, %v2100
    %v2103 = vmul.f32 %v2097, %v2101
    %v2104 = vmul.f32 %v2098, %v2102
    %v2105 = vmul.f32 %v2088, %v2103
    %v2106 = vmul.f32 %v2090, %v2104
    %2109 = vrot.lane.b32.xlu0 %v2105, 48
    %v2110 = vpop.permute.xlu0 %2109
    %2111 = vrot.lane.b32.xlu0 %v2106, 48
    %v2112 = vpop.permute.xlu0 %2111
    %2115 = vst.msk [vmem:[#allocation7 + $0x30] sm:$0xff] %vm1130, %v2110
    %2116 = vst.msk [vmem:[#allocation7 + $0x48] sm:$0xff] %vm1130, %v2112
    %2117 = vset.pattern.permute.xlu0 67
    %2118 = vperm.xlu0 %2117, %v1377
    %v2119 = vpop.permute.xlu0 %2118
    %2121 = vset.pattern.permute.xlu0 67
    %2122 = vperm.xlu0 %2121, %v1378
    %v2123 = vpop.permute.xlu0 %2122
    %v2125 = vmul.f32 %v53, %v2119
    %v2126 = vmul.f32 %v54, %v2123
    %v2127 = vmul.f32 %v2125, 1.442695
    %v2128 = vpow.pop %v2127
    %v2129 = vmul.f32 %v2126, 1.442695
    %v2130 = vpow.pop %v2129
    %2131 = vset.pattern.permute.xlu0 67
    %2132 = vperm.xlu0 %2131, %v1375
    %v2133 = vpop.permute.xlu0 %2132
    %2135 = vset.pattern.permute.xlu0 67
    %2136 = vperm.xlu0 %2135, %v1376
    %v2137 = vpop.permute.xlu0 %2136
    %v2139 = vmul.f32 %v2133, %v2128
    %v2140 = vmul.f32 %v2137, %v2130
    %2143 = vrot.lane.b32.xlu0 %v2139, 48
    %v2144 = vpop.permute.xlu0 %2143
    %2145 = vrot.lane.b32.xlu0 %v2140, 48
    %v2146 = vpop.permute.xlu0 %2145
    %2149 = vst.msk [vmem:[#allocation7 + $0x38] sm:$0xff] %vm1130, %v2144
    %2150 = vst.msk [vmem:[#allocation7 + $0x50] sm:$0xff] %vm1130, %v2146
    %2153 = vrot.lane.b32.xlu0 %v170, 96
    %v2154 = vpop.permute.xlu0 %2153
    %2155 = vrot.lane.b32.xlu0 %v176, 96
    %v2156 = vpop.permute.xlu0 %2155
    %v2159 = vsel %vm357, %v2105, 0
    %v2161 = vsel %vm357, %v2106, 0
    %2163 = vmatprep.subr.mxu0 0.0
    %2164 = vmatpush1.msra.mxu0 0.0
    %2165 = vmatprep.subr.mxu0 0.0
    %2166 = vmatpush1.msra.mxu0 0.0
    %2167 = vmatprep.subr.mxu0 0.0
    %2168 = vmatpush1.msra.mxu0 0.0
    %2169 = vmatprep.subr.mxu0 0.0
    %2170 = vmatpush1.msra.mxu0 0.0
    %2171 = vmatprep.subr.mxu0 0.0
    %2172 = vmatpush1.msra.mxu0 0.0
    %2173 = vmatprep.subr.mxu0 0.0
    %2174 = vmatpush1.msra.mxu0 0.0
    %2175 = vmatprep.subr.mxu0 0.0
    %2176 = vmatpush1.msra.mxu0 0.0
    %2177 = vmatprep.subr.mxu0 0.0
    %2178 = vmatpush1.msra.mxu0 0.0
    %2179 = vmatprep.subr.mxu0 0.0
    %2180 = vmatpush1.msra.mxu0 0.0
    %2181 = vmatprep.subr.mxu0 0.0
    %2182 = vmatpush1.msra.mxu0 0.0
    %2183 = vmatprep.subr.mxu0 0.0
    %2184 = vmatpush1.msra.mxu0 0.0
    %2185 = vmatprep.subr.mxu0 0.0
    %2186 = vmatpush1.msra.mxu0 0.0
    %2187 = vmatprep.subr.mxu0 0.0
    %2188 = vmatpush1.msra.mxu0 0.0
    %2189 = vmatprep.subr.mxu0 0.0
    %2190 = vmatpush1.msra.mxu0 0.0
    %2191 = vmatprep.subr.mxu0 0.0
    %2192 = vmatpush1.msra.mxu0 %v2156
    %2193 = vmatprep.subr.mxu0 0.0
    %2194 = vmatpush1.msra.mxu0 %v2154
    %2195 = vmatprep.subr.mxu0 0.0
    %2196 = vmatpush2.msra.mxu0 0.0
    %2197 = vmatprep.subr.mxu0 0.0
    %2198 = vmatpush2.msra.mxu0 0.0
    %2199 = vmatprep.subr.mxu0 0.0
    %2200 = vmatpush2.msra.mxu0 0.0
    %2201 = vmatprep.subr.mxu0 0.0
    %2202 = vmatpush2.msra.mxu0 0.0
    %2203 = vmatprep.subr.mxu0 0.0
    %2204 = vmatpush2.msra.mxu0 0.0
    %2205 = vmatprep.subr.mxu0 0.0
    %2206 = vmatpush2.msra.mxu0 0.0
    %2207 = vmatprep.subr.mxu0 0.0
    %2208 = vmatpush2.msra.mxu0 0.0
    %2209 = vmatprep.subr.mxu0 0.0
    %2210 = vmatpush2.msra.mxu0 0.0
    %2211 = vmatprep.subr.mxu0 0.0
    %2212 = vmatpush2.msra.mxu0 0.0
    %2213 = vmatprep.subr.mxu0 0.0
    %2214 = vmatpush2.msra.mxu0 0.0
    %2215 = vmatprep.subr.mxu0 0.0
    %2216 = vmatpush2.msra.mxu0 0.0
    %2217 = vmatprep.subr.mxu0 0.0
    %2218 = vmatpush2.msra.mxu0 0.0
    %2219 = vmatprep.subr.mxu0 0.0
    %2220 = vmatpush2.msra.mxu0 0.0
    %2221 = vmatprep.subr.mxu0 0.0
    %2222 = vmatpush2.msra.mxu0 0.0
    %2223 = vmatprep.subr.mxu0 0.0
    %2224 = vmatpush2.msra.mxu0 0.0
    %2225 = vmatprep.subr.mxu0 0.0
    %2226 = vmatpush2.msra.mxu0 0.0
    %2227 = vmatprep.mubr.f32.mxu0 0.0
    %2228 = vmatmul.mubr.f32.gmra.mxu0 %v2159
    %v2229 = vpop.f32.mrf.mxu0
    %v2230 = vadd.f32 0.0, %v2229
    %v2231 = vpop.f32.mrf.mxu0
    %2232 = vmatprep.mubr.f32.mxu0 0.0
    %2233 = vmatmul.mubr.f32.gmra.mxu0 %v2161
    %v2234 = vpop.f32.mrf.mxu0
    %v2235 = vadd.f32 0.0, %v2234
    %v2236 = vpop.f32.mrf.mxu0
    %2237 = vdwg.mxu0
    %v2238 = vadd.f32 %v1986, %v2230
    %v2239 = vadd.f32 %v1987, %v2235
    %v2240 = vld [vmem:[#allocation5 + $0x21] ss:$0 sm:$0xff]
    %v2241 = vadd.f32 %v1254, %v2240
    %v2242 = vadd.f32 %v1255, %v2240
    %v2243 = vadd.f32 %v2238, %v2240
    %v2244 = vadd.f32 %v2239, %v2240
    %v2245 = vadd.f32 %v49, %v2241
    %v2246 = vadd.f32 %v50, %v2242
    %v2247 = vadd.f32 %v51, %v2243
    %v2248 = vadd.f32 %v52, %v2244
    %v2249 = vld [vmem:[#allocation5 + $0x22] ss:$0 sm:$0xff]
    %v2250 = vld [vmem:[#allocation5 + $0x23] ss:$0 sm:$0xff]
    %v2251 = vsel %vm76, %v2245, 0.0
    %2252 = vadd.xlane.f32.xlu0 %v2251
    %v2253 = vpop.xlane.xlu0 %2252
    %v2254 = vsel %vm76, %v2246, 0.0
    %2255 = vadd.xlane.f32.xlu0 %v2254
    %v2256 = vpop.xlane.xlu0 %2255
    %v2257 = vsel %vm76, %v2247, 0.0
    %2258 = vadd.xlane.f32.xlu0 %v2257
    %v2259 = vpop.xlane.xlu0 %2258
    %v2260 = vsel %vm76, %v2248, 0.0
    %2261 = vadd.xlane.f32.xlu0 %v2260
    %v2262 = vpop.xlane.xlu0 %2261
    %v2263 = vrcp.pop 32.0
    %v2264 = vmul.f32 %v2253, %v2263
    %v2265 = vmul.f32 %v2256, %v2263
    %v2266 = vmul.f32 %v2259, %v2263
    %v2267 = vmul.f32 %v2262, %v2263
    %v2268 = vsub.f32 %v2245, %v2264
    %v2269 = vsub.f32 %v2246, %v2265
    %v2270 = vsub.f32 %v2247, %v2266
    %v2271 = vsub.f32 %v2248, %v2267
    %v2272 = vmul.f32 %v2268, %v2268
    %v2273 = vmul.f32 %v2269, %v2269
    %v2274 = vmul.f32 %v2270, %v2270
    %v2275 = vmul.f32 %v2271, %v2271
    %v2276 = vsel %vm76, %v2272, 0.0
    %2277 = vadd.xlane.f32.xlu0 %v2276
    %v2278 = vpop.xlane.xlu0 %2277
    %v2279 = vsel %vm76, %v2273, 0.0
    %2280 = vadd.xlane.f32.xlu0 %v2279
    %v2281 = vpop.xlane.xlu0 %2280
    %v2282 = vsel %vm76, %v2274, 0.0
    %2283 = vadd.xlane.f32.xlu0 %v2282
    %v2284 = vpop.xlane.xlu0 %2283
    %v2285 = vsel %vm76, %v2275, 0.0
    %2286 = vadd.xlane.f32.xlu0 %v2285
    %v2287 = vpop.xlane.xlu0 %2286
    %v2288 = vmul.f32 %v2278, %v2263
    %v2289 = vmul.f32 %v2281, %v2263
    %v2290 = vmul.f32 %v2284, %v2263
    %v2291 = vmul.f32 %v2287, %v2263
    %v2292 = vadd.f32 %v2288, 1e-05
    %v2293 = vadd.f32 %v2289, 1e-05
    %v2294 = vadd.f32 %v2290, 1e-05
    %v2295 = vadd.f32 %v2291, 1e-05
    %v2296 = vrsqrt.pop %v2292
    %v2297 = vrsqrt.pop %v2293
    %v2298 = vrsqrt.pop %v2294
    %v2299 = vrsqrt.pop %v2295
    %v2300 = vmul.f32 %v2268, %v2296
    %v2301 = vmul.f32 %v2269, %v2297
    %v2302 = vmul.f32 %v2270, %v2298
    %v2303 = vmul.f32 %v2271, %v2299
    %v2304 = vmul.f32 %v2300, %v2249
    %v2305 = vmul.f32 %v2301, %v2249
    %v2306 = vmul.f32 %v2302, %v2249
    %v2307 = vmul.f32 %v2303, %v2249
    %v2308 = vadd.f32 %v2304, %v2250
    %v2309 = vadd.f32 %v2305, %v2250
    %v2310 = vadd.f32 %v2306, %v2250
    %v2311 = vadd.f32 %v2307, %v2250
    %v2312 = vld [vmem:[%s2] sm:$0xff]
    %v2313 = vld [vmem:[%s2 + $0x8] sm:$0xff]
    %v2314 = vld [vmem:[%s2 + $0x10] sm:$0xff]
    %v2315 = vld [vmem:[%s2 + $0x18] sm:$0xff]
    %v2316 = vld [vmem:[#allocation5 + $0x24] ss:$0 sm:$0xff]
    %v2318 = vsel %vm76, %v2308, 0
    %v2321 = vsel %vm76, %v2309, 0
    %v2324 = vsel %vm76, %v2310, 0
    %v2327 = vsel %vm76, %v2311, 0
    %2329 = vmatprep.subr.mxu0 0.0
    %2330 = vmatpush1.msra.mxu0 0.0
    %2331 = vmatprep.subr.mxu0 0.0
    %2332 = vmatpush1.msra.mxu0 0.0
    %2333 = vmatprep.subr.mxu0 0.0
    %2334 = vmatpush1.msra.mxu0 0.0
    %2335 = vmatprep.subr.mxu0 0.0
    %2336 = vmatpush1.msra.mxu0 0.0
    %2337 = vmatprep.subr.mxu0 0.0
    %2338 = vmatpush1.msra.mxu0 0.0
    %2339 = vmatprep.subr.mxu0 0.0
    %2340 = vmatpush1.msra.mxu0 0.0
    %2341 = vmatprep.subr.mxu0 0.0
    %2342 = vmatpush1.msra.mxu0 0.0
    %2343 = vmatprep.subr.mxu0 0.0
    %2344 = vmatpush1.msra.mxu0 0.0
    %2345 = vmatprep.subr.mxu0 0.0
    %2346 = vmatpush1.msra.mxu0 0.0
    %2347 = vmatprep.subr.mxu0 0.0
    %2348 = vmatpush1.msra.mxu0 0.0
    %2349 = vmatprep.subr.mxu0 0.0
    %2350 = vmatpush1.msra.mxu0 0.0
    %2351 = vmatprep.subr.mxu0 0.0
    %2352 = vmatpush1.msra.mxu0 0.0
    %2353 = vmatprep.subr.mxu0 0.0
    %2354 = vmatpush1.msra.mxu0 %v2315
    %2355 = vmatprep.subr.mxu0 0.0
    %2356 = vmatpush1.msra.mxu0 %v2314
    %2357 = vmatprep.subr.mxu0 0.0
    %2358 = vmatpush1.msra.mxu0 %v2313
    %2359 = vmatprep.subr.mxu0 0.0
    %2360 = vmatpush1.msra.mxu0 %v2312
    %2361 = vmatprep.subr.mxu0 0.0
    %2362 = vmatpush2.msra.mxu0 0.0
    %2363 = vmatprep.subr.mxu0 0.0
    %2364 = vmatpush2.msra.mxu0 0.0
    %2365 = vmatprep.subr.mxu0 0.0
    %2366 = vmatpush2.msra.mxu0 0.0
    %2367 = vmatprep.subr.mxu0 0.0
    %2368 = vmatpush2.msra.mxu0 0.0
    %2369 = vmatprep.subr.mxu0 0.0
    %2370 = vmatpush2.msra.mxu0 0.0
    %2371 = vmatprep.subr.mxu0 0.0
    %2372 = vmatpush2.msra.mxu0 0.0
    %2373 = vmatprep.subr.mxu0 0.0
    %2374 = vmatpush2.msra.mxu0 0.0
    %2375 = vmatprep.subr.mxu0 0.0
    %2376 = vmatpush2.msra.mxu0 0.0
    %2377 = vmatprep.subr.mxu0 0.0
    %2378 = vmatpush2.msra.mxu0 0.0
    %2379 = vmatprep.subr.mxu0 0.0
    %2380 = vmatpush2.msra.mxu0 0.0
    %2381 = vmatprep.subr.mxu0 0.0
    %2382 = vmatpush2.msra.mxu0 0.0
    %2383 = vmatprep.subr.mxu0 0.0
    %2384 = vmatpush2.msra.mxu0 0.0
    %2385 = vmatprep.subr.mxu0 0.0
    %2386 = vmatpush2.msra.mxu0 0.0
    %2387 = vmatprep.subr.mxu0 0.0
    %2388 = vmatpush2.msra.mxu0 0.0
    %2389 = vmatprep.subr.mxu0 0.0
    %2390 = vmatpush2.msra.mxu0 0.0
    %2391 = vmatprep.subr.mxu0 0.0
    %2392 = vmatpush2.msra.mxu0 0.0
    %2393 = vmatprep.mubr.f32.mxu0 0.0
    %2394 = vmatmul.mubr.f32.gmra.mxu0 %v2318
    %v2395 = vpop.f32.mrf.mxu0
    %v2396 = vadd.f32 %v2316, %v2395
    %v2397 = vpop.f32.mrf.mxu0
    %2398 = vmatprep.mubr.f32.mxu0 0.0
    %2399 = vmatmul.mubr.f32.gmra.mxu0 %v2321
    %v2400 = vpop.f32.mrf.mxu0
    %v2401 = vadd.f32 %v2316, %v2400
    %v2402 = vpop.f32.mrf.mxu0
    %2403 = vmatprep.mubr.f32.mxu0 0.0
    %2404 = vmatmul.mubr.f32.gmra.mxu0 %v2324
    %v2405 = vpop.f32.mrf.mxu0
    %v2406 = vadd.f32 %v2316, %v2405
    %v2407 = vpop.f32.mrf.mxu0
    %2408 = vmatprep.mubr.f32.mxu0 0.0
    %2409 = vmatmul.mubr.f32.gmra.mxu0 %v2327
    %v2410 = vpop.f32.mrf.mxu0
    %v2411 = vadd.f32 %v2316, %v2410
    %v2412 = vpop.f32.mrf.mxu0
    %2413 = vdwg.mxu0
    %v2414 = vmax.f32 %v2396, 0.0
    %v2415 = vmax.f32 %v2401, 0.0
    %v2416 = vmax.f32 %v2406, 0.0
    %v2417 = vmax.f32 %v2411, 0.0
    %v2418 = vld [vmem:[%s3] sm:$0xff]
    %v2419 = vld [vmem:[%s3 + $0x8] sm:$0xff]
    %v2420 = vld [vmem:[%s3 + $0x10] sm:$0xff]
    %v2421 = vld [vmem:[%s3 + $0x18] sm:$0xff]
    %v2422 = vld [vmem:[%s3 + $0x20] sm:$0xff]
    %v2423 = vld [vmem:[%s3 + $0x28] sm:$0xff]
    %v2424 = vld [vmem:[%s3 + $0x30] sm:$0xff]
    %v2425 = vld [vmem:[%s3 + $0x38] sm:$0xff]
    %v2426 = vld [vmem:[#allocation5 + $0x25] ss:$0 sm:$0xff]
    %vm2427 = vcmask 523264
    %v2429 = vsel %vm2427, %v2414, 0
    %v2432 = vsel %vm2427, %v2415, 0
    %v2435 = vsel %vm2427, %v2416, 0
    %v2438 = vsel %vm2427, %v2417, 0
    %2440 = vmatprep.subr.mxu0 0.0
    %2441 = vmatpush1.msra.mxu0 0.0
    %2442 = vmatprep.subr.mxu0 0.0
    %2443 = vmatpush1.msra.mxu0 0.0
    %2444 = vmatprep.subr.mxu0 0.0
    %2445 = vmatpush1.msra.mxu0 0.0
    %2446 = vmatprep.subr.mxu0 0.0
    %2447 = vmatpush1.msra.mxu0 0.0
    %2448 = vmatprep.subr.mxu0 0.0
    %2449 = vmatpush1.msra.mxu0 0.0
    %2450 = vmatprep.subr.mxu0 0.0
    %2451 = vmatpush1.msra.mxu0 0.0
    %2452 = vmatprep.subr.mxu0 0.0
    %2453 = vmatpush1.msra.mxu0 0.0
    %2454 = vmatprep.subr.mxu0 0.0
    %2455 = vmatpush1.msra.mxu0 0.0
    %2456 = vmatprep.subr.mxu0 0.0
    %2457 = vmatpush1.msra.mxu0 %v2425
    %2458 = vmatprep.subr.mxu0 0.0
    %2459 = vmatpush1.msra.mxu0 %v2424
    %2460 = vmatprep.subr.mxu0 0.0
    %2461 = vmatpush1.msra.mxu0 %v2423
    %2462 = vmatprep.subr.mxu0 0.0
    %2463 = vmatpush1.msra.mxu0 %v2422
    %2464 = vmatprep.subr.mxu0 0.0
    %2465 = vmatpush1.msra.mxu0 %v2421
    %2466 = vmatprep.subr.mxu0 0.0
    %2467 = vmatpush1.msra.mxu0 %v2420
    %2468 = vmatprep.subr.mxu0 0.0
    %2469 = vmatpush1.msra.mxu0 %v2419
    %2470 = vmatprep.subr.mxu0 0.0
    %2471 = vmatpush1.msra.mxu0 %v2418
    %2472 = vmatprep.subr.mxu0 0.0
    %2473 = vmatpush2.msra.mxu0 0.0
    %2474 = vmatprep.subr.mxu0 0.0
    %2475 = vmatpush2.msra.mxu0 0.0
    %2476 = vmatprep.subr.mxu0 0.0
    %2477 = vmatpush2.msra.mxu0 0.0
    %2478 = vmatprep.subr.mxu0 0.0
    %2479 = vmatpush2.msra.mxu0 0.0
    %2480 = vmatprep.subr.mxu0 0.0
    %2481 = vmatpush2.msra.mxu0 0.0
    %2482 = vmatprep.subr.mxu0 0.0
    %2483 = vmatpush2.msra.mxu0 0.0
    %2484 = vmatprep.subr.mxu0 0.0
    %2485 = vmatpush2.msra.mxu0 0.0
    %2486 = vmatprep.subr.mxu0 0.0
    %2487 = vmatpush2.msra.mxu0 0.0
    %2488 = vmatprep.subr.mxu0 0.0
    %2489 = vmatpush2.msra.mxu0 0.0
    %2490 = vmatprep.subr.mxu0 0.0
    %2491 = vmatpush2.msra.mxu0 0.0
    %2492 = vmatprep.subr.mxu0 0.0
    %2493 = vmatpush2.msra.mxu0 0.0
    %2494 = vmatprep.subr.mxu0 0.0
    %2495 = vmatpush2.msra.mxu0 0.0
    %2496 = vmatprep.subr.mxu0 0.0
    %2497 = vmatpush2.msra.mxu0 0.0
    %2498 = vmatprep.subr.mxu0 0.0
    %2499 = vmatpush2.msra.mxu0 0.0
    %2500 = vmatprep.subr.mxu0 0.0
    %2501 = vmatpush2.msra.mxu0 0.0
    %2502 = vmatprep.subr.mxu0 0.0
    %2503 = vmatpush2.msra.mxu0 0.0
    %2504 = vmatprep.mubr.f32.mxu0 0.0
    %2505 = vmatmul.mubr.f32.gmra.mxu0 %v2429
    %v2506 = vpop.f32.mrf.mxu0
    %v2507 = vadd.f32 %v2426, %v2506
    %v2508 = vpop.f32.mrf.mxu0
    %2509 = vmatprep.mubr.f32.mxu0 0.0
    %2510 = vmatmul.mubr.f32.gmra.mxu0 %v2432
    %v2511 = vpop.f32.mrf.mxu0
    %v2512 = vadd.f32 %v2426, %v2511
    %v2513 = vpop.f32.mrf.mxu0
    %2514 = vmatprep.mubr.f32.mxu0 0.0
    %2515 = vmatmul.mubr.f32.gmra.mxu0 %v2435
    %v2516 = vpop.f32.mrf.mxu0
    %v2517 = vadd.f32 %v2426, %v2516
    %v2518 = vpop.f32.mrf.mxu0
    %2519 = vmatprep.mubr.f32.mxu0 0.0
    %2520 = vmatmul.mubr.f32.gmra.mxu0 %v2438
    %v2521 = vpop.f32.mrf.mxu0
    %v2522 = vadd.f32 %v2426, %v2521
    %v2523 = vpop.f32.mrf.mxu0
    %2524 = vdwg.mxu0
    %v2525 = vadd.f32 %v2308, %v2507
    %v2526 = vadd.f32 %v2309, %v2512
    %v2527 = vadd.f32 %v2310, %v2517
    %v2528 = vadd.f32 %v2311, %v2522
    %v2529 = vld [vmem:[#allocation5 + $0x26] ss:$0 sm:$0xff]
    %v2530 = vld [vmem:[#allocation5 + $0x27] ss:$0 sm:$0xff]
    %v2531 = vsel %vm76, %v2525, 0.0
    %2532 = vadd.xlane.f32.xlu0 %v2531
    %v2533 = vpop.xlane.xlu0 %2532
    %v2534 = vsel %vm76, %v2526, 0.0
    %2535 = vadd.xlane.f32.xlu0 %v2534
    %v2536 = vpop.xlane.xlu0 %2535
    %v2537 = vsel %vm76, %v2527, 0.0
    %2538 = vadd.xlane.f32.xlu0 %v2537
    %v2539 = vpop.xlane.xlu0 %2538
    %v2540 = vsel %vm76, %v2528, 0.0
    %2541 = vadd.xlane.f32.xlu0 %v2540
    %v2542 = vpop.xlane.xlu0 %2541
    %v2543 = vmul.f32 %v2533, %v2263
    %v2544 = vmul.f32 %v2536, %v2263
    %v2545 = vmul.f32 %v2539, %v2263
    %v2546 = vmul.f32 %v2542, %v2263
    %v2547 = vsub.f32 %v2525, %v2543
    %v2548 = vsub.f32 %v2526, %v2544
    %v2549 = vsub.f32 %v2527, %v2545
    %v2550 = vsub.f32 %v2528, %v2546
    %v2551 = vmul.f32 %v2547, %v2547
    %v2552 = vmul.f32 %v2548, %v2548
    %v2553 = vmul.f32 %v2549, %v2549
    %v2554 = vmul.f32 %v2550, %v2550
    %v2555 = vsel %vm76, %v2551, 0.0
    %2556 = vadd.xlane.f32.xlu0 %v2555
    %v2557 = vpop.xlane.xlu0 %2556
    %v2558 = vsel %vm76, %v2552, 0.0
    %2559 = vadd.xlane.f32.xlu0 %v2558
    %v2560 = vpop.xlane.xlu0 %2559
    %v2561 = vsel %vm76, %v2553, 0.0
    %2562 = vadd.xlane.f32.xlu0 %v2561
    %v2563 = vpop.xlane.xlu0 %2562
    %v2564 = vsel %vm76, %v2554, 0.0
    %2565 = vadd.xlane.f32.xlu0 %v2564
    %v2566 = vpop.xlane.xlu0 %2565
    %v2567 = vmul.f32 %v2557, %v2263
    %v2568 = vmul.f32 %v2560, %v2263
    %v2569 = vmul.f32 %v2563, %v2263
    %v2570 = vmul.f32 %v2566, %v2263
    %v2571 = vadd.f32 %v2567, 1e-05
    %v2572 = vadd.f32 %v2568, 1e-05
    %v2573 = vadd.f32 %v2569, 1e-05
    %v2574 = vadd.f32 %v2570, 1e-05
    %v2575 = vrsqrt.pop %v2571
    %v2576 = vrsqrt.pop %v2572
    %v2577 = vrsqrt.pop %v2573
    %v2578 = vrsqrt.pop %v2574
    %v2579 = vmul.f32 %v2547, %v2575
    %v2580 = vmul.f32 %v2548, %v2576
    %v2581 = vmul.f32 %v2549, %v2577
    %v2582 = vmul.f32 %v2550, %v2578
    %v2583 = vmul.f32 %v2579, %v2529
    %v2584 = vmul.f32 %v2580, %v2529
    %v2585 = vmul.f32 %v2581, %v2529
    %v2586 = vmul.f32 %v2582, %v2529
    %v2587 = vadd.f32 %v2583, %v2530
    %v2588 = vadd.f32 %v2584, %v2530
    %v2589 = vadd.f32 %v2585, %v2530
    %v2590 = vadd.f32 %v2586, %v2530
    %s2591 = scalar_lea.vmem %s1, 64
    %v2592 = vld [vmem:[%s2591] sm:$0xff]
    %v2593 = vld [vmem:[%s2591 + $0x8] sm:$0xff]
    %v2594 = vld [vmem:[%s2591 + $0x10] sm:$0xff]
    %v2595 = vld [vmem:[%s2591 + $0x18] sm:$0xff]
    %v2596 = vld [vmem:[%s2591 + $0x20] sm:$0xff]
    %v2597 = vld [vmem:[%s2591 + $0x28] sm:$0xff]
    %v2598 = vld [vmem:[%s2591 + $0x30] sm:$0xff]
    %v2599 = vld [vmem:[%s2591 + $0x38] sm:$0xff]
    %s2600 = scalar_lea.vmem [#allocation5], 48
    %v2601 = vld [vmem:[%s2600] ss:$8 sm:$0x3]
    %v2603 = vlaneseq
    %v2604 = vshrl.u32 %v2603, 7
    %v2605 = vsub.s32 0, %v2604
    %v2606 = vrot.slane %v2601, %v2605
    %v2607 = vlaneseq
    %v2608 = vshrl.u32 %v2607, 7
    %v2609 = vsub.s32 1, %v2608
    %v2610 = vrot.slane %v2601, %v2609
    %v2614 = vsel %vm76, %v2587, 0
    %v2617 = vsel %vm76, %v2588, 0
    %v2620 = vsel %vm76, %v2589, 0
    %v2623 = vsel %vm76, %v2590, 0
    %2625 = vmatprep.subr.mxu0 0.0
    %2626 = vmatpush1.msra.mxu0 0.0
    %2627 = vmatprep.subr.mxu0 0.0
    %2628 = vmatpush1.msra.mxu0 0.0
    %2629 = vmatprep.subr.mxu0 0.0
    %2630 = vmatpush1.msra.mxu0 0.0
    %2631 = vmatprep.subr.mxu0 0.0
    %2632 = vmatpush1.msra.mxu0 0.0
    %2633 = vmatprep.subr.mxu0 0.0
    %2634 = vmatpush1.msra.mxu0 0.0
    %2635 = vmatprep.subr.mxu0 0.0
    %2636 = vmatpush1.msra.mxu0 0.0
    %2637 = vmatprep.subr.mxu0 0.0
    %2638 = vmatpush1.msra.mxu0 0.0
    %2639 = vmatprep.subr.mxu0 0.0
    %2640 = vmatpush1.msra.mxu0 0.0
    %2641 = vmatprep.subr.mxu0 0.0
    %2642 = vmatpush1.msra.mxu0 0.0
    %2643 = vmatprep.subr.mxu0 0.0
    %2644 = vmatpush1.msra.mxu0 0.0
    %2645 = vmatprep.subr.mxu0 0.0
    %2646 = vmatpush1.msra.mxu0 0.0
    %2647 = vmatprep.subr.mxu0 0.0
    %2648 = vmatpush1.msra.mxu0 0.0
    %2649 = vmatprep.subr.mxu0 %v2599
    %2650 = vmatpush1.msra.mxu0 %v2598
    %2651 = vmatprep.subr.mxu0 %v2597
    %2652 = vmatpush1.msra.mxu0 %v2596
    %2653 = vmatprep.subr.mxu0 %v2595
    %2654 = vmatpush1.msra.mxu0 %v2594
    %2655 = vmatprep.subr.mxu0 %v2593
    %2656 = vmatpush1.msra.mxu0 %v2592
    %2657 = vmatprep.subr.mxu0 0.0
    %2658 = vmatpush2.msra.mxu0 0.0
    %2659 = vmatprep.subr.mxu0 0.0
    %2660 = vmatpush2.msra.mxu0 0.0
    %2661 = vmatprep.subr.mxu0 0.0
    %2662 = vmatpush2.msra.mxu0 0.0
    %2663 = vmatprep.subr.mxu0 0.0
    %2664 = vmatpush2.msra.mxu0 0.0
    %2665 = vmatprep.subr.mxu0 0.0
    %2666 = vmatpush2.msra.mxu0 0.0
    %2667 = vmatprep.subr.mxu0 0.0
    %2668 = vmatpush2.msra.mxu0 0.0
    %2669 = vmatprep.subr.mxu0 0.0
    %2670 = vmatpush2.msra.mxu0 0.0
    %2671 = vmatprep.subr.mxu0 0.0
    %2672 = vmatpush2.msra.mxu0 0.0
    %2673 = vmatprep.subr.mxu0 0.0
    %2674 = vmatpush2.msra.mxu0 0.0
    %2675 = vmatprep.subr.mxu0 0.0
    %2676 = vmatpush2.msra.mxu0 0.0
    %2677 = vmatprep.subr.mxu0 0.0
    %2678 = vmatpush2.msra.mxu0 0.0
    %2679 = vmatprep.subr.mxu0 0.0
    %2680 = vmatpush2.msra.mxu0 0.0
    %2681 = vmatprep.subr.mxu0 0.0
    %2682 = vmatpush2.msra.mxu0 0.0
    %2683 = vmatprep.subr.mxu0 0.0
    %2684 = vmatpush2.msra.mxu0 0.0
    %2685 = vmatprep.subr.mxu0 0.0
    %2686 = vmatpush2.msra.mxu0 0.0
    %2687 = vmatprep.subr.mxu0 0.0
    %2688 = vmatpush2.msra.mxu0 0.0
    %2689 = vmatprep.mubr.f32.mxu0 0.0
    %2690 = vmatmul.mubr.f32.gmra.mxu0 %v2614
    %v2691 = vpop.f32.mrf.mxu0
    %v2692 = vadd.f32 %v2606, %v2691
    %v2693 = vpop.f32.mrf.mxu0
    %v2694 = vadd.f32 %v2610, %v2693
    %2695 = vmatprep.mubr.f32.mxu0 0.0
    %2696 = vmatmul.mubr.f32.gmra.mxu0 %v2617
    %v2697 = vpop.f32.mrf.mxu0
    %v2698 = vadd.f32 %v2606, %v2697
    %v2699 = vpop.f32.mrf.mxu0
    %v2700 = vadd.f32 %v2610, %v2699
    %2701 = vmatprep.mubr.f32.mxu0 0.0
    %2702 = vmatmul.mubr.f32.gmra.mxu0 %v2620
    %v2703 = vpop.f32.mrf.mxu0
    %v2704 = vadd.f32 %v2606, %v2703
    %v2705 = vpop.f32.mrf.mxu0
    %v2706 = vadd.f32 %v2610, %v2705
    %2707 = vmatprep.mubr.f32.mxu0 0.0
    %2708 = vmatmul.mubr.f32.gmra.mxu0 %v2623
    %v2709 = vpop.f32.mrf.mxu0
    %v2710 = vadd.f32 %v2606, %v2709
    %v2711 = vpop.f32.mrf.mxu0
    %v2712 = vadd.f32 %v2610, %v2711
    %2713 = vdwg.mxu0
    %v2714 = vmul.f32 %v2694, -5.0
    %v2715 = vmul.f32 %v2700, -5.0
    %v2716 = vmul.f32 %v2706, -5.0
    %v2717 = vmul.f32 %v2712, -5.0
    %v2718 = vmul.f32 %v2714, 1.442695
    %v2719 = vpow.pop %v2718
    %v2720 = vmul.f32 %v2715, 1.442695
    %v2721 = vpow.pop %v2720
    %v2722 = vmul.f32 %v2716, 1.442695
    %v2723 = vpow.pop %v2722
    %v2724 = vmul.f32 %v2717, 1.442695
    %v2725 = vpow.pop %v2724
    %v2726 = vadd.f32 %v2719, 1.0
    %v2727 = vadd.f32 %v2721, 1.0
    %v2728 = vadd.f32 %v2723, 1.0
    %v2729 = vadd.f32 %v2725, 1.0
    %v2730 = vrcp.pop %v2726
    %v2731 = vrcp.pop %v2727
    %v2732 = vrcp.pop %v2728
    %v2733 = vrcp.pop %v2729
    %v2734 = vmul.f32 %v2726, %v2730
    %v2735 = vmul.f32 %v2727, %v2731
    %v2736 = vmul.f32 %v2728, %v2732
    %v2737 = vmul.f32 %v2729, %v2733
    %v2738 = vsub.f32 2.0, %v2734
    %v2739 = vsub.f32 2.0, %v2735
    %v2740 = vsub.f32 2.0, %v2736
    %v2741 = vsub.f32 2.0, %v2737
    %v2742 = vmul.f32 %v2730, %v2738
    %v2743 = vmul.f32 %v2731, %v2739
    %v2744 = vmul.f32 %v2732, %v2740
    %v2745 = vmul.f32 %v2733, %v2741
    %v2746 = vadd.f32 %v2742, 1e-05
    %v2747 = vadd.f32 %v2743, 1e-05
    %v2748 = vadd.f32 %v2744, 1e-05
    %v2749 = vadd.f32 %v2745, 1e-05
    %v2750 = vmul.f32 %v2746, 1.0986123
    %v2751 = vmul.f32 %v2747, 1.0986123
    %v2752 = vmul.f32 %v2748, 1.0986123
    %v2753 = vmul.f32 %v2749, 1.0986123
    %v2754 = vmul.f32 %v2750, 1.442695
    %v2755 = vpow.pop %v2754
    %v2756 = vmul.f32 %v2751, 1.442695
    %v2757 = vpow.pop %v2756
    %v2758 = vmul.f32 %v2752, 1.442695
    %v2759 = vpow.pop %v2758
    %v2760 = vmul.f32 %v2753, 1.442695
    %v2761 = vpow.pop %v2760
    %v2762 = vsub.f32 %v2755, 1.0
    %v2763 = vsub.f32 %v2757, 1.0
    %v2764 = vsub.f32 %v2759, 1.0
    %v2765 = vsub.f32 %v2761, 1.0
    %2770 = vrot.lane.b32.xlu0 %v2762, 100
    %v2771 = vpop.permute.xlu0 %2770
    %2772 = vrot.lane.b32.xlu0 %v2763, 100
    %v2773 = vpop.permute.xlu0 %2772
    %2774 = vrot.lane.b32.xlu0 %v2764, 100
    %v2775 = vpop.permute.xlu0 %2774
    %2776 = vrot.lane.b32.xlu0 %v2765, 100
    %v2777 = vpop.permute.xlu0 %2776
    %vm2782 = vcmask 326944
    %2783 = vst.msk [vmem:[#allocation7 + $0x10] sm:$0xff] %vm2782, %v2771
    %2784 = vst.msk [vmem:[#allocation7 + $0x28] sm:$0xff] %vm2782, %v2773
    %2785 = vst.msk [vmem:[#allocation7 + $0x40] sm:$0xff] %vm2782, %v2775
    %2786 = vst.msk [vmem:[#allocation7 + $0x58] sm:$0xff] %vm2782, %v2777
    %v2787 = vrcp.pop %v2762
    %v2788 = vrcp.pop %v2763
    %v2789 = vrcp.pop %v2764
    %v2790 = vrcp.pop %v2765
    %v2791 = vmul.f32 %v2762, %v2787
    %v2792 = vmul.f32 %v2763, %v2788
    %v2793 = vmul.f32 %v2764, %v2789
    %v2794 = vmul.f32 %v2765, %v2790
    %v2795 = vsub.f32 2.0, %v2791
    %v2796 = vsub.f32 2.0, %v2792
    %v2797 = vsub.f32 2.0, %v2793
    %v2798 = vsub.f32 2.0, %v2794
    %v2799 = vmul.f32 %v2787, %v2795
    %v2800 = vmul.f32 %v2788, %v2796
    %v2801 = vmul.f32 %v2789, %v2797
    %v2802 = vmul.f32 %v2790, %v2798
    %2805 = vrot.lane.b32.xlu0 %v2692, 96
    %v2806 = vpop.permute.xlu0 %2805
    %2807 = vrot.lane.b32.xlu0 %v2698, 96
    %v2808 = vpop.permute.xlu0 %2807
    %v2809 = vsel %vm273, %v2692, 0
    %v2811 = vsel %vm273, %v2698, 0
    %v2813 = vsel %vm273, %v2806, 0
    %v2815 = vsel %vm273, %v2808, 0
    %2817 = vmatprep.subr.mxu0 0.0
    %2818 = vmatpush1.xpose.msra.mxu0 0.0
    %2819 = vmatprep.subr.mxu0 0.0
    %2820 = vmatpush1.xpose.msra.mxu0 0.0
    %2821 = vmatprep.subr.mxu0 0.0
    %2822 = vmatpush1.xpose.msra.mxu0 0.0
    %2823 = vmatprep.subr.mxu0 0.0
    %2824 = vmatpush1.xpose.msra.mxu0 0.0
    %2825 = vmatprep.subr.mxu0 0.0
    %2826 = vmatpush1.xpose.msra.mxu0 0.0
    %2827 = vmatprep.subr.mxu0 0.0
    %2828 = vmatpush1.xpose.msra.mxu0 0.0
    %2829 = vmatprep.subr.mxu0 0.0
    %2830 = vmatpush1.xpose.msra.mxu0 0.0
    %2831 = vmatprep.subr.mxu0 0.0
    %2832 = vmatpush1.xpose.msra.mxu0 0.0
    %2833 = vmatprep.subr.mxu0 0.0
    %2834 = vmatpush1.xpose.msra.mxu0 0.0
    %2835 = vmatprep.subr.mxu0 0.0
    %2836 = vmatpush1.xpose.msra.mxu0 0.0
    %2837 = vmatprep.subr.mxu0 0.0
    %2838 = vmatpush1.xpose.msra.mxu0 0.0
    %2839 = vmatprep.subr.mxu0 0.0
    %2840 = vmatpush1.xpose.msra.mxu0 0.0
    %2841 = vmatprep.subr.mxu0 0.0
    %2842 = vmatpush1.xpose.msra.mxu0 0.0
    %2843 = vmatprep.subr.mxu0 0.0
    %2844 = vmatpush1.xpose.msra.mxu0 0.0
    %2845 = vmatprep.subr.mxu0 0.0
    %2846 = vmatpush1.xpose.msra.mxu0 %v2815
    %2847 = vmatprep.subr.mxu0 0.0
    %2848 = vmatpush1.xpose.msra.mxu0 %v2813
    %2849 = vmatprep.subr.mxu0 0.0
    %2850 = vmatpush2.xpose.msra.mxu0 0.0
    %2851 = vmatprep.subr.mxu0 0.0
    %2852 = vmatpush2.xpose.msra.mxu0 0.0
    %2853 = vmatprep.subr.mxu0 0.0
    %2854 = vmatpush2.xpose.msra.mxu0 0.0
    %2855 = vmatprep.subr.mxu0 0.0
    %2856 = vmatpush2.xpose.msra.mxu0 0.0
    %2857 = vmatprep.subr.mxu0 0.0
    %2858 = vmatpush2.xpose.msra.mxu0 0.0
    %2859 = vmatprep.subr.mxu0 0.0
    %2860 = vmatpush2.xpose.msra.mxu0 0.0
    %2861 = vmatprep.subr.mxu0 0.0
    %2862 = vmatpush2.xpose.msra.mxu0 0.0
    %2863 = vmatprep.subr.mxu0 0.0
    %2864 = vmatpush2.xpose.msra.mxu0 0.0
    %2865 = vmatprep.subr.mxu0 0.0
    %2866 = vmatpush2.xpose.msra.mxu0 0.0
    %2867 = vmatprep.subr.mxu0 0.0
    %2868 = vmatpush2.xpose.msra.mxu0 0.0
    %2869 = vmatprep.subr.mxu0 0.0
    %2870 = vmatpush2.xpose.msra.mxu0 0.0
    %2871 = vmatprep.subr.mxu0 0.0
    %2872 = vmatpush2.xpose.msra.mxu0 0.0
    %2873 = vmatprep.subr.mxu0 0.0
    %2874 = vmatpush2.xpose.msra.mxu0 0.0
    %2875 = vmatprep.subr.mxu0 0.0
    %2876 = vmatpush2.xpose.msra.mxu0 0.0
    %2877 = vmatprep.subr.mxu0 0.0
    %2878 = vmatpush2.xpose.msra.mxu0 0.0
    %2879 = vmatprep.subr.mxu0 0.0
    %2880 = vmatpush2.xpose.msra.mxu0 0.0
    %2881 = vmatprep.mubr.f32.mxu0 0.0
    %2882 = vmatmul.mubr.f32.gmra.mxu0 %v2809
    %v2883 = vpop.f32.mrf.mxu0
    %v2884 = vadd.f32 0.0, %v2883
    %v2885 = vpop.f32.mrf.mxu0
    %2886 = vmatprep.mubr.f32.mxu0 0.0
    %2887 = vmatmul.mubr.f32.gmra.mxu0 %v2811
    %v2888 = vpop.f32.mrf.mxu0
    %v2889 = vadd.f32 0.0, %v2888
    %v2890 = vpop.f32.mrf.mxu0
    %2891 = vdwg.mxu0
    %v2892 = vsel %vm357, %v2884, -inf
    %2893 = vmax.xlane.f32.xlu0 %v2892
    %v2894 = vpop.xlane.xlu0 %2893
    %v2895 = vsel %vm357, %v2889, -inf
    %2896 = vmax.xlane.f32.xlu0 %v2895
    %v2897 = vpop.xlane.xlu0 %2896
    %v2898 = vsub.f32 %v2884, %v2894
    %v2899 = vsub.f32 %v2889, %v2897
    %v2900 = vmul.f32 %v2898, 1.442695
    %v2901 = vpow.pop %v2900
    %v2902 = vmul.f32 %v2899, 1.442695
    %v2903 = vpow.pop %v2902
    %v2904 = vsel %vm357, %v2901, 0.0
    %2905 = vadd.xlane.f32.xlu0 %v2904
    %v2906 = vpop.xlane.xlu0 %2905
    %v2907 = vsel %vm357, %v2903, 0.0
    %2908 = vadd.xlane.f32.xlu0 %v2907
    %v2909 = vpop.xlane.xlu0 %2908
    %v2910 = vrcp.pop %v2906
    %v2911 = vrcp.pop %v2909
    %v2912 = vmul.f32 %v2906, %v2910
    %v2913 = vmul.f32 %v2909, %v2911
    %v2914 = vsub.f32 2.0, %v2912
    %v2915 = vsub.f32 2.0, %v2913
    %v2916 = vmul.f32 %v2910, %v2914
    %v2917 = vmul.f32 %v2911, %v2915
    %v2918 = vmul.f32 %v2901, %v2916
    %v2919 = vmul.f32 %v2903, %v2917
    %2922 = vrot.lane.b32.xlu0 %v2918, 64
    %v2923 = vpop.permute.xlu0 %2922
    %2924 = vrot.lane.b32.xlu0 %v2919, 64
    %v2925 = vpop.permute.xlu0 %2924
    %vm2928 = vcmask 654848
    %2929 = vst.msk [vmem:[#allocation7] sm:$0xff] %vm2928, %v2923
    %2930 = vst.msk [vmem:[#allocation7 + $0x18] sm:$0xff] %vm2928, %v2925
    %v2931 = vmul.f32 %v2799, 0.3989423
    %v2932 = vmul.f32 %v2800, 0.3989423
    %v2933 = vmul.f32 %v2799, %v2799
    %v2934 = vmul.f32 %v2800, %v2800
    %2936 = vset.pattern.permute.xlu0 64
    %2937 = vperm.xlu0 %2936, %v2933
    %v2938 = vpop.permute.xlu0 %2937
    %2941 = vset.pattern.permute.xlu0 64
    %2942 = vperm.xlu0 %2941, %v2934
    %v2943 = vpop.permute.xlu0 %2942
    %v2945 = vmul.f32 %v53, %v2938
    %v2946 = vmul.f32 %v54, %v2943
    %v2947 = vmul.f32 %v2945, 1.442695
    %v2948 = vpow.pop %v2947
    %v2949 = vmul.f32 %v2946, 1.442695
    %v2950 = vpow.pop %v2949
    %2952 = vset.pattern.permute.xlu0 64
    %2953 = vperm.xlu0 %2952, %v2931
    %v2954 = vpop.permute.xlu0 %2953
    %2957 = vset.pattern.permute.xlu0 64
    %2958 = vperm.xlu0 %2957, %v2932
    %v2959 = vpop.permute.xlu0 %2958
    %v2961 = vmul.f32 %v2954, %v2948
    %v2962 = vmul.f32 %v2959, %v2950
    %2965 = vrot.lane.b32.xlu0 %v2961, 64
    %v2966 = vpop.permute.xlu0 %2965
    %2967 = vrot.lane.b32.xlu0 %v2962, 64
    %v2968 = vpop.permute.xlu0 %2967
    %2971 = vst.msk [vmem:[#allocation7 + $0x8] sm:$0xff] %vm2928, %v2966
    %2972 = vst.msk [vmem:[#allocation7 + $0x20] sm:$0xff] %vm2928, %v2968
    %2973 = vrot.lane.b32.xlu0 %v2692, 120
    %v2974 = vpop.permute.xlu0 %2973
    %2975 = vrot.lane.b32.xlu0 %v2698, 120
    %v2976 = vpop.permute.xlu0 %2975
    %2977 = vrot.lane.b32.xlu0 %v2692, 88
    %v2978 = vpop.permute.xlu0 %2977
    %2979 = vrot.lane.b32.xlu0 %v2698, 88
    %v2980 = vpop.permute.xlu0 %2979
    %v2981 = vsel %vm273, %v2974, 0
    %v2983 = vsel %vm273, %v2976, 0
    %v2985 = vsel %vm273, %v2978, 0
    %v2987 = vsel %vm273, %v2980, 0
    %2989 = vmatprep.subr.mxu0 0.0
    %2990 = vmatpush1.xpose.msra.mxu0 0.0
    %2991 = vmatprep.subr.mxu0 0.0
    %2992 = vmatpush1.xpose.msra.mxu0 0.0
    %2993 = vmatprep.subr.mxu0 0.0
    %2994 = vmatpush1.xpose.msra.mxu0 0.0
    %2995 = vmatprep.subr.mxu0 0.0
    %2996 = vmatpush1.xpose.msra.mxu0 0.0
    %2997 = vmatprep.subr.mxu0 0.0
    %2998 = vmatpush1.xpose.msra.mxu0 0.0
    %2999 = vmatprep.subr.mxu0 0.0
    %3000 = vmatpush1.xpose.msra.mxu0 0.0
    %3001 = vmatprep.subr.mxu0 0.0
    %3002 = vmatpush1.xpose.msra.mxu0 0.0
    %3003 = vmatprep.subr.mxu0 0.0
    %3004 = vmatpush1.xpose.msra.mxu0 0.0
    %3005 = vmatprep.subr.mxu0 0.0
    %3006 = vmatpush1.xpose.msra.mxu0 0.0
    %3007 = vmatprep.subr.mxu0 0.0
    %3008 = vmatpush1.xpose.msra.mxu0 0.0
    %3009 = vmatprep.subr.mxu0 0.0
    %3010 = vmatpush1.xpose.msra.mxu0 0.0
    %3011 = vmatprep.subr.mxu0 0.0
    %3012 = vmatpush1.xpose.msra.mxu0 0.0
    %3013 = vmatprep.subr.mxu0 0.0
    %3014 = vmatpush1.xpose.msra.mxu0 0.0
    %3015 = vmatprep.subr.mxu0 0.0
    %3016 = vmatpush1.xpose.msra.mxu0 0.0
    %3017 = vmatprep.subr.mxu0 0.0
    %3018 = vmatpush1.xpose.msra.mxu0 %v2987
    %3019 = vmatprep.subr.mxu0 0.0
    %3020 = vmatpush1.xpose.msra.mxu0 %v2985
    %3021 = vmatprep.subr.mxu0 0.0
    %3022 = vmatpush2.xpose.msra.mxu0 0.0
    %3023 = vmatprep.subr.mxu0 0.0
    %3024 = vmatpush2.xpose.msra.mxu0 0.0
    %3025 = vmatprep.subr.mxu0 0.0
    %3026 = vmatpush2.xpose.msra.mxu0 0.0
    %3027 = vmatprep.subr.mxu0 0.0
    %3028 = vmatpush2.xpose.msra.mxu0 0.0
    %3029 = vmatprep.subr.mxu0 0.0
    %3030 = vmatpush2.xpose.msra.mxu0 0.0
    %3031 = vmatprep.subr.mxu0 0.0
    %3032 = vmatpush2.xpose.msra.mxu0 0.0
    %3033 = vmatprep.subr.mxu0 0.0
    %3034 = vmatpush2.xpose.msra.mxu0 0.0
    %3035 = vmatprep.subr.mxu0 0.0
    %3036 = vmatpush2.xpose.msra.mxu0 0.0
    %3037 = vmatprep.subr.mxu0 0.0
    %3038 = vmatpush2.xpose.msra.mxu0 0.0
    %3039 = vmatprep.subr.mxu0 0.0
    %3040 = vmatpush2.xpose.msra.mxu0 0.0
    %3041 = vmatprep.subr.mxu0 0.0
    %3042 = vmatpush2.xpose.msra.mxu0 0.0
    %3043 = vmatprep.subr.mxu0 0.0
    %3044 = vmatpush2.xpose.msra.mxu0 0.0
    %3045 = vmatprep.subr.mxu0 0.0
    %3046 = vmatpush2.xpose.msra.mxu0 0.0
    %3047 = vmatprep.subr.mxu0 0.0
    %3048 = vmatpush2.xpose.msra.mxu0 0.0
    %3049 = vmatprep.subr.mxu0 0.0
    %3050 = vmatpush2.xpose.msra.mxu0 0.0
    %3051 = vmatprep.subr.mxu0 0.0
    %3052 = vmatpush2.xpose.msra.mxu0 0.0
    %3053 = vmatprep.mubr.f32.mxu0 0.0
    %3054 = vmatmul.mubr.f32.gmra.mxu0 %v2981
    %v3055 = vpop.f32.mrf.mxu0
    %v3056 = vadd.f32 0.0, %v3055
    %v3057 = vpop.f32.mrf.mxu0
    %3058 = vmatprep.mubr.f32.mxu0 0.0
    %3059 = vmatmul.mubr.f32.gmra.mxu0 %v2983
    %v3060 = vpop.f32.mrf.mxu0
    %v3061 = vadd.f32 0.0, %v3060
    %v3062 = vpop.f32.mrf.mxu0
    %3063 = vdwg.mxu0
    %v3064 = vsel %vm357, %v3056, -inf
    %3065 = vmax.xlane.f32.xlu0 %v3064
    %v3066 = vpop.xlane.xlu0 %3065
    %v3067 = vsel %vm357, %v3061, -inf
    %3068 = vmax.xlane.f32.xlu0 %v3067
    %v3069 = vpop.xlane.xlu0 %3068
    %v3070 = vsub.f32 %v3056, %v3066
    %v3071 = vsub.f32 %v3061, %v3069
    %v3072 = vmul.f32 %v3070, 1.442695
    %v3073 = vpow.pop %v3072
    %v3074 = vmul.f32 %v3071, 1.442695
    %v3075 = vpow.pop %v3074
    %v3076 = vsel %vm357, %v3073, 0.0
    %3077 = vadd.xlane.f32.xlu0 %v3076
    %v3078 = vpop.xlane.xlu0 %3077
    %v3079 = vsel %vm357, %v3075, 0.0
    %3080 = vadd.xlane.f32.xlu0 %v3079
    %v3081 = vpop.xlane.xlu0 %3080
    %v3082 = vrcp.pop %v3078
    %v3083 = vrcp.pop %v3081
    %v3084 = vmul.f32 %v3078, %v3082
    %v3085 = vmul.f32 %v3081, %v3083
    %v3086 = vsub.f32 2.0, %v3084
    %v3087 = vsub.f32 2.0, %v3085
    %v3088 = vmul.f32 %v3082, %v3086
    %v3089 = vmul.f32 %v3083, %v3087
    %v3090 = vmul.f32 %v3073, %v3088
    %v3091 = vmul.f32 %v3075, %v3089
    %3094 = vrot.lane.b32.xlu0 %v3090, 80
    %v3095 = vpop.permute.xlu0 %3094
    %3096 = vrot.lane.b32.xlu0 %v3091, 80
    %v3097 = vpop.permute.xlu0 %3096
    %vm3100 = vcmask 786048
    %3101 = vst.msk [vmem:[#allocation7] sm:$0xff] %vm3100, %v3095
    %3102 = vst.msk [vmem:[#allocation7 + $0x18] sm:$0xff] %vm3100, %v3097
    %3103 = vset.pattern.permute.xlu0 65
    %3104 = vperm.xlu0 %3103, %v2933
    %v3105 = vpop.permute.xlu0 %3104
    %3107 = vset.pattern.permute.xlu0 65
    %3108 = vperm.xlu0 %3107, %v2934
    %v3109 = vpop.permute.xlu0 %3108
    %v3111 = vmul.f32 %v53, %v3105
    %v3112 = vmul.f32 %v54, %v3109
    %v3113 = vmul.f32 %v3111, 1.442695
    %v3114 = vpow.pop %v3113
    %v3115 = vmul.f32 %v3112, 1.442695
    %v3116 = vpow.pop %v3115
    %3117 = vset.pattern.permute.xlu0 65
    %3118 = vperm.xlu0 %3117, %v2931
    %v3119 = vpop.permute.xlu0 %3118
    %3121 = vset.pattern.permute.xlu0 65
    %3122 = vperm.xlu0 %3121, %v2932
    %v3123 = vpop.permute.xlu0 %3122
    %v3125 = vmul.f32 %v3119, %v3114
    %v3126 = vmul.f32 %v3123, %v3116
    %3129 = vrot.lane.b32.xlu0 %v3125, 80
    %v3130 = vpop.permute.xlu0 %3129
    %3131 = vrot.lane.b32.xlu0 %v3126, 80
    %v3132 = vpop.permute.xlu0 %3131
    %3135 = vst.msk [vmem:[#allocation7 + $0x8] sm:$0xff] %vm3100, %v3130
    %3136 = vst.msk [vmem:[#allocation7 + $0x20] sm:$0xff] %vm3100, %v3132
    %3137 = vrot.lane.b32.xlu0 %v2692, 32
    %v3138 = vpop.permute.xlu0 %3137
    %3139 = vrot.lane.b32.xlu0 %v2698, 32
    %v3140 = vpop.permute.xlu0 %3139
    %v3143 = vsel %vm357, %v3090, 0
    %v3145 = vsel %vm357, %v3091, 0
    %3147 = vmatprep.subr.mxu0 0.0
    %3148 = vmatpush1.msra.mxu0 0.0
    %3149 = vmatprep.subr.mxu0 0.0
    %3150 = vmatpush1.msra.mxu0 0.0
    %3151 = vmatprep.subr.mxu0 0.0
    %3152 = vmatpush1.msra.mxu0 0.0
    %3153 = vmatprep.subr.mxu0 0.0
    %3154 = vmatpush1.msra.mxu0 0.0
    %3155 = vmatprep.subr.mxu0 0.0
    %3156 = vmatpush1.msra.mxu0 0.0
    %3157 = vmatprep.subr.mxu0 0.0
    %3158 = vmatpush1.msra.mxu0 0.0
    %3159 = vmatprep.subr.mxu0 0.0
    %3160 = vmatpush1.msra.mxu0 0.0
    %3161 = vmatprep.subr.mxu0 0.0
    %3162 = vmatpush1.msra.mxu0 0.0
    %3163 = vmatprep.subr.mxu0 0.0
    %3164 = vmatpush1.msra.mxu0 0.0
    %3165 = vmatprep.subr.mxu0 0.0
    %3166 = vmatpush1.msra.mxu0 0.0
    %3167 = vmatprep.subr.mxu0 0.0
    %3168 = vmatpush1.msra.mxu0 0.0
    %3169 = vmatprep.subr.mxu0 0.0
    %3170 = vmatpush1.msra.mxu0 0.0
    %3171 = vmatprep.subr.mxu0 0.0
    %3172 = vmatpush1.msra.mxu0 0.0
    %3173 = vmatprep.subr.mxu0 0.0
    %3174 = vmatpush1.msra.mxu0 0.0
    %3175 = vmatprep.subr.mxu0 0.0
    %3176 = vmatpush1.msra.mxu0 %v3140
    %3177 = vmatprep.subr.mxu0 0.0
    %3178 = vmatpush1.msra.mxu0 %v3138
    %3179 = vmatprep.subr.mxu0 0.0
    %3180 = vmatpush2.msra.mxu0 0.0
    %3181 = vmatprep.subr.mxu0 0.0
    %3182 = vmatpush2.msra.mxu0 0.0
    %3183 = vmatprep.subr.mxu0 0.0
    %3184 = vmatpush2.msra.mxu0 0.0
    %3185 = vmatprep.subr.mxu0 0.0
    %3186 = vmatpush2.msra.mxu0 0.0
    %3187 = vmatprep.subr.mxu0 0.0
    %3188 = vmatpush2.msra.mxu0 0.0
    %3189 = vmatprep.subr.mxu0 0.0
    %3190 = vmatpush2.msra.mxu0 0.0
    %3191 = vmatprep.subr.mxu0 0.0
    %3192 = vmatpush2.msra.mxu0 0.0
    %3193 = vmatprep.subr.mxu0 0.0
    %3194 = vmatpush2.msra.mxu0 0.0
    %3195 = vmatprep.subr.mxu0 0.0
    %3196 = vmatpush2.msra.mxu0 0.0
    %3197 = vmatprep.subr.mxu0 0.0
    %3198 = vmatpush2.msra.mxu0 0.0
    %3199 = vmatprep.subr.mxu0 0.0
    %3200 = vmatpush2.msra.mxu0 0.0
    %3201 = vmatprep.subr.mxu0 0.0
    %3202 = vmatpush2.msra.mxu0 0.0
    %3203 = vmatprep.subr.mxu0 0.0
    %3204 = vmatpush2.msra.mxu0 0.0
    %3205 = vmatprep.subr.mxu0 0.0
    %3206 = vmatpush2.msra.mxu0 0.0
    %3207 = vmatprep.subr.mxu0 0.0
    %3208 = vmatpush2.msra.mxu0 0.0
    %3209 = vmatprep.subr.mxu0 0.0
    %3210 = vmatpush2.msra.mxu0 0.0
    %3211 = vmatprep.mubr.f32.mxu0 0.0
    %3212 = vmatmul.mubr.f32.gmra.mxu0 %v3143
    %v3213 = vpop.f32.mrf.mxu0
    %v3214 = vadd.f32 0.0, %v3213
    %v3215 = vpop.f32.mrf.mxu0
    %3216 = vmatprep.mubr.f32.mxu0 0.0
    %3217 = vmatmul.mubr.f32.gmra.mxu0 %v3145
    %v3218 = vpop.f32.mrf.mxu0
    %v3219 = vadd.f32 0.0, %v3218
    %v3220 = vpop.f32.mrf.mxu0
    %3221 = vdwg.mxu0
    %3222 = vrot.lane.b32.xlu0 %v2692, 64
    %v3223 = vpop.permute.xlu0 %3222
    %3224 = vrot.lane.b32.xlu0 %v2698, 64
    %v3225 = vpop.permute.xlu0 %3224
    %v3228 = vsel %vm357, %v2918, 0
    %v3230 = vsel %vm357, %v2919, 0
    %3232 = vmatprep.subr.mxu0 0.0
    %3233 = vmatpush1.msra.mxu0 0.0
    %3234 = vmatprep.subr.mxu0 0.0
    %3235 = vmatpush1.msra.mxu0 0.0
    %3236 = vmatprep.subr.mxu0 0.0
    %3237 = vmatpush1.msra.mxu0 0.0
    %3238 = vmatprep.subr.mxu0 0.0
    %3239 = vmatpush1.msra.mxu0 0.0
    %3240 = vmatprep.subr.mxu0 0.0
    %3241 = vmatpush1.msra.mxu0 0.0
    %3242 = vmatprep.subr.mxu0 0.0
    %3243 = vmatpush1.msra.mxu0 0.0
    %3244 = vmatprep.subr.mxu0 0.0
    %3245 = vmatpush1.msra.mxu0 0.0
    %3246 = vmatprep.subr.mxu0 0.0
    %3247 = vmatpush1.msra.mxu0 0.0
    %3248 = vmatprep.subr.mxu0 0.0
    %3249 = vmatpush1.msra.mxu0 0.0
    %3250 = vmatprep.subr.mxu0 0.0
    %3251 = vmatpush1.msra.mxu0 0.0
    %3252 = vmatprep.subr.mxu0 0.0
    %3253 = vmatpush1.msra.mxu0 0.0
    %3254 = vmatprep.subr.mxu0 0.0
    %3255 = vmatpush1.msra.mxu0 0.0
    %3256 = vmatprep.subr.mxu0 0.0
    %3257 = vmatpush1.msra.mxu0 0.0
    %3258 = vmatprep.subr.mxu0 0.0
    %3259 = vmatpush1.msra.mxu0 0.0
    %3260 = vmatprep.subr.mxu0 0.0
    %3261 = vmatpush1.msra.mxu0 %v3225
    %3262 = vmatprep.subr.mxu0 0.0
    %3263 = vmatpush1.msra.mxu0 %v3223
    %3264 = vmatprep.subr.mxu0 0.0
    %3265 = vmatpush2.msra.mxu0 0.0
    %3266 = vmatprep.subr.mxu0 0.0
    %3267 = vmatpush2.msra.mxu0 0.0
    %3268 = vmatprep.subr.mxu0 0.0
    %3269 = vmatpush2.msra.mxu0 0.0
    %3270 = vmatprep.subr.mxu0 0.0
    %3271 = vmatpush2.msra.mxu0 0.0
    %3272 = vmatprep.subr.mxu0 0.0
    %3273 = vmatpush2.msra.mxu0 0.0
    %3274 = vmatprep.subr.mxu0 0.0
    %3275 = vmatpush2.msra.mxu0 0.0
    %3276 = vmatprep.subr.mxu0 0.0
    %3277 = vmatpush2.msra.mxu0 0.0
    %3278 = vmatprep.subr.mxu0 0.0
    %3279 = vmatpush2.msra.mxu0 0.0
    %3280 = vmatprep.subr.mxu0 0.0
    %3281 = vmatpush2.msra.mxu0 0.0
    %3282 = vmatprep.subr.mxu0 0.0
    %3283 = vmatpush2.msra.mxu0 0.0
    %3284 = vmatprep.subr.mxu0 0.0
    %3285 = vmatpush2.msra.mxu0 0.0
    %3286 = vmatprep.subr.mxu0 0.0
    %3287 = vmatpush2.msra.mxu0 0.0
    %3288 = vmatprep.subr.mxu0 0.0
    %3289 = vmatpush2.msra.mxu0 0.0
    %3290 = vmatprep.subr.mxu0 0.0
    %3291 = vmatpush2.msra.mxu0 0.0
    %3292 = vmatprep.subr.mxu0 0.0
    %3293 = vmatpush2.msra.mxu0 0.0
    %3294 = vmatprep.subr.mxu0 0.0
    %3295 = vmatpush2.msra.mxu0 0.0
    %3296 = vmatprep.mubr.f32.mxu0 0.0
    %3297 = vmatmul.mubr.f32.gmra.mxu0 %v3228
    %v3298 = vpop.f32.mrf.mxu0
    %v3299 = vadd.f32 %v3214, %v3298
    %v3300 = vpop.f32.mrf.mxu0
    %3301 = vmatprep.mubr.f32.mxu0 0.0
    %3302 = vmatmul.mubr.f32.gmra.mxu0 %v3230
    %v3303 = vpop.f32.mrf.mxu0
    %v3304 = vadd.f32 %v3219, %v3303
    %v3305 = vpop.f32.mrf.mxu0
    %3306 = vdwg.mxu0
    %3307 = vrot.lane.b32.xlu0 %v2692, 112
    %v3308 = vpop.permute.xlu0 %3307
    %3309 = vrot.lane.b32.xlu0 %v2698, 112
    %v3310 = vpop.permute.xlu0 %3309
    %3311 = vrot.lane.b32.xlu0 %v2692, 80
    %v3312 = vpop.permute.xlu0 %3311
    %3313 = vrot.lane.b32.xlu0 %v2698, 80
    %v3314 = vpop.permute.xlu0 %3313
    %v3315 = vsel %vm273, %v3308, 0
    %v3317 = vsel %vm273, %v3310, 0
    %v3319 = vsel %vm273, %v3312, 0
    %v3321 = vsel %vm273, %v3314, 0
    %3323 = vmatprep.subr.mxu0 0.0
    %3324 = vmatpush1.xpose.msra.mxu0 0.0
    %3325 = vmatprep.subr.mxu0 0.0
    %3326 = vmatpush1.xpose.msra.mxu0 0.0
    %3327 = vmatprep.subr.mxu0 0.0
    %3328 = vmatpush1.xpose.msra.mxu0 0.0
    %3329 = vmatprep.subr.mxu0 0.0
    %3330 = vmatpush1.xpose.msra.mxu0 0.0
    %3331 = vmatprep.subr.mxu0 0.0
    %3332 = vmatpush1.xpose.msra.mxu0 0.0
    %3333 = vmatprep.subr.mxu0 0.0
    %3334 = vmatpush1.xpose.msra.mxu0 0.0
    %3335 = vmatprep.subr.mxu0 0.0
    %3336 = vmatpush1.xpose.msra.mxu0 0.0
    %3337 = vmatprep.subr.mxu0 0.0
    %3338 = vmatpush1.xpose.msra.mxu0 0.0
    %3339 = vmatprep.subr.mxu0 0.0
    %3340 = vmatpush1.xpose.msra.mxu0 0.0
    %3341 = vmatprep.subr.mxu0 0.0
    %3342 = vmatpush1.xpose.msra.mxu0 0.0
    %3343 = vmatprep.subr.mxu0 0.0
    %3344 = vmatpush1.xpose.msra.mxu0 0.0
    %3345 = vmatprep.subr.mxu0 0.0
    %3346 = vmatpush1.xpose.msra.mxu0 0.0
    %3347 = vmatprep.subr.mxu0 0.0
    %3348 = vmatpush1.xpose.msra.mxu0 0.0
    %3349 = vmatprep.subr.mxu0 0.0
    %3350 = vmatpush1.xpose.msra.mxu0 0.0
    %3351 = vmatprep.subr.mxu0 0.0
    %3352 = vmatpush1.xpose.msra.mxu0 %v3321
    %3353 = vmatprep.subr.mxu0 0.0
    %3354 = vmatpush1.xpose.msra.mxu0 %v3319
    %3355 = vmatprep.subr.mxu0 0.0
    %3356 = vmatpush2.xpose.msra.mxu0 0.0
    %3357 = vmatprep.subr.mxu0 0.0
    %3358 = vmatpush2.xpose.msra.mxu0 0.0
    %3359 = vmatprep.subr.mxu0 0.0
    %3360 = vmatpush2.xpose.msra.mxu0 0.0
    %3361 = vmatprep.subr.mxu0 0.0
    %3362 = vmatpush2.xpose.msra.mxu0 0.0
    %3363 = vmatprep.subr.mxu0 0.0
    %3364 = vmatpush2.xpose.msra.mxu0 0.0
    %3365 = vmatprep.subr.mxu0 0.0
    %3366 = vmatpush2.xpose.msra.mxu0 0.0
    %3367 = vmatprep.subr.mxu0 0.0
    %3368 = vmatpush2.xpose.msra.mxu0 0.0
    %3369 = vmatprep.subr.mxu0 0.0
    %3370 = vmatpush2.xpose.msra.mxu0 0.0
    %3371 = vmatprep.subr.mxu0 0.0
    %3372 = vmatpush2.xpose.msra.mxu0 0.0
    %3373 = vmatprep.subr.mxu0 0.0
    %3374 = vmatpush2.xpose.msra.mxu0 0.0
    %3375 = vmatprep.subr.mxu0 0.0
    %3376 = vmatpush2.xpose.msra.mxu0 0.0
    %3377 = vmatprep.subr.mxu0 0.0
    %3378 = vmatpush2.xpose.msra.mxu0 0.0
    %3379 = vmatprep.subr.mxu0 0.0
    %3380 = vmatpush2.xpose.msra.mxu0 0.0
    %3381 = vmatprep.subr.mxu0 0.0
    %3382 = vmatpush2.xpose.msra.mxu0 0.0
    %3383 = vmatprep.subr.mxu0 0.0
    %3384 = vmatpush2.xpose.msra.mxu0 0.0
    %3385 = vmatprep.subr.mxu0 0.0
    %3386 = vmatpush2.xpose.msra.mxu0 0.0
    %3387 = vmatprep.mubr.f32.mxu0 0.0
    %3388 = vmatmul.mubr.f32.gmra.mxu0 %v3315
    %v3389 = vpop.f32.mrf.mxu0
    %v3390 = vadd.f32 0.0, %v3389
    %v3391 = vpop.f32.mrf.mxu0
    %3392 = vmatprep.mubr.f32.mxu0 0.0
    %3393 = vmatmul.mubr.f32.gmra.mxu0 %v3317
    %v3394 = vpop.f32.mrf.mxu0
    %v3395 = vadd.f32 0.0, %v3394
    %v3396 = vpop.f32.mrf.mxu0
    %3397 = vdwg.mxu0
    %v3398 = vsel %vm357, %v3390, -inf
    %3399 = vmax.xlane.f32.xlu0 %v3398
    %v3400 = vpop.xlane.xlu0 %3399
    %v3401 = vsel %vm357, %v3395, -inf
    %3402 = vmax.xlane.f32.xlu0 %v3401
    %v3403 = vpop.xlane.xlu0 %3402
    %v3404 = vsub.f32 %v3390, %v3400
    %v3405 = vsub.f32 %v3395, %v3403
    %v3406 = vmul.f32 %v3404, 1.442695
    %v3407 = vpow.pop %v3406
    %v3408 = vmul.f32 %v3405, 1.442695
    %v3409 = vpow.pop %v3408
    %v3410 = vsel %vm357, %v3407, 0.0
    %3411 = vadd.xlane.f32.xlu0 %v3410
    %v3412 = vpop.xlane.xlu0 %3411
    %v3413 = vsel %vm357, %v3409, 0.0
    %3414 = vadd.xlane.f32.xlu0 %v3413
    %v3415 = vpop.xlane.xlu0 %3414
    %v3416 = vrcp.pop %v3412
    %v3417 = vrcp.pop %v3415
    %v3418 = vmul.f32 %v3412, %v3416
    %v3419 = vmul.f32 %v3415, %v3417
    %v3420 = vsub.f32 2.0, %v3418
    %v3421 = vsub.f32 2.0, %v3419
    %v3422 = vmul.f32 %v3416, %v3420
    %v3423 = vmul.f32 %v3417, %v3421
    %v3424 = vmul.f32 %v3407, %v3422
    %v3425 = vmul.f32 %v3409, %v3423
    %3428 = vrot.lane.b32.xlu0 %v3424, 96
    %v3429 = vpop.permute.xlu0 %3428
    %3430 = vrot.lane.b32.xlu0 %v3425, 96
    %v3431 = vpop.permute.xlu0 %3430
    %vm3434 = vcmask 917248
    %3435 = vst.msk [vmem:[#allocation7] sm:$0xff] %vm3434, %v3429
    %3436 = vst.msk [vmem:[#allocation7 + $0x18] sm:$0xff] %vm3434, %v3431
    %3437 = vset.pattern.permute.xlu0 66
    %3438 = vperm.xlu0 %3437, %v2933
    %v3439 = vpop.permute.xlu0 %3438
    %3441 = vset.pattern.permute.xlu0 66
    %3442 = vperm.xlu0 %3441, %v2934
    %v3443 = vpop.permute.xlu0 %3442
    %v3445 = vmul.f32 %v53, %v3439
    %v3446 = vmul.f32 %v54, %v3443
    %v3447 = vmul.f32 %v3445, 1.442695
    %v3448 = vpow.pop %v3447
    %v3449 = vmul.f32 %v3446, 1.442695
    %v3450 = vpow.pop %v3449
    %3451 = vset.pattern.permute.xlu0 66
    %3452 = vperm.xlu0 %3451, %v2931
    %v3453 = vpop.permute.xlu0 %3452
    %3455 = vset.pattern.permute.xlu0 66
    %3456 = vperm.xlu0 %3455, %v2932
    %v3457 = vpop.permute.xlu0 %3456
    %v3459 = vmul.f32 %v3453, %v3448
    %v3460 = vmul.f32 %v3457, %v3450
    %3463 = vrot.lane.b32.xlu0 %v3459, 96
    %v3464 = vpop.permute.xlu0 %3463
    %3465 = vrot.lane.b32.xlu0 %v3460, 96
    %v3466 = vpop.permute.xlu0 %3465
    %3469 = vst.msk [vmem:[#allocation7 + $0x8] sm:$0xff] %vm3434, %v3464
    %3470 = vst.msk [vmem:[#allocation7 + $0x20] sm:$0xff] %vm3434, %v3466
    %v3471 = vsel %vm357, %v3424, 0
    %v3473 = vsel %vm357, %v3425, 0
    %3475 = vmatprep.subr.mxu0 0.0
    %3476 = vmatpush1.msra.mxu0 0.0
    %3477 = vmatprep.subr.mxu0 0.0
    %3478 = vmatpush1.msra.mxu0 0.0
    %3479 = vmatprep.subr.mxu0 0.0
    %3480 = vmatpush1.msra.mxu0 0.0
    %3481 = vmatprep.subr.mxu0 0.0
    %3482 = vmatpush1.msra.mxu0 0.0
    %3483 = vmatprep.subr.mxu0 0.0
    %3484 = vmatpush1.msra.mxu0 0.0
    %3485 = vmatprep.subr.mxu0 0.0
    %3486 = vmatpush1.msra.mxu0 0.0
    %3487 = vmatprep.subr.mxu0 0.0
    %3488 = vmatpush1.msra.mxu0 0.0
    %3489 = vmatprep.subr.mxu0 0.0
    %3490 = vmatpush1.msra.mxu0 0.0
    %3491 = vmatprep.subr.mxu0 0.0
    %3492 = vmatpush1.msra.mxu0 0.0
    %3493 = vmatprep.subr.mxu0 0.0
    %3494 = vmatpush1.msra.mxu0 0.0
    %3495 = vmatprep.subr.mxu0 0.0
    %3496 = vmatpush1.msra.mxu0 0.0
    %3497 = vmatprep.subr.mxu0 0.0
    %3498 = vmatpush1.msra.mxu0 0.0
    %3499 = vmatprep.subr.mxu0 0.0
    %3500 = vmatpush1.msra.mxu0 0.0
    %3501 = vmatprep.subr.mxu0 0.0
    %3502 = vmatpush1.msra.mxu0 0.0
    %3503 = vmatprep.subr.mxu0 0.0
    %3504 = vmatpush1.msra.mxu0 %v2700
    %3505 = vmatprep.subr.mxu0 0.0
    %3506 = vmatpush1.msra.mxu0 %v2694
    %3507 = vmatprep.subr.mxu0 0.0
    %3508 = vmatpush2.msra.mxu0 0.0
    %3509 = vmatprep.subr.mxu0 0.0
    %3510 = vmatpush2.msra.mxu0 0.0
    %3511 = vmatprep.subr.mxu0 0.0
    %3512 = vmatpush2.msra.mxu0 0.0
    %3513 = vmatprep.subr.mxu0 0.0
    %3514 = vmatpush2.msra.mxu0 0.0
    %3515 = vmatprep.subr.mxu0 0.0
    %3516 = vmatpush2.msra.mxu0 0.0
    %3517 = vmatprep.subr.mxu0 0.0
    %3518 = vmatpush2.msra.mxu0 0.0
    %3519 = vmatprep.subr.mxu0 0.0
    %3520 = vmatpush2.msra.mxu0 0.0
    %3521 = vmatprep.subr.mxu0 0.0
    %3522 = vmatpush2.msra.mxu0 0.0
    %3523 = vmatprep.subr.mxu0 0.0
    %3524 = vmatpush2.msra.mxu0 0.0
    %3525 = vmatprep.subr.mxu0 0.0
    %3526 = vmatpush2.msra.mxu0 0.0
    %3527 = vmatprep.subr.mxu0 0.0
    %3528 = vmatpush2.msra.mxu0 0.0
    %3529 = vmatprep.subr.mxu0 0.0
    %3530 = vmatpush2.msra.mxu0 0.0
    %3531 = vmatprep.subr.mxu0 0.0
    %3532 = vmatpush2.msra.mxu0 0.0
    %3533 = vmatprep.subr.mxu0 0.0
    %3534 = vmatpush2.msra.mxu0 0.0
    %3535 = vmatprep.subr.mxu0 0.0
    %3536 = vmatpush2.msra.mxu0 0.0
    %3537 = vmatprep.subr.mxu0 0.0
    %3538 = vmatpush2.msra.mxu0 0.0
    %3539 = vmatprep.mubr.f32.mxu0 0.0
    %3540 = vmatmul.mubr.f32.gmra.mxu0 %v3471
    %v3541 = vpop.f32.mrf.mxu0
    %v3542 = vadd.f32 0.0, %v3541
    %v3543 = vpop.f32.mrf.mxu0
    %3544 = vmatprep.mubr.f32.mxu0 0.0
    %3545 = vmatmul.mubr.f32.gmra.mxu0 %v3473
    %v3546 = vpop.f32.mrf.mxu0
    %v3547 = vadd.f32 0.0, %v3546
    %v3548 = vpop.f32.mrf.mxu0
    %3549 = vdwg.mxu0
    %v3550 = vadd.f32 %v3299, %v3542
    %v3551 = vadd.f32 %v3304, %v3547
    %3552 = vrot.lane.b32.xlu0 %v2692, 104
    %v3553 = vpop.permute.xlu0 %3552
    %3554 = vrot.lane.b32.xlu0 %v2698, 104
    %v3555 = vpop.permute.xlu0 %3554
    %3556 = vrot.lane.b32.xlu0 %v2692, 72
    %v3557 = vpop.permute.xlu0 %3556
    %3558 = vrot.lane.b32.xlu0 %v2698, 72
    %v3559 = vpop.permute.xlu0 %3558
    %v3560 = vsel %vm273, %v3553, 0
    %v3562 = vsel %vm273, %v3555, 0
    %v3564 = vsel %vm273, %v3557, 0
    %v3566 = vsel %vm273, %v3559, 0
    %3568 = vmatprep.subr.mxu0 0.0
    %3569 = vmatpush1.xpose.msra.mxu0 0.0
    %3570 = vmatprep.subr.mxu0 0.0
    %3571 = vmatpush1.xpose.msra.mxu0 0.0
    %3572 = vmatprep.subr.mxu0 0.0
    %3573 = vmatpush1.xpose.msra.mxu0 0.0
    %3574 = vmatprep.subr.mxu0 0.0
    %3575 = vmatpush1.xpose.msra.mxu0 0.0
    %3576 = vmatprep.subr.mxu0 0.0
    %3577 = vmatpush1.xpose.msra.mxu0 0.0
    %3578 = vmatprep.subr.mxu0 0.0
    %3579 = vmatpush1.xpose.msra.mxu0 0.0
    %3580 = vmatprep.subr.mxu0 0.0
    %3581 = vmatpush1.xpose.msra.mxu0 0.0
    %3582 = vmatprep.subr.mxu0 0.0
    %3583 = vmatpush1.xpose.msra.mxu0 0.0
    %3584 = vmatprep.subr.mxu0 0.0
    %3585 = vmatpush1.xpose.msra.mxu0 0.0
    %3586 = vmatprep.subr.mxu0 0.0
    %3587 = vmatpush1.xpose.msra.mxu0 0.0
    %3588 = vmatprep.subr.mxu0 0.0
    %3589 = vmatpush1.xpose.msra.mxu0 0.0
    %3590 = vmatprep.subr.mxu0 0.0
    %3591 = vmatpush1.xpose.msra.mxu0 0.0
    %3592 = vmatprep.subr.mxu0 0.0
    %3593 = vmatpush1.xpose.msra.mxu0 0.0
    %3594 = vmatprep.subr.mxu0 0.0
    %3595 = vmatpush1.xpose.msra.mxu0 0.0
    %3596 = vmatprep.subr.mxu0 0.0
    %3597 = vmatpush1.xpose.msra.mxu0 %v3566
    %3598 = vmatprep.subr.mxu0 0.0
    %3599 = vmatpush1.xpose.msra.mxu0 %v3564
    %3600 = vmatprep.subr.mxu0 0.0
    %3601 = vmatpush2.xpose.msra.mxu0 0.0
    %3602 = vmatprep.subr.mxu0 0.0
    %3603 = vmatpush2.xpose.msra.mxu0 0.0
    %3604 = vmatprep.subr.mxu0 0.0
    %3605 = vmatpush2.xpose.msra.mxu0 0.0
    %3606 = vmatprep.subr.mxu0 0.0
    %3607 = vmatpush2.xpose.msra.mxu0 0.0
    %3608 = vmatprep.subr.mxu0 0.0
    %3609 = vmatpush2.xpose.msra.mxu0 0.0
    %3610 = vmatprep.subr.mxu0 0.0
    %3611 = vmatpush2.xpose.msra.mxu0 0.0
    %3612 = vmatprep.subr.mxu0 0.0
    %3613 = vmatpush2.xpose.msra.mxu0 0.0
    %3614 = vmatprep.subr.mxu0 0.0
    %3615 = vmatpush2.xpose.msra.mxu0 0.0
    %3616 = vmatprep.subr.mxu0 0.0
    %3617 = vmatpush2.xpose.msra.mxu0 0.0
    %3618 = vmatprep.subr.mxu0 0.0
    %3619 = vmatpush2.xpose.msra.mxu0 0.0
    %3620 = vmatprep.subr.mxu0 0.0
    %3621 = vmatpush2.xpose.msra.mxu0 0.0
    %3622 = vmatprep.subr.mxu0 0.0
    %3623 = vmatpush2.xpose.msra.mxu0 0.0
    %3624 = vmatprep.subr.mxu0 0.0
    %3625 = vmatpush2.xpose.msra.mxu0 0.0
    %3626 = vmatprep.subr.mxu0 0.0
    %3627 = vmatpush2.xpose.msra.mxu0 0.0
    %3628 = vmatprep.subr.mxu0 0.0
    %3629 = vmatpush2.xpose.msra.mxu0 0.0
    %3630 = vmatprep.subr.mxu0 0.0
    %3631 = vmatpush2.xpose.msra.mxu0 0.0
    %3632 = vmatprep.mubr.f32.mxu0 0.0
    %3633 = vmatmul.mubr.f32.gmra.mxu0 %v3560
    %v3634 = vpop.f32.mrf.mxu0
    %v3635 = vadd.f32 0.0, %v3634
    %v3636 = vpop.f32.mrf.mxu0
    %3637 = vmatprep.mubr.f32.mxu0 0.0
    %3638 = vmatmul.mubr.f32.gmra.mxu0 %v3562
    %v3639 = vpop.f32.mrf.mxu0
    %v3640 = vadd.f32 0.0, %v3639
    %v3641 = vpop.f32.mrf.mxu0
    %3642 = vdwg.mxu0
    %v3643 = vsel %vm357, %v3635, -inf
    %3644 = vmax.xlane.f32.xlu0 %v3643
    %v3645 = vpop.xlane.xlu0 %3644
    %v3646 = vsel %vm357, %v3640, -inf
    %3647 = vmax.xlane.f32.xlu0 %v3646
    %v3648 = vpop.xlane.xlu0 %3647
    %v3649 = vsub.f32 %v3635, %v3645
    %v3650 = vsub.f32 %v3640, %v3648
    %v3651 = vmul.f32 %v3649, 1.442695
    %v3652 = vpow.pop %v3651
    %v3653 = vmul.f32 %v3650, 1.442695
    %v3654 = vpow.pop %v3653
    %v3655 = vsel %vm357, %v3652, 0.0
    %3656 = vadd.xlane.f32.xlu0 %v3655
    %v3657 = vpop.xlane.xlu0 %3656
    %v3658 = vsel %vm357, %v3654, 0.0
    %3659 = vadd.xlane.f32.xlu0 %v3658
    %v3660 = vpop.xlane.xlu0 %3659
    %v3661 = vrcp.pop %v3657
    %v3662 = vrcp.pop %v3660
    %v3663 = vmul.f32 %v3657, %v3661
    %v3664 = vmul.f32 %v3660, %v3662
    %v3665 = vsub.f32 2.0, %v3663
    %v3666 = vsub.f32 2.0, %v3664
    %v3667 = vmul.f32 %v3661, %v3665
    %v3668 = vmul.f32 %v3662, %v3666
    %v3669 = vmul.f32 %v3652, %v3667
    %v3670 = vmul.f32 %v3654, %v3668
    %3673 = vrot.lane.b32.xlu0 %v3669, 112
    %v3674 = vpop.permute.xlu0 %3673
    %3675 = vrot.lane.b32.xlu0 %v3670, 112
    %v3676 = vpop.permute.xlu0 %3675
    %vm3679 = vcmask 1048448
    %3680 = vst.msk [vmem:[#allocation7] sm:$0xff] %vm3679, %v3674
    %3681 = vst.msk [vmem:[#allocation7 + $0x18] sm:$0xff] %vm3679, %v3676
    %3682 = vset.pattern.permute.xlu0 67
    %3683 = vperm.xlu0 %3682, %v2933
    %v3684 = vpop.permute.xlu0 %3683
    %3686 = vset.pattern.permute.xlu0 67
    %3687 = vperm.xlu0 %3686, %v2934
    %v3688 = vpop.permute.xlu0 %3687
    %v3690 = vmul.f32 %v53, %v3684
    %v3691 = vmul.f32 %v54, %v3688
    %v3692 = vmul.f32 %v3690, 1.442695
    %v3693 = vpow.pop %v3692
    %v3694 = vmul.f32 %v3691, 1.442695
    %v3695 = vpow.pop %v3694
    %3696 = vset.pattern.permute.xlu0 67
    %3697 = vperm.xlu0 %3696, %v2931
    %v3698 = vpop.permute.xlu0 %3697
    %3700 = vset.pattern.permute.xlu0 67
    %3701 = vperm.xlu0 %3700, %v2932
    %v3702 = vpop.permute.xlu0 %3701
    %v3704 = vmul.f32 %v3698, %v3693
    %v3705 = vmul.f32 %v3702, %v3695
    %3708 = vrot.lane.b32.xlu0 %v3704, 112
    %v3709 = vpop.permute.xlu0 %3708
    %3710 = vrot.lane.b32.xlu0 %v3705, 112
    %v3711 = vpop.permute.xlu0 %3710
    %3714 = vst.msk [vmem:[#allocation7 + $0x8] sm:$0xff] %vm3679, %v3709
    %3715 = vst.msk [vmem:[#allocation7 + $0x20] sm:$0xff] %vm3679, %v3711
    %3718 = vrot.lane.b32.xlu0 %v2694, 96
    %v3719 = vpop.permute.xlu0 %3718
    %3720 = vrot.lane.b32.xlu0 %v2700, 96
    %v3721 = vpop.permute.xlu0 %3720
    %v3724 = vsel %vm357, %v3669, 0
    %v3726 = vsel %vm357, %v3670, 0
    %3728 = vmatprep.subr.mxu0 0.0
    %3729 = vmatpush1.msra.mxu0 0.0
    %3730 = vmatprep.subr.mxu0 0.0
    %3731 = vmatpush1.msra.mxu0 0.0
    %3732 = vmatprep.subr.mxu0 0.0
    %3733 = vmatpush1.msra.mxu0 0.0
    %3734 = vmatprep.subr.mxu0 0.0
    %3735 = vmatpush1.msra.mxu0 0.0
    %3736 = vmatprep.subr.mxu0 0.0
    %3737 = vmatpush1.msra.mxu0 0.0
    %3738 = vmatprep.subr.mxu0 0.0
    %3739 = vmatpush1.msra.mxu0 0.0
    %3740 = vmatprep.subr.mxu0 0.0
    %3741 = vmatpush1.msra.mxu0 0.0
    %3742 = vmatprep.subr.mxu0 0.0
    %3743 = vmatpush1.msra.mxu0 0.0
    %3744 = vmatprep.subr.mxu0 0.0
    %3745 = vmatpush1.msra.mxu0 0.0
    %3746 = vmatprep.subr.mxu0 0.0
    %3747 = vmatpush1.msra.mxu0 0.0
    %3748 = vmatprep.subr.mxu0 0.0
    %3749 = vmatpush1.msra.mxu0 0.0
    %3750 = vmatprep.subr.mxu0 0.0
    %3751 = vmatpush1.msra.mxu0 0.0
    %3752 = vmatprep.subr.mxu0 0.0
    %3753 = vmatpush1.msra.mxu0 0.0
    %3754 = vmatprep.subr.mxu0 0.0
    %3755 = vmatpush1.msra.mxu0 0.0
    %3756 = vmatprep.subr.mxu0 0.0
    %3757 = vmatpush1.msra.mxu0 %v3721
    %3758 = vmatprep.subr.mxu0 0.0
    %3759 = vmatpush1.msra.mxu0 %v3719
    %3760 = vmatprep.subr.mxu0 0.0
    %3761 = vmatpush2.msra.mxu0 0.0
    %3762 = vmatprep.subr.mxu0 0.0
    %3763 = vmatpush2.msra.mxu0 0.0
    %3764 = vmatprep.subr.mxu0 0.0
    %3765 = vmatpush2.msra.mxu0 0.0
    %3766 = vmatprep.subr.mxu0 0.0
    %3767 = vmatpush2.msra.mxu0 0.0
    %3768 = vmatprep.subr.mxu0 0.0
    %3769 = vmatpush2.msra.mxu0 0.0
    %3770 = vmatprep.subr.mxu0 0.0
    %3771 = vmatpush2.msra.mxu0 0.0
    %3772 = vmatprep.subr.mxu0 0.0
    %3773 = vmatpush2.msra.mxu0 0.0
    %3774 = vmatprep.subr.mxu0 0.0
    %3775 = vmatpush2.msra.mxu0 0.0
    %3776 = vmatprep.subr.mxu0 0.0
    %3777 = vmatpush2.msra.mxu0 0.0
    %3778 = vmatprep.subr.mxu0 0.0
    %3779 = vmatpush2.msra.mxu0 0.0
    %3780 = vmatprep.subr.mxu0 0.0
    %3781 = vmatpush2.msra.mxu0 0.0
    %3782 = vmatprep.subr.mxu0 0.0
    %3783 = vmatpush2.msra.mxu0 0.0
    %3784 = vmatprep.subr.mxu0 0.0
    %3785 = vmatpush2.msra.mxu0 0.0
    %3786 = vmatprep.subr.mxu0 0.0
    %3787 = vmatpush2.msra.mxu0 0.0
    %3788 = vmatprep.subr.mxu0 0.0
    %3789 = vmatpush2.msra.mxu0 0.0
    %3790 = vmatprep.subr.mxu0 0.0
    %3791 = vmatpush2.msra.mxu0 0.0
    %3792 = vmatprep.mubr.f32.mxu0 0.0
    %3793 = vmatmul.mubr.f32.gmra.mxu0 %v3724
    %v3794 = vpop.f32.mrf.mxu0
    %v3795 = vadd.f32 0.0, %v3794
    %v3796 = vpop.f32.mrf.mxu0
    %3797 = vmatprep.mubr.f32.mxu0 0.0
    %3798 = vmatmul.mubr.f32.gmra.mxu0 %v3726
    %v3799 = vpop.f32.mrf.mxu0
    %v3800 = vadd.f32 0.0, %v3799
    %v3801 = vpop.f32.mrf.mxu0
    %3802 = vdwg.mxu0
    %v3803 = vadd.f32 %v3550, %v3795
    %v3804 = vadd.f32 %v3551, %v3800
    %3807 = vrot.lane.b32.xlu0 %v2704, 96
    %v3808 = vpop.permute.xlu0 %3807
    %3809 = vrot.lane.b32.xlu0 %v2710, 96
    %v3810 = vpop.permute.xlu0 %3809
    %v3811 = vsel %vm273, %v2704, 0
    %v3813 = vsel %vm273, %v2710, 0
    %v3815 = vsel %vm273, %v3808, 0
    %v3817 = vsel %vm273, %v3810, 0
    %3819 = vmatprep.subr.mxu0 0.0
    %3820 = vmatpush1.xpose.msra.mxu0 0.0
    %3821 = vmatprep.subr.mxu0 0.0
    %3822 = vmatpush1.xpose.msra.mxu0 0.0
    %3823 = vmatprep.subr.mxu0 0.0
    %3824 = vmatpush1.xpose.msra.mxu0 0.0
    %3825 = vmatprep.subr.mxu0 0.0
    %3826 = vmatpush1.xpose.msra.mxu0 0.0
    %3827 = vmatprep.subr.mxu0 0.0
    %3828 = vmatpush1.xpose.msra.mxu0 0.0
    %3829 = vmatprep.subr.mxu0 0.0
    %3830 = vmatpush1.xpose.msra.mxu0 0.0
    %3831 = vmatprep.subr.mxu0 0.0
    %3832 = vmatpush1.xpose.msra.mxu0 0.0
    %3833 = vmatprep.subr.mxu0 0.0
    %3834 = vmatpush1.xpose.msra.mxu0 0.0
    %3835 = vmatprep.subr.mxu0 0.0
    %3836 = vmatpush1.xpose.msra.mxu0 0.0
    %3837 = vmatprep.subr.mxu0 0.0
    %3838 = vmatpush1.xpose.msra.mxu0 0.0
    %3839 = vmatprep.subr.mxu0 0.0
    %3840 = vmatpush1.xpose.msra.mxu0 0.0
    %3841 = vmatprep.subr.mxu0 0.0
    %3842 = vmatpush1.xpose.msra.mxu0 0.0
    %3843 = vmatprep.subr.mxu0 0.0
    %3844 = vmatpush1.xpose.msra.mxu0 0.0
    %3845 = vmatprep.subr.mxu0 0.0
    %3846 = vmatpush1.xpose.msra.mxu0 0.0
    %3847 = vmatprep.subr.mxu0 0.0
    %3848 = vmatpush1.xpose.msra.mxu0 %v3817
    %3849 = vmatprep.subr.mxu0 0.0
    %3850 = vmatpush1.xpose.msra.mxu0 %v3815
    %3851 = vmatprep.subr.mxu0 0.0
    %3852 = vmatpush2.xpose.msra.mxu0 0.0
    %3853 = vmatprep.subr.mxu0 0.0
    %3854 = vmatpush2.xpose.msra.mxu0 0.0
    %3855 = vmatprep.subr.mxu0 0.0
    %3856 = vmatpush2.xpose.msra.mxu0 0.0
    %3857 = vmatprep.subr.mxu0 0.0
    %3858 = vmatpush2.xpose.msra.mxu0 0.0
    %3859 = vmatprep.subr.mxu0 0.0
    %3860 = vmatpush2.xpose.msra.mxu0 0.0
    %3861 = vmatprep.subr.mxu0 0.0
    %3862 = vmatpush2.xpose.msra.mxu0 0.0
    %3863 = vmatprep.subr.mxu0 0.0
    %3864 = vmatpush2.xpose.msra.mxu0 0.0
    %3865 = vmatprep.subr.mxu0 0.0
    %3866 = vmatpush2.xpose.msra.mxu0 0.0
    %3867 = vmatprep.subr.mxu0 0.0
    %3868 = vmatpush2.xpose.msra.mxu0 0.0
    %3869 = vmatprep.subr.mxu0 0.0
    %3870 = vmatpush2.xpose.msra.mxu0 0.0
    %3871 = vmatprep.subr.mxu0 0.0
    %3872 = vmatpush2.xpose.msra.mxu0 0.0
    %3873 = vmatprep.subr.mxu0 0.0
    %3874 = vmatpush2.xpose.msra.mxu0 0.0
    %3875 = vmatprep.subr.mxu0 0.0
    %3876 = vmatpush2.xpose.msra.mxu0 0.0
    %3877 = vmatprep.subr.mxu0 0.0
    %3878 = vmatpush2.xpose.msra.mxu0 0.0
    %3879 = vmatprep.subr.mxu0 0.0
    %3880 = vmatpush2.xpose.msra.mxu0 0.0
    %3881 = vmatprep.subr.mxu0 0.0
    %3882 = vmatpush2.xpose.msra.mxu0 0.0
    %3883 = vmatprep.mubr.f32.mxu0 0.0
    %3884 = vmatmul.mubr.f32.gmra.mxu0 %v3811
    %v3885 = vpop.f32.mrf.mxu0
    %v3886 = vadd.f32 0.0, %v3885
    %v3887 = vpop.f32.mrf.mxu0
    %3888 = vmatprep.mubr.f32.mxu0 0.0
    %3889 = vmatmul.mubr.f32.gmra.mxu0 %v3813
    %v3890 = vpop.f32.mrf.mxu0
    %v3891 = vadd.f32 0.0, %v3890
    %v3892 = vpop.f32.mrf.mxu0
    %3893 = vdwg.mxu0
    %v3894 = vsel %vm357, %v3886, -inf
    %3895 = vmax.xlane.f32.xlu0 %v3894
    %v3896 = vpop.xlane.xlu0 %3895
    %v3897 = vsel %vm357, %v3891, -inf
    %3898 = vmax.xlane.f32.xlu0 %v3897
    %v3899 = vpop.xlane.xlu0 %3898
    %v3900 = vsub.f32 %v3886, %v3896
    %v3901 = vsub.f32 %v3891, %v3899
    %v3902 = vmul.f32 %v3900, 1.442695
    %v3903 = vpow.pop %v3902
    %v3904 = vmul.f32 %v3901, 1.442695
    %v3905 = vpow.pop %v3904
    %v3906 = vsel %vm357, %v3903, 0.0
    %3907 = vadd.xlane.f32.xlu0 %v3906
    %v3908 = vpop.xlane.xlu0 %3907
    %v3909 = vsel %vm357, %v3905, 0.0
    %3910 = vadd.xlane.f32.xlu0 %v3909
    %v3911 = vpop.xlane.xlu0 %3910
    %v3912 = vrcp.pop %v3908
    %v3913 = vrcp.pop %v3911
    %v3914 = vmul.f32 %v3908, %v3912
    %v3915 = vmul.f32 %v3911, %v3913
    %v3916 = vsub.f32 2.0, %v3914
    %v3917 = vsub.f32 2.0, %v3915
    %v3918 = vmul.f32 %v3912, %v3916
    %v3919 = vmul.f32 %v3913, %v3917
    %v3920 = vmul.f32 %v3903, %v3918
    %v3921 = vmul.f32 %v3905, %v3919
    %3924 = vrot.lane.b32.xlu0 %v3920, 64
    %v3925 = vpop.permute.xlu0 %3924
    %3926 = vrot.lane.b32.xlu0 %v3921, 64
    %v3927 = vpop.permute.xlu0 %3926
    %3930 = vst.msk [vmem:[#allocation7 + $0x30] sm:$0xff] %vm2928, %v3925
    %3931 = vst.msk [vmem:[#allocation7 + $0x48] sm:$0xff] %vm2928, %v3927
    %v3932 = vmul.f32 %v2801, 0.3989423
    %v3933 = vmul.f32 %v2802, 0.3989423
    %v3934 = vmul.f32 %v2801, %v2801
    %v3935 = vmul.f32 %v2802, %v2802
    %3937 = vset.pattern.permute.xlu0 64
    %3938 = vperm.xlu0 %3937, %v3934
    %v3939 = vpop.permute.xlu0 %3938
    %3942 = vset.pattern.permute.xlu0 64
    %3943 = vperm.xlu0 %3942, %v3935
    %v3944 = vpop.permute.xlu0 %3943
    %v3946 = vmul.f32 %v53, %v3939
    %v3947 = vmul.f32 %v54, %v3944
    %v3948 = vmul.f32 %v3946, 1.442695
    %v3949 = vpow.pop %v3948
    %v3950 = vmul.f32 %v3947, 1.442695
    %v3951 = vpow.pop %v3950
    %3953 = vset.pattern.permute.xlu0 64
    %3954 = vperm.xlu0 %3953, %v3932
    %v3955 = vpop.permute.xlu0 %3954
    %3958 = vset.pattern.permute.xlu0 64
    %3959 = vperm.xlu0 %3958, %v3933
    %v3960 = vpop.permute.xlu0 %3959
    %v3962 = vmul.f32 %v3955, %v3949
    %v3963 = vmul.f32 %v3960, %v3951
    %3966 = vrot.lane.b32.xlu0 %v3962, 64
    %v3967 = vpop.permute.xlu0 %3966
    %3968 = vrot.lane.b32.xlu0 %v3963, 64
    %v3969 = vpop.permute.xlu0 %3968
    %3972 = vst.msk [vmem:[#allocation7 + $0x38] sm:$0xff] %vm2928, %v3967
    %3973 = vst.msk [vmem:[#allocation7 + $0x50] sm:$0xff] %vm2928, %v3969
    %3974 = vrot.lane.b32.xlu0 %v2704, 120
    %v3975 = vpop.permute.xlu0 %3974
    %3976 = vrot.lane.b32.xlu0 %v2710, 120
    %v3977 = vpop.permute.xlu0 %3976
    %3978 = vrot.lane.b32.xlu0 %v2704, 88
    %v3979 = vpop.permute.xlu0 %3978
    %3980 = vrot.lane.b32.xlu0 %v2710, 88
    %v3981 = vpop.permute.xlu0 %3980
    %v3982 = vsel %vm273, %v3975, 0
    %v3984 = vsel %vm273, %v3977, 0
    %v3986 = vsel %vm273, %v3979, 0
    %v3988 = vsel %vm273, %v3981, 0
    %3990 = vmatprep.subr.mxu0 0.0
    %3991 = vmatpush1.xpose.msra.mxu0 0.0
    %3992 = vmatprep.subr.mxu0 0.0
    %3993 = vmatpush1.xpose.msra.mxu0 0.0
    %3994 = vmatprep.subr.mxu0 0.0
    %3995 = vmatpush1.xpose.msra.mxu0 0.0
    %3996 = vmatprep.subr.mxu0 0.0
    %3997 = vmatpush1.xpose.msra.mxu0 0.0
    %3998 = vmatprep.subr.mxu0 0.0
    %3999 = vmatpush1.xpose.msra.mxu0 0.0
    %4000 = vmatprep.subr.mxu0 0.0
    %4001 = vmatpush1.xpose.msra.mxu0 0.0
    %4002 = vmatprep.subr.mxu0 0.0
    %4003 = vmatpush1.xpose.msra.mxu0 0.0
    %4004 = vmatprep.subr.mxu0 0.0
    %4005 = vmatpush1.xpose.msra.mxu0 0.0
    %4006 = vmatprep.subr.mxu0 0.0
    %4007 = vmatpush1.xpose.msra.mxu0 0.0
    %4008 = vmatprep.subr.mxu0 0.0
    %4009 = vmatpush1.xpose.msra.mxu0 0.0
    %4010 = vmatprep.subr.mxu0 0.0
    %4011 = vmatpush1.xpose.msra.mxu0 0.0
    %4012 = vmatprep.subr.mxu0 0.0
    %4013 = vmatpush1.xpose.msra.mxu0 0.0
    %4014 = vmatprep.subr.mxu0 0.0
    %4015 = vmatpush1.xpose.msra.mxu0 0.0
    %4016 = vmatprep.subr.mxu0 0.0
    %4017 = vmatpush1.xpose.msra.mxu0 0.0
    %4018 = vmatprep.subr.mxu0 0.0
    %4019 = vmatpush1.xpose.msra.mxu0 %v3988
    %4020 = vmatprep.subr.mxu0 0.0
    %4021 = vmatpush1.xpose.msra.mxu0 %v3986
    %4022 = vmatprep.subr.mxu0 0.0
    %4023 = vmatpush2.xpose.msra.mxu0 0.0
    %4024 = vmatprep.subr.mxu0 0.0
    %4025 = vmatpush2.xpose.msra.mxu0 0.0
    %4026 = vmatprep.subr.mxu0 0.0
    %4027 = vmatpush2.xpose.msra.mxu0 0.0
    %4028 = vmatprep.subr.mxu0 0.0
    %4029 = vmatpush2.xpose.msra.mxu0 0.0
    %4030 = vmatprep.subr.mxu0 0.0
    %4031 = vmatpush2.xpose.msra.mxu0 0.0
    %4032 = vmatprep.subr.mxu0 0.0
    %4033 = vmatpush2.xpose.msra.mxu0 0.0
    %4034 = vmatprep.subr.mxu0 0.0
    %4035 = vmatpush2.xpose.msra.mxu0 0.0
    %4036 = vmatprep.subr.mxu0 0.0
    %4037 = vmatpush2.xpose.msra.mxu0 0.0
    %4038 = vmatprep.subr.mxu0 0.0
    %4039 = vmatpush2.xpose.msra.mxu0 0.0
    %4040 = vmatprep.subr.mxu0 0.0
    %4041 = vmatpush2.xpose.msra.mxu0 0.0
    %4042 = vmatprep.subr.mxu0 0.0
    %4043 = vmatpush2.xpose.msra.mxu0 0.0
    %4044 = vmatprep.subr.mxu0 0.0
    %4045 = vmatpush2.xpose.msra.mxu0 0.0
    %4046 = vmatprep.subr.mxu0 0.0
    %4047 = vmatpush2.xpose.msra.mxu0 0.0
    %4048 = vmatprep.subr.mxu0 0.0
    %4049 = vmatpush2.xpose.msra.mxu0 0.0
    %4050 = vmatprep.subr.mxu0 0.0
    %4051 = vmatpush2.xpose.msra.mxu0 0.0
    %4052 = vmatprep.subr.mxu0 0.0
    %4053 = vmatpush2.xpose.msra.mxu0 0.0
    %4054 = vmatprep.mubr.f32.mxu0 0.0
    %4055 = vmatmul.mubr.f32.gmra.mxu0 %v3982
    %v4056 = vpop.f32.mrf.mxu0
    %v4057 = vadd.f32 0.0, %v4056
    %v4058 = vpop.f32.mrf.mxu0
    %4059 = vmatprep.mubr.f32.mxu0 0.0
    %4060 = vmatmul.mubr.f32.gmra.mxu0 %v3984
    %v4061 = vpop.f32.mrf.mxu0
    %v4062 = vadd.f32 0.0, %v4061
    %v4063 = vpop.f32.mrf.mxu0
    %4064 = vdwg.mxu0
    %v4065 = vsel %vm357, %v4057, -inf
    %4066 = vmax.xlane.f32.xlu0 %v4065
    %v4067 = vpop.xlane.xlu0 %4066
    %v4068 = vsel %vm357, %v4062, -inf
    %4069 = vmax.xlane.f32.xlu0 %v4068
    %v4070 = vpop.xlane.xlu0 %4069
    %v4071 = vsub.f32 %v4057, %v4067
    %v4072 = vsub.f32 %v4062, %v4070
    %v4073 = vmul.f32 %v4071, 1.442695
    %v4074 = vpow.pop %v4073
    %v4075 = vmul.f32 %v4072, 1.442695
    %v4076 = vpow.pop %v4075
    %v4077 = vsel %vm357, %v4074, 0.0
    %4078 = vadd.xlane.f32.xlu0 %v4077
    %v4079 = vpop.xlane.xlu0 %4078
    %v4080 = vsel %vm357, %v4076, 0.0
    %4081 = vadd.xlane.f32.xlu0 %v4080
    %v4082 = vpop.xlane.xlu0 %4081
    %v4083 = vrcp.pop %v4079
    %v4084 = vrcp.pop %v4082
    %v4085 = vmul.f32 %v4079, %v4083
    %v4086 = vmul.f32 %v4082, %v4084
    %v4087 = vsub.f32 2.0, %v4085
    %v4088 = vsub.f32 2.0, %v4086
    %v4089 = vmul.f32 %v4083, %v4087
    %v4090 = vmul.f32 %v4084, %v4088
    %v4091 = vmul.f32 %v4074, %v4089
    %v4092 = vmul.f32 %v4076, %v4090
    %4095 = vrot.lane.b32.xlu0 %v4091, 80
    %v4096 = vpop.permute.xlu0 %4095
    %4097 = vrot.lane.b32.xlu0 %v4092, 80
    %v4098 = vpop.permute.xlu0 %4097
    %4101 = vst.msk [vmem:[#allocation7 + $0x30] sm:$0xff] %vm3100, %v4096
    %4102 = vst.msk [vmem:[#allocation7 + $0x48] sm:$0xff] %vm3100, %v4098
    %4103 = vset.pattern.permute.xlu0 65
    %4104 = vperm.xlu0 %4103, %v3934
    %v4105 = vpop.permute.xlu0 %4104
    %4107 = vset.pattern.permute.xlu0 65
    %4108 = vperm.xlu0 %4107, %v3935
    %v4109 = vpop.permute.xlu0 %4108
    %v4111 = vmul.f32 %v53, %v4105
    %v4112 = vmul.f32 %v54, %v4109
    %v4113 = vmul.f32 %v4111, 1.442695
    %v4114 = vpow.pop %v4113
    %v4115 = vmul.f32 %v4112, 1.442695
    %v4116 = vpow.pop %v4115
    %4117 = vset.pattern.permute.xlu0 65
    %4118 = vperm.xlu0 %4117, %v3932
    %v4119 = vpop.permute.xlu0 %4118
    %4121 = vset.pattern.permute.xlu0 65
    %4122 = vperm.xlu0 %4121, %v3933
    %v4123 = vpop.permute.xlu0 %4122
    %v4125 = vmul.f32 %v4119, %v4114
    %v4126 = vmul.f32 %v4123, %v4116
    %4129 = vrot.lane.b32.xlu0 %v4125, 80
    %v4130 = vpop.permute.xlu0 %4129
    %4131 = vrot.lane.b32.xlu0 %v4126, 80
    %v4132 = vpop.permute.xlu0 %4131
    %4135 = vst.msk [vmem:[#allocation7 + $0x38] sm:$0xff] %vm3100, %v4130
    %4136 = vst.msk [vmem:[#allocation7 + $0x50] sm:$0xff] %vm3100, %v4132
    %4137 = vrot.lane.b32.xlu0 %v2704, 32
    %v4138 = vpop.permute.xlu0 %4137
    %4139 = vrot.lane.b32.xlu0 %v2710, 32
    %v4140 = vpop.permute.xlu0 %4139
    %v4143 = vsel %vm357, %v4091, 0
    %v4145 = vsel %vm357, %v4092, 0
    %4147 = vmatprep.subr.mxu0 0.0
    %4148 = vmatpush1.msra.mxu0 0.0
    %4149 = vmatprep.subr.mxu0 0.0
    %4150 = vmatpush1.msra.mxu0 0.0
    %4151 = vmatprep.subr.mxu0 0.0
    %4152 = vmatpush1.msra.mxu0 0.0
    %4153 = vmatprep.subr.mxu0 0.0
    %4154 = vmatpush1.msra.mxu0 0.0
    %4155 = vmatprep.subr.mxu0 0.0
    %4156 = vmatpush1.msra.mxu0 0.0
    %4157 = vmatprep.subr.mxu0 0.0
    %4158 = vmatpush1.msra.mxu0 0.0
    %4159 = vmatprep.subr.mxu0 0.0
    %4160 = vmatpush1.msra.mxu0 0.0
    %4161 = vmatprep.subr.mxu0 0.0
    %4162 = vmatpush1.msra.mxu0 0.0
    %4163 = vmatprep.subr.mxu0 0.0
    %4164 = vmatpush1.msra.mxu0 0.0
    %4165 = vmatprep.subr.mxu0 0.0
    %4166 = vmatpush1.msra.mxu0 0.0
    %4167 = vmatprep.subr.mxu0 0.0
    %4168 = vmatpush1.msra.mxu0 0.0
    %4169 = vmatprep.subr.mxu0 0.0
    %4170 = vmatpush1.msra.mxu0 0.0
    %4171 = vmatprep.subr.mxu0 0.0
    %4172 = vmatpush1.msra.mxu0 0.0
    %4173 = vmatprep.subr.mxu0 0.0
    %4174 = vmatpush1.msra.mxu0 0.0
    %4175 = vmatprep.subr.mxu0 0.0
    %4176 = vmatpush1.msra.mxu0 %v4140
    %4177 = vmatprep.subr.mxu0 0.0
    %4178 = vmatpush1.msra.mxu0 %v4138
    %4179 = vmatprep.subr.mxu0 0.0
    %4180 = vmatpush2.msra.mxu0 0.0
    %4181 = vmatprep.subr.mxu0 0.0
    %4182 = vmatpush2.msra.mxu0 0.0
    %4183 = vmatprep.subr.mxu0 0.0
    %4184 = vmatpush2.msra.mxu0 0.0
    %4185 = vmatprep.subr.mxu0 0.0
    %4186 = vmatpush2.msra.mxu0 0.0
    %4187 = vmatprep.subr.mxu0 0.0
    %4188 = vmatpush2.msra.mxu0 0.0
    %4189 = vmatprep.subr.mxu0 0.0
    %4190 = vmatpush2.msra.mxu0 0.0
    %4191 = vmatprep.subr.mxu0 0.0
    %4192 = vmatpush2.msra.mxu0 0.0
    %4193 = vmatprep.subr.mxu0 0.0
    %4194 = vmatpush2.msra.mxu0 0.0
    %4195 = vmatprep.subr.mxu0 0.0
    %4196 = vmatpush2.msra.mxu0 0.0
    %4197 = vmatprep.subr.mxu0 0.0
    %4198 = vmatpush2.msra.mxu0 0.0
    %4199 = vmatprep.subr.mxu0 0.0
    %4200 = vmatpush2.msra.mxu0 0.0
    %4201 = vmatprep.subr.mxu0 0.0
    %4202 = vmatpush2.msra.mxu0 0.0
    %4203 = vmatprep.subr.mxu0 0.0
    %4204 = vmatpush2.msra.mxu0 0.0
    %4205 = vmatprep.subr.mxu0 0.0
    %4206 = vmatpush2.msra.mxu0 0.0
    %4207 = vmatprep.subr.mxu0 0.0
    %4208 = vmatpush2.msra.mxu0 0.0
    %4209 = vmatprep.subr.mxu0 0.0
    %4210 = vmatpush2.msra.mxu0 0.0
    %4211 = vmatprep.mubr.f32.mxu0 0.0
    %4212 = vmatmul.mubr.f32.gmra.mxu0 %v4143
    %v4213 = vpop.f32.mrf.mxu0
    %v4214 = vadd.f32 0.0, %v4213
    %v4215 = vpop.f32.mrf.mxu0
    %4216 = vmatprep.mubr.f32.mxu0 0.0
    %4217 = vmatmul.mubr.f32.gmra.mxu0 %v4145
    %v4218 = vpop.f32.mrf.mxu0
    %v4219 = vadd.f32 0.0, %v4218
    %v4220 = vpop.f32.mrf.mxu0
    %4221 = vdwg.mxu0
    %4222 = vrot.lane.b32.xlu0 %v2704, 64
    %v4223 = vpop.permute.xlu0 %4222
    %4224 = vrot.lane.b32.xlu0 %v2710, 64
    %v4225 = vpop.permute.xlu0 %4224
    %v4228 = vsel %vm357, %v3920, 0
    %v4230 = vsel %vm357, %v3921, 0
    %4232 = vmatprep.subr.mxu0 0.0
    %4233 = vmatpush1.msra.mxu0 0.0
    %4234 = vmatprep.subr.mxu0 0.0
    %4235 = vmatpush1.msra.mxu0 0.0
    %4236 = vmatprep.subr.mxu0 0.0
    %4237 = vmatpush1.msra.mxu0 0.0
    %4238 = vmatprep.subr.mxu0 0.0
    %4239 = vmatpush1.msra.mxu0 0.0
    %4240 = vmatprep.subr.mxu0 0.0
    %4241 = vmatpush1.msra.mxu0 0.0
    %4242 = vmatprep.subr.mxu0 0.0
    %4243 = vmatpush1.msra.mxu0 0.0
    %4244 = vmatprep.subr.mxu0 0.0
    %4245 = vmatpush1.msra.mxu0 0.0
    %4246 = vmatprep.subr.mxu0 0.0
    %4247 = vmatpush1.msra.mxu0 0.0
    %4248 = vmatprep.subr.mxu0 0.0
    %4249 = vmatpush1.msra.mxu0 0.0
    %4250 = vmatprep.subr.mxu0 0.0
    %4251 = vmatpush1.msra.mxu0 0.0
    %4252 = vmatprep.subr.mxu0 0.0
    %4253 = vmatpush1.msra.mxu0 0.0
    %4254 = vmatprep.subr.mxu0 0.0
    %4255 = vmatpush1.msra.mxu0 0.0
    %4256 = vmatprep.subr.mxu0 0.0
    %4257 = vmatpush1.msra.mxu0 0.0
    %4258 = vmatprep.subr.mxu0 0.0
    %4259 = vmatpush1.msra.mxu0 0.0
    %4260 = vmatprep.subr.mxu0 0.0
    %4261 = vmatpush1.msra.mxu0 %v4225
    %4262 = vmatprep.subr.mxu0 0.0
    %4263 = vmatpush1.msra.mxu0 %v4223
    %4264 = vmatprep.subr.mxu0 0.0
    %4265 = vmatpush2.msra.mxu0 0.0
    %4266 = vmatprep.subr.mxu0 0.0
    %4267 = vmatpush2.msra.mxu0 0.0
    %4268 = vmatprep.subr.mxu0 0.0
    %4269 = vmatpush2.msra.mxu0 0.0
    %4270 = vmatprep.subr.mxu0 0.0
    %4271 = vmatpush2.msra.mxu0 0.0
    %4272 = vmatprep.subr.mxu0 0.0
    %4273 = vmatpush2.msra.mxu0 0.0
    %4274 = vmatprep.subr.mxu0 0.0
    %4275 = vmatpush2.msra.mxu0 0.0
    %4276 = vmatprep.subr.mxu0 0.0
    %4277 = vmatpush2.msra.mxu0 0.0
    %4278 = vmatprep.subr.mxu0 0.0
    %4279 = vmatpush2.msra.mxu0 0.0
    %4280 = vmatprep.subr.mxu0 0.0
    %4281 = vmatpush2.msra.mxu0 0.0
    %4282 = vmatprep.subr.mxu0 0.0
    %4283 = vmatpush2.msra.mxu0 0.0
    %4284 = vmatprep.subr.mxu0 0.0
    %4285 = vmatpush2.msra.mxu0 0.0
    %4286 = vmatprep.subr.mxu0 0.0
    %4287 = vmatpush2.msra.mxu0 0.0
    %4288 = vmatprep.subr.mxu0 0.0
    %4289 = vmatpush2.msra.mxu0 0.0
    %4290 = vmatprep.subr.mxu0 0.0
    %4291 = vmatpush2.msra.mxu0 0.0
    %4292 = vmatprep.subr.mxu0 0.0
    %4293 = vmatpush2.msra.mxu0 0.0
    %4294 = vmatprep.subr.mxu0 0.0
    %4295 = vmatpush2.msra.mxu0 0.0
    %4296 = vmatprep.mubr.f32.mxu0 0.0
    %4297 = vmatmul.mubr.f32.gmra.mxu0 %v4228
    %v4298 = vpop.f32.mrf.mxu0
    %v4299 = vadd.f32 %v4214, %v4298
    %v4300 = vpop.f32.mrf.mxu0
    %4301 = vmatprep.mubr.f32.mxu0 0.0
    %4302 = vmatmul.mubr.f32.gmra.mxu0 %v4230
    %v4303 = vpop.f32.mrf.mxu0
    %v4304 = vadd.f32 %v4219, %v4303
    %v4305 = vpop.f32.mrf.mxu0
    %4306 = vdwg.mxu0
    %4307 = vrot.lane.b32.xlu0 %v2704, 112
    %v4308 = vpop.permute.xlu0 %4307
    %4309 = vrot.lane.b32.xlu0 %v2710, 112
    %v4310 = vpop.permute.xlu0 %4309
    %4311 = vrot.lane.b32.xlu0 %v2704, 80
    %v4312 = vpop.permute.xlu0 %4311
    %4313 = vrot.lane.b32.xlu0 %v2710, 80
    %v4314 = vpop.permute.xlu0 %4313
    %v4315 = vsel %vm273, %v4308, 0
    %v4317 = vsel %vm273, %v4310, 0
    %v4319 = vsel %vm273, %v4312, 0
    %v4321 = vsel %vm273, %v4314, 0
    %4323 = vmatprep.subr.mxu0 0.0
    %4324 = vmatpush1.xpose.msra.mxu0 0.0
    %4325 = vmatprep.subr.mxu0 0.0
    %4326 = vmatpush1.xpose.msra.mxu0 0.0
    %4327 = vmatprep.subr.mxu0 0.0
    %4328 = vmatpush1.xpose.msra.mxu0 0.0
    %4329 = vmatprep.subr.mxu0 0.0
    %4330 = vmatpush1.xpose.msra.mxu0 0.0
    %4331 = vmatprep.subr.mxu0 0.0
    %4332 = vmatpush1.xpose.msra.mxu0 0.0
    %4333 = vmatprep.subr.mxu0 0.0
    %4334 = vmatpush1.xpose.msra.mxu0 0.0
    %4335 = vmatprep.subr.mxu0 0.0
    %4336 = vmatpush1.xpose.msra.mxu0 0.0
    %4337 = vmatprep.subr.mxu0 0.0
    %4338 = vmatpush1.xpose.msra.mxu0 0.0
    %4339 = vmatprep.subr.mxu0 0.0
    %4340 = vmatpush1.xpose.msra.mxu0 0.0
    %4341 = vmatprep.subr.mxu0 0.0
    %4342 = vmatpush1.xpose.msra.mxu0 0.0
    %4343 = vmatprep.subr.mxu0 0.0
    %4344 = vmatpush1.xpose.msra.mxu0 0.0
    %4345 = vmatprep.subr.mxu0 0.0
    %4346 = vmatpush1.xpose.msra.mxu0 0.0
    %4347 = vmatprep.subr.mxu0 0.0
    %4348 = vmatpush1.xpose.msra.mxu0 0.0
    %4349 = vmatprep.subr.mxu0 0.0
    %4350 = vmatpush1.xpose.msra.mxu0 0.0
    %4351 = vmatprep.subr.mxu0 0.0
    %4352 = vmatpush1.xpose.msra.mxu0 %v4321
    %4353 = vmatprep.subr.mxu0 0.0
    %4354 = vmatpush1.xpose.msra.mxu0 %v4319
    %4355 = vmatprep.subr.mxu0 0.0
    %4356 = vmatpush2.xpose.msra.mxu0 0.0
    %4357 = vmatprep.subr.mxu0 0.0
    %4358 = vmatpush2.xpose.msra.mxu0 0.0
    %4359 = vmatprep.subr.mxu0 0.0
    %4360 = vmatpush2.xpose.msra.mxu0 0.0
    %4361 = vmatprep.subr.mxu0 0.0
    %4362 = vmatpush2.xpose.msra.mxu0 0.0
    %4363 = vmatprep.subr.mxu0 0.0
    %4364 = vmatpush2.xpose.msra.mxu0 0.0
    %4365 = vmatprep.subr.mxu0 0.0
    %4366 = vmatpush2.xpose.msra.mxu0 0.0
    %4367 = vmatprep.subr.mxu0 0.0
    %4368 = vmatpush2.xpose.msra.mxu0 0.0
    %4369 = vmatprep.subr.mxu0 0.0
    %4370 = vmatpush2.xpose.msra.mxu0 0.0
    %4371 = vmatprep.subr.mxu0 0.0
    %4372 = vmatpush2.xpose.msra.mxu0 0.0
    %4373 = vmatprep.subr.mxu0 0.0
    %4374 = vmatpush2.xpose.msra.mxu0 0.0
    %4375 = vmatprep.subr.mxu0 0.0
    %4376 = vmatpush2.xpose.msra.mxu0 0.0
    %4377 = vmatprep.subr.mxu0 0.0
    %4378 = vmatpush2.xpose.msra.mxu0 0.0
    %4379 = vmatprep.subr.mxu0 0.0
    %4380 = vmatpush2.xpose.msra.mxu0 0.0
    %4381 = vmatprep.subr.mxu0 0.0
    %4382 = vmatpush2.xpose.msra.mxu0 0.0
    %4383 = vmatprep.subr.mxu0 0.0
    %4384 = vmatpush2.xpose.msra.mxu0 0.0
    %4385 = vmatprep.subr.mxu0 0.0
    %4386 = vmatpush2.xpose.msra.mxu0 0.0
    %4387 = vmatprep.mubr.f32.mxu0 0.0
    %4388 = vmatmul.mubr.f32.gmra.mxu0 %v4315
    %v4389 = vpop.f32.mrf.mxu0
    %v4390 = vadd.f32 0.0, %v4389
    %v4391 = vpop.f32.mrf.mxu0
    %4392 = vmatprep.mubr.f32.mxu0 0.0
    %4393 = vmatmul.mubr.f32.gmra.mxu0 %v4317
    %v4394 = vpop.f32.mrf.mxu0
    %v4395 = vadd.f32 0.0, %v4394
    %v4396 = vpop.f32.mrf.mxu0
    %4397 = vdwg.mxu0
    %v4398 = vsel %vm357, %v4390, -inf
    %4399 = vmax.xlane.f32.xlu0 %v4398
    %v4400 = vpop.xlane.xlu0 %4399
    %v4401 = vsel %vm357, %v4395, -inf
    %4402 = vmax.xlane.f32.xlu0 %v4401
    %v4403 = vpop.xlane.xlu0 %4402
    %v4404 = vsub.f32 %v4390, %v4400
    %v4405 = vsub.f32 %v4395, %v4403
    %v4406 = vmul.f32 %v4404, 1.442695
    %v4407 = vpow.pop %v4406
    %v4408 = vmul.f32 %v4405, 1.442695
    %v4409 = vpow.pop %v4408
    %v4410 = vsel %vm357, %v4407, 0.0
    %4411 = vadd.xlane.f32.xlu0 %v4410
    %v4412 = vpop.xlane.xlu0 %4411
    %v4413 = vsel %vm357, %v4409, 0.0
    %4414 = vadd.xlane.f32.xlu0 %v4413
    %v4415 = vpop.xlane.xlu0 %4414
    %v4416 = vrcp.pop %v4412
    %v4417 = vrcp.pop %v4415
    %v4418 = vmul.f32 %v4412, %v4416
    %v4419 = vmul.f32 %v4415, %v4417
    %v4420 = vsub.f32 2.0, %v4418
    %v4421 = vsub.f32 2.0, %v4419
    %v4422 = vmul.f32 %v4416, %v4420
    %v4423 = vmul.f32 %v4417, %v4421
    %v4424 = vmul.f32 %v4407, %v4422
    %v4425 = vmul.f32 %v4409, %v4423
    %4428 = vrot.lane.b32.xlu0 %v4424, 96
    %v4429 = vpop.permute.xlu0 %4428
    %4430 = vrot.lane.b32.xlu0 %v4425, 96
    %v4431 = vpop.permute.xlu0 %4430
    %4434 = vst.msk [vmem:[#allocation7 + $0x30] sm:$0xff] %vm3434, %v4429
    %4435 = vst.msk [vmem:[#allocation7 + $0x48] sm:$0xff] %vm3434, %v4431
    %4436 = vset.pattern.permute.xlu0 66
    %4437 = vperm.xlu0 %4436, %v3934
    %v4438 = vpop.permute.xlu0 %4437
    %4440 = vset.pattern.permute.xlu0 66
    %4441 = vperm.xlu0 %4440, %v3935
    %v4442 = vpop.permute.xlu0 %4441
    %v4444 = vmul.f32 %v53, %v4438
    %v4445 = vmul.f32 %v54, %v4442
    %v4446 = vmul.f32 %v4444, 1.442695
    %v4447 = vpow.pop %v4446
    %v4448 = vmul.f32 %v4445, 1.442695
    %v4449 = vpow.pop %v4448
    %4450 = vset.pattern.permute.xlu0 66
    %4451 = vperm.xlu0 %4450, %v3932
    %v4452 = vpop.permute.xlu0 %4451
    %4454 = vset.pattern.permute.xlu0 66
    %4455 = vperm.xlu0 %4454, %v3933
    %v4456 = vpop.permute.xlu0 %4455
    %v4458 = vmul.f32 %v4452, %v4447
    %v4459 = vmul.f32 %v4456, %v4449
    %4462 = vrot.lane.b32.xlu0 %v4458, 96
    %v4463 = vpop.permute.xlu0 %4462
    %4464 = vrot.lane.b32.xlu0 %v4459, 96
    %v4465 = vpop.permute.xlu0 %4464
    %4468 = vst.msk [vmem:[#allocation7 + $0x38] sm:$0xff] %vm3434, %v4463
    %4469 = vst.msk [vmem:[#allocation7 + $0x50] sm:$0xff] %vm3434, %v4465
    %v4470 = vsel %vm357, %v4424, 0
    %v4472 = vsel %vm357, %v4425, 0
    %4474 = vmatprep.subr.mxu0 0.0
    %4475 = vmatpush1.msra.mxu0 0.0
    %4476 = vmatprep.subr.mxu0 0.0
    %4477 = vmatpush1.msra.mxu0 0.0
    %4478 = vmatprep.subr.mxu0 0.0
    %4479 = vmatpush1.msra.mxu0 0.0
    %4480 = vmatprep.subr.mxu0 0.0
    %4481 = vmatpush1.msra.mxu0 0.0
    %4482 = vmatprep.subr.mxu0 0.0
    %4483 = vmatpush1.msra.mxu0 0.0
    %4484 = vmatprep.subr.mxu0 0.0
    %4485 = vmatpush1.msra.mxu0 0.0
    %4486 = vmatprep.subr.mxu0 0.0
    %4487 = vmatpush1.msra.mxu0 0.0
    %4488 = vmatprep.subr.mxu0 0.0
    %4489 = vmatpush1.msra.mxu0 0.0
    %4490 = vmatprep.subr.mxu0 0.0
    %4491 = vmatpush1.msra.mxu0 0.0
    %4492 = vmatprep.subr.mxu0 0.0
    %4493 = vmatpush1.msra.mxu0 0.0
    %4494 = vmatprep.subr.mxu0 0.0
    %4495 = vmatpush1.msra.mxu0 0.0
    %4496 = vmatprep.subr.mxu0 0.0
    %4497 = vmatpush1.msra.mxu0 0.0
    %4498 = vmatprep.subr.mxu0 0.0
    %4499 = vmatpush1.msra.mxu0 0.0
    %4500 = vmatprep.subr.mxu0 0.0
    %4501 = vmatpush1.msra.mxu0 0.0
    %4502 = vmatprep.subr.mxu0 0.0
    %4503 = vmatpush1.msra.mxu0 %v2712
    %4504 = vmatprep.subr.mxu0 0.0
    %4505 = vmatpush1.msra.mxu0 %v2706
    %4506 = vmatprep.subr.mxu0 0.0
    %4507 = vmatpush2.msra.mxu0 0.0
    %4508 = vmatprep.subr.mxu0 0.0
    %4509 = vmatpush2.msra.mxu0 0.0
    %4510 = vmatprep.subr.mxu0 0.0
    %4511 = vmatpush2.msra.mxu0 0.0
    %4512 = vmatprep.subr.mxu0 0.0
    %4513 = vmatpush2.msra.mxu0 0.0
    %4514 = vmatprep.subr.mxu0 0.0
    %4515 = vmatpush2.msra.mxu0 0.0
    %4516 = vmatprep.subr.mxu0 0.0
    %4517 = vmatpush2.msra.mxu0 0.0
    %4518 = vmatprep.subr.mxu0 0.0
    %4519 = vmatpush2.msra.mxu0 0.0
    %4520 = vmatprep.subr.mxu0 0.0
    %4521 = vmatpush2.msra.mxu0 0.0
    %4522 = vmatprep.subr.mxu0 0.0
    %4523 = vmatpush2.msra.mxu0 0.0
    %4524 = vmatprep.subr.mxu0 0.0
    %4525 = vmatpush2.msra.mxu0 0.0
    %4526 = vmatprep.subr.mxu0 0.0
    %4527 = vmatpush2.msra.mxu0 0.0
    %4528 = vmatprep.subr.mxu0 0.0
    %4529 = vmatpush2.msra.mxu0 0.0
    %4530 = vmatprep.subr.mxu0 0.0
    %4531 = vmatpush2.msra.mxu0 0.0
    %4532 = vmatprep.subr.mxu0 0.0
    %4533 = vmatpush2.msra.mxu0 0.0
    %4534 = vmatprep.subr.mxu0 0.0
    %4535 = vmatpush2.msra.mxu0 0.0
    %4536 = vmatprep.subr.mxu0 0.0
    %4537 = vmatpush2.msra.mxu0 0.0
    %4538 = vmatprep.mubr.f32.mxu0 0.0
    %4539 = vmatmul.mubr.f32.gmra.mxu0 %v4470
    %v4540 = vpop.f32.mrf.mxu0
    %v4541 = vadd.f32 0.0, %v4540
    %v4542 = vpop.f32.mrf.mxu0
    %4543 = vmatprep.mubr.f32.mxu0 0.0
    %4544 = vmatmul.mubr.f32.gmra.mxu0 %v4472
    %v4545 = vpop.f32.mrf.mxu0
    %v4546 = vadd.f32 0.0, %v4545
    %v4547 = vpop.f32.mrf.mxu0
    %4548 = vdwg.mxu0
    %v4549 = vadd.f32 %v4299, %v4541
    %v4550 = vadd.f32 %v4304, %v4546
    %4551 = vrot.lane.b32.xlu0 %v2704, 104
    %v4552 = vpop.permute.xlu0 %4551
    %4553 = vrot.lane.b32.xlu0 %v2710, 104
    %v4554 = vpop.permute.xlu0 %4553
    %4555 = vrot.lane.b32.xlu0 %v2704, 72
    %v4556 = vpop.permute.xlu0 %4555
    %4557 = vrot.lane.b32.xlu0 %v2710, 72
    %v4558 = vpop.permute.xlu0 %4557
    %v4559 = vsel %vm273, %v4552, 0
    %v4561 = vsel %vm273, %v4554, 0
    %v4563 = vsel %vm273, %v4556, 0
    %v4565 = vsel %vm273, %v4558, 0
    %4567 = vmatprep.subr.mxu0 0.0
    %4568 = vmatpush1.xpose.msra.mxu0 0.0
    %4569 = vmatprep.subr.mxu0 0.0
    %4570 = vmatpush1.xpose.msra.mxu0 0.0
    %4571 = vmatprep.subr.mxu0 0.0
    %4572 = vmatpush1.xpose.msra.mxu0 0.0
    %4573 = vmatprep.subr.mxu0 0.0
    %4574 = vmatpush1.xpose.msra.mxu0 0.0
    %4575 = vmatprep.subr.mxu0 0.0
    %4576 = vmatpush1.xpose.msra.mxu0 0.0
    %4577 = vmatprep.subr.mxu0 0.0
    %4578 = vmatpush1.xpose.msra.mxu0 0.0
    %4579 = vmatprep.subr.mxu0 0.0
    %4580 = vmatpush1.xpose.msra.mxu0 0.0
    %4581 = vmatprep.subr.mxu0 0.0
    %4582 = vmatpush1.xpose.msra.mxu0 0.0
    %4583 = vmatprep.subr.mxu0 0.0
    %4584 = vmatpush1.xpose.msra.mxu0 0.0
    %4585 = vmatprep.subr.mxu0 0.0
    %4586 = vmatpush1.xpose.msra.mxu0 0.0
    %4587 = vmatprep.subr.mxu0 0.0
    %4588 = vmatpush1.xpose.msra.mxu0 0.0
    %4589 = vmatprep.subr.mxu0 0.0
    %4590 = vmatpush1.xpose.msra.mxu0 0.0
    %4591 = vmatprep.subr.mxu0 0.0
    %4592 = vmatpush1.xpose.msra.mxu0 0.0
    %4593 = vmatprep.subr.mxu0 0.0
    %4594 = vmatpush1.xpose.msra.mxu0 0.0
    %4595 = vmatprep.subr.mxu0 0.0
    %4596 = vmatpush1.xpose.msra.mxu0 %v4565
    %4597 = vmatprep.subr.mxu0 0.0
    %4598 = vmatpush1.xpose.msra.mxu0 %v4563
    %4599 = vmatprep.subr.mxu0 0.0
    %4600 = vmatpush2.xpose.msra.mxu0 0.0
    %4601 = vmatprep.subr.mxu0 0.0
    %4602 = vmatpush2.xpose.msra.mxu0 0.0
    %4603 = vmatprep.subr.mxu0 0.0
    %4604 = vmatpush2.xpose.msra.mxu0 0.0
    %4605 = vmatprep.subr.mxu0 0.0
    %4606 = vmatpush2.xpose.msra.mxu0 0.0
    %4607 = vmatprep.subr.mxu0 0.0
    %4608 = vmatpush2.xpose.msra.mxu0 0.0
    %4609 = vmatprep.subr.mxu0 0.0
    %4610 = vmatpush2.xpose.msra.mxu0 0.0
    %4611 = vmatprep.subr.mxu0 0.0
    %4612 = vmatpush2.xpose.msra.mxu0 0.0
    %4613 = vmatprep.subr.mxu0 0.0
    %4614 = vmatpush2.xpose.msra.mxu0 0.0
    %4615 = vmatprep.subr.mxu0 0.0
    %4616 = vmatpush2.xpose.msra.mxu0 0.0
    %4617 = vmatprep.subr.mxu0 0.0
    %4618 = vmatpush2.xpose.msra.mxu0 0.0
    %4619 = vmatprep.subr.mxu0 0.0
    %4620 = vmatpush2.xpose.msra.mxu0 0.0
    %4621 = vmatprep.subr.mxu0 0.0
    %4622 = vmatpush2.xpose.msra.mxu0 0.0
    %4623 = vmatprep.subr.mxu0 0.0
    %4624 = vmatpush2.xpose.msra.mxu0 0.0
    %4625 = vmatprep.subr.mxu0 0.0
    %4626 = vmatpush2.xpose.msra.mxu0 0.0
    %4627 = vmatprep.subr.mxu0 0.0
    %4628 = vmatpush2.xpose.msra.mxu0 0.0
    %4629 = vmatprep.subr.mxu0 0.0
    %4630 = vmatpush2.xpose.msra.mxu0 0.0
    %4631 = vmatprep.mubr.f32.mxu0 0.0
    %4632 = vmatmul.mubr.f32.gmra.mxu0 %v4559
    %v4633 = vpop.f32.mrf.mxu0
    %v4634 = vadd.f32 0.0, %v4633
    %v4635 = vpop.f32.mrf.mxu0
    %4636 = vmatprep.mubr.f32.mxu0 0.0
    %4637 = vmatmul.mubr.f32.gmra.mxu0 %v4561
    %v4638 = vpop.f32.mrf.mxu0
    %v4639 = vadd.f32 0.0, %v4638
    %v4640 = vpop.f32.mrf.mxu0
    %4641 = vdwg.mxu0
    %v4642 = vsel %vm357, %v4634, -inf
    %4643 = vmax.xlane.f32.xlu0 %v4642
    %v4644 = vpop.xlane.xlu0 %4643
    %v4645 = vsel %vm357, %v4639, -inf
    %4646 = vmax.xlane.f32.xlu0 %v4645
    %v4647 = vpop.xlane.xlu0 %4646
    %v4648 = vsub.f32 %v4634, %v4644
    %v4649 = vsub.f32 %v4639, %v4647
    %v4650 = vmul.f32 %v4648, 1.442695
    %v4651 = vpow.pop %v4650
    %v4652 = vmul.f32 %v4649, 1.442695
    %v4653 = vpow.pop %v4652
    %v4654 = vsel %vm357, %v4651, 0.0
    %4655 = vadd.xlane.f32.xlu0 %v4654
    %v4656 = vpop.xlane.xlu0 %4655
    %v4657 = vsel %vm357, %v4653, 0.0
    %4658 = vadd.xlane.f32.xlu0 %v4657
    %v4659 = vpop.xlane.xlu0 %4658
    %v4660 = vrcp.pop %v4656
    %v4661 = vrcp.pop %v4659
    %v4662 = vmul.f32 %v4656, %v4660
    %v4663 = vmul.f32 %v4659, %v4661
    %v4664 = vsub.f32 2.0, %v4662
    %v4665 = vsub.f32 2.0, %v4663
    %v4666 = vmul.f32 %v4660, %v4664
    %v4667 = vmul.f32 %v4661, %v4665
    %v4668 = vmul.f32 %v4651, %v4666
    %v4669 = vmul.f32 %v4653, %v4667
    %4672 = vrot.lane.b32.xlu0 %v4668, 112
    %v4673 = vpop.permute.xlu0 %4672
    %4674 = vrot.lane.b32.xlu0 %v4669, 112
    %v4675 = vpop.permute.xlu0 %4674
    %4678 = vst.msk [vmem:[#allocation7 + $0x30] sm:$0xff] %vm3679, %v4673
    %4679 = vst.msk [vmem:[#allocation7 + $0x48] sm:$0xff] %vm3679, %v4675
    %4680 = vset.pattern.permute.xlu0 67
    %4681 = vperm.xlu0 %4680, %v3934
    %v4682 = vpop.permute.xlu0 %4681
    %4684 = vset.pattern.permute.xlu0 67
    %4685 = vperm.xlu0 %4684, %v3935
    %v4686 = vpop.permute.xlu0 %4685
    %v4688 = vmul.f32 %v53, %v4682
    %v4689 = vmul.f32 %v54, %v4686
    %v4690 = vmul.f32 %v4688, 1.442695
    %v4691 = vpow.pop %v4690
    %v4692 = vmul.f32 %v4689, 1.442695
    %v4693 = vpow.pop %v4692
    %4694 = vset.pattern.permute.xlu0 67
    %4695 = vperm.xlu0 %4694, %v3932
    %v4696 = vpop.permute.xlu0 %4695
    %4698 = vset.pattern.permute.xlu0 67
    %4699 = vperm.xlu0 %4698, %v3933
    %v4700 = vpop.permute.xlu0 %4699
    %v4702 = vmul.f32 %v4696, %v4691
    %v4703 = vmul.f32 %v4700, %v4693
    %4706 = vrot.lane.b32.xlu0 %v4702, 112
    %v4707 = vpop.permute.xlu0 %4706
    %4708 = vrot.lane.b32.xlu0 %v4703, 112
    %v4709 = vpop.permute.xlu0 %4708
    %4712 = vst.msk [vmem:[#allocation7 + $0x38] sm:$0xff] %vm3679, %v4707
    %4713 = vst.msk [vmem:[#allocation7 + $0x50] sm:$0xff] %vm3679, %v4709
    %4716 = vrot.lane.b32.xlu0 %v2706, 96
    %v4717 = vpop.permute.xlu0 %4716
    %4718 = vrot.lane.b32.xlu0 %v2712, 96
    %v4719 = vpop.permute.xlu0 %4718
    %v4722 = vsel %vm357, %v4668, 0
    %v4724 = vsel %vm357, %v4669, 0
    %4726 = vmatprep.subr.mxu0 0.0
    %4727 = vmatpush1.msra.mxu0 0.0
    %4728 = vmatprep.subr.mxu0 0.0
    %4729 = vmatpush1.msra.mxu0 0.0
    %4730 = vmatprep.subr.mxu0 0.0
    %4731 = vmatpush1.msra.mxu0 0.0
    %4732 = vmatprep.subr.mxu0 0.0
    %4733 = vmatpush1.msra.mxu0 0.0
    %4734 = vmatprep.subr.mxu0 0.0
    %4735 = vmatpush1.msra.mxu0 0.0
    %4736 = vmatprep.subr.mxu0 0.0
    %4737 = vmatpush1.msra.mxu0 0.0
    %4738 = vmatprep.subr.mxu0 0.0
    %4739 = vmatpush1.msra.mxu0 0.0
    %4740 = vmatprep.subr.mxu0 0.0
    %4741 = vmatpush1.msra.mxu0 0.0
    %4742 = vmatprep.subr.mxu0 0.0
    %4743 = vmatpush1.msra.mxu0 0.0
    %4744 = vmatprep.subr.mxu0 0.0
    %4745 = vmatpush1.msra.mxu0 0.0
    %4746 = vmatprep.subr.mxu0 0.0
    %4747 = vmatpush1.msra.mxu0 0.0
    %4748 = vmatprep.subr.mxu0 0.0
    %4749 = vmatpush1.msra.mxu0 0.0
    %4750 = vmatprep.subr.mxu0 0.0
    %4751 = vmatpush1.msra.mxu0 0.0
    %4752 = vmatprep.subr.mxu0 0.0
    %4753 = vmatpush1.msra.mxu0 0.0
    %4754 = vmatprep.subr.mxu0 0.0
    %4755 = vmatpush1.msra.mxu0 %v4719
    %4756 = vmatprep.subr.mxu0 0.0
    %4757 = vmatpush1.msra.mxu0 %v4717
    %4758 = vmatprep.subr.mxu0 0.0
    %4759 = vmatpush2.msra.mxu0 0.0
    %4760 = vmatprep.subr.mxu0 0.0
    %4761 = vmatpush2.msra.mxu0 0.0
    %4762 = vmatprep.subr.mxu0 0.0
    %4763 = vmatpush2.msra.mxu0 0.0
    %4764 = vmatprep.subr.mxu0 0.0
    %4765 = vmatpush2.msra.mxu0 0.0
    %4766 = vmatprep.subr.mxu0 0.0
    %4767 = vmatpush2.msra.mxu0 0.0
    %4768 = vmatprep.subr.mxu0 0.0
    %4769 = vmatpush2.msra.mxu0 0.0
    %4770 = vmatprep.subr.mxu0 0.0
    %4771 = vmatpush2.msra.mxu0 0.0
    %4772 = vmatprep.subr.mxu0 0.0
    %4773 = vmatpush2.msra.mxu0 0.0
    %4774 = vmatprep.subr.mxu0 0.0
    %4775 = vmatpush2.msra.mxu0 0.0
    %4776 = vmatprep.subr.mxu0 0.0
    %4777 = vmatpush2.msra.mxu0 0.0
    %4778 = vmatprep.subr.mxu0 0.0
    %4779 = vmatpush2.msra.mxu0 0.0
    %4780 = vmatprep.subr.mxu0 0.0
    %4781 = vmatpush2.msra.mxu0 0.0
    %4782 = vmatprep.subr.mxu0 0.0
    %4783 = vmatpush2.msra.mxu0 0.0
    %4784 = vmatprep.subr.mxu0 0.0
    %4785 = vmatpush2.msra.mxu0 0.0
    %4786 = vmatprep.subr.mxu0 0.0
    %4787 = vmatpush2.msra.mxu0 0.0
    %4788 = vmatprep.subr.mxu0 0.0
    %4789 = vmatpush2.msra.mxu0 0.0
    %4790 = vmatprep.mubr.f32.mxu0 0.0
    %4791 = vmatmul.mubr.f32.gmra.mxu0 %v4722
    %v4792 = vpop.f32.mrf.mxu0
    %v4793 = vadd.f32 0.0, %v4792
    %v4794 = vpop.f32.mrf.mxu0
    %4795 = vmatprep.mubr.f32.mxu0 0.0
    %4796 = vmatmul.mubr.f32.gmra.mxu0 %v4724
    %v4797 = vpop.f32.mrf.mxu0
    %v4798 = vadd.f32 0.0, %v4797
    %v4799 = vpop.f32.mrf.mxu0
    %4800 = vdwg.mxu0
    %v4801 = vadd.f32 %v4549, %v4793
    %v4802 = vadd.f32 %v4550, %v4798
    %v4803 = vld [vmem:[#allocation5 + $0x31] ss:$0 sm:$0xff]
    %v4804 = vadd.f32 %v3803, %v4803
    %v4805 = vadd.f32 %v3804, %v4803
    %v4806 = vadd.f32 %v4801, %v4803
    %v4807 = vadd.f32 %v4802, %v4803
    %v4808 = vadd.f32 %v2587, %v4804
    %v4809 = vadd.f32 %v2588, %v4805
    %v4810 = vadd.f32 %v2589, %v4806
    %v4811 = vadd.f32 %v2590, %v4807
    %v4812 = vld [vmem:[#allocation5 + $0x32] ss:$0 sm:$0xff]
    %v4813 = vld [vmem:[#allocation5 + $0x33] ss:$0 sm:$0xff]
    %v4814 = vsel %vm76, %v4808, 0.0
    %4815 = vadd.xlane.f32.xlu0 %v4814
    %v4816 = vpop.xlane.xlu0 %4815
    %v4817 = vsel %vm76, %v4809, 0.0
    %4818 = vadd.xlane.f32.xlu0 %v4817
    %v4819 = vpop.xlane.xlu0 %4818
    %v4820 = vsel %vm76, %v4810, 0.0
    %4821 = vadd.xlane.f32.xlu0 %v4820
    %v4822 = vpop.xlane.xlu0 %4821
    %v4823 = vsel %vm76, %v4811, 0.0
    %4824 = vadd.xlane.f32.xlu0 %v4823
    %v4825 = vpop.xlane.xlu0 %4824
    %v4826 = vmul.f32 %v4816, %v2263
    %v4827 = vmul.f32 %v4819, %v2263
    %v4828 = vmul.f32 %v4822, %v2263
    %v4829 = vmul.f32 %v4825, %v2263
    %v4830 = vsub.f32 %v4808, %v4826
    %v4831 = vsub.f32 %v4809, %v4827
    %v4832 = vsub.f32 %v4810, %v4828
    %v4833 = vsub.f32 %v4811, %v4829
    %v4834 = vmul.f32 %v4830, %v4830
    %v4835 = vmul.f32 %v4831, %v4831
    %v4836 = vmul.f32 %v4832, %v4832
    %v4837 = vmul.f32 %v4833, %v4833
    %v4838 = vsel %vm76, %v4834, 0.0
    %4839 = vadd.xlane.f32.xlu0 %v4838
    %v4840 = vpop.xlane.xlu0 %4839
    %v4841 = vsel %vm76, %v4835, 0.0
    %4842 = vadd.xlane.f32.xlu0 %v4841
    %v4843 = vpop.xlane.xlu0 %4842
    %v4844 = vsel %vm76, %v4836, 0.0
    %4845 = vadd.xlane.f32.xlu0 %v4844
    %v4846 = vpop.xlane.xlu0 %4845
    %v4847 = vsel %vm76, %v4837, 0.0
    %4848 = vadd.xlane.f32.xlu0 %v4847
    %v4849 = vpop.xlane.xlu0 %4848
    %v4850 = vmul.f32 %v4840, %v2263
    %v4851 = vmul.f32 %v4843, %v2263
    %v4852 = vmul.f32 %v4846, %v2263
    %v4853 = vmul.f32 %v4849, %v2263
    %v4854 = vadd.f32 %v4850, 1e-05
    %v4855 = vadd.f32 %v4851, 1e-05
    %v4856 = vadd.f32 %v4852, 1e-05
    %v4857 = vadd.f32 %v4853, 1e-05
    %v4858 = vrsqrt.pop %v4854
    %v4859 = vrsqrt.pop %v4855
    %v4860 = vrsqrt.pop %v4856
    %v4861 = vrsqrt.pop %v4857
    %v4862 = vmul.f32 %v4830, %v4858
    %v4863 = vmul.f32 %v4831, %v4859
    %v4864 = vmul.f32 %v4832, %v4860
    %v4865 = vmul.f32 %v4833, %v4861
    %v4866 = vmul.f32 %v4862, %v4812
    %v4867 = vmul.f32 %v4863, %v4812
    %v4868 = vmul.f32 %v4864, %v4812
    %v4869 = vmul.f32 %v4865, %v4812
    %v4870 = vadd.f32 %v4866, %v4813
    %v4871 = vadd.f32 %v4867, %v4813
    %v4872 = vadd.f32 %v4868, %v4813
    %v4873 = vadd.f32 %v4869, %v4813
    %s4874 = scalar_lea.vmem %s2, 32
    %v4875 = vld [vmem:[%s4874] sm:$0xff]
    %v4876 = vld [vmem:[%s4874 + $0x8] sm:$0xff]
    %v4877 = vld [vmem:[%s4874 + $0x10] sm:$0xff]
    %v4878 = vld [vmem:[%s4874 + $0x18] sm:$0xff]
    %v4879 = vld [vmem:[#allocation5 + $0x34] ss:$0 sm:$0xff]
    %v4881 = vsel %vm76, %v4870, 0
    %v4884 = vsel %vm76, %v4871, 0
    %v4887 = vsel %vm76, %v4872, 0
    %v4890 = vsel %vm76, %v4873, 0
    %4892 = vmatprep.subr.mxu0 0.0
    %4893 = vmatpush1.msra.mxu0 0.0
    %4894 = vmatprep.subr.mxu0 0.0
    %4895 = vmatpush1.msra.mxu0 0.0
    %4896 = vmatprep.subr.mxu0 0.0
    %4897 = vmatpush1.msra.mxu0 0.0
    %4898 = vmatprep.subr.mxu0 0.0
    %4899 = vmatpush1.msra.mxu0 0.0
    %4900 = vmatprep.subr.mxu0 0.0
    %4901 = vmatpush1.msra.mxu0 0.0
    %4902 = vmatprep.subr.mxu0 0.0
    %4903 = vmatpush1.msra.mxu0 0.0
    %4904 = vmatprep.subr.mxu0 0.0
    %4905 = vmatpush1.msra.mxu0 0.0
    %4906 = vmatprep.subr.mxu0 0.0
    %4907 = vmatpush1.msra.mxu0 0.0
    %4908 = vmatprep.subr.mxu0 0.0
    %4909 = vmatpush1.msra.mxu0 0.0
    %4910 = vmatprep.subr.mxu0 0.0
    %4911 = vmatpush1.msra.mxu0 0.0
    %4912 = vmatprep.subr.mxu0 0.0
    %4913 = vmatpush1.msra.mxu0 0.0
    %4914 = vmatprep.subr.mxu0 0.0
    %4915 = vmatpush1.msra.mxu0 0.0
    %4916 = vmatprep.subr.mxu0 0.0
    %4917 = vmatpush1.msra.mxu0 %v4878
    %4918 = vmatprep.subr.mxu0 0.0
    %4919 = vmatpush1.msra.mxu0 %v4877
    %4920 = vmatprep.subr.mxu0 0.0
    %4921 = vmatpush1.msra.mxu0 %v4876
    %4922 = vmatprep.subr.mxu0 0.0
    %4923 = vmatpush1.msra.mxu0 %v4875
    %4924 = vmatprep.subr.mxu0 0.0
    %4925 = vmatpush2.msra.mxu0 0.0
    %4926 = vmatprep.subr.mxu0 0.0
    %4927 = vmatpush2.msra.mxu0 0.0
    %4928 = vmatprep.subr.mxu0 0.0
    %4929 = vmatpush2.msra.mxu0 0.0
    %4930 = vmatprep.subr.mxu0 0.0
    %4931 = vmatpush2.msra.mxu0 0.0
    %4932 = vmatprep.subr.mxu0 0.0
    %4933 = vmatpush2.msra.mxu0 0.0
    %4934 = vmatprep.subr.mxu0 0.0
    %4935 = vmatpush2.msra.mxu0 0.0
    %4936 = vmatprep.subr.mxu0 0.0
    %4937 = vmatpush2.msra.mxu0 0.0
    %4938 = vmatprep.subr.mxu0 0.0
    %4939 = vmatpush2.msra.mxu0 0.0
    %4940 = vmatprep.subr.mxu0 0.0
    %4941 = vmatpush2.msra.mxu0 0.0
    %4942 = vmatprep.subr.mxu0 0.0
    %4943 = vmatpush2.msra.mxu0 0.0
    %4944 = vmatprep.subr.mxu0 0.0
    %4945 = vmatpush2.msra.mxu0 0.0
    %4946 = vmatprep.subr.mxu0 0.0
    %4947 = vmatpush2.msra.mxu0 0.0
    %4948 = vmatprep.subr.mxu0 0.0
    %4949 = vmatpush2.msra.mxu0 0.0
    %4950 = vmatprep.subr.mxu0 0.0
    %4951 = vmatpush2.msra.mxu0 0.0
    %4952 = vmatprep.subr.mxu0 0.0
    %4953 = vmatpush2.msra.mxu0 0.0
    %4954 = vmatprep.subr.mxu0 0.0
    %4955 = vmatpush2.msra.mxu0 0.0
    %4956 = vmatprep.mubr.f32.mxu0 0.0
    %4957 = vmatmul.mubr.f32.gmra.mxu0 %v4881
    %v4958 = vpop.f32.mrf.mxu0
    %v4959 = vadd.f32 %v4879, %v4958
    %v4960 = vpop.f32.mrf.mxu0
    %4961 = vmatprep.mubr.f32.mxu0 0.0
    %4962 = vmatmul.mubr.f32.gmra.mxu0 %v4884
    %v4963 = vpop.f32.mrf.mxu0
    %v4964 = vadd.f32 %v4879, %v4963
    %v4965 = vpop.f32.mrf.mxu0
    %4966 = vmatprep.mubr.f32.mxu0 0.0
    %4967 = vmatmul.mubr.f32.gmra.mxu0 %v4887
    %v4968 = vpop.f32.mrf.mxu0
    %v4969 = vadd.f32 %v4879, %v4968
    %v4970 = vpop.f32.mrf.mxu0
    %4971 = vmatprep.mubr.f32.mxu0 0.0
    %4972 = vmatmul.mubr.f32.gmra.mxu0 %v4890
    %v4973 = vpop.f32.mrf.mxu0
    %v4974 = vadd.f32 %v4879, %v4973
    %v4975 = vpop.f32.mrf.mxu0
    %4976 = vdwg.mxu0
    %v4977 = vmax.f32 %v4959, 0.0
    %v4978 = vmax.f32 %v4964, 0.0
    %v4979 = vmax.f32 %v4969, 0.0
    %v4980 = vmax.f32 %v4974, 0.0
    %s4981 = scalar_lea.vmem %s3, 64
    %v4982 = vld [vmem:[%s4981] sm:$0xff]
    %v4983 = vld [vmem:[%s4981 + $0x8] sm:$0xff]
    %v4984 = vld [vmem:[%s4981 + $0x10] sm:$0xff]
    %v4985 = vld [vmem:[%s4981 + $0x18] sm:$0xff]
    %v4986 = vld [vmem:[%s4981 + $0x20] sm:$0xff]
    %v4987 = vld [vmem:[%s4981 + $0x28] sm:$0xff]
    %v4988 = vld [vmem:[%s4981 + $0x30] sm:$0xff]
    %v4989 = vld [vmem:[%s4981 + $0x38] sm:$0xff]
    %v4990 = vld [vmem:[#allocation5 + $0x35] ss:$0 sm:$0xff]
    %v4992 = vsel %vm2427, %v4977, 0
    %v4995 = vsel %vm2427, %v4978, 0
    %v4998 = vsel %vm2427, %v4979, 0
    %v5001 = vsel %vm2427, %v4980, 0
    %5003 = vmatprep.subr.mxu0 0.0
    %5004 = vmatpush1.msra.mxu0 0.0
    %5005 = vmatprep.subr.mxu0 0.0
    %5006 = vmatpush1.msra.mxu0 0.0
    %5007 = vmatprep.subr.mxu0 0.0
    %5008 = vmatpush1.msra.mxu0 0.0
    %5009 = vmatprep.subr.mxu0 0.0
    %5010 = vmatpush1.msra.mxu0 0.0
    %5011 = vmatprep.subr.mxu0 0.0
    %5012 = vmatpush1.msra.mxu0 0.0
    %5013 = vmatprep.subr.mxu0 0.0
    %5014 = vmatpush1.msra.mxu0 0.0
    %5015 = vmatprep.subr.mxu0 0.0
    %5016 = vmatpush1.msra.mxu0 0.0
    %5017 = vmatprep.subr.mxu0 0.0
    %5018 = vmatpush1.msra.mxu0 0.0
    %5019 = vmatprep.subr.mxu0 0.0
    %5020 = vmatpush1.msra.mxu0 %v4989
    %5021 = vmatprep.subr.mxu0 0.0
    %5022 = vmatpush1.msra.mxu0 %v4988
    %5023 = vmatprep.subr.mxu0 0.0
    %5024 = vmatpush1.msra.mxu0 %v4987
    %5025 = vmatprep.subr.mxu0 0.0
    %5026 = vmatpush1.msra.mxu0 %v4986
    %5027 = vmatprep.subr.mxu0 0.0
    %5028 = vmatpush1.msra.mxu0 %v4985
    %5029 = vmatprep.subr.mxu0 0.0
    %5030 = vmatpush1.msra.mxu0 %v4984
    %5031 = vmatprep.subr.mxu0 0.0
    %5032 = vmatpush1.msra.mxu0 %v4983
    %5033 = vmatprep.subr.mxu0 0.0
    %5034 = vmatpush1.msra.mxu0 %v4982
    %5035 = vmatprep.subr.mxu0 0.0
    %5036 = vmatpush2.msra.mxu0 0.0
    %5037 = vmatprep.subr.mxu0 0.0
    %5038 = vmatpush2.msra.mxu0 0.0
    %5039 = vmatprep.subr.mxu0 0.0
    %5040 = vmatpush2.msra.mxu0 0.0
    %5041 = vmatprep.subr.mxu0 0.0
    %5042 = vmatpush2.msra.mxu0 0.0
    %5043 = vmatprep.subr.mxu0 0.0
    %5044 = vmatpush2.msra.mxu0 0.0
    %5045 = vmatprep.subr.mxu0 0.0
    %5046 = vmatpush2.msra.mxu0 0.0
    %5047 = vmatprep.subr.mxu0 0.0
    %5048 = vmatpush2.msra.mxu0 0.0
    %5049 = vmatprep.subr.mxu0 0.0
    %5050 = vmatpush2.msra.mxu0 0.0
    %5051 = vmatprep.subr.mxu0 0.0
    %5052 = vmatpush2.msra.mxu0 0.0
    %5053 = vmatprep.subr.mxu0 0.0
    %5054 = vmatpush2.msra.mxu0 0.0
    %5055 = vmatprep.subr.mxu0 0.0
    %5056 = vmatpush2.msra.mxu0 0.0
    %5057 = vmatprep.subr.mxu0 0.0
    %5058 = vmatpush2.msra.mxu0 0.0
    %5059 = vmatprep.subr.mxu0 0.0
    %5060 = vmatpush2.msra.mxu0 0.0
    %5061 = vmatprep.subr.mxu0 0.0
    %5062 = vmatpush2.msra.mxu0 0.0
    %5063 = vmatprep.subr.mxu0 0.0
    %5064 = vmatpush2.msra.mxu0 0.0
    %5065 = vmatprep.subr.mxu0 0.0
    %5066 = vmatpush2.msra.mxu0 0.0
    %5067 = vmatprep.mubr.f32.mxu0 0.0
    %5068 = vmatmul.mubr.f32.gmra.mxu0 %v4992
    %v5069 = vpop.f32.mrf.mxu0
    %v5070 = vadd.f32 %v4990, %v5069
    %v5071 = vpop.f32.mrf.mxu0
    %5072 = vmatprep.mubr.f32.mxu0 0.0
    %5073 = vmatmul.mubr.f32.gmra.mxu0 %v4995
    %v5074 = vpop.f32.mrf.mxu0
    %v5075 = vadd.f32 %v4990, %v5074
    %v5076 = vpop.f32.mrf.mxu0
    %5077 = vmatprep.mubr.f32.mxu0 0.0
    %5078 = vmatmul.mubr.f32.gmra.mxu0 %v4998
    %v5079 = vpop.f32.mrf.mxu0
    %v5080 = vadd.f32 %v4990, %v5079
    %v5081 = vpop.f32.mrf.mxu0
    %5082 = vmatprep.mubr.f32.mxu0 0.0
    %5083 = vmatmul.mubr.f32.gmra.mxu0 %v5001
    %v5084 = vpop.f32.mrf.mxu0
    %v5085 = vadd.f32 %v4990, %v5084
    %v5086 = vpop.f32.mrf.mxu0
    %5087 = vdwg.mxu0
    %v5088 = vadd.f32 %v4870, %v5070
    %v5089 = vadd.f32 %v4871, %v5075
    %v5090 = vadd.f32 %v4872, %v5080
    %v5091 = vadd.f32 %v4873, %v5085
    %v5092 = vld [vmem:[#allocation5 + $0x36] ss:$0 sm:$0xff]
    %v5093 = vld [vmem:[#allocation5 + $0x37] ss:$0 sm:$0xff]
    %v5094 = vsel %vm76, %v5088, 0.0
    %5095 = vadd.xlane.f32.xlu0 %v5094
    %v5096 = vpop.xlane.xlu0 %5095
    %v5097 = vsel %vm76, %v5089, 0.0
    %5098 = vadd.xlane.f32.xlu0 %v5097
    %v5099 = vpop.xlane.xlu0 %5098
    %v5100 = vsel %vm76, %v5090, 0.0
    %5101 = vadd.xlane.f32.xlu0 %v5100
    %v5102 = vpop.xlane.xlu0 %5101
    %v5103 = vsel %vm76, %v5091, 0.0
    %5104 = vadd.xlane.f32.xlu0 %v5103
    %v5105 = vpop.xlane.xlu0 %5104
    %v5106 = vmul.f32 %v5096, %v2263
    %v5107 = vmul.f32 %v5099, %v2263
    %v5108 = vmul.f32 %v5102, %v2263
    %v5109 = vmul.f32 %v5105, %v2263
    %v5110 = vsub.f32 %v5088, %v5106
    %v5111 = vsub.f32 %v5089, %v5107
    %v5112 = vsub.f32 %v5090, %v5108
    %v5113 = vsub.f32 %v5091, %v5109
    %v5114 = vmul.f32 %v5110, %v5110
    %v5115 = vmul.f32 %v5111, %v5111
    %v5116 = vmul.f32 %v5112, %v5112
    %v5117 = vmul.f32 %v5113, %v5113
    %v5118 = vsel %vm76, %v5114, 0.0
    %5119 = vadd.xlane.f32.xlu0 %v5118
    %v5120 = vpop.xlane.xlu0 %5119
    %v5121 = vsel %vm76, %v5115, 0.0
    %5122 = vadd.xlane.f32.xlu0 %v5121
    %v5123 = vpop.xlane.xlu0 %5122
    %v5124 = vsel %vm76, %v5116, 0.0
    %5125 = vadd.xlane.f32.xlu0 %v5124
    %v5126 = vpop.xlane.xlu0 %5125
    %v5127 = vsel %vm76, %v5117, 0.0
    %5128 = vadd.xlane.f32.xlu0 %v5127
    %v5129 = vpop.xlane.xlu0 %5128
    %v5130 = vmul.f32 %v5120, %v2263
    %v5131 = vmul.f32 %v5123, %v2263
    %v5132 = vmul.f32 %v5126, %v2263
    %v5133 = vmul.f32 %v5129, %v2263
    %v5134 = vadd.f32 %v5130, 1e-05
    %v5135 = vadd.f32 %v5131, 1e-05
    %v5136 = vadd.f32 %v5132, 1e-05
    %v5137 = vadd.f32 %v5133, 1e-05
    %v5138 = vrsqrt.pop %v5134
    %v5139 = vrsqrt.pop %v5135
    %v5140 = vrsqrt.pop %v5136
    %v5141 = vrsqrt.pop %v5137
    %v5142 = vmul.f32 %v5110, %v5138
    %v5143 = vmul.f32 %v5111, %v5139
    %v5144 = vmul.f32 %v5112, %v5140
    %v5145 = vmul.f32 %v5113, %v5141
    %v5146 = vmul.f32 %v5142, %v5092
    %v5147 = vmul.f32 %v5143, %v5092
    %v5148 = vmul.f32 %v5144, %v5092
    %v5149 = vmul.f32 %v5145, %v5092
    %v5150 = vadd.f32 %v5146, %v5093
    %v5151 = vadd.f32 %v5147, %v5093
    %v5152 = vadd.f32 %v5148, %v5093
    %v5153 = vadd.f32 %v5149, %v5093
    %v5154 = vld [vmem:[#allocation5 + $0x40] ss:$0 sm:$0xff]
    %v5155 = vld [vmem:[#allocation5 + $0x41] ss:$0 sm:$0xff]
    %v5156 = vsel %vm76, %v5150, 0.0
    %5157 = vadd.xlane.f32.xlu0 %v5156
    %v5158 = vpop.xlane.xlu0 %5157
    %v5159 = vsel %vm76, %v5151, 0.0
    %5160 = vadd.xlane.f32.xlu0 %v5159
    %v5161 = vpop.xlane.xlu0 %5160
    %v5162 = vsel %vm76, %v5152, 0.0
    %5163 = vadd.xlane.f32.xlu0 %v5162
    %v5164 = vpop.xlane.xlu0 %5163
    %v5165 = vsel %vm76, %v5153, 0.0
    %5166 = vadd.xlane.f32.xlu0 %v5165
    %v5167 = vpop.xlane.xlu0 %5166
    %v5168 = vmul.f32 %v5158, %v2263
    %v5169 = vmul.f32 %v5161, %v2263
    %v5170 = vmul.f32 %v5164, %v2263
    %v5171 = vmul.f32 %v5167, %v2263
    %v5172 = vsub.f32 %v5150, %v5168
    %v5173 = vsub.f32 %v5151, %v5169
    %v5174 = vsub.f32 %v5152, %v5170
    %v5175 = vsub.f32 %v5153, %v5171
    %v5176 = vmul.f32 %v5172, %v5172
    %v5177 = vmul.f32 %v5173, %v5173
    %v5178 = vmul.f32 %v5174, %v5174
    %v5179 = vmul.f32 %v5175, %v5175
    %v5180 = vsel %vm76, %v5176, 0.0
    %5181 = vadd.xlane.f32.xlu0 %v5180
    %v5182 = vpop.xlane.xlu0 %5181
    %v5183 = vsel %vm76, %v5177, 0.0
    %5184 = vadd.xlane.f32.xlu0 %v5183
    %v5185 = vpop.xlane.xlu0 %5184
    %v5186 = vsel %vm76, %v5178, 0.0
    %5187 = vadd.xlane.f32.xlu0 %v5186
    %v5188 = vpop.xlane.xlu0 %5187
    %v5189 = vsel %vm76, %v5179, 0.0
    %5190 = vadd.xlane.f32.xlu0 %v5189
    %v5191 = vpop.xlane.xlu0 %5190
    %v5192 = vmul.f32 %v5182, %v2263
    %v5193 = vmul.f32 %v5185, %v2263
    %v5194 = vmul.f32 %v5188, %v2263
    %v5195 = vmul.f32 %v5191, %v2263
    %v5196 = vadd.f32 %v5192, 1e-05
    %v5197 = vadd.f32 %v5193, 1e-05
    %v5198 = vadd.f32 %v5194, 1e-05
    %v5199 = vadd.f32 %v5195, 1e-05
    %v5200 = vrsqrt.pop %v5196
    %v5201 = vrsqrt.pop %v5197
    %v5202 = vrsqrt.pop %v5198
    %v5203 = vrsqrt.pop %v5199
    %v5204 = vmul.f32 %v5172, %v5200
    %v5205 = vmul.f32 %v5173, %v5201
    %v5206 = vmul.f32 %v5174, %v5202
    %v5207 = vmul.f32 %v5175, %v5203
    %v5208 = vmul.f32 %v5204, %v5154
    %v5209 = vmul.f32 %v5205, %v5154
    %v5210 = vmul.f32 %v5206, %v5154
    %v5211 = vmul.f32 %v5207, %v5154
    %v5212 = vadd.f32 %v5208, %v5155
    %v5213 = vadd.f32 %v5209, %v5155
    %v5214 = vadd.f32 %v5210, %v5155
    %v5215 = vadd.f32 %v5211, %v5155
    %5216 = vst.msk [vmem:[#allocation7 + $0x10] sm:$0xff] %vm76, %v5212
    %5217 = vst.msk [vmem:[#allocation7 + $0x28] sm:$0xff] %vm76, %v5213
    %5218 = vst.msk [vmem:[#allocation7 + $0x40] sm:$0xff] %vm76, %v5214
    %5219 = vst.msk [vmem:[#allocation7 + $0x58] sm:$0xff] %vm76, %v5215
    // Predicated region
    $region30: #{tpu_custom_call.1} parent=1 // pred_check
      _
    $region31: #{tpu_custom_call.1} parent=1 // pred_check_branch
      %5221 = sbr.rel (0) target = $region33
    $region32: #{tpu_custom_call.1} parent=1 // pred_region
      %s5223 = ssub.s32 1536, 1536
      %5224 = vsyncadd [#allocation4], %s5223
      %s5225 = sshll.u32 [#allocation7], 4
      %s5226 = int_to_ptr.vmem [resolvable:$true] %s5225
      %5231 = dma.vmem_to_hbm [thread:$0]  %s5226, 1536, %s5, [#allocation4], 384, 384, 24
    $region33: #{tpu_custom_call.1} parent=1 // pred_fallthru
      _
    // Predicated region
    $region34: #{tpu_custom_call.1} parent=1 // pred_check
      _
    $region35: #{tpu_custom_call.1} parent=1 // pred_check_branch
      %5233 = sbr.rel (0) target = $region37
    $region36: #{tpu_custom_call.1} parent=1 // pred_region
      %5234 = dma.done [#allocation4], 1536
    $region37: #{tpu_custom_call.1} parent=1 // pred_fallthru
      _
    %5235 = vsyncpa [#allocation3], 1
    %5236 = vsyncpa [#allocation6], 1
    %5237 = vsyncpa [#allocation4], 1

</llo_original>
